<compile_context>
chip_gen: v7x
topology: tpu7x:2x2x1
jax: 0.10.0
libtpu: 0.0.40
codegen_flags: <defaults>
</compile_context>

<pallas_src>
import functools
import math

import jax
import jax.numpy as jnp
from jax.experimental import pallas as pl
from jax.experimental.pallas import tpu as pltpu


def _round_up(a, b):
    return ((a + b - 1) // b) * b


def _bnn_block_kernel(x_ref, w1_ref, w2_ref, b2_ref, o_ref):
    """One grid step == one block of TS prior samples.

    x_ref : (N, K1)          input with a ones column appended (K1 = indim + 1)
    w1_ref: (1, K1, L)       L = width*TS, lane index j = w*TS + t; row K1-1 is fc1 bias
    w2_ref: (1, indim, L)    same lane layout as w1
    b2_ref: (1, indim, TS)
    o_ref : (indim, N, TS)   sample axis last -> lane-dense, unmasked stores
    """
    indim, _, TS = o_ref.shape
    L = w1_ref.shape[2]
    width = L // TS

    x = x_ref[...]                                                     # (N, K1)
    # fc1 (+ bias, folded into the contraction) + tanh for all TS samples at once.
    h = jnp.tanh(jnp.dot(x, w1_ref[0], preferred_element_type=jnp.float32))  # (N, L)

    for o in range(indim):                       # indim is tiny (<=4): unrolled at trace time
        tmp = h * w2_ref[0, o:o + 1, :]          # (N, L)
        # Segmented sum over w.  With lane index j = w*TS + t, the w-th segment is the
        # contiguous, 128-aligned lane window [w*TS, (w+1)*TS) -> every slice below is a
        # plain vreg-column selection and every add is a full-lane VALU op.
        parts = [tmp[:, w * TS:(w + 1) * TS] for w in range(width)]
        while len(parts) > 1:
            nxt = [parts[i] + parts[i + 1] for i in range(0, len(parts) - 1, 2)]
            if len(parts) % 2 == 1:
                nxt.append(parts[-1])
            parts = nxt
        res = parts[0] + b2_ref[0, o:o + 1, :]   # (N, TS)
        o_ref[o, :, :] = res.astype(o_ref.dtype)


@functools.partial(jax.jit, static_argnames=("block_samples",))
def bnn_forward_pallas(x, fc1_w, fc1_b, fc2_w, fc2_b, *, block_samples=256):
    """Forward pass for all prior samples.

    x:      (N, indim)
    fc1_w:  (S, width, indim)   fc1_b: (S, width)
    fc2_w:  (S, indim, width)   fc2_b: (S, indim)
    returns (indim, N, S)   -- i.e. torch's `out` with axes reversed (sample axis last).
    """
    S, width, indim = fc1_w.shape
    N = x.shape[0]

    # Samples per grid step: multiple of 128 (lane-dense output), capped near S.
    TS = max(128, min(_round_up(block_samples, 128), _round_up(S, 128)))
    Sp = _round_up(S, TS)
    nb = Sp // TS
    pad = Sp - S
    if pad:
        fc1_w = jnp.pad(fc1_w, ((0, pad), (0, 0), (0, 0)))
        fc1_b = jnp.pad(fc1_b, ((0, pad), (0, 0)))
        fc2_w = jnp.pad(fc2_w, ((0, pad), (0, 0), (0, 0)))
        fc2_b = jnp.pad(fc2_b, ((0, pad), (0, 0)))

    f32 = jnp.float32
    K1 = indim + 1
    L = width * TS

    # Kernel-side weight layout (per block): lane index j = w*TS + t, t = local sample.
    # One relayout pass over the (small) weight tensors here buys a fused wide matmul
    # and relayout-free reductions inside the kernel.
    w1k = jnp.transpose(fc1_w.reshape(nb, TS, width, indim).astype(f32), (0, 3, 2, 1))  # (nb, indim, width, TS)
    b1k = jnp.transpose(fc1_b.reshape(nb, TS, width).astype(f32), (0, 2, 1))[:, None]   # (nb, 1,     width, TS)
    w1k = jnp.concatenate([w1k, b1k], axis=1).reshape(nb, K1, L)                        # (nb, K1, L)
    w2k = jnp.transpose(fc2_w.reshape(nb, TS, indim, width).astype(f32),
                        (0, 2, 3, 1)).reshape(nb, indim, L)                             # (nb, indim, L)
    b2k = jnp.transpose(fc2_b.reshape(nb, TS, indim).astype(f32), (0, 2, 1))            # (nb, indim, TS)
    x_aug = jnp.concatenate([x.astype(f32), jnp.ones((N, 1), f32)], axis=1)             # (N, K1)

    out = pl.pallas_call(
        _bnn_block_kernel,
        out_shape=jax.ShapeDtypeStruct((indim, N, Sp), jnp.float32),
        grid_spec=pltpu.PrefetchScalarGridSpec(
            num_scalar_prefetch=0,
            grid=(nb,),
            in_specs=[
                pl.BlockSpec((N, K1), lambda s: (0, 0)),          # x: resident, never re-DMA'd
                pl.BlockSpec((1, K1, L), lambda s: (s, 0, 0)),
                pl.BlockSpec((1, indim, L), lambda s: (s, 0, 0)),
                pl.BlockSpec((1, indim, TS), lambda s: (s, 0, 0)),
            ],
            out_specs=pl.BlockSpec((indim, N, TS), lambda s: (0, 0, s)),
        ),
        compiler_params=pltpu.CompilerParams(
            dimension_semantics=("parallel",),
            vmem_limit_bytes=48 * 1024 * 1024,
        ),
    )(x_aug, w1k, w2k, b2k)
    return out[:, :, :S]


def sample_prior_params(key, *, n_samples, width, indim,
                        ma, mu, mb, mv, sa, su, sb, wv):
    """Gaussian prior samples in the torch module's shapes (done in plain JAX)."""
    k1, k2, k3, k4 = jax.random.split(key, 4)
    fc1_w = mu + su * jax.random.normal(k1, (n_samples, width, indim), jnp.float32)
    fc1_b = ma + sa * jax.random.normal(k2, (n_samples, width), jnp.float32)
    fc2_w = mv + (wv / math.sqrt(width)) * jax.random.normal(
        k3, (n_samples, indim, width), jnp.float32)
    fc2_b = mb + sb * jax.random.normal(k4, (n_samples, indim), jnp.float32)
    return fc1_w, fc1_b, fc2_w, fc2_b


def forward(x, params, n_samples):
    """Mirrors SingleHiddenLayerWideNNWithGaussianPrior.forward return semantics."""
    fc1_w, fc1_b, fc2_w, fc2_b = params
    ker = bnn_forward_pallas(x, fc1_w, fc1_b, fc2_w, fc2_b)   # (indim, N, S) == torch out with axes reversed
    if n_samples == 1:
        return ker[:, :, 0].T                                 # torch: out.squeeze(0) -> (N, indim)
    # torch: out.squeeze().T ; since .T reverses all axes and commutes with squeeze,
    # it equals squeeze() of the already-reversed kernel output.
    return jnp.squeeze(ker)


def forward_reference(x, params):
    """Pure-JAX reference of the same math (f32, highest precision)."""
    fc1_w, fc1_b, fc2_w, fc2_b = params
    hp = jax.lax.Precision.HIGHEST
    h = jnp.tanh(jnp.einsum("ni,swi->snw", x, fc1_w, precision=hp) + fc1_b[:, None, :])
    y = jnp.einsum("snw,sow->sno", h, fc2_w, precision=hp) + fc2_b[:, None, :]
    return y                                                  # (S, N, indim)


if __name__ == "__main__":
    N, INDIM, WIDTH = 16, 4, 128
    hyper = dict(ma=0.0, mu=0.0, mb=0.0, mv=0.0, sa=1.0, su=1.0, sb=0.1, wv=1.0)

    key = jax.random.PRNGKey(0)
    kx, kp1, kp2, kp3 = jax.random.split(key, 4)
    x = jax.random.normal(kx, (N, INDIM), jnp.float32)

    # n_samples = 1 path
    p1 = sample_prior_params(kp1, n_samples=1, width=WIDTH, indim=INDIM, **hyper)
    out1 = jax.block_until_ready(forward(x, p1, n_samples=1))
    ref1 = forward_reference(x, p1)[0]
    assert out1.shape == (N, INDIM), out1.shape
    assert jnp.allclose(out1, ref1, atol=2e-4, rtol=2e-4), float(jnp.max(jnp.abs(out1 - ref1)))

    # n_samples > 1, not a multiple of the per-step sample block (exercises padding + 2 grid steps)
    S = 300
    p3 = sample_prior_params(kp2, n_samples=S, width=WIDTH, indim=INDIM, **hyper)
    out3 = jax.block_until_ready(forward(x, p3, n_samples=S))
    ref3 = jnp.squeeze(forward_reference(x, p3)).T
    assert out3.shape == ref3.shape == (INDIM, N, S), (out3.shape, ref3.shape)
    assert jnp.allclose(out3, ref3, atol=2e-4, rtol=2e-4), float(jnp.max(jnp.abs(out3 - ref3)))

    # indim = 1 (the module's default/required outdim) path, non-pow2-friendly small width
    x1 = jax.random.normal(kp3, (N, 1), jnp.float32)
    p4 = sample_prior_params(kp3, n_samples=5, width=64, indim=1, **hyper)
    out4 = jax.block_until_ready(forward(x1, p4, n_samples=5))
    ref4 = jnp.squeeze(forward_reference(x1, p4)).T
    assert out4.shape == ref4.shape == (N, 5), (out4.shape, ref4.shape)
    assert jnp.allclose(out4, ref4, atol=2e-4, rtol=2e-4), float(jnp.max(jnp.abs(out4 - ref4)))

    print("KERNEL_OK")
</pallas_src>

<mosaic_0001>
module attributes {stable_mosaic.version = 11 : i64} {
  func.func @_bnn_block_kernel(%arg0: i32, %arg1: memref<16x5xf32, #tpu.memory_space<vmem>>, %arg2: memref<1x5x16384xf32, #tpu.memory_space<vmem>>, %arg3: memref<1x4x16384xf32, #tpu.memory_space<vmem>>, %arg4: memref<1x4x128xf32, #tpu.memory_space<vmem>>, %arg5: memref<4x16x128xf32, #tpu.memory_space<vmem>>) attributes {dimension_semantics = [#tpu.dimension_semantics<parallel>], iteration_bounds = array<i64: 1>, scalar_prefetch = 0 : i64, scratch_operands = 0 : i64, tpu.core_type = #tpu.core_type<tc>, window_params = [{pipeline_mode = #tpu.pipeline_mode<synchronous>, transform_indices = @transform_0, window_bounds = array<i64: 16, 5>}, {transform_indices = @transform_1, window_bounds = array<i64: 1, 5, 16384>}, {transform_indices = @transform_2, window_bounds = array<i64: 1, 4, 16384>}, {transform_indices = @transform_3, window_bounds = array<i64: 1, 4, 128>}, {transform_indices = @transform_4, window_bounds = array<i64: 4, 16, 128>}]} {
    %c0 = arith.constant 0 : index
    %c0_0 = arith.constant 0 : index
    %0 = vector.load %arg1[%c0, %c0_0] : memref<16x5xf32, #tpu.memory_space<vmem>>, vector<16x5xf32>
    %c0_1 = arith.constant 0 : index
    %c0_2 = arith.constant 0 : index
    %c0_3 = arith.constant 0 : index
    %1 = vector.load %arg2[%c0_1, %c0_2, %c0_3] : memref<1x5x16384xf32, #tpu.memory_space<vmem>>, vector<1x5x16384xf32>
    %2 = vector.shape_cast %1 : vector<1x5x16384xf32> to vector<5x16384xf32>
    %cst = arith.constant dense<0.000000e+00> : vector<16x16384xf32>
    %3 = tpu.matmul %0, %2, %cst {dimension_numbers = #tpu.dot_dimension_numbers<[1], [0], [0], [1], [0, 0, 1, 1], [], []>} : vector<16x5xf32>, vector<5x16384xf32>, vector<16x16384xf32> -> vector<16x16384xf32>
    %4 = math.tanh %3 : vector<16x16384xf32>
    %c0_4 = arith.constant 0 : index
    %c0_5 = arith.constant 0 : index
    %c0_6 = arith.constant 0 : index
    %5 = vector.load %arg3[%c0_4, %c0_5, %c0_6] : memref<1x4x16384xf32, #tpu.memory_space<vmem>>, vector<1x1x16384xf32>
    %6 = vector.shape_cast %5 : vector<1x1x16384xf32> to vector<1x16384xf32>
    %7 = vector.broadcast %6 : vector<1x16384xf32> to vector<16x16384xf32>
    %8 = arith.mulf %4, %7 : vector<16x16384xf32>
    %9 = vector.extract_strided_slice %8 {offsets = [0, 0], sizes = [16, 128], strides = [1, 1]} : vector<16x16384xf32> to vector<16x128xf32>
    %10 = vector.extract_strided_slice %8 {offsets = [0, 128], sizes = [16, 128], strides = [1, 1]} : vector<16x16384xf32> to vector<16x128xf32>
    %11 = vector.extract_strided_slice %8 {offsets = [0, 256], sizes = [16, 128], strides = [1, 1]} : vector<16x16384xf32> to vector<16x128xf32>
    %12 = vector.extract_strided_slice %8 {offsets = [0, 384], sizes = [16, 128], strides = [1, 1]} : vector<16x16384xf32> to vector<16x128xf32>
    %13 = vector.extract_strided_slice %8 {offsets = [0, 512], sizes = [16, 128], strides = [1, 1]} : vector<16x16384xf32> to vector<16x128xf32>
    %14 = vector.extract_strided_slice %8 {offsets = [0, 640], sizes = [16, 128], strides = [1, 1]} : vector<16x16384xf32> to vector<16x128xf32>
    %15 = vector.extract_strided_slice %8 {offsets = [0, 768], sizes = [16, 128], strides = [1, 1]} : vector<16x16384xf32> to vector<16x128xf32>
    %16 = vector.extract_strided_slice %8 {offsets = [0, 896], sizes = [16, 128], strides = [1, 1]} : vector<16x16384xf32> to vector<16x128xf32>
    %17 = vector.extract_strided_slice %8 {offsets = [0, 1024], sizes = [16, 128], strides = [1, 1]} : vector<16x16384xf32> to vector<16x128xf32>
    %18 = vector.extract_strided_slice %8 {offsets = [0, 1152], sizes = [16, 128], strides = [1, 1]} : vector<16x16384xf32> to vector<16x128xf32>
    %19 = vector.extract_strided_slice %8 {offsets = [0, 1280], sizes = [16, 128], strides = [1, 1]} : vector<16x16384xf32> to vector<16x128xf32>
    %20 = vector.extract_strided_slice %8 {offsets = [0, 1408], sizes = [16, 128], strides = [1, 1]} : vector<16x16384xf32> to vector<16x128xf32>
    %21 = vector.extract_strided_slice %8 {offsets = [0, 1536], sizes = [16, 128], strides = [1, 1]} : vector<16x16384xf32> to vector<16x128xf32>
    %22 = vector.extract_strided_slice %8 {offsets = [0, 1664], sizes = [16, 128], strides = [1, 1]} : vector<16x16384xf32> to vector<16x128xf32>
    %23 = vector.extract_strided_slice %8 {offsets = [0, 1792], sizes = [16, 128], strides = [1, 1]} : vector<16x16384xf32> to vector<16x128xf32>
    %24 = vector.extract_strided_slice %8 {offsets = [0, 1920], sizes = [16, 128], strides = [1, 1]} : vector<16x16384xf32> to vector<16x128xf32>
    %25 = vector.extract_strided_slice %8 {offsets = [0, 2048], sizes = [16, 128], strides = [1, 1]} : vector<16x16384xf32> to vector<16x128xf32>
    %26 = vector.extract_strided_slice %8 {offsets = [0, 2176], sizes = [16, 128], strides = [1, 1]} : vector<16x16384xf32> to vector<16x128xf32>
    %27 = vector.extract_strided_slice %8 {offsets = [0, 2304], sizes = [16, 128], strides = [1, 1]} : vector<16x16384xf32> to vector<16x128xf32>
    %28 = vector.extract_strided_slice %8 {offsets = [0, 2432], sizes = [16, 128], strides = [1, 1]} : vector<16x16384xf32> to vector<16x128xf32>
    %29 = vector.extract_strided_slice %8 {offsets = [0, 2560], sizes = [16, 128], strides = [1, 1]} : vector<16x16384xf32> to vector<16x128xf32>
    %30 = vector.extract_strided_slice %8 {offsets = [0, 2688], sizes = [16, 128], strides = [1, 1]} : vector<16x16384xf32> to vector<16x128xf32>
    %31 = vector.extract_strided_slice %8 {offsets = [0, 2816], sizes = [16, 128], strides = [1, 1]} : vector<16x16384xf32> to vector<16x128xf32>
    %32 = vector.extract_strided_slice %8 {offsets = [0, 2944], sizes = [16, 128], strides = [1, 1]} : vector<16x16384xf32> to vector<16x128xf32>
    %33 = vector.extract_strided_slice %8 {offsets = [0, 3072], sizes = [16, 128], strides = [1, 1]} : vector<16x16384xf32> to vector<16x128xf32>
    %34 = vector.extract_strided_slice %8 {offsets = [0, 3200], sizes = [16, 128], strides = [1, 1]} : vector<16x16384xf32> to vector<16x128xf32>
    %35 = vector.extract_strided_slice %8 {offsets = [0, 3328], sizes = [16, 128], strides = [1, 1]} : vector<16x16384xf32> to vector<16x128xf32>
    %36 = vector.extract_strided_slice %8 {offsets = [0, 3456], sizes = [16, 128], strides = [1, 1]} : vector<16x16384xf32> to vector<16x128xf32>
    %37 = vector.extract_strided_slice %8 {offsets = [0, 3584], sizes = [16, 128], strides = [1, 1]} : vector<16x16384xf32> to vector<16x128xf32>
    %38 = vector.extract_strided_slice %8 {offsets = [0, 3712], sizes = [16, 128], strides = [1, 1]} : vector<16x16384xf32> to vector<16x128xf32>
    %39 = vector.extract_strided_slice %8 {offsets = [0, 3840], sizes = [16, 128], strides = [1, 1]} : vector<16x16384xf32> to vector<16x128xf32>
    %40 = vector.extract_strided_slice %8 {offsets = [0, 3968], sizes = [16, 128], strides = [1, 1]} : vector<16x16384xf32> to vector<16x128xf32>
    %41 = vector.extract_strided_slice %8 {offsets = [0, 4096], sizes = [16, 128], strides = [1, 1]} : vector<16x16384xf32> to vector<16x128xf32>
    %42 = vector.extract_strided_slice %8 {offsets = [0, 4224], sizes = [16, 128], strides = [1, 1]} : vector<16x16384xf32> to vector<16x128xf32>
    %43 = vector.extract_strided_slice %8 {offsets = [0, 4352], sizes = [16, 128], strides = [1, 1]} : vector<16x16384xf32> to vector<16x128xf32>
    %44 = vector.extract_strided_slice %8 {offsets = [0, 4480], sizes = [16, 128], strides = [1, 1]} : vector<16x16384xf32> to vector<16x128xf32>
    %45 = vector.extract_strided_slice %8 {offsets = [0, 4608], sizes = [16, 128], strides = [1, 1]} : vector<16x16384xf32> to vector<16x128xf32>
    %46 = vector.extract_strided_slice %8 {offsets = [0, 4736], sizes = [16, 128], strides = [1, 1]} : vector<16x16384xf32> to vector<16x128xf32>
    %47 = vector.extract_strided_slice %8 {offsets = [0, 4864], sizes = [16, 128], strides = [1, 1]} : vector<16x16384xf32> to vector<16x128xf32>
    %48 = vector.extract_strided_slice %8 {offsets = [0, 4992], sizes = [16, 128], strides = [1, 1]} : vector<16x16384xf32> to vector<16x128xf32>
    %49 = vector.extract_strided_slice %8 {offsets = [0, 5120], sizes = [16, 128], strides = [1, 1]} : vector<16x16384xf32> to vector<16x128xf32>
    %50 = vector.extract_strided_slice %8 {offsets = [0, 5248], sizes = [16, 128], strides = [1, 1]} : vector<16x16384xf32> to vector<16x128xf32>
    %51 = vector.extract_strided_slice %8 {offsets = [0, 5376], sizes = [16, 128], strides = [1, 1]} : vector<16x16384xf32> to vector<16x128xf32>
    %52 = vector.extract_strided_slice %8 {offsets = [0, 5504], sizes = [16, 128], strides = [1, 1]} : vector<16x16384xf32> to vector<16x128xf32>
    %53 = vector.extract_strided_slice %8 {offsets = [0, 5632], sizes = [16, 128], strides = [1, 1]} : vector<16x16384xf32> to vector<16x128xf32>
    %54 = vector.extract_strided_slice %8 {offsets = [0, 5760], sizes = [16, 128], strides = [1, 1]} : vector<16x16384xf32> to vector<16x128xf32>
    %55 = vector.extract_strided_slice %8 {offsets = [0, 5888], sizes = [16, 128], strides = [1, 1]} : vector<16x16384xf32> to vector<16x128xf32>
    %56 = vector.extract_strided_slice %8 {offsets = [0, 6016], sizes = [16, 128], strides = [1, 1]} : vector<16x16384xf32> to vector<16x128xf32>
    %57 = vector.extract_strided_slice %8 {offsets = [0, 6144], sizes = [16, 128], strides = [1, 1]} : vector<16x16384xf32> to vector<16x128xf32>
    %58 = vector.extract_strided_slice %8 {offsets = [0, 6272], sizes = [16, 128], strides = [1, 1]} : vector<16x16384xf32> to vector<16x128xf32>
    %59 = vector.extract_strided_slice %8 {offsets = [0, 6400], sizes = [16, 128], strides = [1, 1]} : vector<16x16384xf32> to vector<16x128xf32>
    %60 = vector.extract_strided_slice %8 {offsets = [0, 6528], sizes = [16, 128], strides = [1, 1]} : vector<16x16384xf32> to vector<16x128xf32>
    %61 = vector.extract_strided_slice %8 {offsets = [0, 6656], sizes = [16, 128], strides = [1, 1]} : vector<16x16384xf32> to vector<16x128xf32>
    %62 = vector.extract_strided_slice %8 {offsets = [0, 6784], sizes = [16, 128], strides = [1, 1]} : vector<16x16384xf32> to vector<16x128xf32>
    %63 = vector.extract_strided_slice %8 {offsets = [0, 6912], sizes = [16, 128], strides = [1, 1]} : vector<16x16384xf32> to vector<16x128xf32>
    %64 = vector.extract_strided_slice %8 {offsets = [0, 7040], sizes = [16, 128], strides = [1, 1]} : vector<16x16384xf32> to vector<16x128xf32>
    %65 = vector.extract_strided_slice %8 {offsets = [0, 7168], sizes = [16, 128], strides = [1, 1]} : vector<16x16384xf32> to vector<16x128xf32>
    %66 = vector.extract_strided_slice %8 {offsets = [0, 7296], sizes = [16, 128], strides = [1, 1]} : vector<16x16384xf32> to vector<16x128xf32>
    %67 = vector.extract_strided_slice %8 {offsets = [0, 7424], sizes = [16, 128], strides = [1, 1]} : vector<16x16384xf32> to vector<16x128xf32>
    %68 = vector.extract_strided_slice %8 {offsets = [0, 7552], sizes = [16, 128], strides = [1, 1]} : vector<16x16384xf32> to vector<16x128xf32>
    %69 = vector.extract_strided_slice %8 {offsets = [0, 7680], sizes = [16, 128], strides = [1, 1]} : vector<16x16384xf32> to vector<16x128xf32>
    %70 = vector.extract_strided_slice %8 {offsets = [0, 7808], sizes = [16, 128], strides = [1, 1]} : vector<16x16384xf32> to vector<16x128xf32>
    %71 = vector.extract_strided_slice %8 {offsets = [0, 7936], sizes = [16, 128], strides = [1, 1]} : vector<16x16384xf32> to vector<16x128xf32>
    %72 = vector.extract_strided_slice %8 {offsets = [0, 8064], sizes = [16, 128], strides = [1, 1]} : vector<16x16384xf32> to vector<16x128xf32>
    %73 = vector.extract_strided_slice %8 {offsets = [0, 8192], sizes = [16, 128], strides = [1, 1]} : vector<16x16384xf32> to vector<16x128xf32>
    %74 = vector.extract_strided_slice %8 {offsets = [0, 8320], sizes = [16, 128], strides = [1, 1]} : vector<16x16384xf32> to vector<16x128xf32>
    %75 = vector.extract_strided_slice %8 {offsets = [0, 8448], sizes = [16, 128], strides = [1, 1]} : vector<16x16384xf32> to vector<16x128xf32>
    %76 = vector.extract_strided_slice %8 {offsets = [0, 8576], sizes = [16, 128], strides = [1, 1]} : vector<16x16384xf32> to vector<16x128xf32>
    %77 = vector.extract_strided_slice %8 {offsets = [0, 8704], sizes = [16, 128], strides = [1, 1]} : vector<16x16384xf32> to vector<16x128xf32>
    %78 = vector.extract_strided_slice %8 {offsets = [0, 8832], sizes = [16, 128], strides = [1, 1]} : vector<16x16384xf32> to vector<16x128xf32>
    %79 = vector.extract_strided_slice %8 {offsets = [0, 8960], sizes = [16, 128], strides = [1, 1]} : vector<16x16384xf32> to vector<16x128xf32>
    %80 = vector.extract_strided_slice %8 {offsets = [0, 9088], sizes = [16, 128], strides = [1, 1]} : vector<16x16384xf32> to vector<16x128xf32>
    %81 = vector.extract_strided_slice %8 {offsets = [0, 9216], sizes = [16, 128], strides = [1, 1]} : vector<16x16384xf32> to vector<16x128xf32>
    %82 = vector.extract_strided_slice %8 {offsets = [0, 9344], sizes = [16, 128], strides = [1, 1]} : vector<16x16384xf32> to vector<16x128xf32>
    %83 = vector.extract_strided_slice %8 {offsets = [0, 9472], sizes = [16, 128], strides = [1, 1]} : vector<16x16384xf32> to vector<16x128xf32>
    %84 = vector.extract_strided_slice %8 {offsets = [0, 9600], sizes = [16, 128], strides = [1, 1]} : vector<16x16384xf32> to vector<16x128xf32>
    %85 = vector.extract_strided_slice %8 {offsets = [0, 9728], sizes = [16, 128], strides = [1, 1]} : vector<16x16384xf32> to vector<16x128xf32>
    %86 = vector.extract_strided_slice %8 {offsets = [0, 9856], sizes = [16, 128], strides = [1, 1]} : vector<16x16384xf32> to vector<16x128xf32>
    %87 = vector.extract_strided_slice %8 {offsets = [0, 9984], sizes = [16, 128], strides = [1, 1]} : vector<16x16384xf32> to vector<16x128xf32>
    %88 = vector.extract_strided_slice %8 {offsets = [0, 10112], sizes = [16, 128], strides = [1, 1]} : vector<16x16384xf32> to vector<16x128xf32>
    %89 = vector.extract_strided_slice %8 {offsets = [0, 10240], sizes = [16, 128], strides = [1, 1]} : vector<16x16384xf32> to vector<16x128xf32>
    %90 = vector.extract_strided_slice %8 {offsets = [0, 10368], sizes = [16, 128], strides = [1, 1]} : vector<16x16384xf32> to vector<16x128xf32>
    %91 = vector.extract_strided_slice %8 {offsets = [0, 10496], sizes = [16, 128], strides = [1, 1]} : vector<16x16384xf32> to vector<16x128xf32>
    %92 = vector.extract_strided_slice %8 {offsets = [0, 10624], sizes = [16, 128], strides = [1, 1]} : vector<16x16384xf32> to vector<16x128xf32>
    %93 = vector.extract_strided_slice %8 {offsets = [0, 10752], sizes = [16, 128], strides = [1, 1]} : vector<16x16384xf32> to vector<16x128xf32>
    %94 = vector.extract_strided_slice %8 {offsets = [0, 10880], sizes = [16, 128], strides = [1, 1]} : vector<16x16384xf32> to vector<16x128xf32>
    %95 = vector.extract_strided_slice %8 {offsets = [0, 11008], sizes = [16, 128], strides = [1, 1]} : vector<16x16384xf32> to vector<16x128xf32>
    %96 = vector.extract_strided_slice %8 {offsets = [0, 11136], sizes = [16, 128], strides = [1, 1]} : vector<16x16384xf32> to vector<16x128xf32>
    %97 = vector.extract_strided_slice %8 {offsets = [0, 11264], sizes = [16, 128], strides = [1, 1]} : vector<16x16384xf32> to vector<16x128xf32>
    %98 = vector.extract_strided_slice %8 {offsets = [0, 11392], sizes = [16, 128], strides = [1, 1]} : vector<16x16384xf32> to vector<16x128xf32>
    %99 = vector.extract_strided_slice %8 {offsets = [0, 11520], sizes = [16, 128], strides = [1, 1]} : vector<16x16384xf32> to vector<16x128xf32>
    %100 = vector.extract_strided_slice %8 {offsets = [0, 11648], sizes = [16, 128], strides = [1, 1]} : vector<16x16384xf32> to vector<16x128xf32>
    %101 = vector.extract_strided_slice %8 {offsets = [0, 11776], sizes = [16, 128], strides = [1, 1]} : vector<16x16384xf32> to vector<16x128xf32>
    %102 = vector.extract_strided_slice %8 {offsets = [0, 11904], sizes = [16, 128], strides = [1, 1]} : vector<16x16384xf32> to vector<16x128xf32>
    %103 = vector.extract_strided_slice %8 {offsets = [0, 12032], sizes = [16, 128], strides = [1, 1]} : vector<16x16384xf32> to vector<16x128xf32>
    %104 = vector.extract_strided_slice %8 {offsets = [0, 12160], sizes = [16, 128], strides = [1, 1]} : vector<16x16384xf32> to vector<16x128xf32>
    %105 = vector.extract_strided_slice %8 {offsets = [0, 12288], sizes = [16, 128], strides = [1, 1]} : vector<16x16384xf32> to vector<16x128xf32>
    %106 = vector.extract_strided_slice %8 {offsets = [0, 12416], sizes = [16, 128], strides = [1, 1]} : vector<16x16384xf32> to vector<16x128xf32>
    %107 = vector.extract_strided_slice %8 {offsets = [0, 12544], sizes = [16, 128], strides = [1, 1]} : vector<16x16384xf32> to vector<16x128xf32>
    %108 = vector.extract_strided_slice %8 {offsets = [0, 12672], sizes = [16, 128], strides = [1, 1]} : vector<16x16384xf32> to vector<16x128xf32>
    %109 = vector.extract_strided_slice %8 {offsets = [0, 12800], sizes = [16, 128], strides = [1, 1]} : vector<16x16384xf32> to vector<16x128xf32>
    %110 = vector.extract_strided_slice %8 {offsets = [0, 12928], sizes = [16, 128], strides = [1, 1]} : vector<16x16384xf32> to vector<16x128xf32>
    %111 = vector.extract_strided_slice %8 {offsets = [0, 13056], sizes = [16, 128], strides = [1, 1]} : vector<16x16384xf32> to vector<16x128xf32>
    %112 = vector.extract_strided_slice %8 {offsets = [0, 13184], sizes = [16, 128], strides = [1, 1]} : vector<16x16384xf32> to vector<16x128xf32>
    %113 = vector.extract_strided_slice %8 {offsets = [0, 13312], sizes = [16, 128], strides = [1, 1]} : vector<16x16384xf32> to vector<16x128xf32>
    %114 = vector.extract_strided_slice %8 {offsets = [0, 13440], sizes = [16, 128], strides = [1, 1]} : vector<16x16384xf32> to vector<16x128xf32>
    %115 = vector.extract_strided_slice %8 {offsets = [0, 13568], sizes = [16, 128], strides = [1, 1]} : vector<16x16384xf32> to vector<16x128xf32>
    %116 = vector.extract_strided_slice %8 {offsets = [0, 13696], sizes = [16, 128], strides = [1, 1]} : vector<16x16384xf32> to vector<16x128xf32>
    %117 = vector.extract_strided_slice %8 {offsets = [0, 13824], sizes = [16, 128], strides = [1, 1]} : vector<16x16384xf32> to vector<16x128xf32>
    %118 = vector.extract_strided_slice %8 {offsets = [0, 13952], sizes = [16, 128], strides = [1, 1]} : vector<16x16384xf32> to vector<16x128xf32>
    %119 = vector.extract_strided_slice %8 {offsets = [0, 14080], sizes = [16, 128], strides = [1, 1]} : vector<16x16384xf32> to vector<16x128xf32>
    %120 = vector.extract_strided_slice %8 {offsets = [0, 14208], sizes = [16, 128], strides = [1, 1]} : vector<16x16384xf32> to vector<16x128xf32>
    %121 = vector.extract_strided_slice %8 {offsets = [0, 14336], sizes = [16, 128], strides = [1, 1]} : vector<16x16384xf32> to vector<16x128xf32>
    %122 = vector.extract_strided_slice %8 {offsets = [0, 14464], sizes = [16, 128], strides = [1, 1]} : vector<16x16384xf32> to vector<16x128xf32>
    %123 = vector.extract_strided_slice %8 {offsets = [0, 14592], sizes = [16, 128], strides = [1, 1]} : vector<16x16384xf32> to vector<16x128xf32>
    %124 = vector.extract_strided_slice %8 {offsets = [0, 14720], sizes = [16, 128], strides = [1, 1]} : vector<16x16384xf32> to vector<16x128xf32>
    %125 = vector.extract_strided_slice %8 {offsets = [0, 14848], sizes = [16, 128], strides = [1, 1]} : vector<16x16384xf32> to vector<16x128xf32>
    %126 = vector.extract_strided_slice %8 {offsets = [0, 14976], sizes = [16, 128], strides = [1, 1]} : vector<16x16384xf32> to vector<16x128xf32>
    %127 = vector.extract_strided_slice %8 {offsets = [0, 15104], sizes = [16, 128], strides = [1, 1]} : vector<16x16384xf32> to vector<16x128xf32>
    %128 = vector.extract_strided_slice %8 {offsets = [0, 15232], sizes = [16, 128], strides = [1, 1]} : vector<16x16384xf32> to vector<16x128xf32>
    %129 = vector.extract_strided_slice %8 {offsets = [0, 15360], sizes = [16, 128], strides = [1, 1]} : vector<16x16384xf32> to vector<16x128xf32>
    %130 = vector.extract_strided_slice %8 {offsets = [0, 15488], sizes = [16, 128], strides = [1, 1]} : vector<16x16384xf32> to vector<16x128xf32>
    %131 = vector.extract_strided_slice %8 {offsets = [0, 15616], sizes = [16, 128], strides = [1, 1]} : vector<16x16384xf32> to vector<16x128xf32>
    %132 = vector.extract_strided_slice %8 {offsets = [0, 15744], sizes = [16, 128], strides = [1, 1]} : vector<16x16384xf32> to vector<16x128xf32>
    %133 = vector.extract_strided_slice %8 {offsets = [0, 15872], sizes = [16, 128], strides = [1, 1]} : vector<16x16384xf32> to vector<16x128xf32>
    %134 = vector.extract_strided_slice %8 {offsets = [0, 16000], sizes = [16, 128], strides = [1, 1]} : vector<16x16384xf32> to vector<16x128xf32>
    %135 = vector.extract_strided_slice %8 {offsets = [0, 16128], sizes = [16, 128], strides = [1, 1]} : vector<16x16384xf32> to vector<16x128xf32>
    %136 = vector.extract_strided_slice %8 {offsets = [0, 16256], sizes = [16, 128], strides = [1, 1]} : vector<16x16384xf32> to vector<16x128xf32>
    %137 = arith.addf %9, %10 : vector<16x128xf32>
    %138 = arith.addf %11, %12 : vector<16x128xf32>
    %139 = arith.addf %13, %14 : vector<16x128xf32>
    %140 = arith.addf %15, %16 : vector<16x128xf32>
    %141 = arith.addf %17, %18 : vector<16x128xf32>
    %142 = arith.addf %19, %20 : vector<16x128xf32>
    %143 = arith.addf %21, %22 : vector<16x128xf32>
    %144 = arith.addf %23, %24 : vector<16x128xf32>
    %145 = arith.addf %25, %26 : vector<16x128xf32>
    %146 = arith.addf %27, %28 : vector<16x128xf32>
    %147 = arith.addf %29, %30 : vector<16x128xf32>
    %148 = arith.addf %31, %32 : vector<16x128xf32>
    %149 = arith.addf %33, %34 : vector<16x128xf32>
    %150 = arith.addf %35, %36 : vector<16x128xf32>
    %151 = arith.addf %37, %38 : vector<16x128xf32>
    %152 = arith.addf %39, %40 : vector<16x128xf32>
    %153 = arith.addf %41, %42 : vector<16x128xf32>
    %154 = arith.addf %43, %44 : vector<16x128xf32>
    %155 = arith.addf %45, %46 : vector<16x128xf32>
    %156 = arith.addf %47, %48 : vector<16x128xf32>
    %157 = arith.addf %49, %50 : vector<16x128xf32>
    %158 = arith.addf %51, %52 : vector<16x128xf32>
    %159 = arith.addf %53, %54 : vector<16x128xf32>
    %160 = arith.addf %55, %56 : vector<16x128xf32>
    %161 = arith.addf %57, %58 : vector<16x128xf32>
    %162 = arith.addf %59, %60 : vector<16x128xf32>
    %163 = arith.addf %61, %62 : vector<16x128xf32>
    %164 = arith.addf %63, %64 : vector<16x128xf32>
    %165 = arith.addf %65, %66 : vector<16x128xf32>
    %166 = arith.addf %67, %68 : vector<16x128xf32>
    %167 = arith.addf %69, %70 : vector<16x128xf32>
    %168 = arith.addf %71, %72 : vector<16x128xf32>
    %169 = arith.addf %73, %74 : vector<16x128xf32>
    %170 = arith.addf %75, %76 : vector<16x128xf32>
    %171 = arith.addf %77, %78 : vector<16x128xf32>
    %172 = arith.addf %79, %80 : vector<16x128xf32>
    %173 = arith.addf %81, %82 : vector<16x128xf32>
    %174 = arith.addf %83, %84 : vector<16x128xf32>
    %175 = arith.addf %85, %86 : vector<16x128xf32>
    %176 = arith.addf %87, %88 : vector<16x128xf32>
    %177 = arith.addf %89, %90 : vector<16x128xf32>
    %178 = arith.addf %91, %92 : vector<16x128xf32>
    %179 = arith.addf %93, %94 : vector<16x128xf32>
    %180 = arith.addf %95, %96 : vector<16x128xf32>
    %181 = arith.addf %97, %98 : vector<16x128xf32>
    %182 = arith.addf %99, %100 : vector<16x128xf32>
    %183 = arith.addf %101, %102 : vector<16x128xf32>
    %184 = arith.addf %103, %104 : vector<16x128xf32>
    %185 = arith.addf %105, %106 : vector<16x128xf32>
    %186 = arith.addf %107, %108 : vector<16x128xf32>
    %187 = arith.addf %109, %110 : vector<16x128xf32>
    %188 = arith.addf %111, %112 : vector<16x128xf32>
    %189 = arith.addf %113, %114 : vector<16x128xf32>
    %190 = arith.addf %115, %116 : vector<16x128xf32>
    %191 = arith.addf %117, %118 : vector<16x128xf32>
    %192 = arith.addf %119, %120 : vector<16x128xf32>
    %193 = arith.addf %121, %122 : vector<16x128xf32>
    %194 = arith.addf %123, %124 : vector<16x128xf32>
    %195 = arith.addf %125, %126 : vector<16x128xf32>
    %196 = arith.addf %127, %128 : vector<16x128xf32>
    %197 = arith.addf %129, %130 : vector<16x128xf32>
    %198 = arith.addf %131, %132 : vector<16x128xf32>
    %199 = arith.addf %133, %134 : vector<16x128xf32>
    %200 = arith.addf %135, %136 : vector<16x128xf32>
    %201 = arith.addf %137, %138 : vector<16x128xf32>
    %202 = arith.addf %139, %140 : vector<16x128xf32>
    %203 = arith.addf %141, %142 : vector<16x128xf32>
    %204 = arith.addf %143, %144 : vector<16x128xf32>
    %205 = arith.addf %145, %146 : vector<16x128xf32>
    %206 = arith.addf %147, %148 : vector<16x128xf32>
    %207 = arith.addf %149, %150 : vector<16x128xf32>
    %208 = arith.addf %151, %152 : vector<16x128xf32>
    %209 = arith.addf %153, %154 : vector<16x128xf32>
    %210 = arith.addf %155, %156 : vector<16x128xf32>
    %211 = arith.addf %157, %158 : vector<16x128xf32>
    %212 = arith.addf %159, %160 : vector<16x128xf32>
    %213 = arith.addf %161, %162 : vector<16x128xf32>
    %214 = arith.addf %163, %164 : vector<16x128xf32>
    %215 = arith.addf %165, %166 : vector<16x128xf32>
    %216 = arith.addf %167, %168 : vector<16x128xf32>
    %217 = arith.addf %169, %170 : vector<16x128xf32>
    %218 = arith.addf %171, %172 : vector<16x128xf32>
    %219 = arith.addf %173, %174 : vector<16x128xf32>
    %220 = arith.addf %175, %176 : vector<16x128xf32>
    %221 = arith.addf %177, %178 : vector<16x128xf32>
    %222 = arith.addf %179, %180 : vector<16x128xf32>
    %223 = arith.addf %181, %182 : vector<16x128xf32>
    %224 = arith.addf %183, %184 : vector<16x128xf32>
    %225 = arith.addf %185, %186 : vector<16x128xf32>
    %226 = arith.addf %187, %188 : vector<16x128xf32>
    %227 = arith.addf %189, %190 : vector<16x128xf32>
    %228 = arith.addf %191, %192 : vector<16x128xf32>
    %229 = arith.addf %193, %194 : vector<16x128xf32>
    %230 = arith.addf %195, %196 : vector<16x128xf32>
    %231 = arith.addf %197, %198 : vector<16x128xf32>
    %232 = arith.addf %199, %200 : vector<16x128xf32>
    %233 = arith.addf %201, %202 : vector<16x128xf32>
    %234 = arith.addf %203, %204 : vector<16x128xf32>
    %235 = arith.addf %205, %206 : vector<16x128xf32>
    %236 = arith.addf %207, %208 : vector<16x128xf32>
    %237 = arith.addf %209, %210 : vector<16x128xf32>
    %238 = arith.addf %211, %212 : vector<16x128xf32>
    %239 = arith.addf %213, %214 : vector<16x128xf32>
    %240 = arith.addf %215, %216 : vector<16x128xf32>
    %241 = arith.addf %217, %218 : vector<16x128xf32>
    %242 = arith.addf %219, %220 : vector<16x128xf32>
    %243 = arith.addf %221, %222 : vector<16x128xf32>
    %244 = arith.addf %223, %224 : vector<16x128xf32>
    %245 = arith.addf %225, %226 : vector<16x128xf32>
    %246 = arith.addf %227, %228 : vector<16x128xf32>
    %247 = arith.addf %229, %230 : vector<16x128xf32>
    %248 = arith.addf %231, %232 : vector<16x128xf32>
    %249 = arith.addf %233, %234 : vector<16x128xf32>
    %250 = arith.addf %235, %236 : vector<16x128xf32>
    %251 = arith.addf %237, %238 : vector<16x128xf32>
    %252 = arith.addf %239, %240 : vector<16x128xf32>
    %253 = arith.addf %241, %242 : vector<16x128xf32>
    %254 = arith.addf %243, %244 : vector<16x128xf32>
    %255 = arith.addf %245, %246 : vector<16x128xf32>
    %256 = arith.addf %247, %248 : vector<16x128xf32>
    %257 = arith.addf %249, %250 : vector<16x128xf32>
    %258 = arith.addf %251, %252 : vector<16x128xf32>
    %259 = arith.addf %253, %254 : vector<16x128xf32>
    %260 = arith.addf %255, %256 : vector<16x128xf32>
    %261 = arith.addf %257, %258 : vector<16x128xf32>
    %262 = arith.addf %259, %260 : vector<16x128xf32>
    %263 = arith.addf %261, %262 : vector<16x128xf32>
    %c0_7 = arith.constant 0 : index
    %c0_8 = arith.constant 0 : index
    %c0_9 = arith.constant 0 : index
    %264 = vector.load %arg4[%c0_7, %c0_8, %c0_9] : memref<1x4x128xf32, #tpu.memory_space<vmem>>, vector<1x1x128xf32>
    %265 = vector.shape_cast %264 : vector<1x1x128xf32> to vector<1x128xf32>
    %266 = vector.broadcast %265 : vector<1x128xf32> to vector<16x128xf32>
    %267 = arith.addf %263, %266 : vector<16x128xf32>
    %c0_10 = arith.constant 0 : index
    %c0_11 = arith.constant 0 : index
    %c0_12 = arith.constant 0 : index
    %268 = vector.load %arg5[%c0_10, %c0_11, %c0_12] : memref<4x16x128xf32, #tpu.memory_space<vmem>>, vector<1x16x128xf32>
    %269 = vector.shape_cast %268 : vector<1x16x128xf32> to vector<16x128xf32>
    %270 = vector.shape_cast %267 : vector<16x128xf32> to vector<1x16x128xf32>
    tpu.vector_store %arg5[%c0_10, %c0_11, %c0_12], %270 {strides = array<i32>} : memref<4x16x128xf32, #tpu.memory_space<vmem>>, vector<1x16x128xf32>,
    %c0_13 = arith.constant 0 : index
    %c1 = arith.constant 1 : index
    %c0_14 = arith.constant 0 : index
    %271 = vector.load %arg3[%c0_13, %c1, %c0_14] : memref<1x4x16384xf32, #tpu.memory_space<vmem>>, vector<1x1x16384xf32>
    %272 = vector.shape_cast %271 : vector<1x1x16384xf32> to vector<1x16384xf32>
    %273 = vector.broadcast %272 : vector<1x16384xf32> to vector<16x16384xf32>
    %274 = arith.mulf %4, %273 : vector<16x16384xf32>
    %275 = vector.extract_strided_slice %274 {offsets = [0, 0], sizes = [16, 128], strides = [1, 1]} : vector<16x16384xf32> to vector<16x128xf32>
    %276 = vector.extract_strided_slice %274 {offsets = [0, 128], sizes = [16, 128], strides = [1, 1]} : vector<16x16384xf32> to vector<16x128xf32>
    %277 = vector.extract_strided_slice %274 {offsets = [0, 256], sizes = [16, 128], strides = [1, 1]} : vector<16x16384xf32> to vector<16x128xf32>
    %278 = vector.extract_strided_slice %274 {offsets = [0, 384], sizes = [16, 128], strides = [1, 1]} : vector<16x16384xf32> to vector<16x128xf32>
    %279 = vector.extract_strided_slice %274 {offsets = [0, 512], sizes = [16, 128], strides = [1, 1]} : vector<16x16384xf32> to vector<16x128xf32>
    %280 = vector.extract_strided_slice %274 {offsets = [0, 640], sizes = [16, 128], strides = [1, 1]} : vector<16x16384xf32> to vector<16x128xf32>
    %281 = vector.extract_strided_slice %274 {offsets = [0, 768], sizes = [16, 128], strides = [1, 1]} : vector<16x16384xf32> to vector<16x128xf32>
    %282 = vector.extract_strided_slice %274 {offsets = [0, 896], sizes = [16, 128], strides = [1, 1]} : vector<16x16384xf32> to vector<16x128xf32>
    %283 = vector.extract_strided_slice %274 {offsets = [0, 1024], sizes = [16, 128], strides = [1, 1]} : vector<16x16384xf32> to vector<16x128xf32>
    %284 = vector.extract_strided_slice %274 {offsets = [0, 1152], sizes = [16, 128], strides = [1, 1]} : vector<16x16384xf32> to vector<16x128xf32>
    %285 = vector.extract_strided_slice %274 {offsets = [0, 1280], sizes = [16, 128], strides = [1, 1]} : vector<16x16384xf32> to vector<16x128xf32>
    %286 = vector.extract_strided_slice %274 {offsets = [0, 1408], sizes = [16, 128], strides = [1, 1]} : vector<16x16384xf32> to vector<16x128xf32>
    %287 = vector.extract_strided_slice %274 {offsets = [0, 1536], sizes = [16, 128], strides = [1, 1]} : vector<16x16384xf32> to vector<16x128xf32>
    %288 = vector.extract_strided_slice %274 {offsets = [0, 1664], sizes = [16, 128], strides = [1, 1]} : vector<16x16384xf32> to vector<16x128xf32>
    %289 = vector.extract_strided_slice %274 {offsets = [0, 1792], sizes = [16, 128], strides = [1, 1]} : vector<16x16384xf32> to vector<16x128xf32>
    %290 = vector.extract_strided_slice %274 {offsets = [0, 1920], sizes = [16, 128], strides = [1, 1]} : vector<16x16384xf32> to vector<16x128xf32>
    %291 = vector.extract_strided_slice %274 {offsets = [0, 2048], sizes = [16, 128], strides = [1, 1]} : vector<16x16384xf32> to vector<16x128xf32>
    %292 = vector.extract_strided_slice %274 {offsets = [0, 2176], sizes = [16, 128], strides = [1, 1]} : vector<16x16384xf32> to vector<16x128xf32>
    %293 = vector.extract_strided_slice %274 {offsets = [0, 2304], sizes = [16, 128], strides = [1, 1]} : vector<16x16384xf32> to vector<16x128xf32>
    %294 = vector.extract_strided_slice %274 {offsets = [0, 2432], sizes = [16, 128], strides = [1, 1]} : vector<16x16384xf32> to vector<16x128xf32>
    %295 = vector.extract_strided_slice %274 {offsets = [0, 2560], sizes = [16, 128], strides = [1, 1]} : vector<16x16384xf32> to vector<16x128xf32>
    %296 = vector.extract_strided_slice %274 {offsets = [0, 2688], sizes = [16, 128], strides = [1, 1]} : vector<16x16384xf32> to vector<16x128xf32>
    %297 = vector.extract_strided_slice %274 {offsets = [0, 2816], sizes = [16, 128], strides = [1, 1]} : vector<16x16384xf32> to vector<16x128xf32>
    %298 = vector.extract_strided_slice %274 {offsets = [0, 2944], sizes = [16, 128], strides = [1, 1]} : vector<16x16384xf32> to vector<16x128xf32>
    %299 = vector.extract_strided_slice %274 {offsets = [0, 3072], sizes = [16, 128], strides = [1, 1]} : vector<16x16384xf32> to vector<16x128xf32>
    %300 = vector.extract_strided_slice %274 {offsets = [0, 3200], sizes = [16, 128], strides = [1, 1]} : vector<16x16384xf32> to vector<16x128xf32>
    %301 = vector.extract_strided_slice %274 {offsets = [0, 3328], sizes = [16, 128], strides = [1, 1]} : vector<16x16384xf32> to vector<16x128xf32>
    %302 = vector.extract_strided_slice %274 {offsets = [0, 3456], sizes = [16, 128], strides = [1, 1]} : vector<16x16384xf32> to vector<16x128xf32>
    %303 = vector.extract_strided_slice %274 {offsets = [0, 3584], sizes = [16, 128], strides = [1, 1]} : vector<16x16384xf32> to vector<16x128xf32>
    %304 = vector.extract_strided_slice %274 {offsets = [0, 3712], sizes = [16, 128], strides = [1, 1]} : vector<16x16384xf32> to vector<16x128xf32>
    %305 = vector.extract_strided_slice %274 {offsets = [0, 3840], sizes = [16, 128], strides = [1, 1]} : vector<16x16384xf32> to vector<16x128xf32>
    %306 = vector.extract_strided_slice %274 {offsets = [0, 3968], sizes = [16, 128], strides = [1, 1]} : vector<16x16384xf32> to vector<16x128xf32>
    %307 = vector.extract_strided_slice %274 {offsets = [0, 4096], sizes = [16, 128], strides = [1, 1]} : vector<16x16384xf32> to vector<16x128xf32>
    %308 = vector.extract_strided_slice %274 {offsets = [0, 4224], sizes = [16, 128], strides = [1, 1]} : vector<16x16384xf32> to vector<16x128xf32>
    %309 = vector.extract_strided_slice %274 {offsets = [0, 4352], sizes = [16, 128], strides = [1, 1]} : vector<16x16384xf32> to vector<16x128xf32>
    %310 = vector.extract_strided_slice %274 {offsets = [0, 4480], sizes = [16, 128], strides = [1, 1]} : vector<16x16384xf32> to vector<16x128xf32>
    %311 = vector.extract_strided_slice %274 {offsets = [0, 4608], sizes = [16, 128], strides = [1, 1]} : vector<16x16384xf32> to vector<16x128xf32>
    %312 = vector.extract_strided_slice %274 {offsets = [0, 4736], sizes = [16, 128], strides = [1, 1]} : vector<16x16384xf32> to vector<16x128xf32>
    %313 = vector.extract_strided_slice %274 {offsets = [0, 4864], sizes = [16, 128], strides = [1, 1]} : vector<16x16384xf32> to vector<16x128xf32>
    %314 = vector.extract_strided_slice %274 {offsets = [0, 4992], sizes = [16, 128], strides = [1, 1]} : vector<16x16384xf32> to vector<16x128xf32>
    %315 = vector.extract_strided_slice %274 {offsets = [0, 5120], sizes = [16, 128], strides = [1, 1]} : vector<16x16384xf32> to vector<16x128xf32>
    %316 = vector.extract_strided_slice %274 {offsets = [0, 5248], sizes = [16, 128], strides = [1, 1]} : vector<16x16384xf32> to vector<16x128xf32>
    %317 = vector.extract_strided_slice %274 {offsets = [0, 5376], sizes = [16, 128], strides = [1, 1]} : vector<16x16384xf32> to vector<16x128xf32>
    %318 = vector.extract_strided_slice %274 {offsets = [0, 5504], sizes = [16, 128], strides = [1, 1]} : vector<16x16384xf32> to vector<16x128xf32>
    %319 = vector.extract_strided_slice %274 {offsets = [0, 5632], sizes = [16, 128], strides = [1, 1]} : vector<16x16384xf32> to vector<16x128xf32>
    %320 = vector.extract_strided_slice %274 {offsets = [0, 5760], sizes = [16, 128], strides = [1, 1]} : vector<16x16384xf32> to vector<16x128xf32>
    %321 = vector.extract_strided_slice %274 {offsets = [0, 5888], sizes = [16, 128], strides = [1, 1]} : vector<16x16384xf32> to vector<16x128xf32>
    %322 = vector.extract_strided_slice %274 {offsets = [0, 6016], sizes = [16, 128], strides = [1, 1]} : vector<16x16384xf32> to vector<16x128xf32>
    %323 = vector.extract_strided_slice %274 {offsets = [0, 6144], sizes = [16, 128], strides = [1, 1]} : vector<16x16384xf32> to vector<16x128xf32>
    %324 = vector.extract_strided_slice %274 {offsets = [0, 6272], sizes = [16, 128], strides = [1, 1]} : vector<16x16384xf32> to vector<16x128xf32>
    %325 = vector.extract_strided_slice %274 {offsets = [0, 6400], sizes = [16, 128], strides = [1, 1]} : vector<16x16384xf32> to vector<16x128xf32>
    %326 = vector.extract_strided_slice %274 {offsets = [0, 6528], sizes = [16, 128], strides = [1, 1]} : vector<16x16384xf32> to vector<16x128xf32>
    %327 = vector.extract_strided_slice %274 {offsets = [0, 6656], sizes = [16, 128], strides = [1, 1]} : vector<16x16384xf32> to vector<16x128xf32>
    %328 = vector.extract_strided_slice %274 {offsets = [0, 6784], sizes = [16, 128], strides = [1, 1]} : vector<16x16384xf32> to vector<16x128xf32>
    %329 = vector.extract_strided_slice %274 {offsets = [0, 6912], sizes = [16, 128], strides = [1, 1]} : vector<16x16384xf32> to vector<16x128xf32>
    %330 = vector.extract_strided_slice %274 {offsets = [0, 7040], sizes = [16, 128], strides = [1, 1]} : vector<16x16384xf32> to vector<16x128xf32>
    %331 = vector.extract_strided_slice %274 {offsets = [0, 7168], sizes = [16, 128], strides = [1, 1]} : vector<16x16384xf32> to vector<16x128xf32>
    %332 = vector.extract_strided_slice %274 {offsets = [0, 7296], sizes = [16, 128], strides = [1, 1]} : vector<16x16384xf32> to vector<16x128xf32>
    %333 = vector.extract_strided_slice %274 {offsets = [0, 7424], sizes = [16, 128], strides = [1, 1]} : vector<16x16384xf32> to vector<16x128xf32>
    %334 = vector.extract_strided_slice %274 {offsets = [0, 7552], sizes = [16, 128], strides = [1, 1]} : vector<16x16384xf32> to vector<16x128xf32>
    %335 = vector.extract_strided_slice %274 {offsets = [0, 7680], sizes = [16, 128], strides = [1, 1]} : vector<16x16384xf32> to vector<16x128xf32>
    %336 = vector.extract_strided_slice %274 {offsets = [0, 7808], sizes = [16, 128], strides = [1, 1]} : vector<16x16384xf32> to vector<16x128xf32>
    %337 = vector.extract_strided_slice %274 {offsets = [0, 7936], sizes = [16, 128], strides = [1, 1]} : vector<16x16384xf32> to vector<16x128xf32>
    %338 = vector.extract_strided_slice %274 {offsets = [0, 8064], sizes = [16, 128], strides = [1, 1]} : vector<16x16384xf32> to vector<16x128xf32>
    %339 = vector.extract_strided_slice %274 {offsets = [0, 8192], sizes = [16, 128], strides = [1, 1]} : vector<16x16384xf32> to vector<16x128xf32>
    %340 = vector.extract_strided_slice %274 {offsets = [0, 8320], sizes = [16, 128], strides = [1, 1]} : vector<16x16384xf32> to vector<16x128xf32>
    %341 = vector.extract_strided_slice %274 {offsets = [0, 8448], sizes = [16, 128], strides = [1, 1]} : vector<16x16384xf32> to vector<16x128xf32>
    %342 = vector.extract_strided_slice %274 {offsets = [0, 8576], sizes = [16, 128], strides = [1, 1]} : vector<16x16384xf32> to vector<16x128xf32>
    %343 = vector.extract_strided_slice %274 {offsets = [0, 8704], sizes = [16, 128], strides = [1, 1]} : vector<16x16384xf32> to vector<16x128xf32>
    %344 = vector.extract_strided_slice %274 {offsets = [0, 8832], sizes = [16, 128], strides = [1, 1]} : vector<16x16384xf32> to vector<16x128xf32>
    %345 = vector.extract_strided_slice %274 {offsets = [0, 8960], sizes = [16, 128], strides = [1, 1]} : vector<16x16384xf32> to vector<16x128xf32>
    %346 = vector.extract_strided_slice %274 {offsets = [0, 9088], sizes = [16, 128], strides = [1, 1]} : vector<16x16384xf32> to vector<16x128xf32>
    %347 = vector.extract_strided_slice %274 {offsets = [0, 9216], sizes = [16, 128], strides = [1, 1]} : vector<16x16384xf32> to vector<16x128xf32>
    %348 = vector.extract_strided_slice %274 {offsets = [0, 9344], sizes = [16, 128], strides = [1, 1]} : vector<16x16384xf32> to vector<16x128xf32>
    %349 = vector.extract_strided_slice %274 {offsets = [0, 9472], sizes = [16, 128], strides = [1, 1]} : vector<16x16384xf32> to vector<16x128xf32>
    %350 = vector.extract_strided_slice %274 {offsets = [0, 9600], sizes = [16, 128], strides = [1, 1]} : vector<16x16384xf32> to vector<16x128xf32>
    %351 = vector.extract_strided_slice %274 {offsets = [0, 9728], sizes = [16, 128], strides = [1, 1]} : vector<16x16384xf32> to vector<16x128xf32>
    %352 = vector.extract_strided_slice %274 {offsets = [0, 9856], sizes = [16, 128], strides = [1, 1]} : vector<16x16384xf32> to vector<16x128xf32>
    %353 = vector.extract_strided_slice %274 {offsets = [0, 9984], sizes = [16, 128], strides = [1, 1]} : vector<16x16384xf32> to vector<16x128xf32>
    %354 = vector.extract_strided_slice %274 {offsets = [0, 10112], sizes = [16, 128], strides = [1, 1]} : vector<16x16384xf32> to vector<16x128xf32>
    %355 = vector.extract_strided_slice %274 {offsets = [0, 10240], sizes = [16, 128], strides = [1, 1]} : vector<16x16384xf32> to vector<16x128xf32>
    %356 = vector.extract_strided_slice %274 {offsets = [0, 10368], sizes = [16, 128], strides = [1, 1]} : vector<16x16384xf32> to vector<16x128xf32>
    %357 = vector.extract_strided_slice %274 {offsets = [0, 10496], sizes = [16, 128], strides = [1, 1]} : vector<16x16384xf32> to vector<16x128xf32>
    %358 = vector.extract_strided_slice %274 {offsets = [0, 10624], sizes = [16, 128], strides = [1, 1]} : vector<16x16384xf32> to vector<16x128xf32>
    %359 = vector.extract_strided_slice %274 {offsets = [0, 10752], sizes = [16, 128], strides = [1, 1]} : vector<16x16384xf32> to vector<16x128xf32>
    %360 = vector.extract_strided_slice %274 {offsets = [0, 10880], sizes = [16, 128], strides = [1, 1]} : vector<16x16384xf32> to vector<16x128xf32>
    %361 = vector.extract_strided_slice %274 {offsets = [0, 11008], sizes = [16, 128], strides = [1, 1]} : vector<16x16384xf32> to vector<16x128xf32>
    %362 = vector.extract_strided_slice %274 {offsets = [0, 11136], sizes = [16, 128], strides = [1, 1]} : vector<16x16384xf32> to vector<16x128xf32>
    %363 = vector.extract_strided_slice %274 {offsets = [0, 11264], sizes = [16, 128], strides = [1, 1]} : vector<16x16384xf32> to vector<16x128xf32>
    %364 = vector.extract_strided_slice %274 {offsets = [0, 11392], sizes = [16, 128], strides = [1, 1]} : vector<16x16384xf32> to vector<16x128xf32>
    %365 = vector.extract_strided_slice %274 {offsets = [0, 11520], sizes = [16, 128], strides = [1, 1]} : vector<16x16384xf32> to vector<16x128xf32>
    %366 = vector.extract_strided_slice %274 {offsets = [0, 11648], sizes = [16, 128], strides = [1, 1]} : vector<16x16384xf32> to vector<16x128xf32>
    %367 = vector.extract_strided_slice %274 {offsets = [0, 11776], sizes = [16, 128], strides = [1, 1]} : vector<16x16384xf32> to vector<16x128xf32>
    %368 = vector.extract_strided_slice %274 {offsets = [0, 11904], sizes = [16, 128], strides = [1, 1]} : vector<16x16384xf32> to vector<16x128xf32>
    %369 = vector.extract_strided_slice %274 {offsets = [0, 12032], sizes = [16, 128], strides = [1, 1]} : vector<16x16384xf32> to vector<16x128xf32>
    %370 = vector.extract_strided_slice %274 {offsets = [0, 12160], sizes = [16, 128], strides = [1, 1]} : vector<16x16384xf32> to vector<16x128xf32>
    %371 = vector.extract_strided_slice %274 {offsets = [0, 12288], sizes = [16, 128], strides = [1, 1]} : vector<16x16384xf32> to vector<16x128xf32>
    %372 = vector.extract_strided_slice %274 {offsets = [0, 12416], sizes = [16, 128], strides = [1, 1]} : vector<16x16384xf32> to vector<16x128xf32>
    %373 = vector.extract_strided_slice %274 {offsets = [0, 12544], sizes = [16, 128], strides = [1, 1]} : vector<16x16384xf32> to vector<16x128xf32>
    %374 = vector.extract_strided_slice %274 {offsets = [0, 12672], sizes = [16, 128], strides = [1, 1]} : vector<16x16384xf32> to vector<16x128xf32>
    %375 = vector.extract_strided_slice %274 {offsets = [0, 12800], sizes = [16, 128], strides = [1, 1]} : vector<16x16384xf32> to vector<16x128xf32>
    %376 = vector.extract_strided_slice %274 {offsets = [0, 12928], sizes = [16, 128], strides = [1, 1]} : vector<16x16384xf32> to vector<16x128xf32>
    %377 = vector.extract_strided_slice %274 {offsets = [0, 13056], sizes = [16, 128], strides = [1, 1]} : vector<16x16384xf32> to vector<16x128xf32>
    %378 = vector.extract_strided_slice %274 {offsets = [0, 13184], sizes = [16, 128], strides = [1, 1]} : vector<16x16384xf32> to vector<16x128xf32>
    %379 = vector.extract_strided_slice %274 {offsets = [0, 13312], sizes = [16, 128], strides = [1, 1]} : vector<16x16384xf32> to vector<16x128xf32>
    %380 = vector.extract_strided_slice %274 {offsets = [0, 13440], sizes = [16, 128], strides = [1, 1]} : vector<16x16384xf32> to vector<16x128xf32>
    %381 = vector.extract_strided_slice %274 {offsets = [0, 13568], sizes = [16, 128], strides = [1, 1]} : vector<16x16384xf32> to vector<16x128xf32>
    %382 = vector.extract_strided_slice %274 {offsets = [0, 13696], sizes = [16, 128], strides = [1, 1]} : vector<16x16384xf32> to vector<16x128xf32>
    %383 = vector.extract_strided_slice %274 {offsets = [0, 13824], sizes = [16, 128], strides = [1, 1]} : vector<16x16384xf32> to vector<16x128xf32>
    %384 = vector.extract_strided_slice %274 {offsets = [0, 13952], sizes = [16, 128], strides = [1, 1]} : vector<16x16384xf32> to vector<16x128xf32>
    %385 = vector.extract_strided_slice %274 {offsets = [0, 14080], sizes = [16, 128], strides = [1, 1]} : vector<16x16384xf32> to vector<16x128xf32>
    %386 = vector.extract_strided_slice %274 {offsets = [0, 14208], sizes = [16, 128], strides = [1, 1]} : vector<16x16384xf32> to vector<16x128xf32>
    %387 = vector.extract_strided_slice %274 {offsets = [0, 14336], sizes = [16, 128], strides = [1, 1]} : vector<16x16384xf32> to vector<16x128xf32>
    %388 = vector.extract_strided_slice %274 {offsets = [0, 14464], sizes = [16, 128], strides = [1, 1]} : vector<16x16384xf32> to vector<16x128xf32>
    %389 = vector.extract_strided_slice %274 {offsets = [0, 14592], sizes = [16, 128], strides = [1, 1]} : vector<16x16384xf32> to vector<16x128xf32>
    %390 = vector.extract_strided_slice %274 {offsets = [0, 14720], sizes = [16, 128], strides = [1, 1]} : vector<16x16384xf32> to vector<16x128xf32>
    %391 = vector.extract_strided_slice %274 {offsets = [0, 14848], sizes = [16, 128], strides = [1, 1]} : vector<16x16384xf32> to vector<16x128xf32>
    %392 = vector.extract_strided_slice %274 {offsets = [0, 14976], sizes = [16, 128], strides = [1, 1]} : vector<16x16384xf32> to vector<16x128xf32>
    %393 = vector.extract_strided_slice %274 {offsets = [0, 15104], sizes = [16, 128], strides = [1, 1]} : vector<16x16384xf32> to vector<16x128xf32>
    %394 = vector.extract_strided_slice %274 {offsets = [0, 15232], sizes = [16, 128], strides = [1, 1]} : vector<16x16384xf32> to vector<16x128xf32>
    %395 = vector.extract_strided_slice %274 {offsets = [0, 15360], sizes = [16, 128], strides = [1, 1]} : vector<16x16384xf32> to vector<16x128xf32>
    %396 = vector.extract_strided_slice %274 {offsets = [0, 15488], sizes = [16, 128], strides = [1, 1]} : vector<16x16384xf32> to vector<16x128xf32>
    %397 = vector.extract_strided_slice %274 {offsets = [0, 15616], sizes = [16, 128], strides = [1, 1]} : vector<16x16384xf32> to vector<16x128xf32>
    %398 = vector.extract_strided_slice %274 {offsets = [0, 15744], sizes = [16, 128], strides = [1, 1]} : vector<16x16384xf32> to vector<16x128xf32>
    %399 = vector.extract_strided_slice %274 {offsets = [0, 15872], sizes = [16, 128], strides = [1, 1]} : vector<16x16384xf32> to vector<16x128xf32>
    %400 = vector.extract_strided_slice %274 {offsets = [0, 16000], sizes = [16, 128], strides = [1, 1]} : vector<16x16384xf32> to vector<16x128xf32>
    %401 = vector.extract_strided_slice %274 {offsets = [0, 16128], sizes = [16, 128], strides = [1, 1]} : vector<16x16384xf32> to vector<16x128xf32>
    %402 = vector.extract_strided_slice %274 {offsets = [0, 16256], sizes = [16, 128], strides = [1, 1]} : vector<16x16384xf32> to vector<16x128xf32>
    %403 = arith.addf %275, %276 : vector<16x128xf32>
    %404 = arith.addf %277, %278 : vector<16x128xf32>
    %405 = arith.addf %279, %280 : vector<16x128xf32>
    %406 = arith.addf %281, %282 : vector<16x128xf32>
    %407 = arith.addf %283, %284 : vector<16x128xf32>
    %408 = arith.addf %285, %286 : vector<16x128xf32>
    %409 = arith.addf %287, %288 : vector<16x128xf32>
    %410 = arith.addf %289, %290 : vector<16x128xf32>
    %411 = arith.addf %291, %292 : vector<16x128xf32>
    %412 = arith.addf %293, %294 : vector<16x128xf32>
    %413 = arith.addf %295, %296 : vector<16x128xf32>
    %414 = arith.addf %297, %298 : vector<16x128xf32>
    %415 = arith.addf %299, %300 : vector<16x128xf32>
    %416 = arith.addf %301, %302 : vector<16x128xf32>
    %417 = arith.addf %303, %304 : vector<16x128xf32>
    %418 = arith.addf %305, %306 : vector<16x128xf32>
    %419 = arith.addf %307, %308 : vector<16x128xf32>
    %420 = arith.addf %309, %310 : vector<16x128xf32>
    %421 = arith.addf %311, %312 : vector<16x128xf32>
    %422 = arith.addf %313, %314 : vector<16x128xf32>
    %423 = arith.addf %315, %316 : vector<16x128xf32>
    %424 = arith.addf %317, %318 : vector<16x128xf32>
    %425 = arith.addf %319, %320 : vector<16x128xf32>
    %426 = arith.addf %321, %322 : vector<16x128xf32>
    %427 = arith.addf %323, %324 : vector<16x128xf32>
    %428 = arith.addf %325, %326 : vector<16x128xf32>
    %429 = arith.addf %327, %328 : vector<16x128xf32>
    %430 = arith.addf %329, %330 : vector<16x128xf32>
    %431 = arith.addf %331, %332 : vector<16x128xf32>
    %432 = arith.addf %333, %334 : vector<16x128xf32>
    %433 = arith.addf %335, %336 : vector<16x128xf32>
    %434 = arith.addf %337, %338 : vector<16x128xf32>
    %435 = arith.addf %339, %340 : vector<16x128xf32>
    %436 = arith.addf %341, %342 : vector<16x128xf32>
    %437 = arith.addf %343, %344 : vector<16x128xf32>
    %438 = arith.addf %345, %346 : vector<16x128xf32>
    %439 = arith.addf %347, %348 : vector<16x128xf32>
    %440 = arith.addf %349, %350 : vector<16x128xf32>
    %441 = arith.addf %351, %352 : vector<16x128xf32>
    %442 = arith.addf %353, %354 : vector<16x128xf32>
    %443 = arith.addf %355, %356 : vector<16x128xf32>
    %444 = arith.addf %357, %358 : vector<16x128xf32>
    %445 = arith.addf %359, %360 : vector<16x128xf32>
    %446 = arith.addf %361, %362 : vector<16x128xf32>
    %447 = arith.addf %363, %364 : vector<16x128xf32>
    %448 = arith.addf %365, %366 : vector<16x128xf32>
    %449 = arith.addf %367, %368 : vector<16x128xf32>
    %450 = arith.addf %369, %370 : vector<16x128xf32>
    %451 = arith.addf %371, %372 : vector<16x128xf32>
    %452 = arith.addf %373, %374 : vector<16x128xf32>
    %453 = arith.addf %375, %376 : vector<16x128xf32>
    %454 = arith.addf %377, %378 : vector<16x128xf32>
    %455 = arith.addf %379, %380 : vector<16x128xf32>
    %456 = arith.addf %381, %382 : vector<16x128xf32>
    %457 = arith.addf %383, %384 : vector<16x128xf32>
    %458 = arith.addf %385, %386 : vector<16x128xf32>
    %459 = arith.addf %387, %388 : vector<16x128xf32>
    %460 = arith.addf %389, %390 : vector<16x128xf32>
    %461 = arith.addf %391, %392 : vector<16x128xf32>
    %462 = arith.addf %393, %394 : vector<16x128xf32>
    %463 = arith.addf %395, %396 : vector<16x128xf32>
    %464 = arith.addf %397, %398 : vector<16x128xf32>
    %465 = arith.addf %399, %400 : vector<16x128xf32>
    %466 = arith.addf %401, %402 : vector<16x128xf32>
    %467 = arith.addf %403, %404 : vector<16x128xf32>
    %468 = arith.addf %405, %406 : vector<16x128xf32>
    %469 = arith.addf %407, %408 : vector<16x128xf32>
    %470 = arith.addf %409, %410 : vector<16x128xf32>
    %471 = arith.addf %411, %412 : vector<16x128xf32>
    %472 = arith.addf %413, %414 : vector<16x128xf32>
    %473 = arith.addf %415, %416 : vector<16x128xf32>
    %474 = arith.addf %417, %418 : vector<16x128xf32>
    %475 = arith.addf %419, %420 : vector<16x128xf32>
    %476 = arith.addf %421, %422 : vector<16x128xf32>
    %477 = arith.addf %423, %424 : vector<16x128xf32>
    %478 = arith.addf %425, %426 : vector<16x128xf32>
    %479 = arith.addf %427, %428 : vector<16x128xf32>
    %480 = arith.addf %429, %430 : vector<16x128xf32>
    %481 = arith.addf %431, %432 : vector<16x128xf32>
    %482 = arith.addf %433, %434 : vector<16x128xf32>
    %483 = arith.addf %435, %436 : vector<16x128xf32>
    %484 = arith.addf %437, %438 : vector<16x128xf32>
    %485 = arith.addf %439, %440 : vector<16x128xf32>
    %486 = arith.addf %441, %442 : vector<16x128xf32>
    %487 = arith.addf %443, %444 : vector<16x128xf32>
    %488 = arith.addf %445, %446 : vector<16x128xf32>
    %489 = arith.addf %447, %448 : vector<16x128xf32>
    %490 = arith.addf %449, %450 : vector<16x128xf32>
    %491 = arith.addf %451, %452 : vector<16x128xf32>
    %492 = arith.addf %453, %454 : vector<16x128xf32>
    %493 = arith.addf %455, %456 : vector<16x128xf32>
    %494 = arith.addf %457, %458 : vector<16x128xf32>
    %495 = arith.addf %459, %460 : vector<16x128xf32>
    %496 = arith.addf %461, %462 : vector<16x128xf32>
    %497 = arith.addf %463, %464 : vector<16x128xf32>
    %498 = arith.addf %465, %466 : vector<16x128xf32>
    %499 = arith.addf %467, %468 : vector<16x128xf32>
    %500 = arith.addf %469, %470 : vector<16x128xf32>
    %501 = arith.addf %471, %472 : vector<16x128xf32>
    %502 = arith.addf %473, %474 : vector<16x128xf32>
    %503 = arith.addf %475, %476 : vector<16x128xf32>
    %504 = arith.addf %477, %478 : vector<16x128xf32>
    %505 = arith.addf %479, %480 : vector<16x128xf32>
    %506 = arith.addf %481, %482 : vector<16x128xf32>
    %507 = arith.addf %483, %484 : vector<16x128xf32>
    %508 = arith.addf %485, %486 : vector<16x128xf32>
    %509 = arith.addf %487, %488 : vector<16x128xf32>
    %510 = arith.addf %489, %490 : vector<16x128xf32>
    %511 = arith.addf %491, %492 : vector<16x128xf32>
    %512 = arith.addf %493, %494 : vector<16x128xf32>
    %513 = arith.addf %495, %496 : vector<16x128xf32>
    %514 = arith.addf %497, %498 : vector<16x128xf32>
    %515 = arith.addf %499, %500 : vector<16x128xf32>
    %516 = arith.addf %501, %502 : vector<16x128xf32>
    %517 = arith.addf %503, %504 : vector<16x128xf32>
    %518 = arith.addf %505, %506 : vector<16x128xf32>
    %519 = arith.addf %507, %508 : vector<16x128xf32>
    %520 = arith.addf %509, %510 : vector<16x128xf32>
    %521 = arith.addf %511, %512 : vector<16x128xf32>
    %522 = arith.addf %513, %514 : vector<16x128xf32>
    %523 = arith.addf %515, %516 : vector<16x128xf32>
    %524 = arith.addf %517, %518 : vector<16x128xf32>
    %525 = arith.addf %519, %520 : vector<16x128xf32>
    %526 = arith.addf %521, %522 : vector<16x128xf32>
    %527 = arith.addf %523, %524 : vector<16x128xf32>
    %528 = arith.addf %525, %526 : vector<16x128xf32>
    %529 = arith.addf %527, %528 : vector<16x128xf32>
    %c0_15 = arith.constant 0 : index
    %c1_16 = arith.constant 1 : index
    %c0_17 = arith.constant 0 : index
    %530 = vector.load %arg4[%c0_15, %c1_16, %c0_17] : memref<1x4x128xf32, #tpu.memory_space<vmem>>, vector<1x1x128xf32>
    %531 = vector.shape_cast %530 : vector<1x1x128xf32> to vector<1x128xf32>
    %532 = vector.broadcast %531 : vector<1x128xf32> to vector<16x128xf32>
    %533 = arith.addf %529, %532 : vector<16x128xf32>
    %c1_18 = arith.constant 1 : index
    %c0_19 = arith.constant 0 : index
    %c0_20 = arith.constant 0 : index
    %534 = vector.load %arg5[%c1_18, %c0_19, %c0_20] : memref<4x16x128xf32, #tpu.memory_space<vmem>>, vector<1x16x128xf32>
    %535 = vector.shape_cast %534 : vector<1x16x128xf32> to vector<16x128xf32>
    %536 = vector.shape_cast %533 : vector<16x128xf32> to vector<1x16x128xf32>
    tpu.vector_store %arg5[%c1_18, %c0_19, %c0_20], %536 {strides = array<i32>} : memref<4x16x128xf32, #tpu.memory_space<vmem>>, vector<1x16x128xf32>,
    %c0_21 = arith.constant 0 : index
    %c2 = arith.constant 2 : index
    %c0_22 = arith.constant 0 : index
    %537 = vector.load %arg3[%c0_21, %c2, %c0_22] : memref<1x4x16384xf32, #tpu.memory_space<vmem>>, vector<1x1x16384xf32>
    %538 = vector.shape_cast %537 : vector<1x1x16384xf32> to vector<1x16384xf32>
    %539 = vector.broadcast %538 : vector<1x16384xf32> to vector<16x16384xf32>
    %540 = arith.mulf %4, %539 : vector<16x16384xf32>
    %541 = vector.extract_strided_slice %540 {offsets = [0, 0], sizes = [16, 128], strides = [1, 1]} : vector<16x16384xf32> to vector<16x128xf32>
    %542 = vector.extract_strided_slice %540 {offsets = [0, 128], sizes = [16, 128], strides = [1, 1]} : vector<16x16384xf32> to vector<16x128xf32>
    %543 = vector.extract_strided_slice %540 {offsets = [0, 256], sizes = [16, 128], strides = [1, 1]} : vector<16x16384xf32> to vector<16x128xf32>
    %544 = vector.extract_strided_slice %540 {offsets = [0, 384], sizes = [16, 128], strides = [1, 1]} : vector<16x16384xf32> to vector<16x128xf32>
    %545 = vector.extract_strided_slice %540 {offsets = [0, 512], sizes = [16, 128], strides = [1, 1]} : vector<16x16384xf32> to vector<16x128xf32>
    %546 = vector.extract_strided_slice %540 {offsets = [0, 640], sizes = [16, 128], strides = [1, 1]} : vector<16x16384xf32> to vector<16x128xf32>
    %547 = vector.extract_strided_slice %540 {offsets = [0, 768], sizes = [16, 128], strides = [1, 1]} : vector<16x16384xf32> to vector<16x128xf32>
    %548 = vector.extract_strided_slice %540 {offsets = [0, 896], sizes = [16, 128], strides = [1, 1]} : vector<16x16384xf32> to vector<16x128xf32>
    %549 = vector.extract_strided_slice %540 {offsets = [0, 1024], sizes = [16, 128], strides = [1, 1]} : vector<16x16384xf32> to vector<16x128xf32>
    %550 = vector.extract_strided_slice %540 {offsets = [0, 1152], sizes = [16, 128], strides = [1, 1]} : vector<16x16384xf32> to vector<16x128xf32>
    %551 = vector.extract_strided_slice %540 {offsets = [0, 1280], sizes = [16, 128], strides = [1, 1]} : vector<16x16384xf32> to vector<16x128xf32>
    %552 = vector.extract_strided_slice %540 {offsets = [0, 1408], sizes = [16, 128], strides = [1, 1]} : vector<16x16384xf32> to vector<16x128xf32>
    %553 = vector.extract_strided_slice %540 {offsets = [0, 1536], sizes = [16, 128], strides = [1, 1]} : vector<16x16384xf32> to vector<16x128xf32>
    %554 = vector.extract_strided_slice %540 {offsets = [0, 1664], sizes = [16, 128], strides = [1, 1]} : vector<16x16384xf32> to vector<16x128xf32>
    %555 = vector.extract_strided_slice %540 {offsets = [0, 1792], sizes = [16, 128], strides = [1, 1]} : vector<16x16384xf32> to vector<16x128xf32>
    %556 = vector.extract_strided_slice %540 {offsets = [0, 1920], sizes = [16, 128], strides = [1, 1]} : vector<16x16384xf32> to vector<16x128xf32>
    %557 = vector.extract_strided_slice %540 {offsets = [0, 2048], sizes = [16, 128], strides = [1, 1]} : vector<16x16384xf32> to vector<16x128xf32>
    %558 = vector.extract_strided_slice %540 {offsets = [0, 2176], sizes = [16, 128], strides = [1, 1]} : vector<16x16384xf32> to vector<16x128xf32>
    %559 = vector.extract_strided_slice %540 {offsets = [0, 2304], sizes = [16, 128], strides = [1, 1]} : vector<16x16384xf32> to vector<16x128xf32>
    %560 = vector.extract_strided_slice %540 {offsets = [0, 2432], sizes = [16, 128], strides = [1, 1]} : vector<16x16384xf32> to vector<16x128xf32>
    %561 = vector.extract_strided_slice %540 {offsets = [0, 2560], sizes = [16, 128], strides = [1, 1]} : vector<16x16384xf32> to vector<16x128xf32>
    %562 = vector.extract_strided_slice %540 {offsets = [0, 2688], sizes = [16, 128], strides = [1, 1]} : vector<16x16384xf32> to vector<16x128xf32>
    %563 = vector.extract_strided_slice %540 {offsets = [0, 2816], sizes = [16, 128], strides = [1, 1]} : vector<16x16384xf32> to vector<16x128xf32>
    %564 = vector.extract_strided_slice %540 {offsets = [0, 2944], sizes = [16, 128], strides = [1, 1]} : vector<16x16384xf32> to vector<16x128xf32>
    %565 = vector.extract_strided_slice %540 {offsets = [0, 3072], sizes = [16, 128], strides = [1, 1]} : vector<16x16384xf32> to vector<16x128xf32>
    %566 = vector.extract_strided_slice %540 {offsets = [0, 3200], sizes = [16, 128], strides = [1, 1]} : vector<16x16384xf32> to vector<16x128xf32>
    %567 = vector.extract_strided_slice %540 {offsets = [0, 3328], sizes = [16, 128], strides = [1, 1]} : vector<16x16384xf32> to vector<16x128xf32>
    %568 = vector.extract_strided_slice %540 {offsets = [0, 3456], sizes = [16, 128], strides = [1, 1]} : vector<16x16384xf32> to vector<16x128xf32>
    %569 = vector.extract_strided_slice %540 {offsets = [0, 3584], sizes = [16, 128], strides = [1, 1]} : vector<16x16384xf32> to vector<16x128xf32>
    %570 = vector.extract_strided_slice %540 {offsets = [0, 3712], sizes = [16, 128], strides = [1, 1]} : vector<16x16384xf32> to vector<16x128xf32>
    %571 = vector.extract_strided_slice %540 {offsets = [0, 3840], sizes = [16, 128], strides = [1, 1]} : vector<16x16384xf32> to vector<16x128xf32>
    %572 = vector.extract_strided_slice %540 {offsets = [0, 3968], sizes = [16, 128], strides = [1, 1]} : vector<16x16384xf32> to vector<16x128xf32>
    %573 = vector.extract_strided_slice %540 {offsets = [0, 4096], sizes = [16, 128], strides = [1, 1]} : vector<16x16384xf32> to vector<16x128xf32>
    %574 = vector.extract_strided_slice %540 {offsets = [0, 4224], sizes = [16, 128], strides = [1, 1]} : vector<16x16384xf32> to vector<16x128xf32>
    %575 = vector.extract_strided_slice %540 {offsets = [0, 4352], sizes = [16, 128], strides = [1, 1]} : vector<16x16384xf32> to vector<16x128xf32>
    %576 = vector.extract_strided_slice %540 {offsets = [0, 4480], sizes = [16, 128], strides = [1, 1]} : vector<16x16384xf32> to vector<16x128xf32>
    %577 = vector.extract_strided_slice %540 {offsets = [0, 4608], sizes = [16, 128], strides = [1, 1]} : vector<16x16384xf32> to vector<16x128xf32>
    %578 = vector.extract_strided_slice %540 {offsets = [0, 4736], sizes = [16, 128], strides = [1, 1]} : vector<16x16384xf32> to vector<16x128xf32>
    %579 = vector.extract_strided_slice %540 {offsets = [0, 4864], sizes = [16, 128], strides = [1, 1]} : vector<16x16384xf32> to vector<16x128xf32>
    %580 = vector.extract_strided_slice %540 {offsets = [0, 4992], sizes = [16, 128], strides = [1, 1]} : vector<16x16384xf32> to vector<16x128xf32>
    %581 = vector.extract_strided_slice %540 {offsets = [0, 5120], sizes = [16, 128], strides = [1, 1]} : vector<16x16384xf32> to vector<16x128xf32>
    %582 = vector.extract_strided_slice %540 {offsets = [0, 5248], sizes = [16, 128], strides = [1, 1]} : vector<16x16384xf32> to vector<16x128xf32>
    %583 = vector.extract_strided_slice %540 {offsets = [0, 5376], sizes = [16, 128], strides = [1, 1]} : vector<16x16384xf32> to vector<16x128xf32>
    %584 = vector.extract_strided_slice %540 {offsets = [0, 5504], sizes = [16, 128], strides = [1, 1]} : vector<16x16384xf32> to vector<16x128xf32>
    %585 = vector.extract_strided_slice %540 {offsets = [0, 5632], sizes = [16, 128], strides = [1, 1]} : vector<16x16384xf32> to vector<16x128xf32>
    %586 = vector.extract_strided_slice %540 {offsets = [0, 5760], sizes = [16, 128], strides = [1, 1]} : vector<16x16384xf32> to vector<16x128xf32>
    %587 = vector.extract_strided_slice %540 {offsets = [0, 5888], sizes = [16, 128], strides = [1, 1]} : vector<16x16384xf32> to vector<16x128xf32>
    %588 = vector.extract_strided_slice %540 {offsets = [0, 6016], sizes = [16, 128], strides = [1, 1]} : vector<16x16384xf32> to vector<16x128xf32>
    %589 = vector.extract_strided_slice %540 {offsets = [0, 6144], sizes = [16, 128], strides = [1, 1]} : vector<16x16384xf32> to vector<16x128xf32>
    %590 = vector.extract_strided_slice %540 {offsets = [0, 6272], sizes = [16, 128], strides = [1, 1]} : vector<16x16384xf32> to vector<16x128xf32>
    %591 = vector.extract_strided_slice %540 {offsets = [0, 6400], sizes = [16, 128], strides = [1, 1]} : vector<16x16384xf32> to vector<16x128xf32>
    %592 = vector.extract_strided_slice %540 {offsets = [0, 6528], sizes = [16, 128], strides = [1, 1]} : vector<16x16384xf32> to vector<16x128xf32>
    %593 = vector.extract_strided_slice %540 {offsets = [0, 6656], sizes = [16, 128], strides = [1, 1]} : vector<16x16384xf32> to vector<16x128xf32>
    %594 = vector.extract_strided_slice %540 {offsets = [0, 6784], sizes = [16, 128], strides = [1, 1]} : vector<16x16384xf32> to vector<16x128xf32>
    %595 = vector.extract_strided_slice %540 {offsets = [0, 6912], sizes = [16, 128], strides = [1, 1]} : vector<16x16384xf32> to vector<16x128xf32>
    %596 = vector.extract_strided_slice %540 {offsets = [0, 7040], sizes = [16, 128], strides = [1, 1]} : vector<16x16384xf32> to vector<16x128xf32>
    %597 = vector.extract_strided_slice %540 {offsets = [0, 7168], sizes = [16, 128], strides = [1, 1]} : vector<16x16384xf32> to vector<16x128xf32>
    %598 = vector.extract_strided_slice %540 {offsets = [0, 7296], sizes = [16, 128], strides = [1, 1]} : vector<16x16384xf32> to vector<16x128xf32>
    %599 = vector.extract_strided_slice %540 {offsets = [0, 7424], sizes = [16, 128], strides = [1, 1]} : vector<16x16384xf32> to vector<16x128xf32>
    %600 = vector.extract_strided_slice %540 {offsets = [0, 7552], sizes = [16, 128], strides = [1, 1]} : vector<16x16384xf32> to vector<16x128xf32>
    %601 = vector.extract_strided_slice %540 {offsets = [0, 7680], sizes = [16, 128], strides = [1, 1]} : vector<16x16384xf32> to vector<16x128xf32>
    %602 = vector.extract_strided_slice %540 {offsets = [0, 7808], sizes = [16, 128], strides = [1, 1]} : vector<16x16384xf32> to vector<16x128xf32>
    %603 = vector.extract_strided_slice %540 {offsets = [0, 7936], sizes = [16, 128], strides = [1, 1]} : vector<16x16384xf32> to vector<16x128xf32>
    %604 = vector.extract_strided_slice %540 {offsets = [0, 8064], sizes = [16, 128], strides = [1, 1]} : vector<16x16384xf32> to vector<16x128xf32>
    %605 = vector.extract_strided_slice %540 {offsets = [0, 8192], sizes = [16, 128], strides = [1, 1]} : vector<16x16384xf32> to vector<16x128xf32>
    %606 = vector.extract_strided_slice %540 {offsets = [0, 8320], sizes = [16, 128], strides = [1, 1]} : vector<16x16384xf32> to vector<16x128xf32>
    %607 = vector.extract_strided_slice %540 {offsets = [0, 8448], sizes = [16, 128], strides = [1, 1]} : vector<16x16384xf32> to vector<16x128xf32>
    %608 = vector.extract_strided_slice %540 {offsets = [0, 8576], sizes = [16, 128], strides = [1, 1]} : vector<16x16384xf32> to vector<16x128xf32>
    %609 = vector.extract_strided_slice %540 {offsets = [0, 8704], sizes = [16, 128], strides = [1, 1]} : vector<16x16384xf32> to vector<16x128xf32>
    %610 = vector.extract_strided_slice %540 {offsets = [0, 8832], sizes = [16, 128], strides = [1, 1]} : vector<16x16384xf32> to vector<16x128xf32>
    %611 = vector.extract_strided_slice %540 {offsets = [0, 8960], sizes = [16, 128], strides = [1, 1]} : vector<16x16384xf32> to vector<16x128xf32>
    %612 = vector.extract_strided_slice %540 {offsets = [0, 9088], sizes = [16, 128], strides = [1, 1]} : vector<16x16384xf32> to vector<16x128xf32>
    %613 = vector.extract_strided_slice %540 {offsets = [0, 9216], sizes = [16, 128], strides = [1, 1]} : vector<16x16384xf32> to vector<16x128xf32>
    %614 = vector.extract_strided_slice %540 {offsets = [0, 9344], sizes = [16, 128], strides = [1, 1]} : vector<16x16384xf32> to vector<16x128xf32>
    %615 = vector.extract_strided_slice %540 {offsets = [0, 9472], sizes = [16, 128], strides = [1, 1]} : vector<16x16384xf32> to vector<16x128xf32>
    %616 = vector.extract_strided_slice %540 {offsets = [0, 9600], sizes = [16, 128], strides = [1, 1]} : vector<16x16384xf32> to vector<16x128xf32>
    %617 = vector.extract_strided_slice %540 {offsets = [0, 9728], sizes = [16, 128], strides = [1, 1]} : vector<16x16384xf32> to vector<16x128xf32>
    %618 = vector.extract_strided_slice %540 {offsets = [0, 9856], sizes = [16, 128], strides = [1, 1]} : vector<16x16384xf32> to vector<16x128xf32>
    %619 = vector.extract_strided_slice %540 {offsets = [0, 9984], sizes = [16, 128], strides = [1, 1]} : vector<16x16384xf32> to vector<16x128xf32>
    %620 = vector.extract_strided_slice %540 {offsets = [0, 10112], sizes = [16, 128], strides = [1, 1]} : vector<16x16384xf32> to vector<16x128xf32>
    %621 = vector.extract_strided_slice %540 {offsets = [0, 10240], sizes = [16, 128], strides = [1, 1]} : vector<16x16384xf32> to vector<16x128xf32>
    %622 = vector.extract_strided_slice %540 {offsets = [0, 10368], sizes = [16, 128], strides = [1, 1]} : vector<16x16384xf32> to vector<16x128xf32>
    %623 = vector.extract_strided_slice %540 {offsets = [0, 10496], sizes = [16, 128], strides = [1, 1]} : vector<16x16384xf32> to vector<16x128xf32>
    %624 = vector.extract_strided_slice %540 {offsets = [0, 10624], sizes = [16, 128], strides = [1, 1]} : vector<16x16384xf32> to vector<16x128xf32>
    %625 = vector.extract_strided_slice %540 {offsets = [0, 10752], sizes = [16, 128], strides = [1, 1]} : vector<16x16384xf32> to vector<16x128xf32>
    %626 = vector.extract_strided_slice %540 {offsets = [0, 10880], sizes = [16, 128], strides = [1, 1]} : vector<16x16384xf32> to vector<16x128xf32>
    %627 = vector.extract_strided_slice %540 {offsets = [0, 11008], sizes = [16, 128], strides = [1, 1]} : vector<16x16384xf32> to vector<16x128xf32>
    %628 = vector.extract_strided_slice %540 {offsets = [0, 11136], sizes = [16, 128], strides = [1, 1]} : vector<16x16384xf32> to vector<16x128xf32>
    %629 = vector.extract_strided_slice %540 {offsets = [0, 11264], sizes = [16, 128], strides = [1, 1]} : vector<16x16384xf32> to vector<16x128xf32>
    %630 = vector.extract_strided_slice %540 {offsets = [0, 11392], sizes = [16, 128], strides = [1, 1]} : vector<16x16384xf32> to vector<16x128xf32>
    %631 = vector.extract_strided_slice %540 {offsets = [0, 11520], sizes = [16, 128], strides = [1, 1]} : vector<16x16384xf32> to vector<16x128xf32>
    %632 = vector.extract_strided_slice %540 {offsets = [0, 11648], sizes = [16, 128], strides = [1, 1]} : vector<16x16384xf32> to vector<16x128xf32>
    %633 = vector.extract_strided_slice %540 {offsets = [0, 11776], sizes = [16, 128], strides = [1, 1]} : vector<16x16384xf32> to vector<16x128xf32>
    %634 = vector.extract_strided_slice %540 {offsets = [0, 11904], sizes = [16, 128], strides = [1, 1]} : vector<16x16384xf32> to vector<16x128xf32>
    %635 = vector.extract_strided_slice %540 {offsets = [0, 12032], sizes = [16, 128], strides = [1, 1]} : vector<16x16384xf32> to vector<16x128xf32>
    %636 = vector.extract_strided_slice %540 {offsets = [0, 12160], sizes = [16, 128], strides = [1, 1]} : vector<16x16384xf32> to vector<16x128xf32>
    %637 = vector.extract_strided_slice %540 {offsets = [0, 12288], sizes = [16, 128], strides = [1, 1]} : vector<16x16384xf32> to vector<16x128xf32>
    %638 = vector.extract_strided_slice %540 {offsets = [0, 12416], sizes = [16, 128], strides = [1, 1]} : vector<16x16384xf32> to vector<16x128xf32>
    %639 = vector.extract_strided_slice %540 {offsets = [0, 12544], sizes = [16, 128], strides = [1, 1]} : vector<16x16384xf32> to vector<16x128xf32>
    %640 = vector.extract_strided_slice %540 {offsets = [0, 12672], sizes = [16, 128], strides = [1, 1]} : vector<16x16384xf32> to vector<16x128xf32>
    %641 = vector.extract_strided_slice %540 {offsets = [0, 12800], sizes = [16, 128], strides = [1, 1]} : vector<16x16384xf32> to vector<16x128xf32>
    %642 = vector.extract_strided_slice %540 {offsets = [0, 12928], sizes = [16, 128], strides = [1, 1]} : vector<16x16384xf32> to vector<16x128xf32>
    %643 = vector.extract_strided_slice %540 {offsets = [0, 13056], sizes = [16, 128], strides = [1, 1]} : vector<16x16384xf32> to vector<16x128xf32>
    %644 = vector.extract_strided_slice %540 {offsets = [0, 13184], sizes = [16, 128], strides = [1, 1]} : vector<16x16384xf32> to vector<16x128xf32>
    %645 = vector.extract_strided_slice %540 {offsets = [0, 13312], sizes = [16, 128], strides = [1, 1]} : vector<16x16384xf32> to vector<16x128xf32>
    %646 = vector.extract_strided_slice %540 {offsets = [0, 13440], sizes = [16, 128], strides = [1, 1]} : vector<16x16384xf32> to vector<16x128xf32>
    %647 = vector.extract_strided_slice %540 {offsets = [0, 13568], sizes = [16, 128], strides = [1, 1]} : vector<16x16384xf32> to vector<16x128xf32>
    %648 = vector.extract_strided_slice %540 {offsets = [0, 13696], sizes = [16, 128], strides = [1, 1]} : vector<16x16384xf32> to vector<16x128xf32>
    %649 = vector.extract_strided_slice %540 {offsets = [0, 13824], sizes = [16, 128], strides = [1, 1]} : vector<16x16384xf32> to vector<16x128xf32>
    %650 = vector.extract_strided_slice %540 {offsets = [0, 13952], sizes = [16, 128], strides = [1, 1]} : vector<16x16384xf32> to vector<16x128xf32>
    %651 = vector.extract_strided_slice %540 {offsets = [0, 14080], sizes = [16, 128], strides = [1, 1]} : vector<16x16384xf32> to vector<16x128xf32>
    %652 = vector.extract_strided_slice %540 {offsets = [0, 14208], sizes = [16, 128], strides = [1, 1]} : vector<16x16384xf32> to vector<16x128xf32>
    %653 = vector.extract_strided_slice %540 {offsets = [0, 14336], sizes = [16, 128], strides = [1, 1]} : vector<16x16384xf32> to vector<16x128xf32>
    %654 = vector.extract_strided_slice %540 {offsets = [0, 14464], sizes = [16, 128], strides = [1, 1]} : vector<16x16384xf32> to vector<16x128xf32>
    %655 = vector.extract_strided_slice %540 {offsets = [0, 14592], sizes = [16, 128], strides = [1, 1]} : vector<16x16384xf32> to vector<16x128xf32>
    %656 = vector.extract_strided_slice %540 {offsets = [0, 14720], sizes = [16, 128], strides = [1, 1]} : vector<16x16384xf32> to vector<16x128xf32>
    %657 = vector.extract_strided_slice %540 {offsets = [0, 14848], sizes = [16, 128], strides = [1, 1]} : vector<16x16384xf32> to vector<16x128xf32>
    %658 = vector.extract_strided_slice %540 {offsets = [0, 14976], sizes = [16, 128], strides = [1, 1]} : vector<16x16384xf32> to vector<16x128xf32>
    %659 = vector.extract_strided_slice %540 {offsets = [0, 15104], sizes = [16, 128], strides = [1, 1]} : vector<16x16384xf32> to vector<16x128xf32>
    %660 = vector.extract_strided_slice %540 {offsets = [0, 15232], sizes = [16, 128], strides = [1, 1]} : vector<16x16384xf32> to vector<16x128xf32>
    %661 = vector.extract_strided_slice %540 {offsets = [0, 15360], sizes = [16, 128], strides = [1, 1]} : vector<16x16384xf32> to vector<16x128xf32>
    %662 = vector.extract_strided_slice %540 {offsets = [0, 15488], sizes = [16, 128], strides = [1, 1]} : vector<16x16384xf32> to vector<16x128xf32>
    %663 = vector.extract_strided_slice %540 {offsets = [0, 15616], sizes = [16, 128], strides = [1, 1]} : vector<16x16384xf32> to vector<16x128xf32>
    %664 = vector.extract_strided_slice %540 {offsets = [0, 15744], sizes = [16, 128], strides = [1, 1]} : vector<16x16384xf32> to vector<16x128xf32>
    %665 = vector.extract_strided_slice %540 {offsets = [0, 15872], sizes = [16, 128], strides = [1, 1]} : vector<16x16384xf32> to vector<16x128xf32>
    %666 = vector.extract_strided_slice %540 {offsets = [0, 16000], sizes = [16, 128], strides = [1, 1]} : vector<16x16384xf32> to vector<16x128xf32>
    %667 = vector.extract_strided_slice %540 {offsets = [0, 16128], sizes = [16, 128], strides = [1, 1]} : vector<16x16384xf32> to vector<16x128xf32>
    %668 = vector.extract_strided_slice %540 {offsets = [0, 16256], sizes = [16, 128], strides = [1, 1]} : vector<16x16384xf32> to vector<16x128xf32>
    %669 = arith.addf %541, %542 : vector<16x128xf32>
    %670 = arith.addf %543, %544 : vector<16x128xf32>
    %671 = arith.addf %545, %546 : vector<16x128xf32>
    %672 = arith.addf %547, %548 : vector<16x128xf32>
    %673 = arith.addf %549, %550 : vector<16x128xf32>
    %674 = arith.addf %551, %552 : vector<16x128xf32>
    %675 = arith.addf %553, %554 : vector<16x128xf32>
    %676 = arith.addf %555, %556 : vector<16x128xf32>
    %677 = arith.addf %557, %558 : vector<16x128xf32>
    %678 = arith.addf %559, %560 : vector<16x128xf32>
    %679 = arith.addf %561, %562 : vector<16x128xf32>
    %680 = arith.addf %563, %564 : vector<16x128xf32>
    %681 = arith.addf %565, %566 : vector<16x128xf32>
    %682 = arith.addf %567, %568 : vector<16x128xf32>
    %683 = arith.addf %569, %570 : vector<16x128xf32>
    %684 = arith.addf %571, %572 : vector<16x128xf32>
    %685 = arith.addf %573, %574 : vector<16x128xf32>
    %686 = arith.addf %575, %576 : vector<16x128xf32>
    %687 = arith.addf %577, %578 : vector<16x128xf32>
    %688 = arith.addf %579, %580 : vector<16x128xf32>
    %689 = arith.addf %581, %582 : vector<16x128xf32>
    %690 = arith.addf %583, %584 : vector<16x128xf32>
    %691 = arith.addf %585, %586 : vector<16x128xf32>
    %692 = arith.addf %587, %588 : vector<16x128xf32>
    %693 = arith.addf %589, %590 : vector<16x128xf32>
    %694 = arith.addf %591, %592 : vector<16x128xf32>
    %695 = arith.addf %593, %594 : vector<16x128xf32>
    %696 = arith.addf %595, %596 : vector<16x128xf32>
    %697 = arith.addf %597, %598 : vector<16x128xf32>
    %698 = arith.addf %599, %600 : vector<16x128xf32>
    %699 = arith.addf %601, %602 : vector<16x128xf32>
    %700 = arith.addf %603, %604 : vector<16x128xf32>
    %701 = arith.addf %605, %606 : vector<16x128xf32>
    %702 = arith.addf %607, %608 : vector<16x128xf32>
    %703 = arith.addf %609, %610 : vector<16x128xf32>
    %704 = arith.addf %611, %612 : vector<16x128xf32>
    %705 = arith.addf %613, %614 : vector<16x128xf32>
    %706 = arith.addf %615, %616 : vector<16x128xf32>
    %707 = arith.addf %617, %618 : vector<16x128xf32>
    %708 = arith.addf %619, %620 : vector<16x128xf32>
    %709 = arith.addf %621, %622 : vector<16x128xf32>
    %710 = arith.addf %623, %624 : vector<16x128xf32>
    %711 = arith.addf %625, %626 : vector<16x128xf32>
    %712 = arith.addf %627, %628 : vector<16x128xf32>
    %713 = arith.addf %629, %630 : vector<16x128xf32>
    %714 = arith.addf %631, %632 : vector<16x128xf32>
    %715 = arith.addf %633, %634 : vector<16x128xf32>
    %716 = arith.addf %635, %636 : vector<16x128xf32>
    %717 = arith.addf %637, %638 : vector<16x128xf32>
    %718 = arith.addf %639, %640 : vector<16x128xf32>
    %719 = arith.addf %641, %642 : vector<16x128xf32>
    %720 = arith.addf %643, %644 : vector<16x128xf32>
    %721 = arith.addf %645, %646 : vector<16x128xf32>
    %722 = arith.addf %647, %648 : vector<16x128xf32>
    %723 = arith.addf %649, %650 : vector<16x128xf32>
    %724 = arith.addf %651, %652 : vector<16x128xf32>
    %725 = arith.addf %653, %654 : vector<16x128xf32>
    %726 = arith.addf %655, %656 : vector<16x128xf32>
    %727 = arith.addf %657, %658 : vector<16x128xf32>
    %728 = arith.addf %659, %660 : vector<16x128xf32>
    %729 = arith.addf %661, %662 : vector<16x128xf32>
    %730 = arith.addf %663, %664 : vector<16x128xf32>
    %731 = arith.addf %665, %666 : vector<16x128xf32>
    %732 = arith.addf %667, %668 : vector<16x128xf32>
    %733 = arith.addf %669, %670 : vector<16x128xf32>
    %734 = arith.addf %671, %672 : vector<16x128xf32>
    %735 = arith.addf %673, %674 : vector<16x128xf32>
    %736 = arith.addf %675, %676 : vector<16x128xf32>
    %737 = arith.addf %677, %678 : vector<16x128xf32>
    %738 = arith.addf %679, %680 : vector<16x128xf32>
    %739 = arith.addf %681, %682 : vector<16x128xf32>
    %740 = arith.addf %683, %684 : vector<16x128xf32>
    %741 = arith.addf %685, %686 : vector<16x128xf32>
    %742 = arith.addf %687, %688 : vector<16x128xf32>
    %743 = arith.addf %689, %690 : vector<16x128xf32>
    %744 = arith.addf %691, %692 : vector<16x128xf32>
    %745 = arith.addf %693, %694 : vector<16x128xf32>
    %746 = arith.addf %695, %696 : vector<16x128xf32>
    %747 = arith.addf %697, %698 : vector<16x128xf32>
    %748 = arith.addf %699, %700 : vector<16x128xf32>
    %749 = arith.addf %701, %702 : vector<16x128xf32>
    %750 = arith.addf %703, %704 : vector<16x128xf32>
    %751 = arith.addf %705, %706 : vector<16x128xf32>
    %752 = arith.addf %707, %708 : vector<16x128xf32>
    %753 = arith.addf %709, %710 : vector<16x128xf32>
    %754 = arith.addf %711, %712 : vector<16x128xf32>
    %755 = arith.addf %713, %714 : vector<16x128xf32>
    %756 = arith.addf %715, %716 : vector<16x128xf32>
    %757 = arith.addf %717, %718 : vector<16x128xf32>
    %758 = arith.addf %719, %720 : vector<16x128xf32>
    %759 = arith.addf %721, %722 : vector<16x128xf32>
    %760 = arith.addf %723, %724 : vector<16x128xf32>
    %761 = arith.addf %725, %726 : vector<16x128xf32>
    %762 = arith.addf %727, %728 : vector<16x128xf32>
    %763 = arith.addf %729, %730 : vector<16x128xf32>
    %764 = arith.addf %731, %732 : vector<16x128xf32>
    %765 = arith.addf %733, %734 : vector<16x128xf32>
    %766 = arith.addf %735, %736 : vector<16x128xf32>
    %767 = arith.addf %737, %738 : vector<16x128xf32>
    %768 = arith.addf %739, %740 : vector<16x128xf32>
    %769 = arith.addf %741, %742 : vector<16x128xf32>
    %770 = arith.addf %743, %744 : vector<16x128xf32>
    %771 = arith.addf %745, %746 : vector<16x128xf32>
    %772 = arith.addf %747, %748 : vector<16x128xf32>
    %773 = arith.addf %749, %750 : vector<16x128xf32>
    %774 = arith.addf %751, %752 : vector<16x128xf32>
    %775 = arith.addf %753, %754 : vector<16x128xf32>
    %776 = arith.addf %755, %756 : vector<16x128xf32>
    %777 = arith.addf %757, %758 : vector<16x128xf32>
    %778 = arith.addf %759, %760 : vector<16x128xf32>
    %779 = arith.addf %761, %762 : vector<16x128xf32>
    %780 = arith.addf %763, %764 : vector<16x128xf32>
    %781 = arith.addf %765, %766 : vector<16x128xf32>
    %782 = arith.addf %767, %768 : vector<16x128xf32>
    %783 = arith.addf %769, %770 : vector<16x128xf32>
    %784 = arith.addf %771, %772 : vector<16x128xf32>
    %785 = arith.addf %773, %774 : vector<16x128xf32>
    %786 = arith.addf %775, %776 : vector<16x128xf32>
    %787 = arith.addf %777, %778 : vector<16x128xf32>
    %788 = arith.addf %779, %780 : vector<16x128xf32>
    %789 = arith.addf %781, %782 : vector<16x128xf32>
    %790 = arith.addf %783, %784 : vector<16x128xf32>
    %791 = arith.addf %785, %786 : vector<16x128xf32>
    %792 = arith.addf %787, %788 : vector<16x128xf32>
    %793 = arith.addf %789, %790 : vector<16x128xf32>
    %794 = arith.addf %791, %792 : vector<16x128xf32>
    %795 = arith.addf %793, %794 : vector<16x128xf32>
    %c0_23 = arith.constant 0 : index
    %c2_24 = arith.constant 2 : index
    %c0_25 = arith.constant 0 : index
    %796 = vector.load %arg4[%c0_23, %c2_24, %c0_25] : memref<1x4x128xf32, #tpu.memory_space<vmem>>, vector<1x1x128xf32>
    %797 = vector.shape_cast %796 : vector<1x1x128xf32> to vector<1x128xf32>
    %798 = vector.broadcast %797 : vector<1x128xf32> to vector<16x128xf32>
    %799 = arith.addf %795, %798 : vector<16x128xf32>
    %c2_26 = arith.constant 2 : index
    %c0_27 = arith.constant 0 : index
    %c0_28 = arith.constant 0 : index
    %800 = vector.load %arg5[%c2_26, %c0_27, %c0_28] : memref<4x16x128xf32, #tpu.memory_space<vmem>>, vector<1x16x128xf32>
    %801 = vector.shape_cast %800 : vector<1x16x128xf32> to vector<16x128xf32>
    %802 = vector.shape_cast %799 : vector<16x128xf32> to vector<1x16x128xf32>
    tpu.vector_store %arg5[%c2_26, %c0_27, %c0_28], %802 {strides = array<i32>} : memref<4x16x128xf32, #tpu.memory_space<vmem>>, vector<1x16x128xf32>,
    %c0_29 = arith.constant 0 : index
    %c3 = arith.constant 3 : index
    %c0_30 = arith.constant 0 : index
    %803 = vector.load %arg3[%c0_29, %c3, %c0_30] : memref<1x4x16384xf32, #tpu.memory_space<vmem>>, vector<1x1x16384xf32>
    %804 = vector.shape_cast %803 : vector<1x1x16384xf32> to vector<1x16384xf32>
    %805 = vector.broadcast %804 : vector<1x16384xf32> to vector<16x16384xf32>
    %806 = arith.mulf %4, %805 : vector<16x16384xf32>
    %807 = vector.extract_strided_slice %806 {offsets = [0, 0], sizes = [16, 128], strides = [1, 1]} : vector<16x16384xf32> to vector<16x128xf32>
    %808 = vector.extract_strided_slice %806 {offsets = [0, 128], sizes = [16, 128], strides = [1, 1]} : vector<16x16384xf32> to vector<16x128xf32>
    %809 = vector.extract_strided_slice %806 {offsets = [0, 256], sizes = [16, 128], strides = [1, 1]} : vector<16x16384xf32> to vector<16x128xf32>
    %810 = vector.extract_strided_slice %806 {offsets = [0, 384], sizes = [16, 128], strides = [1, 1]} : vector<16x16384xf32> to vector<16x128xf32>
    %811 = vector.extract_strided_slice %806 {offsets = [0, 512], sizes = [16, 128], strides = [1, 1]} : vector<16x16384xf32> to vector<16x128xf32>
    %812 = vector.extract_strided_slice %806 {offsets = [0, 640], sizes = [16, 128], strides = [1, 1]} : vector<16x16384xf32> to vector<16x128xf32>
    %813 = vector.extract_strided_slice %806 {offsets = [0, 768], sizes = [16, 128], strides = [1, 1]} : vector<16x16384xf32> to vector<16x128xf32>
    %814 = vector.extract_strided_slice %806 {offsets = [0, 896], sizes = [16, 128], strides = [1, 1]} : vector<16x16384xf32> to vector<16x128xf32>
    %815 = vector.extract_strided_slice %806 {offsets = [0, 1024], sizes = [16, 128], strides = [1, 1]} : vector<16x16384xf32> to vector<16x128xf32>
    %816 = vector.extract_strided_slice %806 {offsets = [0, 1152], sizes = [16, 128], strides = [1, 1]} : vector<16x16384xf32> to vector<16x128xf32>
    %817 = vector.extract_strided_slice %806 {offsets = [0, 1280], sizes = [16, 128], strides = [1, 1]} : vector<16x16384xf32> to vector<16x128xf32>
    %818 = vector.extract_strided_slice %806 {offsets = [0, 1408], sizes = [16, 128], strides = [1, 1]} : vector<16x16384xf32> to vector<16x128xf32>
    %819 = vector.extract_strided_slice %806 {offsets = [0, 1536], sizes = [16, 128], strides = [1, 1]} : vector<16x16384xf32> to vector<16x128xf32>
    %820 = vector.extract_strided_slice %806 {offsets = [0, 1664], sizes = [16, 128], strides = [1, 1]} : vector<16x16384xf32> to vector<16x128xf32>
    %821 = vector.extract_strided_slice %806 {offsets = [0, 1792], sizes = [16, 128], strides = [1, 1]} : vector<16x16384xf32> to vector<16x128xf32>
    %822 = vector.extract_strided_slice %806 {offsets = [0, 1920], sizes = [16, 128], strides = [1, 1]} : vector<16x16384xf32> to vector<16x128xf32>
    %823 = vector.extract_strided_slice %806 {offsets = [0, 2048], sizes = [16, 128], strides = [1, 1]} : vector<16x16384xf32> to vector<16x128xf32>
    %824 = vector.extract_strided_slice %806 {offsets = [0, 2176], sizes = [16, 128], strides = [1, 1]} : vector<16x16384xf32> to vector<16x128xf32>
    %825 = vector.extract_strided_slice %806 {offsets = [0, 2304], sizes = [16, 128], strides = [1, 1]} : vector<16x16384xf32> to vector<16x128xf32>
    %826 = vector.extract_strided_slice %806 {offsets = [0, 2432], sizes = [16, 128], strides = [1, 1]} : vector<16x16384xf32> to vector<16x128xf32>
    %827 = vector.extract_strided_slice %806 {offsets = [0, 2560], sizes = [16, 128], strides = [1, 1]} : vector<16x16384xf32> to vector<16x128xf32>
    %828 = vector.extract_strided_slice %806 {offsets = [0, 2688], sizes = [16, 128], strides = [1, 1]} : vector<16x16384xf32> to vector<16x128xf32>
    %829 = vector.extract_strided_slice %806 {offsets = [0, 2816], sizes = [16, 128], strides = [1, 1]} : vector<16x16384xf32> to vector<16x128xf32>
    %830 = vector.extract_strided_slice %806 {offsets = [0, 2944], sizes = [16, 128], strides = [1, 1]} : vector<16x16384xf32> to vector<16x128xf32>
    %831 = vector.extract_strided_slice %806 {offsets = [0, 3072], sizes = [16, 128], strides = [1, 1]} : vector<16x16384xf32> to vector<16x128xf32>
    %832 = vector.extract_strided_slice %806 {offsets = [0, 3200], sizes = [16, 128], strides = [1, 1]} : vector<16x16384xf32> to vector<16x128xf32>
    %833 = vector.extract_strided_slice %806 {offsets = [0, 3328], sizes = [16, 128], strides = [1, 1]} : vector<16x16384xf32> to vector<16x128xf32>
    %834 = vector.extract_strided_slice %806 {offsets = [0, 3456], sizes = [16, 128], strides = [1, 1]} : vector<16x16384xf32> to vector<16x128xf32>
    %835 = vector.extract_strided_slice %806 {offsets = [0, 3584], sizes = [16, 128], strides = [1, 1]} : vector<16x16384xf32> to vector<16x128xf32>
    %836 = vector.extract_strided_slice %806 {offsets = [0, 3712], sizes = [16, 128], strides = [1, 1]} : vector<16x16384xf32> to vector<16x128xf32>
    %837 = vector.extract_strided_slice %806 {offsets = [0, 3840], sizes = [16, 128], strides = [1, 1]} : vector<16x16384xf32> to vector<16x128xf32>
    %838 = vector.extract_strided_slice %806 {offsets = [0, 3968], sizes = [16, 128], strides = [1, 1]} : vector<16x16384xf32> to vector<16x128xf32>
    %839 = vector.extract_strided_slice %806 {offsets = [0, 4096], sizes = [16, 128], strides = [1, 1]} : vector<16x16384xf32> to vector<16x128xf32>
    %840 = vector.extract_strided_slice %806 {offsets = [0, 4224], sizes = [16, 128], strides = [1, 1]} : vector<16x16384xf32> to vector<16x128xf32>
    %841 = vector.extract_strided_slice %806 {offsets = [0, 4352], sizes = [16, 128], strides = [1, 1]} : vector<16x16384xf32> to vector<16x128xf32>
    %842 = vector.extract_strided_slice %806 {offsets = [0, 4480], sizes = [16, 128], strides = [1, 1]} : vector<16x16384xf32> to vector<16x128xf32>
    %843 = vector.extract_strided_slice %806 {offsets = [0, 4608], sizes = [16, 128], strides = [1, 1]} : vector<16x16384xf32> to vector<16x128xf32>
    %844 = vector.extract_strided_slice %806 {offsets = [0, 4736], sizes = [16, 128], strides = [1, 1]} : vector<16x16384xf32> to vector<16x128xf32>
    %845 = vector.extract_strided_slice %806 {offsets = [0, 4864], sizes = [16, 128], strides = [1, 1]} : vector<16x16384xf32> to vector<16x128xf32>
    %846 = vector.extract_strided_slice %806 {offsets = [0, 4992], sizes = [16, 128], strides = [1, 1]} : vector<16x16384xf32> to vector<16x128xf32>
    %847 = vector.extract_strided_slice %806 {offsets = [0, 5120], sizes = [16, 128], strides = [1, 1]} : vector<16x16384xf32> to vector<16x128xf32>
    %848 = vector.extract_strided_slice %806 {offsets = [0, 5248], sizes = [16, 128], strides = [1, 1]} : vector<16x16384xf32> to vector<16x128xf32>
    %849 = vector.extract_strided_slice %806 {offsets = [0, 5376], sizes = [16, 128], strides = [1, 1]} : vector<16x16384xf32> to vector<16x128xf32>
    %850 = vector.extract_strided_slice %806 {offsets = [0, 5504], sizes = [16, 128], strides = [1, 1]} : vector<16x16384xf32> to vector<16x128xf32>
    %851 = vector.extract_strided_slice %806 {offsets = [0, 5632], sizes = [16, 128], strides = [1, 1]} : vector<16x16384xf32> to vector<16x128xf32>
    %852 = vector.extract_strided_slice %806 {offsets = [0, 5760], sizes = [16, 128], strides = [1, 1]} : vector<16x16384xf32> to vector<16x128xf32>
    %853 = vector.extract_strided_slice %806 {offsets = [0, 5888], sizes = [16, 128], strides = [1, 1]} : vector<16x16384xf32> to vector<16x128xf32>
    %854 = vector.extract_strided_slice %806 {offsets = [0, 6016], sizes = [16, 128], strides = [1, 1]} : vector<16x16384xf32> to vector<16x128xf32>
    %855 = vector.extract_strided_slice %806 {offsets = [0, 6144], sizes = [16, 128], strides = [1, 1]} : vector<16x16384xf32> to vector<16x128xf32>
    %856 = vector.extract_strided_slice %806 {offsets = [0, 6272], sizes = [16, 128], strides = [1, 1]} : vector<16x16384xf32> to vector<16x128xf32>
    %857 = vector.extract_strided_slice %806 {offsets = [0, 6400], sizes = [16, 128], strides = [1, 1]} : vector<16x16384xf32> to vector<16x128xf32>
    %858 = vector.extract_strided_slice %806 {offsets = [0, 6528], sizes = [16, 128], strides = [1, 1]} : vector<16x16384xf32> to vector<16x128xf32>
    %859 = vector.extract_strided_slice %806 {offsets = [0, 6656], sizes = [16, 128], strides = [1, 1]} : vector<16x16384xf32> to vector<16x128xf32>
    %860 = vector.extract_strided_slice %806 {offsets = [0, 6784], sizes = [16, 128], strides = [1, 1]} : vector<16x16384xf32> to vector<16x128xf32>
    %861 = vector.extract_strided_slice %806 {offsets = [0, 6912], sizes = [16, 128], strides = [1, 1]} : vector<16x16384xf32> to vector<16x128xf32>
    %862 = vector.extract_strided_slice %806 {offsets = [0, 7040], sizes = [16, 128], strides = [1, 1]} : vector<16x16384xf32> to vector<16x128xf32>
    %863 = vector.extract_strided_slice %806 {offsets = [0, 7168], sizes = [16, 128], strides = [1, 1]} : vector<16x16384xf32> to vector<16x128xf32>
    %864 = vector.extract_strided_slice %806 {offsets = [0, 7296], sizes = [16, 128], strides = [1, 1]} : vector<16x16384xf32> to vector<16x128xf32>
    %865 = vector.extract_strided_slice %806 {offsets = [0, 7424], sizes = [16, 128], strides = [1, 1]} : vector<16x16384xf32> to vector<16x128xf32>
    %866 = vector.extract_strided_slice %806 {offsets = [0, 7552], sizes = [16, 128], strides = [1, 1]} : vector<16x16384xf32> to vector<16x128xf32>
    %867 = vector.extract_strided_slice %806 {offsets = [0, 7680], sizes = [16, 128], strides = [1, 1]} : vector<16x16384xf32> to vector<16x128xf32>
    %868 = vector.extract_strided_slice %806 {offsets = [0, 7808], sizes = [16, 128], strides = [1, 1]} : vector<16x16384xf32> to vector<16x128xf32>
    %869 = vector.extract_strided_slice %806 {offsets = [0, 7936], sizes = [16, 128], strides = [1, 1]} : vector<16x16384xf32> to vector<16x128xf32>
    %870 = vector.extract_strided_slice %806 {offsets = [0, 8064], sizes = [16, 128], strides = [1, 1]} : vector<16x16384xf32> to vector<16x128xf32>
    %871 = vector.extract_strided_slice %806 {offsets = [0, 8192], sizes = [16, 128], strides = [1, 1]} : vector<16x16384xf32> to vector<16x128xf32>
    %872 = vector.extract_strided_slice %806 {offsets = [0, 8320], sizes = [16, 128], strides = [1, 1]} : vector<16x16384xf32> to vector<16x128xf32>
    %873 = vector.extract_strided_slice %806 {offsets = [0, 8448], sizes = [16, 128], strides = [1, 1]} : vector<16x16384xf32> to vector<16x128xf32>
    %874 = vector.extract_strided_slice %806 {offsets = [0, 8576], sizes = [16, 128], strides = [1, 1]} : vector<16x16384xf32> to vector<16x128xf32>
    %875 = vector.extract_strided_slice %806 {offsets = [0, 8704], sizes = [16, 128], strides = [1, 1]} : vector<16x16384xf32> to vector<16x128xf32>
    %876 = vector.extract_strided_slice %806 {offsets = [0, 8832], sizes = [16, 128], strides = [1, 1]} : vector<16x16384xf32> to vector<16x128xf32>
    %877 = vector.extract_strided_slice %806 {offsets = [0, 8960], sizes = [16, 128], strides = [1, 1]} : vector<16x16384xf32> to vector<16x128xf32>
    %878 = vector.extract_strided_slice %806 {offsets = [0, 9088], sizes = [16, 128], strides = [1, 1]} : vector<16x16384xf32> to vector<16x128xf32>
    %879 = vector.extract_strided_slice %806 {offsets = [0, 9216], sizes = [16, 128], strides = [1, 1]} : vector<16x16384xf32> to vector<16x128xf32>
    %880 = vector.extract_strided_slice %806 {offsets = [0, 9344], sizes = [16, 128], strides = [1, 1]} : vector<16x16384xf32> to vector<16x128xf32>
    %881 = vector.extract_strided_slice %806 {offsets = [0, 9472], sizes = [16, 128], strides = [1, 1]} : vector<16x16384xf32> to vector<16x128xf32>
    %882 = vector.extract_strided_slice %806 {offsets = [0, 9600], sizes = [16, 128], strides = [1, 1]} : vector<16x16384xf32> to vector<16x128xf32>
    %883 = vector.extract_strided_slice %806 {offsets = [0, 9728], sizes = [16, 128], strides = [1, 1]} : vector<16x16384xf32> to vector<16x128xf32>
    %884 = vector.extract_strided_slice %806 {offsets = [0, 9856], sizes = [16, 128], strides = [1, 1]} : vector<16x16384xf32> to vector<16x128xf32>
    %885 = vector.extract_strided_slice %806 {offsets = [0, 9984], sizes = [16, 128], strides = [1, 1]} : vector<16x16384xf32> to vector<16x128xf32>
    %886 = vector.extract_strided_slice %806 {offsets = [0, 10112], sizes = [16, 128], strides = [1, 1]} : vector<16x16384xf32> to vector<16x128xf32>
    %887 = vector.extract_strided_slice %806 {offsets = [0, 10240], sizes = [16, 128], strides = [1, 1]} : vector<16x16384xf32> to vector<16x128xf32>
    %888 = vector.extract_strided_slice %806 {offsets = [0, 10368], sizes = [16, 128], strides = [1, 1]} : vector<16x16384xf32> to vector<16x128xf32>
    %889 = vector.extract_strided_slice %806 {offsets = [0, 10496], sizes = [16, 128], strides = [1, 1]} : vector<16x16384xf32> to vector<16x128xf32>
    %890 = vector.extract_strided_slice %806 {offsets = [0, 10624], sizes = [16, 128], strides = [1, 1]} : vector<16x16384xf32> to vector<16x128xf32>
    %891 = vector.extract_strided_slice %806 {offsets = [0, 10752], sizes = [16, 128], strides = [1, 1]} : vector<16x16384xf32> to vector<16x128xf32>
    %892 = vector.extract_strided_slice %806 {offsets = [0, 10880], sizes = [16, 128], strides = [1, 1]} : vector<16x16384xf32> to vector<16x128xf32>
    %893 = vector.extract_strided_slice %806 {offsets = [0, 11008], sizes = [16, 128], strides = [1, 1]} : vector<16x16384xf32> to vector<16x128xf32>
    %894 = vector.extract_strided_slice %806 {offsets = [0, 11136], sizes = [16, 128], strides = [1, 1]} : vector<16x16384xf32> to vector<16x128xf32>
    %895 = vector.extract_strided_slice %806 {offsets = [0, 11264], sizes = [16, 128], strides = [1, 1]} : vector<16x16384xf32> to vector<16x128xf32>
    %896 = vector.extract_strided_slice %806 {offsets = [0, 11392], sizes = [16, 128], strides = [1, 1]} : vector<16x16384xf32> to vector<16x128xf32>
    %897 = vector.extract_strided_slice %806 {offsets = [0, 11520], sizes = [16, 128], strides = [1, 1]} : vector<16x16384xf32> to vector<16x128xf32>
    %898 = vector.extract_strided_slice %806 {offsets = [0, 11648], sizes = [16, 128], strides = [1, 1]} : vector<16x16384xf32> to vector<16x128xf32>
    %899 = vector.extract_strided_slice %806 {offsets = [0, 11776], sizes = [16, 128], strides = [1, 1]} : vector<16x16384xf32> to vector<16x128xf32>
    %900 = vector.extract_strided_slice %806 {offsets = [0, 11904], sizes = [16, 128], strides = [1, 1]} : vector<16x16384xf32> to vector<16x128xf32>
    %901 = vector.extract_strided_slice %806 {offsets = [0, 12032], sizes = [16, 128], strides = [1, 1]} : vector<16x16384xf32> to vector<16x128xf32>
    %902 = vector.extract_strided_slice %806 {offsets = [0, 12160], sizes = [16, 128], strides = [1, 1]} : vector<16x16384xf32> to vector<16x128xf32>
    %903 = vector.extract_strided_slice %806 {offsets = [0, 12288], sizes = [16, 128], strides = [1, 1]} : vector<16x16384xf32> to vector<16x128xf32>
    %904 = vector.extract_strided_slice %806 {offsets = [0, 12416], sizes = [16, 128], strides = [1, 1]} : vector<16x16384xf32> to vector<16x128xf32>
    %905 = vector.extract_strided_slice %806 {offsets = [0, 12544], sizes = [16, 128], strides = [1, 1]} : vector<16x16384xf32> to vector<16x128xf32>
    %906 = vector.extract_strided_slice %806 {offsets = [0, 12672], sizes = [16, 128], strides = [1, 1]} : vector<16x16384xf32> to vector<16x128xf32>
    %907 = vector.extract_strided_slice %806 {offsets = [0, 12800], sizes = [16, 128], strides = [1, 1]} : vector<16x16384xf32> to vector<16x128xf32>
    %908 = vector.extract_strided_slice %806 {offsets = [0, 12928], sizes = [16, 128], strides = [1, 1]} : vector<16x16384xf32> to vector<16x128xf32>
    %909 = vector.extract_strided_slice %806 {offsets = [0, 13056], sizes = [16, 128], strides = [1, 1]} : vector<16x16384xf32> to vector<16x128xf32>
    %910 = vector.extract_strided_slice %806 {offsets = [0, 13184], sizes = [16, 128], strides = [1, 1]} : vector<16x16384xf32> to vector<16x128xf32>
    %911 = vector.extract_strided_slice %806 {offsets = [0, 13312], sizes = [16, 128], strides = [1, 1]} : vector<16x16384xf32> to vector<16x128xf32>
    %912 = vector.extract_strided_slice %806 {offsets = [0, 13440], sizes = [16, 128], strides = [1, 1]} : vector<16x16384xf32> to vector<16x128xf32>
    %913 = vector.extract_strided_slice %806 {offsets = [0, 13568], sizes = [16, 128], strides = [1, 1]} : vector<16x16384xf32> to vector<16x128xf32>
    %914 = vector.extract_strided_slice %806 {offsets = [0, 13696], sizes = [16, 128], strides = [1, 1]} : vector<16x16384xf32> to vector<16x128xf32>
    %915 = vector.extract_strided_slice %806 {offsets = [0, 13824], sizes = [16, 128], strides = [1, 1]} : vector<16x16384xf32> to vector<16x128xf32>
    %916 = vector.extract_strided_slice %806 {offsets = [0, 13952], sizes = [16, 128], strides = [1, 1]} : vector<16x16384xf32> to vector<16x128xf32>
    %917 = vector.extract_strided_slice %806 {offsets = [0, 14080], sizes = [16, 128], strides = [1, 1]} : vector<16x16384xf32> to vector<16x128xf32>
    %918 = vector.extract_strided_slice %806 {offsets = [0, 14208], sizes = [16, 128], strides = [1, 1]} : vector<16x16384xf32> to vector<16x128xf32>
    %919 = vector.extract_strided_slice %806 {offsets = [0, 14336], sizes = [16, 128], strides = [1, 1]} : vector<16x16384xf32> to vector<16x128xf32>
    %920 = vector.extract_strided_slice %806 {offsets = [0, 14464], sizes = [16, 128], strides = [1, 1]} : vector<16x16384xf32> to vector<16x128xf32>
    %921 = vector.extract_strided_slice %806 {offsets = [0, 14592], sizes = [16, 128], strides = [1, 1]} : vector<16x16384xf32> to vector<16x128xf32>
    %922 = vector.extract_strided_slice %806 {offsets = [0, 14720], sizes = [16, 128], strides = [1, 1]} : vector<16x16384xf32> to vector<16x128xf32>
    %923 = vector.extract_strided_slice %806 {offsets = [0, 14848], sizes = [16, 128], strides = [1, 1]} : vector<16x16384xf32> to vector<16x128xf32>
    %924 = vector.extract_strided_slice %806 {offsets = [0, 14976], sizes = [16, 128], strides = [1, 1]} : vector<16x16384xf32> to vector<16x128xf32>
    %925 = vector.extract_strided_slice %806 {offsets = [0, 15104], sizes = [16, 128], strides = [1, 1]} : vector<16x16384xf32> to vector<16x128xf32>
    %926 = vector.extract_strided_slice %806 {offsets = [0, 15232], sizes = [16, 128], strides = [1, 1]} : vector<16x16384xf32> to vector<16x128xf32>
    %927 = vector.extract_strided_slice %806 {offsets = [0, 15360], sizes = [16, 128], strides = [1, 1]} : vector<16x16384xf32> to vector<16x128xf32>
    %928 = vector.extract_strided_slice %806 {offsets = [0, 15488], sizes = [16, 128], strides = [1, 1]} : vector<16x16384xf32> to vector<16x128xf32>
    %929 = vector.extract_strided_slice %806 {offsets = [0, 15616], sizes = [16, 128], strides = [1, 1]} : vector<16x16384xf32> to vector<16x128xf32>
    %930 = vector.extract_strided_slice %806 {offsets = [0, 15744], sizes = [16, 128], strides = [1, 1]} : vector<16x16384xf32> to vector<16x128xf32>
    %931 = vector.extract_strided_slice %806 {offsets = [0, 15872], sizes = [16, 128], strides = [1, 1]} : vector<16x16384xf32> to vector<16x128xf32>
    %932 = vector.extract_strided_slice %806 {offsets = [0, 16000], sizes = [16, 128], strides = [1, 1]} : vector<16x16384xf32> to vector<16x128xf32>
    %933 = vector.extract_strided_slice %806 {offsets = [0, 16128], sizes = [16, 128], strides = [1, 1]} : vector<16x16384xf32> to vector<16x128xf32>
    %934 = vector.extract_strided_slice %806 {offsets = [0, 16256], sizes = [16, 128], strides = [1, 1]} : vector<16x16384xf32> to vector<16x128xf32>
    %935 = arith.addf %807, %808 : vector<16x128xf32>
    %936 = arith.addf %809, %810 : vector<16x128xf32>
    %937 = arith.addf %811, %812 : vector<16x128xf32>
    %938 = arith.addf %813, %814 : vector<16x128xf32>
    %939 = arith.addf %815, %816 : vector<16x128xf32>
    %940 = arith.addf %817, %818 : vector<16x128xf32>
    %941 = arith.addf %819, %820 : vector<16x128xf32>
    %942 = arith.addf %821, %822 : vector<16x128xf32>
    %943 = arith.addf %823, %824 : vector<16x128xf32>
    %944 = arith.addf %825, %826 : vector<16x128xf32>
    %945 = arith.addf %827, %828 : vector<16x128xf32>
    %946 = arith.addf %829, %830 : vector<16x128xf32>
    %947 = arith.addf %831, %832 : vector<16x128xf32>
    %948 = arith.addf %833, %834 : vector<16x128xf32>
    %949 = arith.addf %835, %836 : vector<16x128xf32>
    %950 = arith.addf %837, %838 : vector<16x128xf32>
    %951 = arith.addf %839, %840 : vector<16x128xf32>
    %952 = arith.addf %841, %842 : vector<16x128xf32>
    %953 = arith.addf %843, %844 : vector<16x128xf32>
    %954 = arith.addf %845, %846 : vector<16x128xf32>
    %955 = arith.addf %847, %848 : vector<16x128xf32>
    %956 = arith.addf %849, %850 : vector<16x128xf32>
    %957 = arith.addf %851, %852 : vector<16x128xf32>
    %958 = arith.addf %853, %854 : vector<16x128xf32>
    %959 = arith.addf %855, %856 : vector<16x128xf32>
    %960 = arith.addf %857, %858 : vector<16x128xf32>
    %961 = arith.addf %859, %860 : vector<16x128xf32>
    %962 = arith.addf %861, %862 : vector<16x128xf32>
    %963 = arith.addf %863, %864 : vector<16x128xf32>
    %964 = arith.addf %865, %866 : vector<16x128xf32>
    %965 = arith.addf %867, %868 : vector<16x128xf32>
    %966 = arith.addf %869, %870 : vector<16x128xf32>
    %967 = arith.addf %871, %872 : vector<16x128xf32>
    %968 = arith.addf %873, %874 : vector<16x128xf32>
    %969 = arith.addf %875, %876 : vector<16x128xf32>
    %970 = arith.addf %877, %878 : vector<16x128xf32>
    %971 = arith.addf %879, %880 : vector<16x128xf32>
    %972 = arith.addf %881, %882 : vector<16x128xf32>
    %973 = arith.addf %883, %884 : vector<16x128xf32>
    %974 = arith.addf %885, %886 : vector<16x128xf32>
    %975 = arith.addf %887, %888 : vector<16x128xf32>
    %976 = arith.addf %889, %890 : vector<16x128xf32>
    %977 = arith.addf %891, %892 : vector<16x128xf32>
    %978 = arith.addf %893, %894 : vector<16x128xf32>
    %979 = arith.addf %895, %896 : vector<16x128xf32>
    %980 = arith.addf %897, %898 : vector<16x128xf32>
    %981 = arith.addf %899, %900 : vector<16x128xf32>
    %982 = arith.addf %901, %902 : vector<16x128xf32>
    %983 = arith.addf %903, %904 : vector<16x128xf32>
    %984 = arith.addf %905, %906 : vector<16x128xf32>
    %985 = arith.addf %907, %908 : vector<16x128xf32>
    %986 = arith.addf %909, %910 : vector<16x128xf32>
    %987 = arith.addf %911, %912 : vector<16x128xf32>
    %988 = arith.addf %913, %914 : vector<16x128xf32>
    %989 = arith.addf %915, %916 : vector<16x128xf32>
    %990 = arith.addf %917, %918 : vector<16x128xf32>
    %991 = arith.addf %919, %920 : vector<16x128xf32>
    %992 = arith.addf %921, %922 : vector<16x128xf32>
    %993 = arith.addf %923, %924 : vector<16x128xf32>
    %994 = arith.addf %925, %926 : vector<16x128xf32>
    %995 = arith.addf %927, %928 : vector<16x128xf32>
    %996 = arith.addf %929, %930 : vector<16x128xf32>
    %997 = arith.addf %931, %932 : vector<16x128xf32>
    %998 = arith.addf %933, %934 : vector<16x128xf32>
    %999 = arith.addf %935, %936 : vector<16x128xf32>
    %1000 = arith.addf %937, %938 : vector<16x128xf32>
    %1001 = arith.addf %939, %940 : vector<16x128xf32>
    %1002 = arith.addf %941, %942 : vector<16x128xf32>
    %1003 = arith.addf %943, %944 : vector<16x128xf32>
    %1004 = arith.addf %945, %946 : vector<16x128xf32>
    %1005 = arith.addf %947, %948 : vector<16x128xf32>
    %1006 = arith.addf %949, %950 : vector<16x128xf32>
    %1007 = arith.addf %951, %952 : vector<16x128xf32>
    %1008 = arith.addf %953, %954 : vector<16x128xf32>
    %1009 = arith.addf %955, %956 : vector<16x128xf32>
    %1010 = arith.addf %957, %958 : vector<16x128xf32>
    %1011 = arith.addf %959, %960 : vector<16x128xf32>
    %1012 = arith.addf %961, %962 : vector<16x128xf32>
    %1013 = arith.addf %963, %964 : vector<16x128xf32>
    %1014 = arith.addf %965, %966 : vector<16x128xf32>
    %1015 = arith.addf %967, %968 : vector<16x128xf32>
    %1016 = arith.addf %969, %970 : vector<16x128xf32>
    %1017 = arith.addf %971, %972 : vector<16x128xf32>
    %1018 = arith.addf %973, %974 : vector<16x128xf32>
    %1019 = arith.addf %975, %976 : vector<16x128xf32>
    %1020 = arith.addf %977, %978 : vector<16x128xf32>
    %1021 = arith.addf %979, %980 : vector<16x128xf32>
    %1022 = arith.addf %981, %982 : vector<16x128xf32>
    %1023 = arith.addf %983, %984 : vector<16x128xf32>
    %1024 = arith.addf %985, %986 : vector<16x128xf32>
    %1025 = arith.addf %987, %988 : vector<16x128xf32>
    %1026 = arith.addf %989, %990 : vector<16x128xf32>
    %1027 = arith.addf %991, %992 : vector<16x128xf32>
    %1028 = arith.addf %993, %994 : vector<16x128xf32>
    %1029 = arith.addf %995, %996 : vector<16x128xf32>
    %1030 = arith.addf %997, %998 : vector<16x128xf32>
    %1031 = arith.addf %999, %1000 : vector<16x128xf32>
    %1032 = arith.addf %1001, %1002 : vector<16x128xf32>
    %1033 = arith.addf %1003, %1004 : vector<16x128xf32>
    %1034 = arith.addf %1005, %1006 : vector<16x128xf32>
    %1035 = arith.addf %1007, %1008 : vector<16x128xf32>
    %1036 = arith.addf %1009, %1010 : vector<16x128xf32>
    %1037 = arith.addf %1011, %1012 : vector<16x128xf32>
    %1038 = arith.addf %1013, %1014 : vector<16x128xf32>
    %1039 = arith.addf %1015, %1016 : vector<16x128xf32>
    %1040 = arith.addf %1017, %1018 : vector<16x128xf32>
    %1041 = arith.addf %1019, %1020 : vector<16x128xf32>
    %1042 = arith.addf %1021, %1022 : vector<16x128xf32>
    %1043 = arith.addf %1023, %1024 : vector<16x128xf32>
    %1044 = arith.addf %1025, %1026 : vector<16x128xf32>
    %1045 = arith.addf %1027, %1028 : vector<16x128xf32>
    %1046 = arith.addf %1029, %1030 : vector<16x128xf32>
    %1047 = arith.addf %1031, %1032 : vector<16x128xf32>
    %1048 = arith.addf %1033, %1034 : vector<16x128xf32>
    %1049 = arith.addf %1035, %1036 : vector<16x128xf32>
    %1050 = arith.addf %1037, %1038 : vector<16x128xf32>
    %1051 = arith.addf %1039, %1040 : vector<16x128xf32>
    %1052 = arith.addf %1041, %1042 : vector<16x128xf32>
    %1053 = arith.addf %1043, %1044 : vector<16x128xf32>
    %1054 = arith.addf %1045, %1046 : vector<16x128xf32>
    %1055 = arith.addf %1047, %1048 : vector<16x128xf32>
    %1056 = arith.addf %1049, %1050 : vector<16x128xf32>
    %1057 = arith.addf %1051, %1052 : vector<16x128xf32>
    %1058 = arith.addf %1053, %1054 : vector<16x128xf32>
    %1059 = arith.addf %1055, %1056 : vector<16x128xf32>
    %1060 = arith.addf %1057, %1058 : vector<16x128xf32>
    %1061 = arith.addf %1059, %1060 : vector<16x128xf32>
    %c0_31 = arith.constant 0 : index
    %c3_32 = arith.constant 3 : index
    %c0_33 = arith.constant 0 : index
    %1062 = vector.load %arg4[%c0_31, %c3_32, %c0_33] : memref<1x4x128xf32, #tpu.memory_space<vmem>>, vector<1x1x128xf32>
    %1063 = vector.shape_cast %1062 : vector<1x1x128xf32> to vector<1x128xf32>
    %1064 = vector.broadcast %1063 : vector<1x128xf32> to vector<16x128xf32>
    %1065 = arith.addf %1061, %1064 : vector<16x128xf32>
    %c3_34 = arith.constant 3 : index
    %c0_35 = arith.constant 0 : index
    %c0_36 = arith.constant 0 : index
    %1066 = vector.load %arg5[%c3_34, %c0_35, %c0_36] : memref<4x16x128xf32, #tpu.memory_space<vmem>>, vector<1x16x128xf32>
    %1067 = vector.shape_cast %1066 : vector<1x16x128xf32> to vector<16x128xf32>
    %1068 = vector.shape_cast %1065 : vector<16x128xf32> to vector<1x16x128xf32>
    tpu.vector_store %arg5[%c3_34, %c0_35, %c0_36], %1068 {strides = array<i32>} : memref<4x16x128xf32, #tpu.memory_space<vmem>>, vector<1x16x128xf32>,
    return
  }
  func.func @transform_0(%arg0: i32) -> (i32, i32) {
    %c0_i32 = arith.constant 0 : i32
    %c0_i32_0 = arith.constant 0 : i32
    %c0_i32_1 = arith.constant 0 : i32
    return %c0_i32, %c0_i32_0 : i32, i32
  }
  func.func @transform_1(%arg0: i32) -> (i32, i32, i32) {
    %c0_i32 = arith.constant 0 : i32
    %c0_i32_0 = arith.constant 0 : i32
    %c0_i32_1 = arith.constant 0 : i32
    return %arg0, %c0_i32, %c0_i32_0 : i32, i32, i32
  }
  func.func @transform_2(%arg0: i32) -> (i32, i32, i32) {
    %c0_i32 = arith.constant 0 : i32
    %c0_i32_0 = arith.constant 0 : i32
    %c0_i32_1 = arith.constant 0 : i32
    return %arg0, %c0_i32, %c0_i32_0 : i32, i32, i32
  }
  func.func @transform_3(%arg0: i32) -> (i32, i32, i32) {
    %c0_i32 = arith.constant 0 : i32
    %c0_i32_0 = arith.constant 0 : i32
    %c0_i32_1 = arith.constant 0 : i32
    return %arg0, %c0_i32, %c0_i32_0 : i32, i32, i32
  }
  func.func @transform_4(%arg0: i32) -> (i32, i32, i32) {
    %c0_i32 = arith.constant 0 : i32
    %c0_i32_0 = arith.constant 0 : i32
    %c0_i32_1 = arith.constant 0 : i32
    return %c0_i32, %c0_i32_0, %arg0 : i32, i32, i32
  }
}

</mosaic_0001>

<llo_original>
// kernel: bnn_forward_pallas.1
$region0: #{bnn_forward_pallas.1}
  #allocation0 [shape = 'u32[]', space=smem, size = 0x4, offset = 0x4, fixed_abs, tag = 'smem constant byte address 0x4 - core index']
  #allocation1 [shape = 'u32[144,128]{1,0:T(1,128)}', space=vmem, size = 0x12000, scoped, tag = 'internal scratch']
  %s0 = inlined_call_operand.vmem [shape: f32[16,5], index: 0, kind: input, shape index: {}]
  %s1 = inlined_call_operand.vmem [shape: f32[1,5,16384], index: 1, kind: input, shape index: {}]
  %s2 = inlined_call_operand.vmem [shape: f32[1,4,16384], index: 2, kind: input, shape index: {}]
  %s3 = inlined_call_operand.vmem [shape: f32[1,4,128], index: 3, kind: input, shape index: {}]
  %s4 = inlined_call_operand.vmem [shape: f32[4,16,128], index: 4, kind: output, shape index: {}]
  %s5 = sld [smem:[#allocation0]]
  $region26: #{bnn_forward_pallas.1} parent=0
    _
  %s7 = ssub.s32 1, %s5
  %s8 = scalar_select 0, %s7, %s5
  // Predicated region
  $region2: #{bnn_forward_pallas.1} parent=0 // pred_check
    _
  $region3: #{bnn_forward_pallas.1} parent=0 // pred_check_branch
    %10 = sbr.rel (0) target = $region5
  $region4: #{bnn_forward_pallas.1} parent=0 // pred_region
    _
  $region5: #{bnn_forward_pallas.1} parent=0 // pred_fallthru
    _
  // Predicated region
  $region6: #{bnn_forward_pallas.1} parent=0 // pred_check
    _
  $region7: #{bnn_forward_pallas.1} parent=0 // pred_check_branch
    %12 = sbr.rel (0) target = $region9
  $region8: #{bnn_forward_pallas.1} parent=0 // pred_region
    _
  $region9: #{bnn_forward_pallas.1} parent=0 // pred_fallthru
    _
  // Predicated region
  $region10: #{bnn_forward_pallas.1} parent=0 // pred_check
    _
  $region11: #{bnn_forward_pallas.1} parent=0 // pred_check_branch
    %14 = sbr.rel (0) target = $region13
  $region12: #{bnn_forward_pallas.1} parent=0 // pred_region
    _
  $region13: #{bnn_forward_pallas.1} parent=0 // pred_fallthru
    _
  // Predicated region
  $region14: #{bnn_forward_pallas.1} parent=0 // pred_check
    _
  $region15: #{bnn_forward_pallas.1} parent=0 // pred_check_branch
    %16 = sbr.rel (0) target = $region17
  $region16: #{bnn_forward_pallas.1} parent=0 // pred_region
    _
  $region17: #{bnn_forward_pallas.1} parent=0 // pred_fallthru
    _
  %v17 = vld [vmem:[%s0] sm:$0xff]
  %v18 = vld [vmem:[%s0 + $0x8] sm:$0xff]
  %v19 = vld [vmem:[%s1] sm:$0x1f]
  %v20 = vld [vmem:[%s1 + $0x8] sm:$0x1f]
  %v21 = vld [vmem:[%s1 + $0x10] sm:$0x1f]
  %v22 = vld [vmem:[%s1 + $0x18] sm:$0x1f]
  %v23 = vld [vmem:[%s1 + $0x20] sm:$0x1f]
  %v24 = vld [vmem:[%s1 + $0x28] sm:$0x1f]
  %v25 = vld [vmem:[%s1 + $0x30] sm:$0x1f]
  %v26 = vld [vmem:[%s1 + $0x38] sm:$0x1f]
  %v27 = vld [vmem:[%s1 + $0x40] sm:$0x1f]
  %v28 = vld [vmem:[%s1 + $0x48] sm:$0x1f]
  %v29 = vld [vmem:[%s1 + $0x50] sm:$0x1f]
  %v30 = vld [vmem:[%s1 + $0x58] sm:$0x1f]
  %v31 = vld [vmem:[%s1 + $0x60] sm:$0x1f]
  %v32 = vld [vmem:[%s1 + $0x68] sm:$0x1f]
  %v33 = vld [vmem:[%s1 + $0x70] sm:$0x1f]
  %v34 = vld [vmem:[%s1 + $0x78] sm:$0x1f]
  %v35 = vld [vmem:[%s1 + $0x80] sm:$0x1f]
  %v36 = vld [vmem:[%s1 + $0x88] sm:$0x1f]
  %v37 = vld [vmem:[%s1 + $0x90] sm:$0x1f]
  %v38 = vld [vmem:[%s1 + $0x98] sm:$0x1f]
  %v39 = vld [vmem:[%s1 + $0xa0] sm:$0x1f]
  %v40 = vld [vmem:[%s1 + $0xa8] sm:$0x1f]
  %v41 = vld [vmem:[%s1 + $0xb0] sm:$0x1f]
  %v42 = vld [vmem:[%s1 + $0xb8] sm:$0x1f]
  %v43 = vld [vmem:[%s1 + $0xc0] sm:$0x1f]
  %v44 = vld [vmem:[%s1 + $0xc8] sm:$0x1f]
  %v45 = vld [vmem:[%s1 + $0xd0] sm:$0x1f]
  %v46 = vld [vmem:[%s1 + $0xd8] sm:$0x1f]
  %v47 = vld [vmem:[%s1 + $0xe0] sm:$0x1f]
  %v48 = vld [vmem:[%s1 + $0xe8] sm:$0x1f]
  %v49 = vld [vmem:[%s1 + $0xf0] sm:$0x1f]
  %v50 = vld [vmem:[%s1 + $0xf8] sm:$0x1f]
  %v51 = vld [vmem:[%s1 + $0x100] sm:$0x1f]
  %v52 = vld [vmem:[%s1 + $0x108] sm:$0x1f]
  %v53 = vld [vmem:[%s1 + $0x110] sm:$0x1f]
  %v54 = vld [vmem:[%s1 + $0x118] sm:$0x1f]
  %v55 = vld [vmem:[%s1 + $0x120] sm:$0x1f]
  %v56 = vld [vmem:[%s1 + $0x128] sm:$0x1f]
  %v57 = vld [vmem:[%s1 + $0x130] sm:$0x1f]
  %v58 = vld [vmem:[%s1 + $0x138] sm:$0x1f]
  %v59 = vld [vmem:[%s1 + $0x140] sm:$0x1f]
  %v60 = vld [vmem:[%s1 + $0x148] sm:$0x1f]
  %v61 = vld [vmem:[%s1 + $0x150] sm:$0x1f]
  %v62 = vld [vmem:[%s1 + $0x158] sm:$0x1f]
  %v63 = vld [vmem:[%s1 + $0x160] sm:$0x1f]
  %v64 = vld [vmem:[%s1 + $0x168] sm:$0x1f]
  %v65 = vld [vmem:[%s1 + $0x170] sm:$0x1f]
  %v66 = vld [vmem:[%s1 + $0x178] sm:$0x1f]
  %v67 = vld [vmem:[%s1 + $0x180] sm:$0x1f]
  %v68 = vld [vmem:[%s1 + $0x188] sm:$0x1f]
  %v69 = vld [vmem:[%s1 + $0x190] sm:$0x1f]
  %v70 = vld [vmem:[%s1 + $0x198] sm:$0x1f]
  %v71 = vld [vmem:[%s1 + $0x1a0] sm:$0x1f]
  %v72 = vld [vmem:[%s1 + $0x1a8] sm:$0x1f]
  %v73 = vld [vmem:[%s1 + $0x1b0] sm:$0x1f]
  %v74 = vld [vmem:[%s1 + $0x1b8] sm:$0x1f]
  %v75 = vld [vmem:[%s1 + $0x1c0] sm:$0x1f]
  %v76 = vld [vmem:[%s1 + $0x1c8] sm:$0x1f]
  %v77 = vld [vmem:[%s1 + $0x1d0] sm:$0x1f]
  %v78 = vld [vmem:[%s1 + $0x1d8] sm:$0x1f]
  %v79 = vld [vmem:[%s1 + $0x1e0] sm:$0x1f]
  %v80 = vld [vmem:[%s1 + $0x1e8] sm:$0x1f]
  %v81 = vld [vmem:[%s1 + $0x1f0] sm:$0x1f]
  %v82 = vld [vmem:[%s1 + $0x1f8] sm:$0x1f]
  %v83 = vld [vmem:[%s1 + $0x200] sm:$0x1f]
  %v84 = vld [vmem:[%s1 + $0x208] sm:$0x1f]
  %v85 = vld [vmem:[%s1 + $0x210] sm:$0x1f]
  %v86 = vld [vmem:[%s1 + $0x218] sm:$0x1f]
  %v87 = vld [vmem:[%s1 + $0x220] sm:$0x1f]
  %v88 = vld [vmem:[%s1 + $0x228] sm:$0x1f]
  %v89 = vld [vmem:[%s1 + $0x230] sm:$0x1f]
  %v90 = vld [vmem:[%s1 + $0x238] sm:$0x1f]
  %v91 = vld [vmem:[%s1 + $0x240] sm:$0x1f]
  %v92 = vld [vmem:[%s1 + $0x248] sm:$0x1f]
  %v93 = vld [vmem:[%s1 + $0x250] sm:$0x1f]
  %v94 = vld [vmem:[%s1 + $0x258] sm:$0x1f]
  %v95 = vld [vmem:[%s1 + $0x260] sm:$0x1f]
  %v96 = vld [vmem:[%s1 + $0x268] sm:$0x1f]
  %v97 = vld [vmem:[%s1 + $0x270] sm:$0x1f]
  %v98 = vld [vmem:[%s1 + $0x278] sm:$0x1f]
  %v99 = vld [vmem:[%s1 + $0x280] sm:$0x1f]
  %v100 = vld [vmem:[%s1 + $0x288] sm:$0x1f]
  %v101 = vld [vmem:[%s1 + $0x290] sm:$0x1f]
  %v102 = vld [vmem:[%s1 + $0x298] sm:$0x1f]
  %v103 = vld [vmem:[%s1 + $0x2a0] sm:$0x1f]
  %v104 = vld [vmem:[%s1 + $0x2a8] sm:$0x1f]
  %v105 = vld [vmem:[%s1 + $0x2b0] sm:$0x1f]
  %v106 = vld [vmem:[%s1 + $0x2b8] sm:$0x1f]
  %v107 = vld [vmem:[%s1 + $0x2c0] sm:$0x1f]
  %v108 = vld [vmem:[%s1 + $0x2c8] sm:$0x1f]
  %v109 = vld [vmem:[%s1 + $0x2d0] sm:$0x1f]
  %v110 = vld [vmem:[%s1 + $0x2d8] sm:$0x1f]
  %v111 = vld [vmem:[%s1 + $0x2e0] sm:$0x1f]
  %v112 = vld [vmem:[%s1 + $0x2e8] sm:$0x1f]
  %v113 = vld [vmem:[%s1 + $0x2f0] sm:$0x1f]
  %v114 = vld [vmem:[%s1 + $0x2f8] sm:$0x1f]
  %v115 = vld [vmem:[%s1 + $0x300] sm:$0x1f]
  %v116 = vld [vmem:[%s1 + $0x308] sm:$0x1f]
  %v117 = vld [vmem:[%s1 + $0x310] sm:$0x1f]
  %v118 = vld [vmem:[%s1 + $0x318] sm:$0x1f]
  %v119 = vld [vmem:[%s1 + $0x320] sm:$0x1f]
  %v120 = vld [vmem:[%s1 + $0x328] sm:$0x1f]
  %v121 = vld [vmem:[%s1 + $0x330] sm:$0x1f]
  %v122 = vld [vmem:[%s1 + $0x338] sm:$0x1f]
  %v123 = vld [vmem:[%s1 + $0x340] sm:$0x1f]
  %v124 = vld [vmem:[%s1 + $0x348] sm:$0x1f]
  %v125 = vld [vmem:[%s1 + $0x350] sm:$0x1f]
  %v126 = vld [vmem:[%s1 + $0x358] sm:$0x1f]
  %v127 = vld [vmem:[%s1 + $0x360] sm:$0x1f]
  %v128 = vld [vmem:[%s1 + $0x368] sm:$0x1f]
  %v129 = vld [vmem:[%s1 + $0x370] sm:$0x1f]
  %v130 = vld [vmem:[%s1 + $0x378] sm:$0x1f]
  %v131 = vld [vmem:[%s1 + $0x380] sm:$0x1f]
  %v132 = vld [vmem:[%s1 + $0x388] sm:$0x1f]
  %v133 = vld [vmem:[%s1 + $0x390] sm:$0x1f]
  %v134 = vld [vmem:[%s1 + $0x398] sm:$0x1f]
  %v135 = vld [vmem:[%s1 + $0x3a0] sm:$0x1f]
  %v136 = vld [vmem:[%s1 + $0x3a8] sm:$0x1f]
  %v137 = vld [vmem:[%s1 + $0x3b0] sm:$0x1f]
  %v138 = vld [vmem:[%s1 + $0x3b8] sm:$0x1f]
  %v139 = vld [vmem:[%s1 + $0x3c0] sm:$0x1f]
  %v140 = vld [vmem:[%s1 + $0x3c8] sm:$0x1f]
  %v141 = vld [vmem:[%s1 + $0x3d0] sm:$0x1f]
  %v142 = vld [vmem:[%s1 + $0x3d8] sm:$0x1f]
  %v143 = vld [vmem:[%s1 + $0x3e0] sm:$0x1f]
  %v144 = vld [vmem:[%s1 + $0x3e8] sm:$0x1f]
  %v145 = vld [vmem:[%s1 + $0x3f0] sm:$0x1f]
  %v146 = vld [vmem:[%s1 + $0x3f8] sm:$0x1f]
  %vm147 = vcmask 39936
  %v149 = vsel %vm147, %v17, 0
  %v152 = vsel %vm147, %v18, 0
  %vm154 = vcmask 1044480
  %v156 = vsel %vm154, %v19, 0
  %v159 = vsel %vm154, %v20, 0
  %v162 = vsel %vm154, %v21, 0
  %v165 = vsel %vm154, %v22, 0
  %v168 = vsel %vm154, %v23, 0
  %v171 = vsel %vm154, %v24, 0
  %v174 = vsel %vm154, %v25, 0
  %v177 = vsel %vm154, %v26, 0
  %v180 = vsel %vm154, %v27, 0
  %v183 = vsel %vm154, %v28, 0
  %v186 = vsel %vm154, %v29, 0
  %v189 = vsel %vm154, %v30, 0
  %v192 = vsel %vm154, %v31, 0
  %v195 = vsel %vm154, %v32, 0
  %v198 = vsel %vm154, %v33, 0
  %v201 = vsel %vm154, %v34, 0
  %v204 = vsel %vm154, %v35, 0
  %v207 = vsel %vm154, %v36, 0
  %v210 = vsel %vm154, %v37, 0
  %v213 = vsel %vm154, %v38, 0
  %v216 = vsel %vm154, %v39, 0
  %v219 = vsel %vm154, %v40, 0
  %v222 = vsel %vm154, %v41, 0
  %v225 = vsel %vm154, %v42, 0
  %v228 = vsel %vm154, %v43, 0
  %v231 = vsel %vm154, %v44, 0
  %v234 = vsel %vm154, %v45, 0
  %v237 = vsel %vm154, %v46, 0
  %v240 = vsel %vm154, %v47, 0
  %v243 = vsel %vm154, %v48, 0
  %v246 = vsel %vm154, %v49, 0
  %v249 = vsel %vm154, %v50, 0
  %v252 = vsel %vm154, %v51, 0
  %v255 = vsel %vm154, %v52, 0
  %v258 = vsel %vm154, %v53, 0
  %v261 = vsel %vm154, %v54, 0
  %v264 = vsel %vm154, %v55, 0
  %v267 = vsel %vm154, %v56, 0
  %v270 = vsel %vm154, %v57, 0
  %v273 = vsel %vm154, %v58, 0
  %v276 = vsel %vm154, %v59, 0
  %v279 = vsel %vm154, %v60, 0
  %v282 = vsel %vm154, %v61, 0
  %v285 = vsel %vm154, %v62, 0
  %v288 = vsel %vm154, %v63, 0
  %v291 = vsel %vm154, %v64, 0
  %v294 = vsel %vm154, %v65, 0
  %v297 = vsel %vm154, %v66, 0
  %v300 = vsel %vm154, %v67, 0
  %v303 = vsel %vm154, %v68, 0
  %v306 = vsel %vm154, %v69, 0
  %v309 = vsel %vm154, %v70, 0
  %v312 = vsel %vm154, %v71, 0
  %v315 = vsel %vm154, %v72, 0
  %v318 = vsel %vm154, %v73, 0
  %v321 = vsel %vm154, %v74, 0
  %v324 = vsel %vm154, %v75, 0
  %v327 = vsel %vm154, %v76, 0
  %v330 = vsel %vm154, %v77, 0
  %v333 = vsel %vm154, %v78, 0
  %v336 = vsel %vm154, %v79, 0
  %v339 = vsel %vm154, %v80, 0
  %v342 = vsel %vm154, %v81, 0
  %v345 = vsel %vm154, %v82, 0
  %v348 = vsel %vm154, %v83, 0
  %v351 = vsel %vm154, %v84, 0
  %v354 = vsel %vm154, %v85, 0
  %v357 = vsel %vm154, %v86, 0
  %v360 = vsel %vm154, %v87, 0
  %v363 = vsel %vm154, %v88, 0
  %v366 = vsel %vm154, %v89, 0
  %v369 = vsel %vm154, %v90, 0
  %v372 = vsel %vm154, %v91, 0
  %v375 = vsel %vm154, %v92, 0
  %v378 = vsel %vm154, %v93, 0
  %v381 = vsel %vm154, %v94, 0
  %v384 = vsel %vm154, %v95, 0
  %v387 = vsel %vm154, %v96, 0
  %v390 = vsel %vm154, %v97, 0
  %v393 = vsel %vm154, %v98, 0
  %v396 = vsel %vm154, %v99, 0
  %v399 = vsel %vm154, %v100, 0
  %v402 = vsel %vm154, %v101, 0
  %v405 = vsel %vm154, %v102, 0
  %v408 = vsel %vm154, %v103, 0
  %v411 = vsel %vm154, %v104, 0
  %v414 = vsel %vm154, %v105, 0
  %v417 = vsel %vm154, %v106, 0
  %v420 = vsel %vm154, %v107, 0
  %v423 = vsel %vm154, %v108, 0
  %v426 = vsel %vm154, %v109, 0
  %v429 = vsel %vm154, %v110, 0
  %v432 = vsel %vm154, %v111, 0
  %v435 = vsel %vm154, %v112, 0
  %v438 = vsel %vm154, %v113, 0
  %v441 = vsel %vm154, %v114, 0
  %v444 = vsel %vm154, %v115, 0
  %v447 = vsel %vm154, %v116, 0
  %v450 = vsel %vm154, %v117, 0
  %v453 = vsel %vm154, %v118, 0
  %v456 = vsel %vm154, %v119, 0
  %v459 = vsel %vm154, %v120, 0
  %v462 = vsel %vm154, %v121, 0
  %v465 = vsel %vm154, %v122, 0
  %v468 = vsel %vm154, %v123, 0
  %v471 = vsel %vm154, %v124, 0
  %v474 = vsel %vm154, %v125, 0
  %v477 = vsel %vm154, %v126, 0
  %v480 = vsel %vm154, %v127, 0
  %v483 = vsel %vm154, %v128, 0
  %v486 = vsel %vm154, %v129, 0
  %v489 = vsel %vm154, %v130, 0
  %v492 = vsel %vm154, %v131, 0
  %v495 = vsel %vm154, %v132, 0
  %v498 = vsel %vm154, %v133, 0
  %v501 = vsel %vm154, %v134, 0
  %v504 = vsel %vm154, %v135, 0
  %v507 = vsel %vm154, %v136, 0
  %v510 = vsel %vm154, %v137, 0
  %v513 = vsel %vm154, %v138, 0
  %v516 = vsel %vm154, %v139, 0
  %v519 = vsel %vm154, %v140, 0
  %v522 = vsel %vm154, %v141, 0
  %v525 = vsel %vm154, %v142, 0
  %v528 = vsel %vm154, %v143, 0
  %v531 = vsel %vm154, %v144, 0
  %v534 = vsel %vm154, %v145, 0
  %v537 = vsel %vm154, %v146, 0
  %539 = vmatprep.subr.mxu0 %v159
  %540 = vmatpush1.msra.mxu0 %v156
  %541 = vmatprep.subr.mxu0 0.0
  %542 = vmatpush1.msra.mxu0 0.0
  %543 = vmatprep.subr.mxu0 0.0
  %544 = vmatpush1.msra.mxu0 0.0
  %545 = vmatprep.subr.mxu0 0.0
  %546 = vmatpush1.msra.mxu0 0.0
  %547 = vmatprep.subr.mxu0 0.0
  %548 = vmatpush1.msra.mxu0 0.0
  %549 = vmatprep.subr.mxu0 0.0
  %550 = vmatpush1.msra.mxu0 0.0
  %551 = vmatprep.subr.mxu0 0.0
  %552 = vmatpush1.msra.mxu0 0.0
  %553 = vmatprep.subr.mxu0 0.0
  %554 = vmatpush1.msra.mxu0 0.0
  %555 = vmatprep.subr.mxu0 0.0
  %556 = vmatpush1.msra.mxu0 0.0
  %557 = vmatprep.subr.mxu0 0.0
  %558 = vmatpush1.msra.mxu0 0.0
  %559 = vmatprep.subr.mxu0 0.0
  %560 = vmatpush1.msra.mxu0 0.0
  %561 = vmatprep.subr.mxu0 0.0
  %562 = vmatpush1.msra.mxu0 0.0
  %563 = vmatprep.subr.mxu0 0.0
  %564 = vmatpush1.msra.mxu0 0.0
  %565 = vmatprep.subr.mxu0 0.0
  %566 = vmatpush1.msra.mxu0 0.0
  %567 = vmatprep.subr.mxu0 0.0
  %568 = vmatpush1.msra.mxu0 0.0
  %569 = vmatprep.subr.mxu0 0.0
  %570 = vmatpush1.msra.mxu0 0.0
  %571 = vmatprep.subr.mxu0 0.0
  %572 = vmatpush1.msra.mxu0 0.0
  %573 = vmatprep.subr.mxu0 0.0
  %574 = vmatpush1.msra.mxu0 0.0
  %575 = vmatprep.subr.mxu0 0.0
  %576 = vmatpush1.msra.mxu0 0.0
  %577 = vmatprep.subr.mxu0 0.0
  %578 = vmatpush1.msra.mxu0 0.0
  %579 = vmatprep.subr.mxu0 0.0
  %580 = vmatpush1.msra.mxu0 0.0
  %581 = vmatprep.subr.mxu0 0.0
  %582 = vmatpush1.msra.mxu0 0.0
  %583 = vmatprep.subr.mxu0 0.0
  %584 = vmatpush1.msra.mxu0 0.0
  %585 = vmatprep.subr.mxu0 0.0
  %586 = vmatpush1.msra.mxu0 0.0
  %587 = vmatprep.subr.mxu0 0.0
  %588 = vmatpush1.msra.mxu0 0.0
  %589 = vmatprep.subr.mxu0 0.0
  %590 = vmatpush1.msra.mxu0 0.0
  %591 = vmatprep.subr.mxu0 0.0
  %592 = vmatpush1.msra.mxu0 0.0
  %593 = vmatprep.subr.mxu0 0.0
  %594 = vmatpush1.msra.mxu0 0.0
  %595 = vmatprep.subr.mxu0 0.0
  %596 = vmatpush1.msra.mxu0 0.0
  %597 = vmatprep.subr.mxu0 0.0
  %598 = vmatpush1.msra.mxu0 0.0
  %599 = vmatprep.subr.mxu0 0.0
  %600 = vmatpush1.msra.mxu0 0.0
  %601 = vmatprep.subr.mxu0 0.0
  %602 = vmatpush1.msra.mxu0 0.0
  %603 = vmatprep.mubr.f32.mxu0 0.0
  %604 = vmatmul.mubr.f32.gmra.mrb[0].mxu0 %v149
  %v605 = vpop.f32.mrb[0].mxu0
  %v606 = vadd.f32 0.0, %v605
  %v607 = vpop.f32.mrb[0].mxu0
  %v608 = vadd.f32 0.0, %v607
  %609 = vmatprep.mubr.f32.mxu0 0.0
  %610 = vmatmul.mubr.f32.gmra.mrb[0].mxu0 %v152
  %v611 = vpop.f32.mrb[0].mxu0
  %v612 = vadd.f32 0.0, %v611
  %v613 = vpop.f32.mrb[0].mxu0
  %v614 = vadd.f32 0.0, %v613
  %615 = vdwg.mxu0
  %616 = vmatprep.subr.mxu0 %v165
  %617 = vmatpush1.msra.mxu0 %v162
  %618 = vmatprep.subr.mxu0 0.0
  %619 = vmatpush1.msra.mxu0 0.0
  %620 = vmatprep.subr.mxu0 0.0
  %621 = vmatpush1.msra.mxu0 0.0
  %622 = vmatprep.subr.mxu0 0.0
  %623 = vmatpush1.msra.mxu0 0.0
  %624 = vmatprep.subr.mxu0 0.0
  %625 = vmatpush1.msra.mxu0 0.0
  %626 = vmatprep.subr.mxu0 0.0
  %627 = vmatpush1.msra.mxu0 0.0
  %628 = vmatprep.subr.mxu0 0.0
  %629 = vmatpush1.msra.mxu0 0.0
  %630 = vmatprep.subr.mxu0 0.0
  %631 = vmatpush1.msra.mxu0 0.0
  %632 = vmatprep.subr.mxu0 0.0
  %633 = vmatpush1.msra.mxu0 0.0
  %634 = vmatprep.subr.mxu0 0.0
  %635 = vmatpush1.msra.mxu0 0.0
  %636 = vmatprep.subr.mxu0 0.0
  %637 = vmatpush1.msra.mxu0 0.0
  %638 = vmatprep.subr.mxu0 0.0
  %639 = vmatpush1.msra.mxu0 0.0
  %640 = vmatprep.subr.mxu0 0.0
  %641 = vmatpush1.msra.mxu0 0.0
  %642 = vmatprep.subr.mxu0 0.0
  %643 = vmatpush1.msra.mxu0 0.0
  %644 = vmatprep.subr.mxu0 0.0
  %645 = vmatpush1.msra.mxu0 0.0
  %646 = vmatprep.subr.mxu0 0.0
  %647 = vmatpush1.msra.mxu0 0.0
  %648 = vmatprep.subr.mxu0 0.0
  %649 = vmatpush1.msra.mxu0 0.0
  %650 = vmatprep.subr.mxu0 0.0
  %651 = vmatpush1.msra.mxu0 0.0
  %652 = vmatprep.subr.mxu0 0.0
  %653 = vmatpush1.msra.mxu0 0.0
  %654 = vmatprep.subr.mxu0 0.0
  %655 = vmatpush1.msra.mxu0 0.0
  %656 = vmatprep.subr.mxu0 0.0
  %657 = vmatpush1.msra.mxu0 0.0
  %658 = vmatprep.subr.mxu0 0.0
  %659 = vmatpush1.msra.mxu0 0.0
  %660 = vmatprep.subr.mxu0 0.0
  %661 = vmatpush1.msra.mxu0 0.0
  %662 = vmatprep.subr.mxu0 0.0
  %663 = vmatpush1.msra.mxu0 0.0
  %664 = vmatprep.subr.mxu0 0.0
  %665 = vmatpush1.msra.mxu0 0.0
  %666 = vmatprep.subr.mxu0 0.0
  %667 = vmatpush1.msra.mxu0 0.0
  %668 = vmatprep.subr.mxu0 0.0
  %669 = vmatpush1.msra.mxu0 0.0
  %670 = vmatprep.subr.mxu0 0.0
  %671 = vmatpush1.msra.mxu0 0.0
  %672 = vmatprep.subr.mxu0 0.0
  %673 = vmatpush1.msra.mxu0 0.0
  %674 = vmatprep.subr.mxu0 0.0
  %675 = vmatpush1.msra.mxu0 0.0
  %676 = vmatprep.subr.mxu0 0.0
  %677 = vmatpush1.msra.mxu0 0.0
  %678 = vmatprep.subr.mxu0 0.0
  %679 = vmatpush1.msra.mxu0 0.0
  %680 = vmatprep.mubr.f32.mxu0 0.0
  %681 = vmatmul.mubr.f32.gmra.mrb[0].mxu0 %v149
  %v682 = vpop.f32.mrb[0].mxu0
  %v683 = vadd.f32 0.0, %v682
  %v684 = vpop.f32.mrb[0].mxu0
  %v685 = vadd.f32 0.0, %v684
  %686 = vmatprep.mubr.f32.mxu0 0.0
  %687 = vmatmul.mubr.f32.gmra.mrb[0].mxu0 %v152
  %v688 = vpop.f32.mrb[0].mxu0
  %v689 = vadd.f32 0.0, %v688
  %v690 = vpop.f32.mrb[0].mxu0
  %v691 = vadd.f32 0.0, %v690
  %692 = vdwg.mxu0
  %693 = vmatprep.subr.mxu0 %v171
  %694 = vmatpush1.msra.mxu0 %v168
  %695 = vmatprep.subr.mxu0 0.0
  %696 = vmatpush1.msra.mxu0 0.0
  %697 = vmatprep.subr.mxu0 0.0
  %698 = vmatpush1.msra.mxu0 0.0
  %699 = vmatprep.subr.mxu0 0.0
  %700 = vmatpush1.msra.mxu0 0.0
  %701 = vmatprep.subr.mxu0 0.0
  %702 = vmatpush1.msra.mxu0 0.0
  %703 = vmatprep.subr.mxu0 0.0
  %704 = vmatpush1.msra.mxu0 0.0
  %705 = vmatprep.subr.mxu0 0.0
  %706 = vmatpush1.msra.mxu0 0.0
  %707 = vmatprep.subr.mxu0 0.0
  %708 = vmatpush1.msra.mxu0 0.0
  %709 = vmatprep.subr.mxu0 0.0
  %710 = vmatpush1.msra.mxu0 0.0
  %711 = vmatprep.subr.mxu0 0.0
  %712 = vmatpush1.msra.mxu0 0.0
  %713 = vmatprep.subr.mxu0 0.0
  %714 = vmatpush1.msra.mxu0 0.0
  %715 = vmatprep.subr.mxu0 0.0
  %716 = vmatpush1.msra.mxu0 0.0
  %717 = vmatprep.subr.mxu0 0.0
  %718 = vmatpush1.msra.mxu0 0.0
  %719 = vmatprep.subr.mxu0 0.0
  %720 = vmatpush1.msra.mxu0 0.0
  %721 = vmatprep.subr.mxu0 0.0
  %722 = vmatpush1.msra.mxu0 0.0
  %723 = vmatprep.subr.mxu0 0.0
  %724 = vmatpush1.msra.mxu0 0.0
  %725 = vmatprep.subr.mxu0 0.0
  %726 = vmatpush1.msra.mxu0 0.0
  %727 = vmatprep.subr.mxu0 0.0
  %728 = vmatpush1.msra.mxu0 0.0
  %729 = vmatprep.subr.mxu0 0.0
  %730 = vmatpush1.msra.mxu0 0.0
  %731 = vmatprep.subr.mxu0 0.0
  %732 = vmatpush1.msra.mxu0 0.0
  %733 = vmatprep.subr.mxu0 0.0
  %734 = vmatpush1.msra.mxu0 0.0
  %735 = vmatprep.subr.mxu0 0.0
  %736 = vmatpush1.msra.mxu0 0.0
  %737 = vmatprep.subr.mxu0 0.0
  %738 = vmatpush1.msra.mxu0 0.0
  %739 = vmatprep.subr.mxu0 0.0
  %740 = vmatpush1.msra.mxu0 0.0
  %741 = vmatprep.subr.mxu0 0.0
  %742 = vmatpush1.msra.mxu0 0.0
  %743 = vmatprep.subr.mxu0 0.0
  %744 = vmatpush1.msra.mxu0 0.0
  %745 = vmatprep.subr.mxu0 0.0
  %746 = vmatpush1.msra.mxu0 0.0
  %747 = vmatprep.subr.mxu0 0.0
  %748 = vmatpush1.msra.mxu0 0.0
  %749 = vmatprep.subr.mxu0 0.0
  %750 = vmatpush1.msra.mxu0 0.0
  %751 = vmatprep.subr.mxu0 0.0
  %752 = vmatpush1.msra.mxu0 0.0
  %753 = vmatprep.subr.mxu0 0.0
  %754 = vmatpush1.msra.mxu0 0.0
  %755 = vmatprep.subr.mxu0 0.0
  %756 = vmatpush1.msra.mxu0 0.0
  %757 = vmatprep.mubr.f32.mxu0 0.0
  %758 = vmatmul.mubr.f32.gmra.mrb[0].mxu0 %v149
  %v759 = vpop.f32.mrb[0].mxu0
  %v760 = vadd.f32 0.0, %v759
  %v761 = vpop.f32.mrb[0].mxu0
  %v762 = vadd.f32 0.0, %v761
  %763 = vmatprep.mubr.f32.mxu0 0.0
  %764 = vmatmul.mubr.f32.gmra.mrb[0].mxu0 %v152
  %v765 = vpop.f32.mrb[0].mxu0
  %v766 = vadd.f32 0.0, %v765
  %v767 = vpop.f32.mrb[0].mxu0
  %v768 = vadd.f32 0.0, %v767
  %769 = vdwg.mxu0
  %770 = vmatprep.subr.mxu0 %v177
  %771 = vmatpush1.msra.mxu0 %v174
  %772 = vmatprep.subr.mxu0 0.0
  %773 = vmatpush1.msra.mxu0 0.0
  %774 = vmatprep.subr.mxu0 0.0
  %775 = vmatpush1.msra.mxu0 0.0
  %776 = vmatprep.subr.mxu0 0.0
  %777 = vmatpush1.msra.mxu0 0.0
  %778 = vmatprep.subr.mxu0 0.0
  %779 = vmatpush1.msra.mxu0 0.0
  %780 = vmatprep.subr.mxu0 0.0
  %781 = vmatpush1.msra.mxu0 0.0
  %782 = vmatprep.subr.mxu0 0.0
  %783 = vmatpush1.msra.mxu0 0.0
  %784 = vmatprep.subr.mxu0 0.0
  %785 = vmatpush1.msra.mxu0 0.0
  %786 = vmatprep.subr.mxu0 0.0
  %787 = vmatpush1.msra.mxu0 0.0
  %788 = vmatprep.subr.mxu0 0.0
  %789 = vmatpush1.msra.mxu0 0.0
  %790 = vmatprep.subr.mxu0 0.0
  %791 = vmatpush1.msra.mxu0 0.0
  %792 = vmatprep.subr.mxu0 0.0
  %793 = vmatpush1.msra.mxu0 0.0
  %794 = vmatprep.subr.mxu0 0.0
  %795 = vmatpush1.msra.mxu0 0.0
  %796 = vmatprep.subr.mxu0 0.0
  %797 = vmatpush1.msra.mxu0 0.0
  %798 = vmatprep.subr.mxu0 0.0
  %799 = vmatpush1.msra.mxu0 0.0
  %800 = vmatprep.subr.mxu0 0.0
  %801 = vmatpush1.msra.mxu0 0.0
  %802 = vmatprep.subr.mxu0 0.0
  %803 = vmatpush1.msra.mxu0 0.0
  %804 = vmatprep.subr.mxu0 0.0
  %805 = vmatpush1.msra.mxu0 0.0
  %806 = vmatprep.subr.mxu0 0.0
  %807 = vmatpush1.msra.mxu0 0.0
  %808 = vmatprep.subr.mxu0 0.0
  %809 = vmatpush1.msra.mxu0 0.0
  %810 = vmatprep.subr.mxu0 0.0
  %811 = vmatpush1.msra.mxu0 0.0
  %812 = vmatprep.subr.mxu0 0.0
  %813 = vmatpush1.msra.mxu0 0.0
  %814 = vmatprep.subr.mxu0 0.0
  %815 = vmatpush1.msra.mxu0 0.0
  %816 = vmatprep.subr.mxu0 0.0
  %817 = vmatpush1.msra.mxu0 0.0
  %818 = vmatprep.subr.mxu0 0.0
  %819 = vmatpush1.msra.mxu0 0.0
  %820 = vmatprep.subr.mxu0 0.0
  %821 = vmatpush1.msra.mxu0 0.0
  %822 = vmatprep.subr.mxu0 0.0
  %823 = vmatpush1.msra.mxu0 0.0
  %824 = vmatprep.subr.mxu0 0.0
  %825 = vmatpush1.msra.mxu0 0.0
  %826 = vmatprep.subr.mxu0 0.0
  %827 = vmatpush1.msra.mxu0 0.0
  %828 = vmatprep.subr.mxu0 0.0
  %829 = vmatpush1.msra.mxu0 0.0
  %830 = vmatprep.subr.mxu0 0.0
  %831 = vmatpush1.msra.mxu0 0.0
  %832 = vmatprep.subr.mxu0 0.0
  %833 = vmatpush1.msra.mxu0 0.0
  %834 = vmatprep.mubr.f32.mxu0 0.0
  %835 = vmatmul.mubr.f32.gmra.mrb[0].mxu0 %v149
  %v836 = vpop.f32.mrb[0].mxu0
  %v837 = vadd.f32 0.0, %v836
  %v838 = vpop.f32.mrb[0].mxu0
  %v839 = vadd.f32 0.0, %v838
  %840 = vmatprep.mubr.f32.mxu0 0.0
  %841 = vmatmul.mubr.f32.gmra.mrb[0].mxu0 %v152
  %v842 = vpop.f32.mrb[0].mxu0
  %v843 = vadd.f32 0.0, %v842
  %v844 = vpop.f32.mrb[0].mxu0
  %v845 = vadd.f32 0.0, %v844
  %846 = vdwg.mxu0
  %847 = vmatprep.subr.mxu0 %v183
  %848 = vmatpush1.msra.mxu0 %v180
  %849 = vmatprep.subr.mxu0 0.0
  %850 = vmatpush1.msra.mxu0 0.0
  %851 = vmatprep.subr.mxu0 0.0
  %852 = vmatpush1.msra.mxu0 0.0
  %853 = vmatprep.subr.mxu0 0.0
  %854 = vmatpush1.msra.mxu0 0.0
  %855 = vmatprep.subr.mxu0 0.0
  %856 = vmatpush1.msra.mxu0 0.0
  %857 = vmatprep.subr.mxu0 0.0
  %858 = vmatpush1.msra.mxu0 0.0
  %859 = vmatprep.subr.mxu0 0.0
  %860 = vmatpush1.msra.mxu0 0.0
  %861 = vmatprep.subr.mxu0 0.0
  %862 = vmatpush1.msra.mxu0 0.0
  %863 = vmatprep.subr.mxu0 0.0
  %864 = vmatpush1.msra.mxu0 0.0
  %865 = vmatprep.subr.mxu0 0.0
  %866 = vmatpush1.msra.mxu0 0.0
  %867 = vmatprep.subr.mxu0 0.0
  %868 = vmatpush1.msra.mxu0 0.0
  %869 = vmatprep.subr.mxu0 0.0
  %870 = vmatpush1.msra.mxu0 0.0
  %871 = vmatprep.subr.mxu0 0.0
  %872 = vmatpush1.msra.mxu0 0.0
  %873 = vmatprep.subr.mxu0 0.0
  %874 = vmatpush1.msra.mxu0 0.0
  %875 = vmatprep.subr.mxu0 0.0
  %876 = vmatpush1.msra.mxu0 0.0
  %877 = vmatprep.subr.mxu0 0.0
  %878 = vmatpush1.msra.mxu0 0.0
  %879 = vmatprep.subr.mxu0 0.0
  %880 = vmatpush1.msra.mxu0 0.0
  %881 = vmatprep.subr.mxu0 0.0
  %882 = vmatpush1.msra.mxu0 0.0
  %883 = vmatprep.subr.mxu0 0.0
  %884 = vmatpush1.msra.mxu0 0.0
  %885 = vmatprep.subr.mxu0 0.0
  %886 = vmatpush1.msra.mxu0 0.0
  %887 = vmatprep.subr.mxu0 0.0
  %888 = vmatpush1.msra.mxu0 0.0
  %889 = vmatprep.subr.mxu0 0.0
  %890 = vmatpush1.msra.mxu0 0.0
  %891 = vmatprep.subr.mxu0 0.0
  %892 = vmatpush1.msra.mxu0 0.0
  %893 = vmatprep.subr.mxu0 0.0
  %894 = vmatpush1.msra.mxu0 0.0
  %895 = vmatprep.subr.mxu0 0.0
  %896 = vmatpush1.msra.mxu0 0.0
  %897 = vmatprep.subr.mxu0 0.0
  %898 = vmatpush1.msra.mxu0 0.0
  %899 = vmatprep.subr.mxu0 0.0
  %900 = vmatpush1.msra.mxu0 0.0
  %901 = vmatprep.subr.mxu0 0.0
  %902 = vmatpush1.msra.mxu0 0.0
  %903 = vmatprep.subr.mxu0 0.0
  %904 = vmatpush1.msra.mxu0 0.0
  %905 = vmatprep.subr.mxu0 0.0
  %906 = vmatpush1.msra.mxu0 0.0
  %907 = vmatprep.subr.mxu0 0.0
  %908 = vmatpush1.msra.mxu0 0.0
  %909 = vmatprep.subr.mxu0 0.0
  %910 = vmatpush1.msra.mxu0 0.0
  %911 = vmatprep.mubr.f32.mxu0 0.0
  %912 = vmatmul.mubr.f32.gmra.mrb[0].mxu0 %v149
  %v913 = vpop.f32.mrb[0].mxu0
  %v914 = vadd.f32 0.0, %v913
  %v915 = vpop.f32.mrb[0].mxu0
  %v916 = vadd.f32 0.0, %v915
  %917 = vmatprep.mubr.f32.mxu0 0.0
  %918 = vmatmul.mubr.f32.gmra.mrb[0].mxu0 %v152
  %v919 = vpop.f32.mrb[0].mxu0
  %v920 = vadd.f32 0.0, %v919
  %v921 = vpop.f32.mrb[0].mxu0
  %v922 = vadd.f32 0.0, %v921
  %923 = vdwg.mxu0
  %924 = vmatprep.subr.mxu0 %v189
  %925 = vmatpush1.msra.mxu0 %v186
  %926 = vmatprep.subr.mxu0 0.0
  %927 = vmatpush1.msra.mxu0 0.0
  %928 = vmatprep.subr.mxu0 0.0
  %929 = vmatpush1.msra.mxu0 0.0
  %930 = vmatprep.subr.mxu0 0.0
  %931 = vmatpush1.msra.mxu0 0.0
  %932 = vmatprep.subr.mxu0 0.0
  %933 = vmatpush1.msra.mxu0 0.0
  %934 = vmatprep.subr.mxu0 0.0
  %935 = vmatpush1.msra.mxu0 0.0
  %936 = vmatprep.subr.mxu0 0.0
  %937 = vmatpush1.msra.mxu0 0.0
  %938 = vmatprep.subr.mxu0 0.0
  %939 = vmatpush1.msra.mxu0 0.0
  %940 = vmatprep.subr.mxu0 0.0
  %941 = vmatpush1.msra.mxu0 0.0
  %942 = vmatprep.subr.mxu0 0.0
  %943 = vmatpush1.msra.mxu0 0.0
  %944 = vmatprep.subr.mxu0 0.0
  %945 = vmatpush1.msra.mxu0 0.0
  %946 = vmatprep.subr.mxu0 0.0
  %947 = vmatpush1.msra.mxu0 0.0
  %948 = vmatprep.subr.mxu0 0.0
  %949 = vmatpush1.msra.mxu0 0.0
  %950 = vmatprep.subr.mxu0 0.0
  %951 = vmatpush1.msra.mxu0 0.0
  %952 = vmatprep.subr.mxu0 0.0
  %953 = vmatpush1.msra.mxu0 0.0
  %954 = vmatprep.subr.mxu0 0.0
  %955 = vmatpush1.msra.mxu0 0.0
  %956 = vmatprep.subr.mxu0 0.0
  %957 = vmatpush1.msra.mxu0 0.0
  %958 = vmatprep.subr.mxu0 0.0
  %959 = vmatpush1.msra.mxu0 0.0
  %960 = vmatprep.subr.mxu0 0.0
  %961 = vmatpush1.msra.mxu0 0.0
  %962 = vmatprep.subr.mxu0 0.0
  %963 = vmatpush1.msra.mxu0 0.0
  %964 = vmatprep.subr.mxu0 0.0
  %965 = vmatpush1.msra.mxu0 0.0
  %966 = vmatprep.subr.mxu0 0.0
  %967 = vmatpush1.msra.mxu0 0.0
  %968 = vmatprep.subr.mxu0 0.0
  %969 = vmatpush1.msra.mxu0 0.0
  %970 = vmatprep.subr.mxu0 0.0
  %971 = vmatpush1.msra.mxu0 0.0
  %972 = vmatprep.subr.mxu0 0.0
  %973 = vmatpush1.msra.mxu0 0.0
  %974 = vmatprep.subr.mxu0 0.0
  %975 = vmatpush1.msra.mxu0 0.0
  %976 = vmatprep.subr.mxu0 0.0
  %977 = vmatpush1.msra.mxu0 0.0
  %978 = vmatprep.subr.mxu0 0.0
  %979 = vmatpush1.msra.mxu0 0.0
  %980 = vmatprep.subr.mxu0 0.0
  %981 = vmatpush1.msra.mxu0 0.0
  %982 = vmatprep.subr.mxu0 0.0
  %983 = vmatpush1.msra.mxu0 0.0
  %984 = vmatprep.subr.mxu0 0.0
  %985 = vmatpush1.msra.mxu0 0.0
  %986 = vmatprep.subr.mxu0 0.0
  %987 = vmatpush1.msra.mxu0 0.0
  %988 = vmatprep.mubr.f32.mxu0 0.0
  %989 = vmatmul.mubr.f32.gmra.mrb[0].mxu0 %v149
  %v990 = vpop.f32.mrb[0].mxu0
  %v991 = vadd.f32 0.0, %v990
  %v992 = vpop.f32.mrb[0].mxu0
  %v993 = vadd.f32 0.0, %v992
  %994 = vmatprep.mubr.f32.mxu0 0.0
  %995 = vmatmul.mubr.f32.gmra.mrb[0].mxu0 %v152
  %v996 = vpop.f32.mrb[0].mxu0
  %v997 = vadd.f32 0.0, %v996
  %v998 = vpop.f32.mrb[0].mxu0
  %v999 = vadd.f32 0.0, %v998
  %1000 = vdwg.mxu0
  %1001 = vmatprep.subr.mxu0 %v195
  %1002 = vmatpush1.msra.mxu0 %v192
  %1003 = vmatprep.subr.mxu0 0.0
  %1004 = vmatpush1.msra.mxu0 0.0
  %1005 = vmatprep.subr.mxu0 0.0
  %1006 = vmatpush1.msra.mxu0 0.0
  %1007 = vmatprep.subr.mxu0 0.0
  %1008 = vmatpush1.msra.mxu0 0.0
  %1009 = vmatprep.subr.mxu0 0.0
  %1010 = vmatpush1.msra.mxu0 0.0
  %1011 = vmatprep.subr.mxu0 0.0
  %1012 = vmatpush1.msra.mxu0 0.0
  %1013 = vmatprep.subr.mxu0 0.0
  %1014 = vmatpush1.msra.mxu0 0.0
  %1015 = vmatprep.subr.mxu0 0.0
  %1016 = vmatpush1.msra.mxu0 0.0
  %1017 = vmatprep.subr.mxu0 0.0
  %1018 = vmatpush1.msra.mxu0 0.0
  %1019 = vmatprep.subr.mxu0 0.0
  %1020 = vmatpush1.msra.mxu0 0.0
  %1021 = vmatprep.subr.mxu0 0.0
  %1022 = vmatpush1.msra.mxu0 0.0
  %1023 = vmatprep.subr.mxu0 0.0
  %1024 = vmatpush1.msra.mxu0 0.0
  %1025 = vmatprep.subr.mxu0 0.0
  %1026 = vmatpush1.msra.mxu0 0.0
  %1027 = vmatprep.subr.mxu0 0.0
  %1028 = vmatpush1.msra.mxu0 0.0
  %1029 = vmatprep.subr.mxu0 0.0
  %1030 = vmatpush1.msra.mxu0 0.0
  %1031 = vmatprep.subr.mxu0 0.0
  %1032 = vmatpush1.msra.mxu0 0.0
  %1033 = vmatprep.subr.mxu0 0.0
  %1034 = vmatpush1.msra.mxu0 0.0
  %1035 = vmatprep.subr.mxu0 0.0
  %1036 = vmatpush1.msra.mxu0 0.0
  %1037 = vmatprep.subr.mxu0 0.0
  %1038 = vmatpush1.msra.mxu0 0.0
  %1039 = vmatprep.subr.mxu0 0.0
  %1040 = vmatpush1.msra.mxu0 0.0
  %1041 = vmatprep.subr.mxu0 0.0
  %1042 = vmatpush1.msra.mxu0 0.0
  %1043 = vmatprep.subr.mxu0 0.0
  %1044 = vmatpush1.msra.mxu0 0.0
  %1045 = vmatprep.subr.mxu0 0.0
  %1046 = vmatpush1.msra.mxu0 0.0
  %1047 = vmatprep.subr.mxu0 0.0
  %1048 = vmatpush1.msra.mxu0 0.0
  %1049 = vmatprep.subr.mxu0 0.0
  %1050 = vmatpush1.msra.mxu0 0.0
  %1051 = vmatprep.subr.mxu0 0.0
  %1052 = vmatpush1.msra.mxu0 0.0
  %1053 = vmatprep.subr.mxu0 0.0
  %1054 = vmatpush1.msra.mxu0 0.0
  %1055 = vmatprep.subr.mxu0 0.0
  %1056 = vmatpush1.msra.mxu0 0.0
  %1057 = vmatprep.subr.mxu0 0.0
  %1058 = vmatpush1.msra.mxu0 0.0
  %1059 = vmatprep.subr.mxu0 0.0
  %1060 = vmatpush1.msra.mxu0 0.0
  %1061 = vmatprep.subr.mxu0 0.0
  %1062 = vmatpush1.msra.mxu0 0.0
  %1063 = vmatprep.subr.mxu0 0.0
  %1064 = vmatpush1.msra.mxu0 0.0
  %1065 = vmatprep.mubr.f32.mxu0 0.0
  %1066 = vmatmul.mubr.f32.gmra.mrb[0].mxu0 %v149
  %v1067 = vpop.f32.mrb[0].mxu0
  %v1068 = vadd.f32 0.0, %v1067
  %v1069 = vpop.f32.mrb[0].mxu0
  %v1070 = vadd.f32 0.0, %v1069
  %1071 = vmatprep.mubr.f32.mxu0 0.0
  %1072 = vmatmul.mubr.f32.gmra.mrb[0].mxu0 %v152
  %v1073 = vpop.f32.mrb[0].mxu0
  %v1074 = vadd.f32 0.0, %v1073
  %v1075 = vpop.f32.mrb[0].mxu0
  %v1076 = vadd.f32 0.0, %v1075
  %1077 = vdwg.mxu0
  %1078 = vmatprep.subr.mxu0 %v201
  %1079 = vmatpush1.msra.mxu0 %v198
  %1080 = vmatprep.subr.mxu0 0.0
  %1081 = vmatpush1.msra.mxu0 0.0
  %1082 = vmatprep.subr.mxu0 0.0
  %1083 = vmatpush1.msra.mxu0 0.0
  %1084 = vmatprep.subr.mxu0 0.0
  %1085 = vmatpush1.msra.mxu0 0.0
  %1086 = vmatprep.subr.mxu0 0.0
  %1087 = vmatpush1.msra.mxu0 0.0
  %1088 = vmatprep.subr.mxu0 0.0
  %1089 = vmatpush1.msra.mxu0 0.0
  %1090 = vmatprep.subr.mxu0 0.0
  %1091 = vmatpush1.msra.mxu0 0.0
  %1092 = vmatprep.subr.mxu0 0.0
  %1093 = vmatpush1.msra.mxu0 0.0
  %1094 = vmatprep.subr.mxu0 0.0
  %1095 = vmatpush1.msra.mxu0 0.0
  %1096 = vmatprep.subr.mxu0 0.0
  %1097 = vmatpush1.msra.mxu0 0.0
  %1098 = vmatprep.subr.mxu0 0.0
  %1099 = vmatpush1.msra.mxu0 0.0
  %1100 = vmatprep.subr.mxu0 0.0
  %1101 = vmatpush1.msra.mxu0 0.0
  %1102 = vmatprep.subr.mxu0 0.0
  %1103 = vmatpush1.msra.mxu0 0.0
  %1104 = vmatprep.subr.mxu0 0.0
  %1105 = vmatpush1.msra.mxu0 0.0
  %1106 = vmatprep.subr.mxu0 0.0
  %1107 = vmatpush1.msra.mxu0 0.0
  %1108 = vmatprep.subr.mxu0 0.0
  %1109 = vmatpush1.msra.mxu0 0.0
  %1110 = vmatprep.subr.mxu0 0.0
  %1111 = vmatpush1.msra.mxu0 0.0
  %1112 = vmatprep.subr.mxu0 0.0
  %1113 = vmatpush1.msra.mxu0 0.0
  %1114 = vmatprep.subr.mxu0 0.0
  %1115 = vmatpush1.msra.mxu0 0.0
  %1116 = vmatprep.subr.mxu0 0.0
  %1117 = vmatpush1.msra.mxu0 0.0
  %1118 = vmatprep.subr.mxu0 0.0
  %1119 = vmatpush1.msra.mxu0 0.0
  %1120 = vmatprep.subr.mxu0 0.0
  %1121 = vmatpush1.msra.mxu0 0.0
  %1122 = vmatprep.subr.mxu0 0.0
  %1123 = vmatpush1.msra.mxu0 0.0
  %1124 = vmatprep.subr.mxu0 0.0
  %1125 = vmatpush1.msra.mxu0 0.0
  %1126 = vmatprep.subr.mxu0 0.0
  %1127 = vmatpush1.msra.mxu0 0.0
  %1128 = vmatprep.subr.mxu0 0.0
  %1129 = vmatpush1.msra.mxu0 0.0
  %1130 = vmatprep.subr.mxu0 0.0
  %1131 = vmatpush1.msra.mxu0 0.0
  %1132 = vmatprep.subr.mxu0 0.0
  %1133 = vmatpush1.msra.mxu0 0.0
  %1134 = vmatprep.subr.mxu0 0.0
  %1135 = vmatpush1.msra.mxu0 0.0
  %1136 = vmatprep.subr.mxu0 0.0
  %1137 = vmatpush1.msra.mxu0 0.0
  %1138 = vmatprep.subr.mxu0 0.0
  %1139 = vmatpush1.msra.mxu0 0.0
  %1140 = vmatprep.subr.mxu0 0.0
  %1141 = vmatpush1.msra.mxu0 0.0
  %1142 = vmatprep.mubr.f32.mxu0 0.0
  %1143 = vmatmul.mubr.f32.gmra.mrb[0].mxu0 %v149
  %v1144 = vpop.f32.mrb[0].mxu0
  %v1145 = vadd.f32 0.0, %v1144
  %v1146 = vpop.f32.mrb[0].mxu0
  %v1147 = vadd.f32 0.0, %v1146
  %1148 = vmatprep.mubr.f32.mxu0 0.0
  %1149 = vmatmul.mubr.f32.gmra.mrb[0].mxu0 %v152
  %v1150 = vpop.f32.mrb[0].mxu0
  %v1151 = vadd.f32 0.0, %v1150
  %v1152 = vpop.f32.mrb[0].mxu0
  %v1153 = vadd.f32 0.0, %v1152
  %1154 = vdwg.mxu0
  %1155 = vmatprep.subr.mxu0 %v207
  %1156 = vmatpush1.msra.mxu0 %v204
  %1157 = vmatprep.subr.mxu0 0.0
  %1158 = vmatpush1.msra.mxu0 0.0
  %1159 = vmatprep.subr.mxu0 0.0
  %1160 = vmatpush1.msra.mxu0 0.0
  %1161 = vmatprep.subr.mxu0 0.0
  %1162 = vmatpush1.msra.mxu0 0.0
  %1163 = vmatprep.subr.mxu0 0.0
  %1164 = vmatpush1.msra.mxu0 0.0
  %1165 = vmatprep.subr.mxu0 0.0
  %1166 = vmatpush1.msra.mxu0 0.0
  %1167 = vmatprep.subr.mxu0 0.0
  %1168 = vmatpush1.msra.mxu0 0.0
  %1169 = vmatprep.subr.mxu0 0.0
  %1170 = vmatpush1.msra.mxu0 0.0
  %1171 = vmatprep.subr.mxu0 0.0
  %1172 = vmatpush1.msra.mxu0 0.0
  %1173 = vmatprep.subr.mxu0 0.0
  %1174 = vmatpush1.msra.mxu0 0.0
  %1175 = vmatprep.subr.mxu0 0.0
  %1176 = vmatpush1.msra.mxu0 0.0
  %1177 = vmatprep.subr.mxu0 0.0
  %1178 = vmatpush1.msra.mxu0 0.0
  %1179 = vmatprep.subr.mxu0 0.0
  %1180 = vmatpush1.msra.mxu0 0.0
  %1181 = vmatprep.subr.mxu0 0.0
  %1182 = vmatpush1.msra.mxu0 0.0
  %1183 = vmatprep.subr.mxu0 0.0
  %1184 = vmatpush1.msra.mxu0 0.0
  %1185 = vmatprep.subr.mxu0 0.0
  %1186 = vmatpush1.msra.mxu0 0.0
  %1187 = vmatprep.subr.mxu0 0.0
  %1188 = vmatpush1.msra.mxu0 0.0
  %1189 = vmatprep.subr.mxu0 0.0
  %1190 = vmatpush1.msra.mxu0 0.0
  %1191 = vmatprep.subr.mxu0 0.0
  %1192 = vmatpush1.msra.mxu0 0.0
  %1193 = vmatprep.subr.mxu0 0.0
  %1194 = vmatpush1.msra.mxu0 0.0
  %1195 = vmatprep.subr.mxu0 0.0
  %1196 = vmatpush1.msra.mxu0 0.0
  %1197 = vmatprep.subr.mxu0 0.0
  %1198 = vmatpush1.msra.mxu0 0.0
  %1199 = vmatprep.subr.mxu0 0.0
  %1200 = vmatpush1.msra.mxu0 0.0
  %1201 = vmatprep.subr.mxu0 0.0
  %1202 = vmatpush1.msra.mxu0 0.0
  %1203 = vmatprep.subr.mxu0 0.0
  %1204 = vmatpush1.msra.mxu0 0.0
  %1205 = vmatprep.subr.mxu0 0.0
  %1206 = vmatpush1.msra.mxu0 0.0
  %1207 = vmatprep.subr.mxu0 0.0
  %1208 = vmatpush1.msra.mxu0 0.0
  %1209 = vmatprep.subr.mxu0 0.0
  %1210 = vmatpush1.msra.mxu0 0.0
  %1211 = vmatprep.subr.mxu0 0.0
  %1212 = vmatpush1.msra.mxu0 0.0
  %1213 = vmatprep.subr.mxu0 0.0
  %1214 = vmatpush1.msra.mxu0 0.0
  %1215 = vmatprep.subr.mxu0 0.0
  %1216 = vmatpush1.msra.mxu0 0.0
  %1217 = vmatprep.subr.mxu0 0.0
  %1218 = vmatpush1.msra.mxu0 0.0
  %1219 = vmatprep.mubr.f32.mxu0 0.0
  %1220 = vmatmul.mubr.f32.gmra.mrb[0].mxu0 %v149
  %v1221 = vpop.f32.mrb[0].mxu0
  %v1222 = vadd.f32 0.0, %v1221
  %v1223 = vpop.f32.mrb[0].mxu0
  %v1224 = vadd.f32 0.0, %v1223
  %1225 = vmatprep.mubr.f32.mxu0 0.0
  %1226 = vmatmul.mubr.f32.gmra.mrb[0].mxu0 %v152
  %v1227 = vpop.f32.mrb[0].mxu0
  %v1228 = vadd.f32 0.0, %v1227
  %v1229 = vpop.f32.mrb[0].mxu0
  %v1230 = vadd.f32 0.0, %v1229
  %1231 = vdwg.mxu0
  %1232 = vmatprep.subr.mxu0 %v213
  %1233 = vmatpush1.msra.mxu0 %v210
  %1234 = vmatprep.subr.mxu0 0.0
  %1235 = vmatpush1.msra.mxu0 0.0
  %1236 = vmatprep.subr.mxu0 0.0
  %1237 = vmatpush1.msra.mxu0 0.0
  %1238 = vmatprep.subr.mxu0 0.0
  %1239 = vmatpush1.msra.mxu0 0.0
  %1240 = vmatprep.subr.mxu0 0.0
  %1241 = vmatpush1.msra.mxu0 0.0
  %1242 = vmatprep.subr.mxu0 0.0
  %1243 = vmatpush1.msra.mxu0 0.0
  %1244 = vmatprep.subr.mxu0 0.0
  %1245 = vmatpush1.msra.mxu0 0.0
  %1246 = vmatprep.subr.mxu0 0.0
  %1247 = vmatpush1.msra.mxu0 0.0
  %1248 = vmatprep.subr.mxu0 0.0
  %1249 = vmatpush1.msra.mxu0 0.0
  %1250 = vmatprep.subr.mxu0 0.0
  %1251 = vmatpush1.msra.mxu0 0.0
  %1252 = vmatprep.subr.mxu0 0.0
  %1253 = vmatpush1.msra.mxu0 0.0
  %1254 = vmatprep.subr.mxu0 0.0
  %1255 = vmatpush1.msra.mxu0 0.0
  %1256 = vmatprep.subr.mxu0 0.0
  %1257 = vmatpush1.msra.mxu0 0.0
  %1258 = vmatprep.subr.mxu0 0.0
  %1259 = vmatpush1.msra.mxu0 0.0
  %1260 = vmatprep.subr.mxu0 0.0
  %1261 = vmatpush1.msra.mxu0 0.0
  %1262 = vmatprep.subr.mxu0 0.0
  %1263 = vmatpush1.msra.mxu0 0.0
  %1264 = vmatprep.subr.mxu0 0.0
  %1265 = vmatpush1.msra.mxu0 0.0
  %1266 = vmatprep.subr.mxu0 0.0
  %1267 = vmatpush1.msra.mxu0 0.0
  %1268 = vmatprep.subr.mxu0 0.0
  %1269 = vmatpush1.msra.mxu0 0.0
  %1270 = vmatprep.subr.mxu0 0.0
  %1271 = vmatpush1.msra.mxu0 0.0
  %1272 = vmatprep.subr.mxu0 0.0
  %1273 = vmatpush1.msra.mxu0 0.0
  %1274 = vmatprep.subr.mxu0 0.0
  %1275 = vmatpush1.msra.mxu0 0.0
  %1276 = vmatprep.subr.mxu0 0.0
  %1277 = vmatpush1.msra.mxu0 0.0
  %1278 = vmatprep.subr.mxu0 0.0
  %1279 = vmatpush1.msra.mxu0 0.0
  %1280 = vmatprep.subr.mxu0 0.0
  %1281 = vmatpush1.msra.mxu0 0.0
  %1282 = vmatprep.subr.mxu0 0.0
  %1283 = vmatpush1.msra.mxu0 0.0
  %1284 = vmatprep.subr.mxu0 0.0
  %1285 = vmatpush1.msra.mxu0 0.0
  %1286 = vmatprep.subr.mxu0 0.0
  %1287 = vmatpush1.msra.mxu0 0.0
  %1288 = vmatprep.subr.mxu0 0.0
  %1289 = vmatpush1.msra.mxu0 0.0
  %1290 = vmatprep.subr.mxu0 0.0
  %1291 = vmatpush1.msra.mxu0 0.0
  %1292 = vmatprep.subr.mxu0 0.0
  %1293 = vmatpush1.msra.mxu0 0.0
  %1294 = vmatprep.subr.mxu0 0.0
  %1295 = vmatpush1.msra.mxu0 0.0
  %1296 = vmatprep.mubr.f32.mxu0 0.0
  %1297 = vmatmul.mubr.f32.gmra.mrb[0].mxu0 %v149
  %v1298 = vpop.f32.mrb[0].mxu0
  %v1299 = vadd.f32 0.0, %v1298
  %v1300 = vpop.f32.mrb[0].mxu0
  %v1301 = vadd.f32 0.0, %v1300
  %1302 = vmatprep.mubr.f32.mxu0 0.0
  %1303 = vmatmul.mubr.f32.gmra.mrb[0].mxu0 %v152
  %v1304 = vpop.f32.mrb[0].mxu0
  %v1305 = vadd.f32 0.0, %v1304
  %v1306 = vpop.f32.mrb[0].mxu0
  %v1307 = vadd.f32 0.0, %v1306
  %1308 = vdwg.mxu0
  %1309 = vmatprep.subr.mxu0 %v219
  %1310 = vmatpush1.msra.mxu0 %v216
  %1311 = vmatprep.subr.mxu0 0.0
  %1312 = vmatpush1.msra.mxu0 0.0
  %1313 = vmatprep.subr.mxu0 0.0
  %1314 = vmatpush1.msra.mxu0 0.0
  %1315 = vmatprep.subr.mxu0 0.0
  %1316 = vmatpush1.msra.mxu0 0.0
  %1317 = vmatprep.subr.mxu0 0.0
  %1318 = vmatpush1.msra.mxu0 0.0
  %1319 = vmatprep.subr.mxu0 0.0
  %1320 = vmatpush1.msra.mxu0 0.0
  %1321 = vmatprep.subr.mxu0 0.0
  %1322 = vmatpush1.msra.mxu0 0.0
  %1323 = vmatprep.subr.mxu0 0.0
  %1324 = vmatpush1.msra.mxu0 0.0
  %1325 = vmatprep.subr.mxu0 0.0
  %1326 = vmatpush1.msra.mxu0 0.0
  %1327 = vmatprep.subr.mxu0 0.0
  %1328 = vmatpush1.msra.mxu0 0.0
  %1329 = vmatprep.subr.mxu0 0.0
  %1330 = vmatpush1.msra.mxu0 0.0
  %1331 = vmatprep.subr.mxu0 0.0
  %1332 = vmatpush1.msra.mxu0 0.0
  %1333 = vmatprep.subr.mxu0 0.0
  %1334 = vmatpush1.msra.mxu0 0.0
  %1335 = vmatprep.subr.mxu0 0.0
  %1336 = vmatpush1.msra.mxu0 0.0
  %1337 = vmatprep.subr.mxu0 0.0
  %1338 = vmatpush1.msra.mxu0 0.0
  %1339 = vmatprep.subr.mxu0 0.0
  %1340 = vmatpush1.msra.mxu0 0.0
  %1341 = vmatprep.subr.mxu0 0.0
  %1342 = vmatpush1.msra.mxu0 0.0
  %1343 = vmatprep.subr.mxu0 0.0
  %1344 = vmatpush1.msra.mxu0 0.0
  %1345 = vmatprep.subr.mxu0 0.0
  %1346 = vmatpush1.msra.mxu0 0.0
  %1347 = vmatprep.subr.mxu0 0.0
  %1348 = vmatpush1.msra.mxu0 0.0
  %1349 = vmatprep.subr.mxu0 0.0
  %1350 = vmatpush1.msra.mxu0 0.0
  %1351 = vmatprep.subr.mxu0 0.0
  %1352 = vmatpush1.msra.mxu0 0.0
  %1353 = vmatprep.subr.mxu0 0.0
  %1354 = vmatpush1.msra.mxu0 0.0
  %1355 = vmatprep.subr.mxu0 0.0
  %1356 = vmatpush1.msra.mxu0 0.0
  %1357 = vmatprep.subr.mxu0 0.0
  %1358 = vmatpush1.msra.mxu0 0.0
  %1359 = vmatprep.subr.mxu0 0.0
  %1360 = vmatpush1.msra.mxu0 0.0
  %1361 = vmatprep.subr.mxu0 0.0
  %1362 = vmatpush1.msra.mxu0 0.0
  %1363 = vmatprep.subr.mxu0 0.0
  %1364 = vmatpush1.msra.mxu0 0.0
  %1365 = vmatprep.subr.mxu0 0.0
  %1366 = vmatpush1.msra.mxu0 0.0
  %1367 = vmatprep.subr.mxu0 0.0
  %1368 = vmatpush1.msra.mxu0 0.0
  %1369 = vmatprep.subr.mxu0 0.0
  %1370 = vmatpush1.msra.mxu0 0.0
  %1371 = vmatprep.subr.mxu0 0.0
  %1372 = vmatpush1.msra.mxu0 0.0
  %1373 = vmatprep.mubr.f32.mxu0 0.0
  %1374 = vmatmul.mubr.f32.gmra.mrb[0].mxu0 %v149
  %v1375 = vpop.f32.mrb[0].mxu0
  %v1376 = vadd.f32 0.0, %v1375
  %v1377 = vpop.f32.mrb[0].mxu0
  %v1378 = vadd.f32 0.0, %v1377
  %1379 = vmatprep.mubr.f32.mxu0 0.0
  %1380 = vmatmul.mubr.f32.gmra.mrb[0].mxu0 %v152
  %v1381 = vpop.f32.mrb[0].mxu0
  %v1382 = vadd.f32 0.0, %v1381
  %v1383 = vpop.f32.mrb[0].mxu0
  %v1384 = vadd.f32 0.0, %v1383
  %1385 = vdwg.mxu0
  %1386 = vmatprep.subr.mxu0 %v225
  %1387 = vmatpush1.msra.mxu0 %v222
  %1388 = vmatprep.subr.mxu0 0.0
  %1389 = vmatpush1.msra.mxu0 0.0
  %1390 = vmatprep.subr.mxu0 0.0
  %1391 = vmatpush1.msra.mxu0 0.0
  %1392 = vmatprep.subr.mxu0 0.0
  %1393 = vmatpush1.msra.mxu0 0.0
  %1394 = vmatprep.subr.mxu0 0.0
  %1395 = vmatpush1.msra.mxu0 0.0
  %1396 = vmatprep.subr.mxu0 0.0
  %1397 = vmatpush1.msra.mxu0 0.0
  %1398 = vmatprep.subr.mxu0 0.0
  %1399 = vmatpush1.msra.mxu0 0.0
  %1400 = vmatprep.subr.mxu0 0.0
  %1401 = vmatpush1.msra.mxu0 0.0
  %1402 = vmatprep.subr.mxu0 0.0
  %1403 = vmatpush1.msra.mxu0 0.0
  %1404 = vmatprep.subr.mxu0 0.0
  %1405 = vmatpush1.msra.mxu0 0.0
  %1406 = vmatprep.subr.mxu0 0.0
  %1407 = vmatpush1.msra.mxu0 0.0
  %1408 = vmatprep.subr.mxu0 0.0
  %1409 = vmatpush1.msra.mxu0 0.0
  %1410 = vmatprep.subr.mxu0 0.0
  %1411 = vmatpush1.msra.mxu0 0.0
  %1412 = vmatprep.subr.mxu0 0.0
  %1413 = vmatpush1.msra.mxu0 0.0
  %1414 = vmatprep.subr.mxu0 0.0
  %1415 = vmatpush1.msra.mxu0 0.0
  %1416 = vmatprep.subr.mxu0 0.0
  %1417 = vmatpush1.msra.mxu0 0.0
  %1418 = vmatprep.subr.mxu0 0.0
  %1419 = vmatpush1.msra.mxu0 0.0
  %1420 = vmatprep.subr.mxu0 0.0
  %1421 = vmatpush1.msra.mxu0 0.0
  %1422 = vmatprep.subr.mxu0 0.0
  %1423 = vmatpush1.msra.mxu0 0.0
  %1424 = vmatprep.subr.mxu0 0.0
  %1425 = vmatpush1.msra.mxu0 0.0
  %1426 = vmatprep.subr.mxu0 0.0
  %1427 = vmatpush1.msra.mxu0 0.0
  %1428 = vmatprep.subr.mxu0 0.0
  %1429 = vmatpush1.msra.mxu0 0.0
  %1430 = vmatprep.subr.mxu0 0.0
  %1431 = vmatpush1.msra.mxu0 0.0
  %1432 = vmatprep.subr.mxu0 0.0
  %1433 = vmatpush1.msra.mxu0 0.0
  %1434 = vmatprep.subr.mxu0 0.0
  %1435 = vmatpush1.msra.mxu0 0.0
  %1436 = vmatprep.subr.mxu0 0.0
  %1437 = vmatpush1.msra.mxu0 0.0
  %1438 = vmatprep.subr.mxu0 0.0
  %1439 = vmatpush1.msra.mxu0 0.0
  %1440 = vmatprep.subr.mxu0 0.0
  %1441 = vmatpush1.msra.mxu0 0.0
  %1442 = vmatprep.subr.mxu0 0.0
  %1443 = vmatpush1.msra.mxu0 0.0
  %1444 = vmatprep.subr.mxu0 0.0
  %1445 = vmatpush1.msra.mxu0 0.0
  %1446 = vmatprep.subr.mxu0 0.0
  %1447 = vmatpush1.msra.mxu0 0.0
  %1448 = vmatprep.subr.mxu0 0.0
  %1449 = vmatpush1.msra.mxu0 0.0
  %1450 = vmatprep.mubr.f32.mxu0 0.0
  %1451 = vmatmul.mubr.f32.gmra.mrb[0].mxu0 %v149
  %v1452 = vpop.f32.mrb[0].mxu0
  %v1453 = vadd.f32 0.0, %v1452
  %v1454 = vpop.f32.mrb[0].mxu0
  %v1455 = vadd.f32 0.0, %v1454
  %1456 = vmatprep.mubr.f32.mxu0 0.0
  %1457 = vmatmul.mubr.f32.gmra.mrb[0].mxu0 %v152
  %v1458 = vpop.f32.mrb[0].mxu0
  %v1459 = vadd.f32 0.0, %v1458
  %v1460 = vpop.f32.mrb[0].mxu0
  %v1461 = vadd.f32 0.0, %v1460
  %1462 = vdwg.mxu0
  %1463 = vmatprep.subr.mxu0 %v231
  %1464 = vmatpush1.msra.mxu0 %v228
  %1465 = vmatprep.subr.mxu0 0.0
  %1466 = vmatpush1.msra.mxu0 0.0
  %1467 = vmatprep.subr.mxu0 0.0
  %1468 = vmatpush1.msra.mxu0 0.0
  %1469 = vmatprep.subr.mxu0 0.0
  %1470 = vmatpush1.msra.mxu0 0.0
  %1471 = vmatprep.subr.mxu0 0.0
  %1472 = vmatpush1.msra.mxu0 0.0
  %1473 = vmatprep.subr.mxu0 0.0
  %1474 = vmatpush1.msra.mxu0 0.0
  %1475 = vmatprep.subr.mxu0 0.0
  %1476 = vmatpush1.msra.mxu0 0.0
  %1477 = vmatprep.subr.mxu0 0.0
  %1478 = vmatpush1.msra.mxu0 0.0
  %1479 = vmatprep.subr.mxu0 0.0
  %1480 = vmatpush1.msra.mxu0 0.0
  %1481 = vmatprep.subr.mxu0 0.0
  %1482 = vmatpush1.msra.mxu0 0.0
  %1483 = vmatprep.subr.mxu0 0.0
  %1484 = vmatpush1.msra.mxu0 0.0
  %1485 = vmatprep.subr.mxu0 0.0
  %1486 = vmatpush1.msra.mxu0 0.0
  %1487 = vmatprep.subr.mxu0 0.0
  %1488 = vmatpush1.msra.mxu0 0.0
  %1489 = vmatprep.subr.mxu0 0.0
  %1490 = vmatpush1.msra.mxu0 0.0
  %1491 = vmatprep.subr.mxu0 0.0
  %1492 = vmatpush1.msra.mxu0 0.0
  %1493 = vmatprep.subr.mxu0 0.0
  %1494 = vmatpush1.msra.mxu0 0.0
  %1495 = vmatprep.subr.mxu0 0.0
  %1496 = vmatpush1.msra.mxu0 0.0
  %1497 = vmatprep.subr.mxu0 0.0
  %1498 = vmatpush1.msra.mxu0 0.0
  %1499 = vmatprep.subr.mxu0 0.0
  %1500 = vmatpush1.msra.mxu0 0.0
  %1501 = vmatprep.subr.mxu0 0.0
  %1502 = vmatpush1.msra.mxu0 0.0
  %1503 = vmatprep.subr.mxu0 0.0
  %1504 = vmatpush1.msra.mxu0 0.0
  %1505 = vmatprep.subr.mxu0 0.0
  %1506 = vmatpush1.msra.mxu0 0.0
  %1507 = vmatprep.subr.mxu0 0.0
  %1508 = vmatpush1.msra.mxu0 0.0
  %1509 = vmatprep.subr.mxu0 0.0
  %1510 = vmatpush1.msra.mxu0 0.0
  %1511 = vmatprep.subr.mxu0 0.0
  %1512 = vmatpush1.msra.mxu0 0.0
  %1513 = vmatprep.subr.mxu0 0.0
  %1514 = vmatpush1.msra.mxu0 0.0
  %1515 = vmatprep.subr.mxu0 0.0
  %1516 = vmatpush1.msra.mxu0 0.0
  %1517 = vmatprep.subr.mxu0 0.0
  %1518 = vmatpush1.msra.mxu0 0.0
  %1519 = vmatprep.subr.mxu0 0.0
  %1520 = vmatpush1.msra.mxu0 0.0
  %1521 = vmatprep.subr.mxu0 0.0
  %1522 = vmatpush1.msra.mxu0 0.0
  %1523 = vmatprep.subr.mxu0 0.0
  %1524 = vmatpush1.msra.mxu0 0.0
  %1525 = vmatprep.subr.mxu0 0.0
  %1526 = vmatpush1.msra.mxu0 0.0
  %1527 = vmatprep.mubr.f32.mxu0 0.0
  %1528 = vmatmul.mubr.f32.gmra.mrb[0].mxu0 %v149
  %v1529 = vpop.f32.mrb[0].mxu0
  %v1530 = vadd.f32 0.0, %v1529
  %v1531 = vpop.f32.mrb[0].mxu0
  %v1532 = vadd.f32 0.0, %v1531
  %1533 = vmatprep.mubr.f32.mxu0 0.0
  %1534 = vmatmul.mubr.f32.gmra.mrb[0].mxu0 %v152
  %v1535 = vpop.f32.mrb[0].mxu0
  %v1536 = vadd.f32 0.0, %v1535
  %v1537 = vpop.f32.mrb[0].mxu0
  %v1538 = vadd.f32 0.0, %v1537
  %1539 = vdwg.mxu0
  %1540 = vmatprep.subr.mxu0 %v237
  %1541 = vmatpush1.msra.mxu0 %v234
  %1542 = vmatprep.subr.mxu0 0.0
  %1543 = vmatpush1.msra.mxu0 0.0
  %1544 = vmatprep.subr.mxu0 0.0
  %1545 = vmatpush1.msra.mxu0 0.0
  %1546 = vmatprep.subr.mxu0 0.0
  %1547 = vmatpush1.msra.mxu0 0.0
  %1548 = vmatprep.subr.mxu0 0.0
  %1549 = vmatpush1.msra.mxu0 0.0
  %1550 = vmatprep.subr.mxu0 0.0
  %1551 = vmatpush1.msra.mxu0 0.0
  %1552 = vmatprep.subr.mxu0 0.0
  %1553 = vmatpush1.msra.mxu0 0.0
  %1554 = vmatprep.subr.mxu0 0.0
  %1555 = vmatpush1.msra.mxu0 0.0
  %1556 = vmatprep.subr.mxu0 0.0
  %1557 = vmatpush1.msra.mxu0 0.0
  %1558 = vmatprep.subr.mxu0 0.0
  %1559 = vmatpush1.msra.mxu0 0.0
  %1560 = vmatprep.subr.mxu0 0.0
  %1561 = vmatpush1.msra.mxu0 0.0
  %1562 = vmatprep.subr.mxu0 0.0
  %1563 = vmatpush1.msra.mxu0 0.0
  %1564 = vmatprep.subr.mxu0 0.0
  %1565 = vmatpush1.msra.mxu0 0.0
  %1566 = vmatprep.subr.mxu0 0.0
  %1567 = vmatpush1.msra.mxu0 0.0
  %1568 = vmatprep.subr.mxu0 0.0
  %1569 = vmatpush1.msra.mxu0 0.0
  %1570 = vmatprep.subr.mxu0 0.0
  %1571 = vmatpush1.msra.mxu0 0.0
  %1572 = vmatprep.subr.mxu0 0.0
  %1573 = vmatpush1.msra.mxu0 0.0
  %1574 = vmatprep.subr.mxu0 0.0
  %1575 = vmatpush1.msra.mxu0 0.0
  %1576 = vmatprep.subr.mxu0 0.0
  %1577 = vmatpush1.msra.mxu0 0.0
  %1578 = vmatprep.subr.mxu0 0.0
  %1579 = vmatpush1.msra.mxu0 0.0
  %1580 = vmatprep.subr.mxu0 0.0
  %1581 = vmatpush1.msra.mxu0 0.0
  %1582 = vmatprep.subr.mxu0 0.0
  %1583 = vmatpush1.msra.mxu0 0.0
  %1584 = vmatprep.subr.mxu0 0.0
  %1585 = vmatpush1.msra.mxu0 0.0
  %1586 = vmatprep.subr.mxu0 0.0
  %1587 = vmatpush1.msra.mxu0 0.0
  %1588 = vmatprep.subr.mxu0 0.0
  %1589 = vmatpush1.msra.mxu0 0.0
  %1590 = vmatprep.subr.mxu0 0.0
  %1591 = vmatpush1.msra.mxu0 0.0
  %1592 = vmatprep.subr.mxu0 0.0
  %1593 = vmatpush1.msra.mxu0 0.0
  %1594 = vmatprep.subr.mxu0 0.0
  %1595 = vmatpush1.msra.mxu0 0.0
  %1596 = vmatprep.subr.mxu0 0.0
  %1597 = vmatpush1.msra.mxu0 0.0
  %1598 = vmatprep.subr.mxu0 0.0
  %1599 = vmatpush1.msra.mxu0 0.0
  %1600 = vmatprep.subr.mxu0 0.0
  %1601 = vmatpush1.msra.mxu0 0.0
  %1602 = vmatprep.subr.mxu0 0.0
  %1603 = vmatpush1.msra.mxu0 0.0
  %1604 = vmatprep.mubr.f32.mxu0 0.0
  %1605 = vmatmul.mubr.f32.gmra.mrb[0].mxu0 %v149
  %v1606 = vpop.f32.mrb[0].mxu0
  %v1607 = vadd.f32 0.0, %v1606
  %v1608 = vpop.f32.mrb[0].mxu0
  %v1609 = vadd.f32 0.0, %v1608
  %1610 = vmatprep.mubr.f32.mxu0 0.0
  %1611 = vmatmul.mubr.f32.gmra.mrb[0].mxu0 %v152
  %v1612 = vpop.f32.mrb[0].mxu0
  %v1613 = vadd.f32 0.0, %v1612
  %v1614 = vpop.f32.mrb[0].mxu0
  %v1615 = vadd.f32 0.0, %v1614
  %1616 = vdwg.mxu0
  %1617 = vmatprep.subr.mxu0 %v243
  %1618 = vmatpush1.msra.mxu0 %v240
  %1619 = vmatprep.subr.mxu0 0.0
  %1620 = vmatpush1.msra.mxu0 0.0
  %1621 = vmatprep.subr.mxu0 0.0
  %1622 = vmatpush1.msra.mxu0 0.0
  %1623 = vmatprep.subr.mxu0 0.0
  %1624 = vmatpush1.msra.mxu0 0.0
  %1625 = vmatprep.subr.mxu0 0.0
  %1626 = vmatpush1.msra.mxu0 0.0
  %1627 = vmatprep.subr.mxu0 0.0
  %1628 = vmatpush1.msra.mxu0 0.0
  %1629 = vmatprep.subr.mxu0 0.0
  %1630 = vmatpush1.msra.mxu0 0.0
  %1631 = vmatprep.subr.mxu0 0.0
  %1632 = vmatpush1.msra.mxu0 0.0
  %1633 = vmatprep.subr.mxu0 0.0
  %1634 = vmatpush1.msra.mxu0 0.0
  %1635 = vmatprep.subr.mxu0 0.0
  %1636 = vmatpush1.msra.mxu0 0.0
  %1637 = vmatprep.subr.mxu0 0.0
  %1638 = vmatpush1.msra.mxu0 0.0
  %1639 = vmatprep.subr.mxu0 0.0
  %1640 = vmatpush1.msra.mxu0 0.0
  %1641 = vmatprep.subr.mxu0 0.0
  %1642 = vmatpush1.msra.mxu0 0.0
  %1643 = vmatprep.subr.mxu0 0.0
  %1644 = vmatpush1.msra.mxu0 0.0
  %1645 = vmatprep.subr.mxu0 0.0
  %1646 = vmatpush1.msra.mxu0 0.0
  %1647 = vmatprep.subr.mxu0 0.0
  %1648 = vmatpush1.msra.mxu0 0.0
  %1649 = vmatprep.subr.mxu0 0.0
  %1650 = vmatpush1.msra.mxu0 0.0
  %1651 = vmatprep.subr.mxu0 0.0
  %1652 = vmatpush1.msra.mxu0 0.0
  %1653 = vmatprep.subr.mxu0 0.0
  %1654 = vmatpush1.msra.mxu0 0.0
  %1655 = vmatprep.subr.mxu0 0.0
  %1656 = vmatpush1.msra.mxu0 0.0
  %1657 = vmatprep.subr.mxu0 0.0
  %1658 = vmatpush1.msra.mxu0 0.0
  %1659 = vmatprep.subr.mxu0 0.0
  %1660 = vmatpush1.msra.mxu0 0.0
  %1661 = vmatprep.subr.mxu0 0.0
  %1662 = vmatpush1.msra.mxu0 0.0
  %1663 = vmatprep.subr.mxu0 0.0
  %1664 = vmatpush1.msra.mxu0 0.0
  %1665 = vmatprep.subr.mxu0 0.0
  %1666 = vmatpush1.msra.mxu0 0.0
  %1667 = vmatprep.subr.mxu0 0.0
  %1668 = vmatpush1.msra.mxu0 0.0
  %1669 = vmatprep.subr.mxu0 0.0
  %1670 = vmatpush1.msra.mxu0 0.0
  %1671 = vmatprep.subr.mxu0 0.0
  %1672 = vmatpush1.msra.mxu0 0.0
  %1673 = vmatprep.subr.mxu0 0.0
  %1674 = vmatpush1.msra.mxu0 0.0
  %1675 = vmatprep.subr.mxu0 0.0
  %1676 = vmatpush1.msra.mxu0 0.0
  %1677 = vmatprep.subr.mxu0 0.0
  %1678 = vmatpush1.msra.mxu0 0.0
  %1679 = vmatprep.subr.mxu0 0.0
  %1680 = vmatpush1.msra.mxu0 0.0
  %1681 = vmatprep.mubr.f32.mxu0 0.0
  %1682 = vmatmul.mubr.f32.gmra.mrb[0].mxu0 %v149
  %v1683 = vpop.f32.mrb[0].mxu0
  %v1684 = vadd.f32 0.0, %v1683
  %v1685 = vpop.f32.mrb[0].mxu0
  %v1686 = vadd.f32 0.0, %v1685
  %1687 = vmatprep.mubr.f32.mxu0 0.0
  %1688 = vmatmul.mubr.f32.gmra.mrb[0].mxu0 %v152
  %v1689 = vpop.f32.mrb[0].mxu0
  %v1690 = vadd.f32 0.0, %v1689
  %v1691 = vpop.f32.mrb[0].mxu0
  %v1692 = vadd.f32 0.0, %v1691
  %1693 = vdwg.mxu0
  %1694 = vmatprep.subr.mxu0 %v249
  %1695 = vmatpush1.msra.mxu0 %v246
  %1696 = vmatprep.subr.mxu0 0.0
  %1697 = vmatpush1.msra.mxu0 0.0
  %1698 = vmatprep.subr.mxu0 0.0
  %1699 = vmatpush1.msra.mxu0 0.0
  %1700 = vmatprep.subr.mxu0 0.0
  %1701 = vmatpush1.msra.mxu0 0.0
  %1702 = vmatprep.subr.mxu0 0.0
  %1703 = vmatpush1.msra.mxu0 0.0
  %1704 = vmatprep.subr.mxu0 0.0
  %1705 = vmatpush1.msra.mxu0 0.0
  %1706 = vmatprep.subr.mxu0 0.0
  %1707 = vmatpush1.msra.mxu0 0.0
  %1708 = vmatprep.subr.mxu0 0.0
  %1709 = vmatpush1.msra.mxu0 0.0
  %1710 = vmatprep.subr.mxu0 0.0
  %1711 = vmatpush1.msra.mxu0 0.0
  %1712 = vmatprep.subr.mxu0 0.0
  %1713 = vmatpush1.msra.mxu0 0.0
  %1714 = vmatprep.subr.mxu0 0.0
  %1715 = vmatpush1.msra.mxu0 0.0
  %1716 = vmatprep.subr.mxu0 0.0
  %1717 = vmatpush1.msra.mxu0 0.0
  %1718 = vmatprep.subr.mxu0 0.0
  %1719 = vmatpush1.msra.mxu0 0.0
  %1720 = vmatprep.subr.mxu0 0.0
  %1721 = vmatpush1.msra.mxu0 0.0
  %1722 = vmatprep.subr.mxu0 0.0
  %1723 = vmatpush1.msra.mxu0 0.0
  %1724 = vmatprep.subr.mxu0 0.0
  %1725 = vmatpush1.msra.mxu0 0.0
  %1726 = vmatprep.subr.mxu0 0.0
  %1727 = vmatpush1.msra.mxu0 0.0
  %1728 = vmatprep.subr.mxu0 0.0
  %1729 = vmatpush1.msra.mxu0 0.0
  %1730 = vmatprep.subr.mxu0 0.0
  %1731 = vmatpush1.msra.mxu0 0.0
  %1732 = vmatprep.subr.mxu0 0.0
  %1733 = vmatpush1.msra.mxu0 0.0
  %1734 = vmatprep.subr.mxu0 0.0
  %1735 = vmatpush1.msra.mxu0 0.0
  %1736 = vmatprep.subr.mxu0 0.0
  %1737 = vmatpush1.msra.mxu0 0.0
  %1738 = vmatprep.subr.mxu0 0.0
  %1739 = vmatpush1.msra.mxu0 0.0
  %1740 = vmatprep.subr.mxu0 0.0
  %1741 = vmatpush1.msra.mxu0 0.0
  %1742 = vmatprep.subr.mxu0 0.0
  %1743 = vmatpush1.msra.mxu0 0.0
  %1744 = vmatprep.subr.mxu0 0.0
  %1745 = vmatpush1.msra.mxu0 0.0
  %1746 = vmatprep.subr.mxu0 0.0
  %1747 = vmatpush1.msra.mxu0 0.0
  %1748 = vmatprep.subr.mxu0 0.0
  %1749 = vmatpush1.msra.mxu0 0.0
  %1750 = vmatprep.subr.mxu0 0.0
  %1751 = vmatpush1.msra.mxu0 0.0
  %1752 = vmatprep.subr.mxu0 0.0
  %1753 = vmatpush1.msra.mxu0 0.0
  %1754 = vmatprep.subr.mxu0 0.0
  %1755 = vmatpush1.msra.mxu0 0.0
  %1756 = vmatprep.subr.mxu0 0.0
  %1757 = vmatpush1.msra.mxu0 0.0
  %1758 = vmatprep.mubr.f32.mxu0 0.0
  %1759 = vmatmul.mubr.f32.gmra.mrb[0].mxu0 %v149
  %v1760 = vpop.f32.mrb[0].mxu0
  %v1761 = vadd.f32 0.0, %v1760
  %v1762 = vpop.f32.mrb[0].mxu0
  %v1763 = vadd.f32 0.0, %v1762
  %1764 = vmatprep.mubr.f32.mxu0 0.0
  %1765 = vmatmul.mubr.f32.gmra.mrb[0].mxu0 %v152
  %v1766 = vpop.f32.mrb[0].mxu0
  %v1767 = vadd.f32 0.0, %v1766
  %v1768 = vpop.f32.mrb[0].mxu0
  %v1769 = vadd.f32 0.0, %v1768
  %1770 = vdwg.mxu0
  %1771 = vmatprep.subr.mxu0 %v255
  %1772 = vmatpush1.msra.mxu0 %v252
  %1773 = vmatprep.subr.mxu0 0.0
  %1774 = vmatpush1.msra.mxu0 0.0
  %1775 = vmatprep.subr.mxu0 0.0
  %1776 = vmatpush1.msra.mxu0 0.0
  %1777 = vmatprep.subr.mxu0 0.0
  %1778 = vmatpush1.msra.mxu0 0.0
  %1779 = vmatprep.subr.mxu0 0.0
  %1780 = vmatpush1.msra.mxu0 0.0
  %1781 = vmatprep.subr.mxu0 0.0
  %1782 = vmatpush1.msra.mxu0 0.0
  %1783 = vmatprep.subr.mxu0 0.0
  %1784 = vmatpush1.msra.mxu0 0.0
  %1785 = vmatprep.subr.mxu0 0.0
  %1786 = vmatpush1.msra.mxu0 0.0
  %1787 = vmatprep.subr.mxu0 0.0
  %1788 = vmatpush1.msra.mxu0 0.0
  %1789 = vmatprep.subr.mxu0 0.0
  %1790 = vmatpush1.msra.mxu0 0.0
  %1791 = vmatprep.subr.mxu0 0.0
  %1792 = vmatpush1.msra.mxu0 0.0
  %1793 = vmatprep.subr.mxu0 0.0
  %1794 = vmatpush1.msra.mxu0 0.0
  %1795 = vmatprep.subr.mxu0 0.0
  %1796 = vmatpush1.msra.mxu0 0.0
  %1797 = vmatprep.subr.mxu0 0.0
  %1798 = vmatpush1.msra.mxu0 0.0
  %1799 = vmatprep.subr.mxu0 0.0
  %1800 = vmatpush1.msra.mxu0 0.0
  %1801 = vmatprep.subr.mxu0 0.0
  %1802 = vmatpush1.msra.mxu0 0.0
  %1803 = vmatprep.subr.mxu0 0.0
  %1804 = vmatpush1.msra.mxu0 0.0
  %1805 = vmatprep.subr.mxu0 0.0
  %1806 = vmatpush1.msra.mxu0 0.0
  %1807 = vmatprep.subr.mxu0 0.0
  %1808 = vmatpush1.msra.mxu0 0.0
  %1809 = vmatprep.subr.mxu0 0.0
  %1810 = vmatpush1.msra.mxu0 0.0
  %1811 = vmatprep.subr.mxu0 0.0
  %1812 = vmatpush1.msra.mxu0 0.0
  %1813 = vmatprep.subr.mxu0 0.0
  %1814 = vmatpush1.msra.mxu0 0.0
  %1815 = vmatprep.subr.mxu0 0.0
  %1816 = vmatpush1.msra.mxu0 0.0
  %1817 = vmatprep.subr.mxu0 0.0
  %1818 = vmatpush1.msra.mxu0 0.0
  %1819 = vmatprep.subr.mxu0 0.0
  %1820 = vmatpush1.msra.mxu0 0.0
  %1821 = vmatprep.subr.mxu0 0.0
  %1822 = vmatpush1.msra.mxu0 0.0
  %1823 = vmatprep.subr.mxu0 0.0
  %1824 = vmatpush1.msra.mxu0 0.0
  %1825 = vmatprep.subr.mxu0 0.0
  %1826 = vmatpush1.msra.mxu0 0.0
  %1827 = vmatprep.subr.mxu0 0.0
  %1828 = vmatpush1.msra.mxu0 0.0
  %1829 = vmatprep.subr.mxu0 0.0
  %1830 = vmatpush1.msra.mxu0 0.0
  %1831 = vmatprep.subr.mxu0 0.0
  %1832 = vmatpush1.msra.mxu0 0.0
  %1833 = vmatprep.subr.mxu0 0.0
  %1834 = vmatpush1.msra.mxu0 0.0
  %1835 = vmatprep.mubr.f32.mxu0 0.0
  %1836 = vmatmul.mubr.f32.gmra.mrb[0].mxu0 %v149
  %v1837 = vpop.f32.mrb[0].mxu0
  %v1838 = vadd.f32 0.0, %v1837
  %v1839 = vpop.f32.mrb[0].mxu0
  %v1840 = vadd.f32 0.0, %v1839
  %1841 = vmatprep.mubr.f32.mxu0 0.0
  %1842 = vmatmul.mubr.f32.gmra.mrb[0].mxu0 %v152
  %v1843 = vpop.f32.mrb[0].mxu0
  %v1844 = vadd.f32 0.0, %v1843
  %v1845 = vpop.f32.mrb[0].mxu0
  %v1846 = vadd.f32 0.0, %v1845
  %1847 = vdwg.mxu0
  %1848 = vmatprep.subr.mxu0 %v261
  %1849 = vmatpush1.msra.mxu0 %v258
  %1850 = vmatprep.subr.mxu0 0.0
  %1851 = vmatpush1.msra.mxu0 0.0
  %1852 = vmatprep.subr.mxu0 0.0
  %1853 = vmatpush1.msra.mxu0 0.0
  %1854 = vmatprep.subr.mxu0 0.0
  %1855 = vmatpush1.msra.mxu0 0.0
  %1856 = vmatprep.subr.mxu0 0.0
  %1857 = vmatpush1.msra.mxu0 0.0
  %1858 = vmatprep.subr.mxu0 0.0
  %1859 = vmatpush1.msra.mxu0 0.0
  %1860 = vmatprep.subr.mxu0 0.0
  %1861 = vmatpush1.msra.mxu0 0.0
  %1862 = vmatprep.subr.mxu0 0.0
  %1863 = vmatpush1.msra.mxu0 0.0
  %1864 = vmatprep.subr.mxu0 0.0
  %1865 = vmatpush1.msra.mxu0 0.0
  %1866 = vmatprep.subr.mxu0 0.0
  %1867 = vmatpush1.msra.mxu0 0.0
  %1868 = vmatprep.subr.mxu0 0.0
  %1869 = vmatpush1.msra.mxu0 0.0
  %1870 = vmatprep.subr.mxu0 0.0
  %1871 = vmatpush1.msra.mxu0 0.0
  %1872 = vmatprep.subr.mxu0 0.0
  %1873 = vmatpush1.msra.mxu0 0.0
  %1874 = vmatprep.subr.mxu0 0.0
  %1875 = vmatpush1.msra.mxu0 0.0
  %1876 = vmatprep.subr.mxu0 0.0
  %1877 = vmatpush1.msra.mxu0 0.0
  %1878 = vmatprep.subr.mxu0 0.0
  %1879 = vmatpush1.msra.mxu0 0.0
  %1880 = vmatprep.subr.mxu0 0.0
  %1881 = vmatpush1.msra.mxu0 0.0
  %1882 = vmatprep.subr.mxu0 0.0
  %1883 = vmatpush1.msra.mxu0 0.0
  %1884 = vmatprep.subr.mxu0 0.0
  %1885 = vmatpush1.msra.mxu0 0.0
  %1886 = vmatprep.subr.mxu0 0.0
  %1887 = vmatpush1.msra.mxu0 0.0
  %1888 = vmatprep.subr.mxu0 0.0
  %1889 = vmatpush1.msra.mxu0 0.0
  %1890 = vmatprep.subr.mxu0 0.0
  %1891 = vmatpush1.msra.mxu0 0.0
  %1892 = vmatprep.subr.mxu0 0.0
  %1893 = vmatpush1.msra.mxu0 0.0
  %1894 = vmatprep.subr.mxu0 0.0
  %1895 = vmatpush1.msra.mxu0 0.0
  %1896 = vmatprep.subr.mxu0 0.0
  %1897 = vmatpush1.msra.mxu0 0.0
  %1898 = vmatprep.subr.mxu0 0.0
  %1899 = vmatpush1.msra.mxu0 0.0
  %1900 = vmatprep.subr.mxu0 0.0
  %1901 = vmatpush1.msra.mxu0 0.0
  %1902 = vmatprep.subr.mxu0 0.0
  %1903 = vmatpush1.msra.mxu0 0.0
  %1904 = vmatprep.subr.mxu0 0.0
  %1905 = vmatpush1.msra.mxu0 0.0
  %1906 = vmatprep.subr.mxu0 0.0
  %1907 = vmatpush1.msra.mxu0 0.0
  %1908 = vmatprep.subr.mxu0 0.0
  %1909 = vmatpush1.msra.mxu0 0.0
  %1910 = vmatprep.subr.mxu0 0.0
  %1911 = vmatpush1.msra.mxu0 0.0
  %1912 = vmatprep.mubr.f32.mxu0 0.0
  %1913 = vmatmul.mubr.f32.gmra.mrb[0].mxu0 %v149
  %v1914 = vpop.f32.mrb[0].mxu0
  %v1915 = vadd.f32 0.0, %v1914
  %v1916 = vpop.f32.mrb[0].mxu0
  %v1917 = vadd.f32 0.0, %v1916
  %1918 = vmatprep.mubr.f32.mxu0 0.0
  %1919 = vmatmul.mubr.f32.gmra.mrb[0].mxu0 %v152
  %v1920 = vpop.f32.mrb[0].mxu0
  %v1921 = vadd.f32 0.0, %v1920
  %v1922 = vpop.f32.mrb[0].mxu0
  %v1923 = vadd.f32 0.0, %v1922
  %1924 = vdwg.mxu0
  %1925 = vmatprep.subr.mxu0 %v267
  %1926 = vmatpush1.msra.mxu0 %v264
  %1927 = vmatprep.subr.mxu0 0.0
  %1928 = vmatpush1.msra.mxu0 0.0
  %1929 = vmatprep.subr.mxu0 0.0
  %1930 = vmatpush1.msra.mxu0 0.0
  %1931 = vmatprep.subr.mxu0 0.0
  %1932 = vmatpush1.msra.mxu0 0.0
  %1933 = vmatprep.subr.mxu0 0.0
  %1934 = vmatpush1.msra.mxu0 0.0
  %1935 = vmatprep.subr.mxu0 0.0
  %1936 = vmatpush1.msra.mxu0 0.0
  %1937 = vmatprep.subr.mxu0 0.0
  %1938 = vmatpush1.msra.mxu0 0.0
  %1939 = vmatprep.subr.mxu0 0.0
  %1940 = vmatpush1.msra.mxu0 0.0
  %1941 = vmatprep.subr.mxu0 0.0
  %1942 = vmatpush1.msra.mxu0 0.0
  %1943 = vmatprep.subr.mxu0 0.0
  %1944 = vmatpush1.msra.mxu0 0.0
  %1945 = vmatprep.subr.mxu0 0.0
  %1946 = vmatpush1.msra.mxu0 0.0
  %1947 = vmatprep.subr.mxu0 0.0
  %1948 = vmatpush1.msra.mxu0 0.0
  %1949 = vmatprep.subr.mxu0 0.0
  %1950 = vmatpush1.msra.mxu0 0.0
  %1951 = vmatprep.subr.mxu0 0.0
  %1952 = vmatpush1.msra.mxu0 0.0
  %1953 = vmatprep.subr.mxu0 0.0
  %1954 = vmatpush1.msra.mxu0 0.0
  %1955 = vmatprep.subr.mxu0 0.0
  %1956 = vmatpush1.msra.mxu0 0.0
  %1957 = vmatprep.subr.mxu0 0.0
  %1958 = vmatpush1.msra.mxu0 0.0
  %1959 = vmatprep.subr.mxu0 0.0
  %1960 = vmatpush1.msra.mxu0 0.0
  %1961 = vmatprep.subr.mxu0 0.0
  %1962 = vmatpush1.msra.mxu0 0.0
  %1963 = vmatprep.subr.mxu0 0.0
  %1964 = vmatpush1.msra.mxu0 0.0
  %1965 = vmatprep.subr.mxu0 0.0
  %1966 = vmatpush1.msra.mxu0 0.0
  %1967 = vmatprep.subr.mxu0 0.0
  %1968 = vmatpush1.msra.mxu0 0.0
  %1969 = vmatprep.subr.mxu0 0.0
  %1970 = vmatpush1.msra.mxu0 0.0
  %1971 = vmatprep.subr.mxu0 0.0
  %1972 = vmatpush1.msra.mxu0 0.0
  %1973 = vmatprep.subr.mxu0 0.0
  %1974 = vmatpush1.msra.mxu0 0.0
  %1975 = vmatprep.subr.mxu0 0.0
  %1976 = vmatpush1.msra.mxu0 0.0
  %1977 = vmatprep.subr.mxu0 0.0
  %1978 = vmatpush1.msra.mxu0 0.0
  %1979 = vmatprep.subr.mxu0 0.0
  %1980 = vmatpush1.msra.mxu0 0.0
  %1981 = vmatprep.subr.mxu0 0.0
  %1982 = vmatpush1.msra.mxu0 0.0
  %1983 = vmatprep.subr.mxu0 0.0
  %1984 = vmatpush1.msra.mxu0 0.0
  %1985 = vmatprep.subr.mxu0 0.0
  %1986 = vmatpush1.msra.mxu0 0.0
  %1987 = vmatprep.subr.mxu0 0.0
  %1988 = vmatpush1.msra.mxu0 0.0
  %1989 = vmatprep.mubr.f32.mxu0 0.0
  %1990 = vmatmul.mubr.f32.gmra.mrb[0].mxu0 %v149
  %v1991 = vpop.f32.mrb[0].mxu0
  %v1992 = vadd.f32 0.0, %v1991
  %v1993 = vpop.f32.mrb[0].mxu0
  %v1994 = vadd.f32 0.0, %v1993
  %1995 = vmatprep.mubr.f32.mxu0 0.0
  %1996 = vmatmul.mubr.f32.gmra.mrb[0].mxu0 %v152
  %v1997 = vpop.f32.mrb[0].mxu0
  %v1998 = vadd.f32 0.0, %v1997
  %v1999 = vpop.f32.mrb[0].mxu0
  %v2000 = vadd.f32 0.0, %v1999
  %2001 = vdwg.mxu0
  %2002 = vmatprep.subr.mxu0 %v273
  %2003 = vmatpush1.msra.mxu0 %v270
  %2004 = vmatprep.subr.mxu0 0.0
  %2005 = vmatpush1.msra.mxu0 0.0
  %2006 = vmatprep.subr.mxu0 0.0
  %2007 = vmatpush1.msra.mxu0 0.0
  %2008 = vmatprep.subr.mxu0 0.0
  %2009 = vmatpush1.msra.mxu0 0.0
  %2010 = vmatprep.subr.mxu0 0.0
  %2011 = vmatpush1.msra.mxu0 0.0
  %2012 = vmatprep.subr.mxu0 0.0
  %2013 = vmatpush1.msra.mxu0 0.0
  %2014 = vmatprep.subr.mxu0 0.0
  %2015 = vmatpush1.msra.mxu0 0.0
  %2016 = vmatprep.subr.mxu0 0.0
  %2017 = vmatpush1.msra.mxu0 0.0
  %2018 = vmatprep.subr.mxu0 0.0
  %2019 = vmatpush1.msra.mxu0 0.0
  %2020 = vmatprep.subr.mxu0 0.0
  %2021 = vmatpush1.msra.mxu0 0.0
  %2022 = vmatprep.subr.mxu0 0.0
  %2023 = vmatpush1.msra.mxu0 0.0
  %2024 = vmatprep.subr.mxu0 0.0
  %2025 = vmatpush1.msra.mxu0 0.0
  %2026 = vmatprep.subr.mxu0 0.0
  %2027 = vmatpush1.msra.mxu0 0.0
  %2028 = vmatprep.subr.mxu0 0.0
  %2029 = vmatpush1.msra.mxu0 0.0
  %2030 = vmatprep.subr.mxu0 0.0
  %2031 = vmatpush1.msra.mxu0 0.0
  %2032 = vmatprep.subr.mxu0 0.0
  %2033 = vmatpush1.msra.mxu0 0.0
  %2034 = vmatprep.subr.mxu0 0.0
  %2035 = vmatpush1.msra.mxu0 0.0
  %2036 = vmatprep.subr.mxu0 0.0
  %2037 = vmatpush1.msra.mxu0 0.0
  %2038 = vmatprep.subr.mxu0 0.0
  %2039 = vmatpush1.msra.mxu0 0.0
  %2040 = vmatprep.subr.mxu0 0.0
  %2041 = vmatpush1.msra.mxu0 0.0
  %2042 = vmatprep.subr.mxu0 0.0
  %2043 = vmatpush1.msra.mxu0 0.0
  %2044 = vmatprep.subr.mxu0 0.0
  %2045 = vmatpush1.msra.mxu0 0.0
  %2046 = vmatprep.subr.mxu0 0.0
  %2047 = vmatpush1.msra.mxu0 0.0
  %2048 = vmatprep.subr.mxu0 0.0
  %2049 = vmatpush1.msra.mxu0 0.0
  %2050 = vmatprep.subr.mxu0 0.0
  %2051 = vmatpush1.msra.mxu0 0.0
  %2052 = vmatprep.subr.mxu0 0.0
  %2053 = vmatpush1.msra.mxu0 0.0
  %2054 = vmatprep.subr.mxu0 0.0
  %2055 = vmatpush1.msra.mxu0 0.0
  %2056 = vmatprep.subr.mxu0 0.0
  %2057 = vmatpush1.msra.mxu0 0.0
  %2058 = vmatprep.subr.mxu0 0.0
  %2059 = vmatpush1.msra.mxu0 0.0
  %2060 = vmatprep.subr.mxu0 0.0
  %2061 = vmatpush1.msra.mxu0 0.0
  %2062 = vmatprep.subr.mxu0 0.0
  %2063 = vmatpush1.msra.mxu0 0.0
  %2064 = vmatprep.subr.mxu0 0.0
  %2065 = vmatpush1.msra.mxu0 0.0
  %2066 = vmatprep.mubr.f32.mxu0 0.0
  %2067 = vmatmul.mubr.f32.gmra.mrb[0].mxu0 %v149
  %v2068 = vpop.f32.mrb[0].mxu0
  %v2069 = vadd.f32 0.0, %v2068
  %v2070 = vpop.f32.mrb[0].mxu0
  %v2071 = vadd.f32 0.0, %v2070
  %2072 = vmatprep.mubr.f32.mxu0 0.0
  %2073 = vmatmul.mubr.f32.gmra.mrb[0].mxu0 %v152
  %v2074 = vpop.f32.mrb[0].mxu0
  %v2075 = vadd.f32 0.0, %v2074
  %v2076 = vpop.f32.mrb[0].mxu0
  %v2077 = vadd.f32 0.0, %v2076
  %2078 = vdwg.mxu0
  %2079 = vmatprep.subr.mxu0 %v279
  %2080 = vmatpush1.msra.mxu0 %v276
  %2081 = vmatprep.subr.mxu0 0.0
  %2082 = vmatpush1.msra.mxu0 0.0
  %2083 = vmatprep.subr.mxu0 0.0
  %2084 = vmatpush1.msra.mxu0 0.0
  %2085 = vmatprep.subr.mxu0 0.0
  %2086 = vmatpush1.msra.mxu0 0.0
  %2087 = vmatprep.subr.mxu0 0.0
  %2088 = vmatpush1.msra.mxu0 0.0
  %2089 = vmatprep.subr.mxu0 0.0
  %2090 = vmatpush1.msra.mxu0 0.0
  %2091 = vmatprep.subr.mxu0 0.0
  %2092 = vmatpush1.msra.mxu0 0.0
  %2093 = vmatprep.subr.mxu0 0.0
  %2094 = vmatpush1.msra.mxu0 0.0
  %2095 = vmatprep.subr.mxu0 0.0
  %2096 = vmatpush1.msra.mxu0 0.0
  %2097 = vmatprep.subr.mxu0 0.0
  %2098 = vmatpush1.msra.mxu0 0.0
  %2099 = vmatprep.subr.mxu0 0.0
  %2100 = vmatpush1.msra.mxu0 0.0
  %2101 = vmatprep.subr.mxu0 0.0
  %2102 = vmatpush1.msra.mxu0 0.0
  %2103 = vmatprep.subr.mxu0 0.0
  %2104 = vmatpush1.msra.mxu0 0.0
  %2105 = vmatprep.subr.mxu0 0.0
  %2106 = vmatpush1.msra.mxu0 0.0
  %2107 = vmatprep.subr.mxu0 0.0
  %2108 = vmatpush1.msra.mxu0 0.0
  %2109 = vmatprep.subr.mxu0 0.0
  %2110 = vmatpush1.msra.mxu0 0.0
  %2111 = vmatprep.subr.mxu0 0.0
  %2112 = vmatpush1.msra.mxu0 0.0
  %2113 = vmatprep.subr.mxu0 0.0
  %2114 = vmatpush1.msra.mxu0 0.0
  %2115 = vmatprep.subr.mxu0 0.0
  %2116 = vmatpush1.msra.mxu0 0.0
  %2117 = vmatprep.subr.mxu0 0.0
  %2118 = vmatpush1.msra.mxu0 0.0
  %2119 = vmatprep.subr.mxu0 0.0
  %2120 = vmatpush1.msra.mxu0 0.0
  %2121 = vmatprep.subr.mxu0 0.0
  %2122 = vmatpush1.msra.mxu0 0.0
  %2123 = vmatprep.subr.mxu0 0.0
  %2124 = vmatpush1.msra.mxu0 0.0
  %2125 = vmatprep.subr.mxu0 0.0
  %2126 = vmatpush1.msra.mxu0 0.0
  %2127 = vmatprep.subr.mxu0 0.0
  %2128 = vmatpush1.msra.mxu0 0.0
  %2129 = vmatprep.subr.mxu0 0.0
  %2130 = vmatpush1.msra.mxu0 0.0
  %2131 = vmatprep.subr.mxu0 0.0
  %2132 = vmatpush1.msra.mxu0 0.0
  %2133 = vmatprep.subr.mxu0 0.0
  %2134 = vmatpush1.msra.mxu0 0.0
  %2135 = vmatprep.subr.mxu0 0.0
  %2136 = vmatpush1.msra.mxu0 0.0
  %2137 = vmatprep.subr.mxu0 0.0
  %2138 = vmatpush1.msra.mxu0 0.0
  %2139 = vmatprep.subr.mxu0 0.0
  %2140 = vmatpush1.msra.mxu0 0.0
  %2141 = vmatprep.subr.mxu0 0.0
  %2142 = vmatpush1.msra.mxu0 0.0
  %2143 = vmatprep.mubr.f32.mxu0 0.0
  %2144 = vmatmul.mubr.f32.gmra.mrb[0].mxu0 %v149
  %v2145 = vpop.f32.mrb[0].mxu0
  %v2146 = vadd.f32 0.0, %v2145
  %v2147 = vpop.f32.mrb[0].mxu0
  %v2148 = vadd.f32 0.0, %v2147
  %2149 = vmatprep.mubr.f32.mxu0 0.0
  %2150 = vmatmul.mubr.f32.gmra.mrb[0].mxu0 %v152
  %v2151 = vpop.f32.mrb[0].mxu0
  %v2152 = vadd.f32 0.0, %v2151
  %v2153 = vpop.f32.mrb[0].mxu0
  %v2154 = vadd.f32 0.0, %v2153
  %2155 = vdwg.mxu0
  %2156 = vmatprep.subr.mxu0 %v285
  %2157 = vmatpush1.msra.mxu0 %v282
  %2158 = vmatprep.subr.mxu0 0.0
  %2159 = vmatpush1.msra.mxu0 0.0
  %2160 = vmatprep.subr.mxu0 0.0
  %2161 = vmatpush1.msra.mxu0 0.0
  %2162 = vmatprep.subr.mxu0 0.0
  %2163 = vmatpush1.msra.mxu0 0.0
  %2164 = vmatprep.subr.mxu0 0.0
  %2165 = vmatpush1.msra.mxu0 0.0
  %2166 = vmatprep.subr.mxu0 0.0
  %2167 = vmatpush1.msra.mxu0 0.0
  %2168 = vmatprep.subr.mxu0 0.0
  %2169 = vmatpush1.msra.mxu0 0.0
  %2170 = vmatprep.subr.mxu0 0.0
  %2171 = vmatpush1.msra.mxu0 0.0
  %2172 = vmatprep.subr.mxu0 0.0
  %2173 = vmatpush1.msra.mxu0 0.0
  %2174 = vmatprep.subr.mxu0 0.0
  %2175 = vmatpush1.msra.mxu0 0.0
  %2176 = vmatprep.subr.mxu0 0.0
  %2177 = vmatpush1.msra.mxu0 0.0
  %2178 = vmatprep.subr.mxu0 0.0
  %2179 = vmatpush1.msra.mxu0 0.0
  %2180 = vmatprep.subr.mxu0 0.0
  %2181 = vmatpush1.msra.mxu0 0.0
  %2182 = vmatprep.subr.mxu0 0.0
  %2183 = vmatpush1.msra.mxu0 0.0
  %2184 = vmatprep.subr.mxu0 0.0
  %2185 = vmatpush1.msra.mxu0 0.0
  %2186 = vmatprep.subr.mxu0 0.0
  %2187 = vmatpush1.msra.mxu0 0.0
  %2188 = vmatprep.subr.mxu0 0.0
  %2189 = vmatpush1.msra.mxu0 0.0
  %2190 = vmatprep.subr.mxu0 0.0
  %2191 = vmatpush1.msra.mxu0 0.0
  %2192 = vmatprep.subr.mxu0 0.0
  %2193 = vmatpush1.msra.mxu0 0.0
  %2194 = vmatprep.subr.mxu0 0.0
  %2195 = vmatpush1.msra.mxu0 0.0
  %2196 = vmatprep.subr.mxu0 0.0
  %2197 = vmatpush1.msra.mxu0 0.0
  %2198 = vmatprep.subr.mxu0 0.0
  %2199 = vmatpush1.msra.mxu0 0.0
  %2200 = vmatprep.subr.mxu0 0.0
  %2201 = vmatpush1.msra.mxu0 0.0
  %2202 = vmatprep.subr.mxu0 0.0
  %2203 = vmatpush1.msra.mxu0 0.0
  %2204 = vmatprep.subr.mxu0 0.0
  %2205 = vmatpush1.msra.mxu0 0.0
  %2206 = vmatprep.subr.mxu0 0.0
  %2207 = vmatpush1.msra.mxu0 0.0
  %2208 = vmatprep.subr.mxu0 0.0
  %2209 = vmatpush1.msra.mxu0 0.0
  %2210 = vmatprep.subr.mxu0 0.0
  %2211 = vmatpush1.msra.mxu0 0.0
  %2212 = vmatprep.subr.mxu0 0.0
  %2213 = vmatpush1.msra.mxu0 0.0
  %2214 = vmatprep.subr.mxu0 0.0
  %2215 = vmatpush1.msra.mxu0 0.0
  %2216 = vmatprep.subr.mxu0 0.0
  %2217 = vmatpush1.msra.mxu0 0.0
  %2218 = vmatprep.subr.mxu0 0.0
  %2219 = vmatpush1.msra.mxu0 0.0
  %2220 = vmatprep.mubr.f32.mxu0 0.0
  %2221 = vmatmul.mubr.f32.gmra.mrb[0].mxu0 %v149
  %v2222 = vpop.f32.mrb[0].mxu0
  %v2223 = vadd.f32 0.0, %v2222
  %v2224 = vpop.f32.mrb[0].mxu0
  %v2225 = vadd.f32 0.0, %v2224
  %2226 = vmatprep.mubr.f32.mxu0 0.0
  %2227 = vmatmul.mubr.f32.gmra.mrb[0].mxu0 %v152
  %v2228 = vpop.f32.mrb[0].mxu0
  %v2229 = vadd.f32 0.0, %v2228
  %v2230 = vpop.f32.mrb[0].mxu0
  %v2231 = vadd.f32 0.0, %v2230
  %2232 = vdwg.mxu0
  %2233 = vmatprep.subr.mxu0 %v291
  %2234 = vmatpush1.msra.mxu0 %v288
  %2235 = vmatprep.subr.mxu0 0.0
  %2236 = vmatpush1.msra.mxu0 0.0
  %2237 = vmatprep.subr.mxu0 0.0
  %2238 = vmatpush1.msra.mxu0 0.0
  %2239 = vmatprep.subr.mxu0 0.0
  %2240 = vmatpush1.msra.mxu0 0.0
  %2241 = vmatprep.subr.mxu0 0.0
  %2242 = vmatpush1.msra.mxu0 0.0
  %2243 = vmatprep.subr.mxu0 0.0
  %2244 = vmatpush1.msra.mxu0 0.0
  %2245 = vmatprep.subr.mxu0 0.0
  %2246 = vmatpush1.msra.mxu0 0.0
  %2247 = vmatprep.subr.mxu0 0.0
  %2248 = vmatpush1.msra.mxu0 0.0
  %2249 = vmatprep.subr.mxu0 0.0
  %2250 = vmatpush1.msra.mxu0 0.0
  %2251 = vmatprep.subr.mxu0 0.0
  %2252 = vmatpush1.msra.mxu0 0.0
  %2253 = vmatprep.subr.mxu0 0.0
  %2254 = vmatpush1.msra.mxu0 0.0
  %2255 = vmatprep.subr.mxu0 0.0
  %2256 = vmatpush1.msra.mxu0 0.0
  %2257 = vmatprep.subr.mxu0 0.0
  %2258 = vmatpush1.msra.mxu0 0.0
  %2259 = vmatprep.subr.mxu0 0.0
  %2260 = vmatpush1.msra.mxu0 0.0
  %2261 = vmatprep.subr.mxu0 0.0
  %2262 = vmatpush1.msra.mxu0 0.0
  %2263 = vmatprep.subr.mxu0 0.0
  %2264 = vmatpush1.msra.mxu0 0.0
  %2265 = vmatprep.subr.mxu0 0.0
  %2266 = vmatpush1.msra.mxu0 0.0
  %2267 = vmatprep.subr.mxu0 0.0
  %2268 = vmatpush1.msra.mxu0 0.0
  %2269 = vmatprep.subr.mxu0 0.0
  %2270 = vmatpush1.msra.mxu0 0.0
  %2271 = vmatprep.subr.mxu0 0.0
  %2272 = vmatpush1.msra.mxu0 0.0
  %2273 = vmatprep.subr.mxu0 0.0
  %2274 = vmatpush1.msra.mxu0 0.0
  %2275 = vmatprep.subr.mxu0 0.0
  %2276 = vmatpush1.msra.mxu0 0.0
  %2277 = vmatprep.subr.mxu0 0.0
  %2278 = vmatpush1.msra.mxu0 0.0
  %2279 = vmatprep.subr.mxu0 0.0
  %2280 = vmatpush1.msra.mxu0 0.0
  %2281 = vmatprep.subr.mxu0 0.0
  %2282 = vmatpush1.msra.mxu0 0.0
  %2283 = vmatprep.subr.mxu0 0.0
  %2284 = vmatpush1.msra.mxu0 0.0
  %2285 = vmatprep.subr.mxu0 0.0
  %2286 = vmatpush1.msra.mxu0 0.0
  %2287 = vmatprep.subr.mxu0 0.0
  %2288 = vmatpush1.msra.mxu0 0.0
  %2289 = vmatprep.subr.mxu0 0.0
  %2290 = vmatpush1.msra.mxu0 0.0
  %2291 = vmatprep.subr.mxu0 0.0
  %2292 = vmatpush1.msra.mxu0 0.0
  %2293 = vmatprep.subr.mxu0 0.0
  %2294 = vmatpush1.msra.mxu0 0.0
  %2295 = vmatprep.subr.mxu0 0.0
  %2296 = vmatpush1.msra.mxu0 0.0
  %2297 = vmatprep.mubr.f32.mxu0 0.0
  %2298 = vmatmul.mubr.f32.gmra.mrb[0].mxu0 %v149
  %v2299 = vpop.f32.mrb[0].mxu0
  %v2300 = vadd.f32 0.0, %v2299
  %v2301 = vpop.f32.mrb[0].mxu0
  %v2302 = vadd.f32 0.0, %v2301
  %2303 = vmatprep.mubr.f32.mxu0 0.0
  %2304 = vmatmul.mubr.f32.gmra.mrb[0].mxu0 %v152
  %v2305 = vpop.f32.mrb[0].mxu0
  %v2306 = vadd.f32 0.0, %v2305
  %v2307 = vpop.f32.mrb[0].mxu0
  %v2308 = vadd.f32 0.0, %v2307
  %2309 = vdwg.mxu0
  %2310 = vmatprep.subr.mxu0 %v297
  %2311 = vmatpush1.msra.mxu0 %v294
  %2312 = vmatprep.subr.mxu0 0.0
  %2313 = vmatpush1.msra.mxu0 0.0
  %2314 = vmatprep.subr.mxu0 0.0
  %2315 = vmatpush1.msra.mxu0 0.0
  %2316 = vmatprep.subr.mxu0 0.0
  %2317 = vmatpush1.msra.mxu0 0.0
  %2318 = vmatprep.subr.mxu0 0.0
  %2319 = vmatpush1.msra.mxu0 0.0
  %2320 = vmatprep.subr.mxu0 0.0
  %2321 = vmatpush1.msra.mxu0 0.0
  %2322 = vmatprep.subr.mxu0 0.0
  %2323 = vmatpush1.msra.mxu0 0.0
  %2324 = vmatprep.subr.mxu0 0.0
  %2325 = vmatpush1.msra.mxu0 0.0
  %2326 = vmatprep.subr.mxu0 0.0
  %2327 = vmatpush1.msra.mxu0 0.0
  %2328 = vmatprep.subr.mxu0 0.0
  %2329 = vmatpush1.msra.mxu0 0.0
  %2330 = vmatprep.subr.mxu0 0.0
  %2331 = vmatpush1.msra.mxu0 0.0
  %2332 = vmatprep.subr.mxu0 0.0
  %2333 = vmatpush1.msra.mxu0 0.0
  %2334 = vmatprep.subr.mxu0 0.0
  %2335 = vmatpush1.msra.mxu0 0.0
  %2336 = vmatprep.subr.mxu0 0.0
  %2337 = vmatpush1.msra.mxu0 0.0
  %2338 = vmatprep.subr.mxu0 0.0
  %2339 = vmatpush1.msra.mxu0 0.0
  %2340 = vmatprep.subr.mxu0 0.0
  %2341 = vmatpush1.msra.mxu0 0.0
  %2342 = vmatprep.subr.mxu0 0.0
  %2343 = vmatpush1.msra.mxu0 0.0
  %2344 = vmatprep.subr.mxu0 0.0
  %2345 = vmatpush1.msra.mxu0 0.0
  %2346 = vmatprep.subr.mxu0 0.0
  %2347 = vmatpush1.msra.mxu0 0.0
  %2348 = vmatprep.subr.mxu0 0.0
  %2349 = vmatpush1.msra.mxu0 0.0
  %2350 = vmatprep.subr.mxu0 0.0
  %2351 = vmatpush1.msra.mxu0 0.0
  %2352 = vmatprep.subr.mxu0 0.0
  %2353 = vmatpush1.msra.mxu0 0.0
  %2354 = vmatprep.subr.mxu0 0.0
  %2355 = vmatpush1.msra.mxu0 0.0
  %2356 = vmatprep.subr.mxu0 0.0
  %2357 = vmatpush1.msra.mxu0 0.0
  %2358 = vmatprep.subr.mxu0 0.0
  %2359 = vmatpush1.msra.mxu0 0.0
  %2360 = vmatprep.subr.mxu0 0.0
  %2361 = vmatpush1.msra.mxu0 0.0
  %2362 = vmatprep.subr.mxu0 0.0
  %2363 = vmatpush1.msra.mxu0 0.0
  %2364 = vmatprep.subr.mxu0 0.0
  %2365 = vmatpush1.msra.mxu0 0.0
  %2366 = vmatprep.subr.mxu0 0.0
  %2367 = vmatpush1.msra.mxu0 0.0
  %2368 = vmatprep.subr.mxu0 0.0
  %2369 = vmatpush1.msra.mxu0 0.0
  %2370 = vmatprep.subr.mxu0 0.0
  %2371 = vmatpush1.msra.mxu0 0.0
  %2372 = vmatprep.subr.mxu0 0.0
  %2373 = vmatpush1.msra.mxu0 0.0
  %2374 = vmatprep.mubr.f32.mxu0 0.0
  %2375 = vmatmul.mubr.f32.gmra.mrb[0].mxu0 %v149
  %v2376 = vpop.f32.mrb[0].mxu0
  %v2377 = vadd.f32 0.0, %v2376
  %v2378 = vpop.f32.mrb[0].mxu0
  %v2379 = vadd.f32 0.0, %v2378
  %2380 = vmatprep.mubr.f32.mxu0 0.0
  %2381 = vmatmul.mubr.f32.gmra.mrb[0].mxu0 %v152
  %v2382 = vpop.f32.mrb[0].mxu0
  %v2383 = vadd.f32 0.0, %v2382
  %v2384 = vpop.f32.mrb[0].mxu0
  %v2385 = vadd.f32 0.0, %v2384
  %2386 = vdwg.mxu0
  %2387 = vmatprep.subr.mxu0 %v303
  %2388 = vmatpush1.msra.mxu0 %v300
  %2389 = vmatprep.subr.mxu0 0.0
  %2390 = vmatpush1.msra.mxu0 0.0
  %2391 = vmatprep.subr.mxu0 0.0
  %2392 = vmatpush1.msra.mxu0 0.0
  %2393 = vmatprep.subr.mxu0 0.0
  %2394 = vmatpush1.msra.mxu0 0.0
  %2395 = vmatprep.subr.mxu0 0.0
  %2396 = vmatpush1.msra.mxu0 0.0
  %2397 = vmatprep.subr.mxu0 0.0
  %2398 = vmatpush1.msra.mxu0 0.0
  %2399 = vmatprep.subr.mxu0 0.0
  %2400 = vmatpush1.msra.mxu0 0.0
  %2401 = vmatprep.subr.mxu0 0.0
  %2402 = vmatpush1.msra.mxu0 0.0
  %2403 = vmatprep.subr.mxu0 0.0
  %2404 = vmatpush1.msra.mxu0 0.0
  %2405 = vmatprep.subr.mxu0 0.0
  %2406 = vmatpush1.msra.mxu0 0.0
  %2407 = vmatprep.subr.mxu0 0.0
  %2408 = vmatpush1.msra.mxu0 0.0
  %2409 = vmatprep.subr.mxu0 0.0
  %2410 = vmatpush1.msra.mxu0 0.0
  %2411 = vmatprep.subr.mxu0 0.0
  %2412 = vmatpush1.msra.mxu0 0.0
  %2413 = vmatprep.subr.mxu0 0.0
  %2414 = vmatpush1.msra.mxu0 0.0
  %2415 = vmatprep.subr.mxu0 0.0
  %2416 = vmatpush1.msra.mxu0 0.0
  %2417 = vmatprep.subr.mxu0 0.0
  %2418 = vmatpush1.msra.mxu0 0.0
  %2419 = vmatprep.subr.mxu0 0.0
  %2420 = vmatpush1.msra.mxu0 0.0
  %2421 = vmatprep.subr.mxu0 0.0
  %2422 = vmatpush1.msra.mxu0 0.0
  %2423 = vmatprep.subr.mxu0 0.0
  %2424 = vmatpush1.msra.mxu0 0.0
  %2425 = vmatprep.subr.mxu0 0.0
  %2426 = vmatpush1.msra.mxu0 0.0
  %2427 = vmatprep.subr.mxu0 0.0
  %2428 = vmatpush1.msra.mxu0 0.0
  %2429 = vmatprep.subr.mxu0 0.0
  %2430 = vmatpush1.msra.mxu0 0.0
  %2431 = vmatprep.subr.mxu0 0.0
  %2432 = vmatpush1.msra.mxu0 0.0
  %2433 = vmatprep.subr.mxu0 0.0
  %2434 = vmatpush1.msra.mxu0 0.0
  %2435 = vmatprep.subr.mxu0 0.0
  %2436 = vmatpush1.msra.mxu0 0.0
  %2437 = vmatprep.subr.mxu0 0.0
  %2438 = vmatpush1.msra.mxu0 0.0
  %2439 = vmatprep.subr.mxu0 0.0
  %2440 = vmatpush1.msra.mxu0 0.0
  %2441 = vmatprep.subr.mxu0 0.0
  %2442 = vmatpush1.msra.mxu0 0.0
  %2443 = vmatprep.subr.mxu0 0.0
  %2444 = vmatpush1.msra.mxu0 0.0
  %2445 = vmatprep.subr.mxu0 0.0
  %2446 = vmatpush1.msra.mxu0 0.0
  %2447 = vmatprep.subr.mxu0 0.0
  %2448 = vmatpush1.msra.mxu0 0.0
  %2449 = vmatprep.subr.mxu0 0.0
  %2450 = vmatpush1.msra.mxu0 0.0
  %2451 = vmatprep.mubr.f32.mxu0 0.0
  %2452 = vmatmul.mubr.f32.gmra.mrb[0].mxu0 %v149
  %v2453 = vpop.f32.mrb[0].mxu0
  %v2454 = vadd.f32 0.0, %v2453
  %v2455 = vpop.f32.mrb[0].mxu0
  %v2456 = vadd.f32 0.0, %v2455
  %2457 = vmatprep.mubr.f32.mxu0 0.0
  %2458 = vmatmul.mubr.f32.gmra.mrb[0].mxu0 %v152
  %v2459 = vpop.f32.mrb[0].mxu0
  %v2460 = vadd.f32 0.0, %v2459
  %v2461 = vpop.f32.mrb[0].mxu0
  %v2462 = vadd.f32 0.0, %v2461
  %2463 = vdwg.mxu0
  %2464 = vmatprep.subr.mxu0 %v309
  %2465 = vmatpush1.msra.mxu0 %v306
  %2466 = vmatprep.subr.mxu0 0.0
  %2467 = vmatpush1.msra.mxu0 0.0
  %2468 = vmatprep.subr.mxu0 0.0
  %2469 = vmatpush1.msra.mxu0 0.0
  %2470 = vmatprep.subr.mxu0 0.0
  %2471 = vmatpush1.msra.mxu0 0.0
  %2472 = vmatprep.subr.mxu0 0.0
  %2473 = vmatpush1.msra.mxu0 0.0
  %2474 = vmatprep.subr.mxu0 0.0
  %2475 = vmatpush1.msra.mxu0 0.0
  %2476 = vmatprep.subr.mxu0 0.0
  %2477 = vmatpush1.msra.mxu0 0.0
  %2478 = vmatprep.subr.mxu0 0.0
  %2479 = vmatpush1.msra.mxu0 0.0
  %2480 = vmatprep.subr.mxu0 0.0
  %2481 = vmatpush1.msra.mxu0 0.0
  %2482 = vmatprep.subr.mxu0 0.0
  %2483 = vmatpush1.msra.mxu0 0.0
  %2484 = vmatprep.subr.mxu0 0.0
  %2485 = vmatpush1.msra.mxu0 0.0
  %2486 = vmatprep.subr.mxu0 0.0
  %2487 = vmatpush1.msra.mxu0 0.0
  %2488 = vmatprep.subr.mxu0 0.0
  %2489 = vmatpush1.msra.mxu0 0.0
  %2490 = vmatprep.subr.mxu0 0.0
  %2491 = vmatpush1.msra.mxu0 0.0
  %2492 = vmatprep.subr.mxu0 0.0
  %2493 = vmatpush1.msra.mxu0 0.0
  %2494 = vmatprep.subr.mxu0 0.0
  %2495 = vmatpush1.msra.mxu0 0.0
  %2496 = vmatprep.subr.mxu0 0.0
  %2497 = vmatpush1.msra.mxu0 0.0
  %2498 = vmatprep.subr.mxu0 0.0
  %2499 = vmatpush1.msra.mxu0 0.0
  %2500 = vmatprep.subr.mxu0 0.0
  %2501 = vmatpush1.msra.mxu0 0.0
  %2502 = vmatprep.subr.mxu0 0.0
  %2503 = vmatpush1.msra.mxu0 0.0
  %2504 = vmatprep.subr.mxu0 0.0
  %2505 = vmatpush1.msra.mxu0 0.0
  %2506 = vmatprep.subr.mxu0 0.0
  %2507 = vmatpush1.msra.mxu0 0.0
  %2508 = vmatprep.subr.mxu0 0.0
  %2509 = vmatpush1.msra.mxu0 0.0
  %2510 = vmatprep.subr.mxu0 0.0
  %2511 = vmatpush1.msra.mxu0 0.0
  %2512 = vmatprep.subr.mxu0 0.0
  %2513 = vmatpush1.msra.mxu0 0.0
  %2514 = vmatprep.subr.mxu0 0.0
  %2515 = vmatpush1.msra.mxu0 0.0
  %2516 = vmatprep.subr.mxu0 0.0
  %2517 = vmatpush1.msra.mxu0 0.0
  %2518 = vmatprep.subr.mxu0 0.0
  %2519 = vmatpush1.msra.mxu0 0.0
  %2520 = vmatprep.subr.mxu0 0.0
  %2521 = vmatpush1.msra.mxu0 0.0
  %2522 = vmatprep.subr.mxu0 0.0
  %2523 = vmatpush1.msra.mxu0 0.0
  %2524 = vmatprep.subr.mxu0 0.0
  %2525 = vmatpush1.msra.mxu0 0.0
  %2526 = vmatprep.subr.mxu0 0.0
  %2527 = vmatpush1.msra.mxu0 0.0
  %2528 = vmatprep.mubr.f32.mxu0 0.0
  %2529 = vmatmul.mubr.f32.gmra.mrb[0].mxu0 %v149
  %v2530 = vpop.f32.mrb[0].mxu0
  %v2531 = vadd.f32 0.0, %v2530
  %v2532 = vpop.f32.mrb[0].mxu0
  %v2533 = vadd.f32 0.0, %v2532
  %2534 = vmatprep.mubr.f32.mxu0 0.0
  %2535 = vmatmul.mubr.f32.gmra.mrb[0].mxu0 %v152
  %v2536 = vpop.f32.mrb[0].mxu0
  %v2537 = vadd.f32 0.0, %v2536
  %v2538 = vpop.f32.mrb[0].mxu0
  %v2539 = vadd.f32 0.0, %v2538
  %2540 = vdwg.mxu0
  %2541 = vmatprep.subr.mxu0 %v315
  %2542 = vmatpush1.msra.mxu0 %v312
  %2543 = vmatprep.subr.mxu0 0.0
  %2544 = vmatpush1.msra.mxu0 0.0
  %2545 = vmatprep.subr.mxu0 0.0
  %2546 = vmatpush1.msra.mxu0 0.0
  %2547 = vmatprep.subr.mxu0 0.0
  %2548 = vmatpush1.msra.mxu0 0.0
  %2549 = vmatprep.subr.mxu0 0.0
  %2550 = vmatpush1.msra.mxu0 0.0
  %2551 = vmatprep.subr.mxu0 0.0
  %2552 = vmatpush1.msra.mxu0 0.0
  %2553 = vmatprep.subr.mxu0 0.0
  %2554 = vmatpush1.msra.mxu0 0.0
  %2555 = vmatprep.subr.mxu0 0.0
  %2556 = vmatpush1.msra.mxu0 0.0
  %2557 = vmatprep.subr.mxu0 0.0
  %2558 = vmatpush1.msra.mxu0 0.0
  %2559 = vmatprep.subr.mxu0 0.0
  %2560 = vmatpush1.msra.mxu0 0.0
  %2561 = vmatprep.subr.mxu0 0.0
  %2562 = vmatpush1.msra.mxu0 0.0
  %2563 = vmatprep.subr.mxu0 0.0
  %2564 = vmatpush1.msra.mxu0 0.0
  %2565 = vmatprep.subr.mxu0 0.0
  %2566 = vmatpush1.msra.mxu0 0.0
  %2567 = vmatprep.subr.mxu0 0.0
  %2568 = vmatpush1.msra.mxu0 0.0
  %2569 = vmatprep.subr.mxu0 0.0
  %2570 = vmatpush1.msra.mxu0 0.0
  %2571 = vmatprep.subr.mxu0 0.0
  %2572 = vmatpush1.msra.mxu0 0.0
  %2573 = vmatprep.subr.mxu0 0.0
  %2574 = vmatpush1.msra.mxu0 0.0
  %2575 = vmatprep.subr.mxu0 0.0
  %2576 = vmatpush1.msra.mxu0 0.0
  %2577 = vmatprep.subr.mxu0 0.0
  %2578 = vmatpush1.msra.mxu0 0.0
  %2579 = vmatprep.subr.mxu0 0.0
  %2580 = vmatpush1.msra.mxu0 0.0
  %2581 = vmatprep.subr.mxu0 0.0
  %2582 = vmatpush1.msra.mxu0 0.0
  %2583 = vmatprep.subr.mxu0 0.0
  %2584 = vmatpush1.msra.mxu0 0.0
  %2585 = vmatprep.subr.mxu0 0.0
  %2586 = vmatpush1.msra.mxu0 0.0
  %2587 = vmatprep.subr.mxu0 0.0
  %2588 = vmatpush1.msra.mxu0 0.0
  %2589 = vmatprep.subr.mxu0 0.0
  %2590 = vmatpush1.msra.mxu0 0.0
  %2591 = vmatprep.subr.mxu0 0.0
  %2592 = vmatpush1.msra.mxu0 0.0
  %2593 = vmatprep.subr.mxu0 0.0
  %2594 = vmatpush1.msra.mxu0 0.0
  %2595 = vmatprep.subr.mxu0 0.0
  %2596 = vmatpush1.msra.mxu0 0.0
  %2597 = vmatprep.subr.mxu0 0.0
  %2598 = vmatpush1.msra.mxu0 0.0
  %2599 = vmatprep.subr.mxu0 0.0
  %2600 = vmatpush1.msra.mxu0 0.0
  %2601 = vmatprep.subr.mxu0 0.0
  %2602 = vmatpush1.msra.mxu0 0.0
  %2603 = vmatprep.subr.mxu0 0.0
  %2604 = vmatpush1.msra.mxu0 0.0
  %2605 = vmatprep.mubr.f32.mxu0 0.0
  %2606 = vmatmul.mubr.f32.gmra.mrb[0].mxu0 %v149
  %v2607 = vpop.f32.mrb[0].mxu0
  %v2608 = vadd.f32 0.0, %v2607
  %v2609 = vpop.f32.mrb[0].mxu0
  %v2610 = vadd.f32 0.0, %v2609
  %2611 = vmatprep.mubr.f32.mxu0 0.0
  %2612 = vmatmul.mubr.f32.gmra.mrb[0].mxu0 %v152
  %v2613 = vpop.f32.mrb[0].mxu0
  %v2614 = vadd.f32 0.0, %v2613
  %v2615 = vpop.f32.mrb[0].mxu0
  %v2616 = vadd.f32 0.0, %v2615
  %2617 = vdwg.mxu0
  %2618 = vmatprep.subr.mxu0 %v321
  %2619 = vmatpush1.msra.mxu0 %v318
  %2620 = vmatprep.subr.mxu0 0.0
  %2621 = vmatpush1.msra.mxu0 0.0
  %2622 = vmatprep.subr.mxu0 0.0
  %2623 = vmatpush1.msra.mxu0 0.0
  %2624 = vmatprep.subr.mxu0 0.0
  %2625 = vmatpush1.msra.mxu0 0.0
  %2626 = vmatprep.subr.mxu0 0.0
  %2627 = vmatpush1.msra.mxu0 0.0
  %2628 = vmatprep.subr.mxu0 0.0
  %2629 = vmatpush1.msra.mxu0 0.0
  %2630 = vmatprep.subr.mxu0 0.0
  %2631 = vmatpush1.msra.mxu0 0.0
  %2632 = vmatprep.subr.mxu0 0.0
  %2633 = vmatpush1.msra.mxu0 0.0
  %2634 = vmatprep.subr.mxu0 0.0
  %2635 = vmatpush1.msra.mxu0 0.0
  %2636 = vmatprep.subr.mxu0 0.0
  %2637 = vmatpush1.msra.mxu0 0.0
  %2638 = vmatprep.subr.mxu0 0.0
  %2639 = vmatpush1.msra.mxu0 0.0
  %2640 = vmatprep.subr.mxu0 0.0
  %2641 = vmatpush1.msra.mxu0 0.0
  %2642 = vmatprep.subr.mxu0 0.0
  %2643 = vmatpush1.msra.mxu0 0.0
  %2644 = vmatprep.subr.mxu0 0.0
  %2645 = vmatpush1.msra.mxu0 0.0
  %2646 = vmatprep.subr.mxu0 0.0
  %2647 = vmatpush1.msra.mxu0 0.0
  %2648 = vmatprep.subr.mxu0 0.0
  %2649 = vmatpush1.msra.mxu0 0.0
  %2650 = vmatprep.subr.mxu0 0.0
  %2651 = vmatpush1.msra.mxu0 0.0
  %2652 = vmatprep.subr.mxu0 0.0
  %2653 = vmatpush1.msra.mxu0 0.0
  %2654 = vmatprep.subr.mxu0 0.0
  %2655 = vmatpush1.msra.mxu0 0.0
  %2656 = vmatprep.subr.mxu0 0.0
  %2657 = vmatpush1.msra.mxu0 0.0
  %2658 = vmatprep.subr.mxu0 0.0
  %2659 = vmatpush1.msra.mxu0 0.0
  %2660 = vmatprep.subr.mxu0 0.0
  %2661 = vmatpush1.msra.mxu0 0.0
  %2662 = vmatprep.subr.mxu0 0.0
  %2663 = vmatpush1.msra.mxu0 0.0
  %2664 = vmatprep.subr.mxu0 0.0
  %2665 = vmatpush1.msra.mxu0 0.0
  %2666 = vmatprep.subr.mxu0 0.0
  %2667 = vmatpush1.msra.mxu0 0.0
  %2668 = vmatprep.subr.mxu0 0.0
  %2669 = vmatpush1.msra.mxu0 0.0
  %2670 = vmatprep.subr.mxu0 0.0
  %2671 = vmatpush1.msra.mxu0 0.0
  %2672 = vmatprep.subr.mxu0 0.0
  %2673 = vmatpush1.msra.mxu0 0.0
  %2674 = vmatprep.subr.mxu0 0.0
  %2675 = vmatpush1.msra.mxu0 0.0
  %2676 = vmatprep.subr.mxu0 0.0
  %2677 = vmatpush1.msra.mxu0 0.0
  %2678 = vmatprep.subr.mxu0 0.0
  %2679 = vmatpush1.msra.mxu0 0.0
  %2680 = vmatprep.subr.mxu0 0.0
  %2681 = vmatpush1.msra.mxu0 0.0
  %2682 = vmatprep.mubr.f32.mxu0 0.0
  %2683 = vmatmul.mubr.f32.gmra.mrb[0].mxu0 %v149
  %v2684 = vpop.f32.mrb[0].mxu0
  %v2685 = vadd.f32 0.0, %v2684
  %v2686 = vpop.f32.mrb[0].mxu0
  %v2687 = vadd.f32 0.0, %v2686
  %2688 = vmatprep.mubr.f32.mxu0 0.0
  %2689 = vmatmul.mubr.f32.gmra.mrb[0].mxu0 %v152
  %v2690 = vpop.f32.mrb[0].mxu0
  %v2691 = vadd.f32 0.0, %v2690
  %v2692 = vpop.f32.mrb[0].mxu0
  %v2693 = vadd.f32 0.0, %v2692
  %2694 = vdwg.mxu0
  %2695 = vmatprep.subr.mxu0 %v327
  %2696 = vmatpush1.msra.mxu0 %v324
  %2697 = vmatprep.subr.mxu0 0.0
  %2698 = vmatpush1.msra.mxu0 0.0
  %2699 = vmatprep.subr.mxu0 0.0
  %2700 = vmatpush1.msra.mxu0 0.0
  %2701 = vmatprep.subr.mxu0 0.0
  %2702 = vmatpush1.msra.mxu0 0.0
  %2703 = vmatprep.subr.mxu0 0.0
  %2704 = vmatpush1.msra.mxu0 0.0
  %2705 = vmatprep.subr.mxu0 0.0
  %2706 = vmatpush1.msra.mxu0 0.0
  %2707 = vmatprep.subr.mxu0 0.0
  %2708 = vmatpush1.msra.mxu0 0.0
  %2709 = vmatprep.subr.mxu0 0.0
  %2710 = vmatpush1.msra.mxu0 0.0
  %2711 = vmatprep.subr.mxu0 0.0
  %2712 = vmatpush1.msra.mxu0 0.0
  %2713 = vmatprep.subr.mxu0 0.0
  %2714 = vmatpush1.msra.mxu0 0.0
  %2715 = vmatprep.subr.mxu0 0.0
  %2716 = vmatpush1.msra.mxu0 0.0
  %2717 = vmatprep.subr.mxu0 0.0
  %2718 = vmatpush1.msra.mxu0 0.0
  %2719 = vmatprep.subr.mxu0 0.0
  %2720 = vmatpush1.msra.mxu0 0.0
  %2721 = vmatprep.subr.mxu0 0.0
  %2722 = vmatpush1.msra.mxu0 0.0
  %2723 = vmatprep.subr.mxu0 0.0
  %2724 = vmatpush1.msra.mxu0 0.0
  %2725 = vmatprep.subr.mxu0 0.0
  %2726 = vmatpush1.msra.mxu0 0.0
  %2727 = vmatprep.subr.mxu0 0.0
  %2728 = vmatpush1.msra.mxu0 0.0
  %2729 = vmatprep.subr.mxu0 0.0
  %2730 = vmatpush1.msra.mxu0 0.0
  %2731 = vmatprep.subr.mxu0 0.0
  %2732 = vmatpush1.msra.mxu0 0.0
  %2733 = vmatprep.subr.mxu0 0.0
  %2734 = vmatpush1.msra.mxu0 0.0
  %2735 = vmatprep.subr.mxu0 0.0
  %2736 = vmatpush1.msra.mxu0 0.0
  %2737 = vmatprep.subr.mxu0 0.0
  %2738 = vmatpush1.msra.mxu0 0.0
  %2739 = vmatprep.subr.mxu0 0.0
  %2740 = vmatpush1.msra.mxu0 0.0
  %2741 = vmatprep.subr.mxu0 0.0
  %2742 = vmatpush1.msra.mxu0 0.0
  %2743 = vmatprep.subr.mxu0 0.0
  %2744 = vmatpush1.msra.mxu0 0.0
  %2745 = vmatprep.subr.mxu0 0.0
  %2746 = vmatpush1.msra.mxu0 0.0
  %2747 = vmatprep.subr.mxu0 0.0
  %2748 = vmatpush1.msra.mxu0 0.0
  %2749 = vmatprep.subr.mxu0 0.0
  %2750 = vmatpush1.msra.mxu0 0.0
  %2751 = vmatprep.subr.mxu0 0.0
  %2752 = vmatpush1.msra.mxu0 0.0
  %2753 = vmatprep.subr.mxu0 0.0
  %2754 = vmatpush1.msra.mxu0 0.0
  %2755 = vmatprep.subr.mxu0 0.0
  %2756 = vmatpush1.msra.mxu0 0.0
  %2757 = vmatprep.subr.mxu0 0.0
  %2758 = vmatpush1.msra.mxu0 0.0
  %2759 = vmatprep.mubr.f32.mxu0 0.0
  %2760 = vmatmul.mubr.f32.gmra.mrb[0].mxu0 %v149
  %v2761 = vpop.f32.mrb[0].mxu0
  %v2762 = vadd.f32 0.0, %v2761
  %v2763 = vpop.f32.mrb[0].mxu0
  %v2764 = vadd.f32 0.0, %v2763
  %2765 = vmatprep.mubr.f32.mxu0 0.0
  %2766 = vmatmul.mubr.f32.gmra.mrb[0].mxu0 %v152
  %v2767 = vpop.f32.mrb[0].mxu0
  %v2768 = vadd.f32 0.0, %v2767
  %v2769 = vpop.f32.mrb[0].mxu0
  %v2770 = vadd.f32 0.0, %v2769
  %2771 = vdwg.mxu0
  %2772 = vmatprep.subr.mxu0 %v333
  %2773 = vmatpush1.msra.mxu0 %v330
  %2774 = vmatprep.subr.mxu0 0.0
  %2775 = vmatpush1.msra.mxu0 0.0
  %2776 = vmatprep.subr.mxu0 0.0
  %2777 = vmatpush1.msra.mxu0 0.0
  %2778 = vmatprep.subr.mxu0 0.0
  %2779 = vmatpush1.msra.mxu0 0.0
  %2780 = vmatprep.subr.mxu0 0.0
  %2781 = vmatpush1.msra.mxu0 0.0
  %2782 = vmatprep.subr.mxu0 0.0
  %2783 = vmatpush1.msra.mxu0 0.0
  %2784 = vmatprep.subr.mxu0 0.0
  %2785 = vmatpush1.msra.mxu0 0.0
  %2786 = vmatprep.subr.mxu0 0.0
  %2787 = vmatpush1.msra.mxu0 0.0
  %2788 = vmatprep.subr.mxu0 0.0
  %2789 = vmatpush1.msra.mxu0 0.0
  %2790 = vmatprep.subr.mxu0 0.0
  %2791 = vmatpush1.msra.mxu0 0.0
  %2792 = vmatprep.subr.mxu0 0.0
  %2793 = vmatpush1.msra.mxu0 0.0
  %2794 = vmatprep.subr.mxu0 0.0
  %2795 = vmatpush1.msra.mxu0 0.0
  %2796 = vmatprep.subr.mxu0 0.0
  %2797 = vmatpush1.msra.mxu0 0.0
  %2798 = vmatprep.subr.mxu0 0.0
  %2799 = vmatpush1.msra.mxu0 0.0
  %2800 = vmatprep.subr.mxu0 0.0
  %2801 = vmatpush1.msra.mxu0 0.0
  %2802 = vmatprep.subr.mxu0 0.0
  %2803 = vmatpush1.msra.mxu0 0.0
  %2804 = vmatprep.subr.mxu0 0.0
  %2805 = vmatpush1.msra.mxu0 0.0
  %2806 = vmatprep.subr.mxu0 0.0
  %2807 = vmatpush1.msra.mxu0 0.0
  %2808 = vmatprep.subr.mxu0 0.0
  %2809 = vmatpush1.msra.mxu0 0.0
  %2810 = vmatprep.subr.mxu0 0.0
  %2811 = vmatpush1.msra.mxu0 0.0
  %2812 = vmatprep.subr.mxu0 0.0
  %2813 = vmatpush1.msra.mxu0 0.0
  %2814 = vmatprep.subr.mxu0 0.0
  %2815 = vmatpush1.msra.mxu0 0.0
  %2816 = vmatprep.subr.mxu0 0.0
  %2817 = vmatpush1.msra.mxu0 0.0
  %2818 = vmatprep.subr.mxu0 0.0
  %2819 = vmatpush1.msra.mxu0 0.0
  %2820 = vmatprep.subr.mxu0 0.0
  %2821 = vmatpush1.msra.mxu0 0.0
  %2822 = vmatprep.subr.mxu0 0.0
  %2823 = vmatpush1.msra.mxu0 0.0
  %2824 = vmatprep.subr.mxu0 0.0
  %2825 = vmatpush1.msra.mxu0 0.0
  %2826 = vmatprep.subr.mxu0 0.0
  %2827 = vmatpush1.msra.mxu0 0.0
  %2828 = vmatprep.subr.mxu0 0.0
  %2829 = vmatpush1.msra.mxu0 0.0
  %2830 = vmatprep.subr.mxu0 0.0
  %2831 = vmatpush1.msra.mxu0 0.0
  %2832 = vmatprep.subr.mxu0 0.0
  %2833 = vmatpush1.msra.mxu0 0.0
  %2834 = vmatprep.subr.mxu0 0.0
  %2835 = vmatpush1.msra.mxu0 0.0
  %2836 = vmatprep.mubr.f32.mxu0 0.0
  %2837 = vmatmul.mubr.f32.gmra.mrb[0].mxu0 %v149
  %v2838 = vpop.f32.mrb[0].mxu0
  %v2839 = vadd.f32 0.0, %v2838
  %v2840 = vpop.f32.mrb[0].mxu0
  %v2841 = vadd.f32 0.0, %v2840
  %2842 = vmatprep.mubr.f32.mxu0 0.0
  %2843 = vmatmul.mubr.f32.gmra.mrb[0].mxu0 %v152
  %v2844 = vpop.f32.mrb[0].mxu0
  %v2845 = vadd.f32 0.0, %v2844
  %v2846 = vpop.f32.mrb[0].mxu0
  %v2847 = vadd.f32 0.0, %v2846
  %2848 = vdwg.mxu0
  %2849 = vmatprep.subr.mxu0 %v339
  %2850 = vmatpush1.msra.mxu0 %v336
  %2851 = vmatprep.subr.mxu0 0.0
  %2852 = vmatpush1.msra.mxu0 0.0
  %2853 = vmatprep.subr.mxu0 0.0
  %2854 = vmatpush1.msra.mxu0 0.0
  %2855 = vmatprep.subr.mxu0 0.0
  %2856 = vmatpush1.msra.mxu0 0.0
  %2857 = vmatprep.subr.mxu0 0.0
  %2858 = vmatpush1.msra.mxu0 0.0
  %2859 = vmatprep.subr.mxu0 0.0
  %2860 = vmatpush1.msra.mxu0 0.0
  %2861 = vmatprep.subr.mxu0 0.0
  %2862 = vmatpush1.msra.mxu0 0.0
  %2863 = vmatprep.subr.mxu0 0.0
  %2864 = vmatpush1.msra.mxu0 0.0
  %2865 = vmatprep.subr.mxu0 0.0
  %2866 = vmatpush1.msra.mxu0 0.0
  %2867 = vmatprep.subr.mxu0 0.0
  %2868 = vmatpush1.msra.mxu0 0.0
  %2869 = vmatprep.subr.mxu0 0.0
  %2870 = vmatpush1.msra.mxu0 0.0
  %2871 = vmatprep.subr.mxu0 0.0
  %2872 = vmatpush1.msra.mxu0 0.0
  %2873 = vmatprep.subr.mxu0 0.0
  %2874 = vmatpush1.msra.mxu0 0.0
  %2875 = vmatprep.subr.mxu0 0.0
  %2876 = vmatpush1.msra.mxu0 0.0
  %2877 = vmatprep.subr.mxu0 0.0
  %2878 = vmatpush1.msra.mxu0 0.0
  %2879 = vmatprep.subr.mxu0 0.0
  %2880 = vmatpush1.msra.mxu0 0.0
  %2881 = vmatprep.subr.mxu0 0.0
  %2882 = vmatpush1.msra.mxu0 0.0
  %2883 = vmatprep.subr.mxu0 0.0
  %2884 = vmatpush1.msra.mxu0 0.0
  %2885 = vmatprep.subr.mxu0 0.0
  %2886 = vmatpush1.msra.mxu0 0.0
  %2887 = vmatprep.subr.mxu0 0.0
  %2888 = vmatpush1.msra.mxu0 0.0
  %2889 = vmatprep.subr.mxu0 0.0
  %2890 = vmatpush1.msra.mxu0 0.0
  %2891 = vmatprep.subr.mxu0 0.0
  %2892 = vmatpush1.msra.mxu0 0.0
  %2893 = vmatprep.subr.mxu0 0.0
  %2894 = vmatpush1.msra.mxu0 0.0
  %2895 = vmatprep.subr.mxu0 0.0
  %2896 = vmatpush1.msra.mxu0 0.0
  %2897 = vmatprep.subr.mxu0 0.0
  %2898 = vmatpush1.msra.mxu0 0.0
  %2899 = vmatprep.subr.mxu0 0.0
  %2900 = vmatpush1.msra.mxu0 0.0
  %2901 = vmatprep.subr.mxu0 0.0
  %2902 = vmatpush1.msra.mxu0 0.0
  %2903 = vmatprep.subr.mxu0 0.0
  %2904 = vmatpush1.msra.mxu0 0.0
  %2905 = vmatprep.subr.mxu0 0.0
  %2906 = vmatpush1.msra.mxu0 0.0
  %2907 = vmatprep.subr.mxu0 0.0
  %2908 = vmatpush1.msra.mxu0 0.0
  %2909 = vmatprep.subr.mxu0 0.0
  %2910 = vmatpush1.msra.mxu0 0.0
  %2911 = vmatprep.subr.mxu0 0.0
  %2912 = vmatpush1.msra.mxu0 0.0
  %2913 = vmatprep.mubr.f32.mxu0 0.0
  %2914 = vmatmul.mubr.f32.gmra.mrb[0].mxu0 %v149
  %v2915 = vpop.f32.mrb[0].mxu0
  %v2916 = vadd.f32 0.0, %v2915
  %v2917 = vpop.f32.mrb[0].mxu0
  %v2918 = vadd.f32 0.0, %v2917
  %2919 = vmatprep.mubr.f32.mxu0 0.0
  %2920 = vmatmul.mubr.f32.gmra.mrb[0].mxu0 %v152
  %v2921 = vpop.f32.mrb[0].mxu0
  %v2922 = vadd.f32 0.0, %v2921
  %v2923 = vpop.f32.mrb[0].mxu0
  %v2924 = vadd.f32 0.0, %v2923
  %2925 = vdwg.mxu0
  %2926 = vmatprep.subr.mxu0 %v345
  %2927 = vmatpush1.msra.mxu0 %v342
  %2928 = vmatprep.subr.mxu0 0.0
  %2929 = vmatpush1.msra.mxu0 0.0
  %2930 = vmatprep.subr.mxu0 0.0
  %2931 = vmatpush1.msra.mxu0 0.0
  %2932 = vmatprep.subr.mxu0 0.0
  %2933 = vmatpush1.msra.mxu0 0.0
  %2934 = vmatprep.subr.mxu0 0.0
  %2935 = vmatpush1.msra.mxu0 0.0
  %2936 = vmatprep.subr.mxu0 0.0
  %2937 = vmatpush1.msra.mxu0 0.0
  %2938 = vmatprep.subr.mxu0 0.0
  %2939 = vmatpush1.msra.mxu0 0.0
  %2940 = vmatprep.subr.mxu0 0.0
  %2941 = vmatpush1.msra.mxu0 0.0
  %2942 = vmatprep.subr.mxu0 0.0
  %2943 = vmatpush1.msra.mxu0 0.0
  %2944 = vmatprep.subr.mxu0 0.0
  %2945 = vmatpush1.msra.mxu0 0.0
  %2946 = vmatprep.subr.mxu0 0.0
  %2947 = vmatpush1.msra.mxu0 0.0
  %2948 = vmatprep.subr.mxu0 0.0
  %2949 = vmatpush1.msra.mxu0 0.0
  %2950 = vmatprep.subr.mxu0 0.0
  %2951 = vmatpush1.msra.mxu0 0.0
  %2952 = vmatprep.subr.mxu0 0.0
  %2953 = vmatpush1.msra.mxu0 0.0
  %2954 = vmatprep.subr.mxu0 0.0
  %2955 = vmatpush1.msra.mxu0 0.0
  %2956 = vmatprep.subr.mxu0 0.0
  %2957 = vmatpush1.msra.mxu0 0.0
  %2958 = vmatprep.subr.mxu0 0.0
  %2959 = vmatpush1.msra.mxu0 0.0
  %2960 = vmatprep.subr.mxu0 0.0
  %2961 = vmatpush1.msra.mxu0 0.0
  %2962 = vmatprep.subr.mxu0 0.0
  %2963 = vmatpush1.msra.mxu0 0.0
  %2964 = vmatprep.subr.mxu0 0.0
  %2965 = vmatpush1.msra.mxu0 0.0
  %2966 = vmatprep.subr.mxu0 0.0
  %2967 = vmatpush1.msra.mxu0 0.0
  %2968 = vmatprep.subr.mxu0 0.0
  %2969 = vmatpush1.msra.mxu0 0.0
  %2970 = vmatprep.subr.mxu0 0.0
  %2971 = vmatpush1.msra.mxu0 0.0
  %2972 = vmatprep.subr.mxu0 0.0
  %2973 = vmatpush1.msra.mxu0 0.0
  %2974 = vmatprep.subr.mxu0 0.0
  %2975 = vmatpush1.msra.mxu0 0.0
  %2976 = vmatprep.subr.mxu0 0.0
  %2977 = vmatpush1.msra.mxu0 0.0
  %2978 = vmatprep.subr.mxu0 0.0
  %2979 = vmatpush1.msra.mxu0 0.0
  %2980 = vmatprep.subr.mxu0 0.0
  %2981 = vmatpush1.msra.mxu0 0.0
  %2982 = vmatprep.subr.mxu0 0.0
  %2983 = vmatpush1.msra.mxu0 0.0
  %2984 = vmatprep.subr.mxu0 0.0
  %2985 = vmatpush1.msra.mxu0 0.0
  %2986 = vmatprep.subr.mxu0 0.0
  %2987 = vmatpush1.msra.mxu0 0.0
  %2988 = vmatprep.subr.mxu0 0.0
  %2989 = vmatpush1.msra.mxu0 0.0
  %2990 = vmatprep.mubr.f32.mxu0 0.0
  %2991 = vmatmul.mubr.f32.gmra.mrb[0].mxu0 %v149
  %v2992 = vpop.f32.mrb[0].mxu0
  %v2993 = vadd.f32 0.0, %v2992
  %v2994 = vpop.f32.mrb[0].mxu0
  %v2995 = vadd.f32 0.0, %v2994
  %2996 = vmatprep.mubr.f32.mxu0 0.0
  %2997 = vmatmul.mubr.f32.gmra.mrb[0].mxu0 %v152
  %v2998 = vpop.f32.mrb[0].mxu0
  %v2999 = vadd.f32 0.0, %v2998
  %v3000 = vpop.f32.mrb[0].mxu0
  %v3001 = vadd.f32 0.0, %v3000
  %3002 = vdwg.mxu0
  %3003 = vmatprep.subr.mxu0 %v351
  %3004 = vmatpush1.msra.mxu0 %v348
  %3005 = vmatprep.subr.mxu0 0.0
  %3006 = vmatpush1.msra.mxu0 0.0
  %3007 = vmatprep.subr.mxu0 0.0
  %3008 = vmatpush1.msra.mxu0 0.0
  %3009 = vmatprep.subr.mxu0 0.0
  %3010 = vmatpush1.msra.mxu0 0.0
  %3011 = vmatprep.subr.mxu0 0.0
  %3012 = vmatpush1.msra.mxu0 0.0
  %3013 = vmatprep.subr.mxu0 0.0
  %3014 = vmatpush1.msra.mxu0 0.0
  %3015 = vmatprep.subr.mxu0 0.0
  %3016 = vmatpush1.msra.mxu0 0.0
  %3017 = vmatprep.subr.mxu0 0.0
  %3018 = vmatpush1.msra.mxu0 0.0
  %3019 = vmatprep.subr.mxu0 0.0
  %3020 = vmatpush1.msra.mxu0 0.0
  %3021 = vmatprep.subr.mxu0 0.0
  %3022 = vmatpush1.msra.mxu0 0.0
  %3023 = vmatprep.subr.mxu0 0.0
  %3024 = vmatpush1.msra.mxu0 0.0
  %3025 = vmatprep.subr.mxu0 0.0
  %3026 = vmatpush1.msra.mxu0 0.0
  %3027 = vmatprep.subr.mxu0 0.0
  %3028 = vmatpush1.msra.mxu0 0.0
  %3029 = vmatprep.subr.mxu0 0.0
  %3030 = vmatpush1.msra.mxu0 0.0
  %3031 = vmatprep.subr.mxu0 0.0
  %3032 = vmatpush1.msra.mxu0 0.0
  %3033 = vmatprep.subr.mxu0 0.0
  %3034 = vmatpush1.msra.mxu0 0.0
  %3035 = vmatprep.subr.mxu0 0.0
  %3036 = vmatpush1.msra.mxu0 0.0
  %3037 = vmatprep.subr.mxu0 0.0
  %3038 = vmatpush1.msra.mxu0 0.0
  %3039 = vmatprep.subr.mxu0 0.0
  %3040 = vmatpush1.msra.mxu0 0.0
  %3041 = vmatprep.subr.mxu0 0.0
  %3042 = vmatpush1.msra.mxu0 0.0
  %3043 = vmatprep.subr.mxu0 0.0
  %3044 = vmatpush1.msra.mxu0 0.0
  %3045 = vmatprep.subr.mxu0 0.0
  %3046 = vmatpush1.msra.mxu0 0.0
  %3047 = vmatprep.subr.mxu0 0.0
  %3048 = vmatpush1.msra.mxu0 0.0
  %3049 = vmatprep.subr.mxu0 0.0
  %3050 = vmatpush1.msra.mxu0 0.0
  %3051 = vmatprep.subr.mxu0 0.0
  %3052 = vmatpush1.msra.mxu0 0.0
  %3053 = vmatprep.subr.mxu0 0.0
  %3054 = vmatpush1.msra.mxu0 0.0
  %3055 = vmatprep.subr.mxu0 0.0
  %3056 = vmatpush1.msra.mxu0 0.0
  %3057 = vmatprep.subr.mxu0 0.0
  %3058 = vmatpush1.msra.mxu0 0.0
  %3059 = vmatprep.subr.mxu0 0.0
  %3060 = vmatpush1.msra.mxu0 0.0
  %3061 = vmatprep.subr.mxu0 0.0
  %3062 = vmatpush1.msra.mxu0 0.0
  %3063 = vmatprep.subr.mxu0 0.0
  %3064 = vmatpush1.msra.mxu0 0.0
  %3065 = vmatprep.subr.mxu0 0.0
  %3066 = vmatpush1.msra.mxu0 0.0
  %3067 = vmatprep.mubr.f32.mxu0 0.0
  %3068 = vmatmul.mubr.f32.gmra.mrb[0].mxu0 %v149
  %v3069 = vpop.f32.mrb[0].mxu0
  %v3070 = vadd.f32 0.0, %v3069
  %v3071 = vpop.f32.mrb[0].mxu0
  %v3072 = vadd.f32 0.0, %v3071
  %3073 = vmatprep.mubr.f32.mxu0 0.0
  %3074 = vmatmul.mubr.f32.gmra.mrb[0].mxu0 %v152
  %v3075 = vpop.f32.mrb[0].mxu0
  %v3076 = vadd.f32 0.0, %v3075
  %v3077 = vpop.f32.mrb[0].mxu0
  %v3078 = vadd.f32 0.0, %v3077
  %3079 = vdwg.mxu0
  %3080 = vmatprep.subr.mxu0 %v357
  %3081 = vmatpush1.msra.mxu0 %v354
  %3082 = vmatprep.subr.mxu0 0.0
  %3083 = vmatpush1.msra.mxu0 0.0
  %3084 = vmatprep.subr.mxu0 0.0
  %3085 = vmatpush1.msra.mxu0 0.0
  %3086 = vmatprep.subr.mxu0 0.0
  %3087 = vmatpush1.msra.mxu0 0.0
  %3088 = vmatprep.subr.mxu0 0.0
  %3089 = vmatpush1.msra.mxu0 0.0
  %3090 = vmatprep.subr.mxu0 0.0
  %3091 = vmatpush1.msra.mxu0 0.0
  %3092 = vmatprep.subr.mxu0 0.0
  %3093 = vmatpush1.msra.mxu0 0.0
  %3094 = vmatprep.subr.mxu0 0.0
  %3095 = vmatpush1.msra.mxu0 0.0
  %3096 = vmatprep.subr.mxu0 0.0
  %3097 = vmatpush1.msra.mxu0 0.0
  %3098 = vmatprep.subr.mxu0 0.0
  %3099 = vmatpush1.msra.mxu0 0.0
  %3100 = vmatprep.subr.mxu0 0.0
  %3101 = vmatpush1.msra.mxu0 0.0
  %3102 = vmatprep.subr.mxu0 0.0
  %3103 = vmatpush1.msra.mxu0 0.0
  %3104 = vmatprep.subr.mxu0 0.0
  %3105 = vmatpush1.msra.mxu0 0.0
  %3106 = vmatprep.subr.mxu0 0.0
  %3107 = vmatpush1.msra.mxu0 0.0
  %3108 = vmatprep.subr.mxu0 0.0
  %3109 = vmatpush1.msra.mxu0 0.0
  %3110 = vmatprep.subr.mxu0 0.0
  %3111 = vmatpush1.msra.mxu0 0.0
  %3112 = vmatprep.subr.mxu0 0.0
  %3113 = vmatpush1.msra.mxu0 0.0
  %3114 = vmatprep.subr.mxu0 0.0
  %3115 = vmatpush1.msra.mxu0 0.0
  %3116 = vmatprep.subr.mxu0 0.0
  %3117 = vmatpush1.msra.mxu0 0.0
  %3118 = vmatprep.subr.mxu0 0.0
  %3119 = vmatpush1.msra.mxu0 0.0
  %3120 = vmatprep.subr.mxu0 0.0
  %3121 = vmatpush1.msra.mxu0 0.0
  %3122 = vmatprep.subr.mxu0 0.0
  %3123 = vmatpush1.msra.mxu0 0.0
  %3124 = vmatprep.subr.mxu0 0.0
  %3125 = vmatpush1.msra.mxu0 0.0
  %3126 = vmatprep.subr.mxu0 0.0
  %3127 = vmatpush1.msra.mxu0 0.0
  %3128 = vmatprep.subr.mxu0 0.0
  %3129 = vmatpush1.msra.mxu0 0.0
  %3130 = vmatprep.subr.mxu0 0.0
  %3131 = vmatpush1.msra.mxu0 0.0
  %3132 = vmatprep.subr.mxu0 0.0
  %3133 = vmatpush1.msra.mxu0 0.0
  %3134 = vmatprep.subr.mxu0 0.0
  %3135 = vmatpush1.msra.mxu0 0.0
  %3136 = vmatprep.subr.mxu0 0.0
  %3137 = vmatpush1.msra.mxu0 0.0
  %3138 = vmatprep.subr.mxu0 0.0
  %3139 = vmatpush1.msra.mxu0 0.0
  %3140 = vmatprep.subr.mxu0 0.0
  %3141 = vmatpush1.msra.mxu0 0.0
  %3142 = vmatprep.subr.mxu0 0.0
  %3143 = vmatpush1.msra.mxu0 0.0
  %3144 = vmatprep.mubr.f32.mxu0 0.0
  %3145 = vmatmul.mubr.f32.gmra.mrb[0].mxu0 %v149
  %v3146 = vpop.f32.mrb[0].mxu0
  %v3147 = vadd.f32 0.0, %v3146
  %v3148 = vpop.f32.mrb[0].mxu0
  %v3149 = vadd.f32 0.0, %v3148
  %3150 = vmatprep.mubr.f32.mxu0 0.0
  %3151 = vmatmul.mubr.f32.gmra.mrb[0].mxu0 %v152
  %v3152 = vpop.f32.mrb[0].mxu0
  %v3153 = vadd.f32 0.0, %v3152
  %v3154 = vpop.f32.mrb[0].mxu0
  %v3155 = vadd.f32 0.0, %v3154
  %3156 = vdwg.mxu0
  %3157 = vmatprep.subr.mxu0 %v363
  %3158 = vmatpush1.msra.mxu0 %v360
  %3159 = vmatprep.subr.mxu0 0.0
  %3160 = vmatpush1.msra.mxu0 0.0
  %3161 = vmatprep.subr.mxu0 0.0
  %3162 = vmatpush1.msra.mxu0 0.0
  %3163 = vmatprep.subr.mxu0 0.0
  %3164 = vmatpush1.msra.mxu0 0.0
  %3165 = vmatprep.subr.mxu0 0.0
  %3166 = vmatpush1.msra.mxu0 0.0
  %3167 = vmatprep.subr.mxu0 0.0
  %3168 = vmatpush1.msra.mxu0 0.0
  %3169 = vmatprep.subr.mxu0 0.0
  %3170 = vmatpush1.msra.mxu0 0.0
  %3171 = vmatprep.subr.mxu0 0.0
  %3172 = vmatpush1.msra.mxu0 0.0
  %3173 = vmatprep.subr.mxu0 0.0
  %3174 = vmatpush1.msra.mxu0 0.0
  %3175 = vmatprep.subr.mxu0 0.0
  %3176 = vmatpush1.msra.mxu0 0.0
  %3177 = vmatprep.subr.mxu0 0.0
  %3178 = vmatpush1.msra.mxu0 0.0
  %3179 = vmatprep.subr.mxu0 0.0
  %3180 = vmatpush1.msra.mxu0 0.0
  %3181 = vmatprep.subr.mxu0 0.0
  %3182 = vmatpush1.msra.mxu0 0.0
  %3183 = vmatprep.subr.mxu0 0.0
  %3184 = vmatpush1.msra.mxu0 0.0
  %3185 = vmatprep.subr.mxu0 0.0
  %3186 = vmatpush1.msra.mxu0 0.0
  %3187 = vmatprep.subr.mxu0 0.0
  %3188 = vmatpush1.msra.mxu0 0.0
  %3189 = vmatprep.subr.mxu0 0.0
  %3190 = vmatpush1.msra.mxu0 0.0
  %3191 = vmatprep.subr.mxu0 0.0
  %3192 = vmatpush1.msra.mxu0 0.0
  %3193 = vmatprep.subr.mxu0 0.0
  %3194 = vmatpush1.msra.mxu0 0.0
  %3195 = vmatprep.subr.mxu0 0.0
  %3196 = vmatpush1.msra.mxu0 0.0
  %3197 = vmatprep.subr.mxu0 0.0
  %3198 = vmatpush1.msra.mxu0 0.0
  %3199 = vmatprep.subr.mxu0 0.0
  %3200 = vmatpush1.msra.mxu0 0.0
  %3201 = vmatprep.subr.mxu0 0.0
  %3202 = vmatpush1.msra.mxu0 0.0
  %3203 = vmatprep.subr.mxu0 0.0
  %3204 = vmatpush1.msra.mxu0 0.0
  %3205 = vmatprep.subr.mxu0 0.0
  %3206 = vmatpush1.msra.mxu0 0.0
  %3207 = vmatprep.subr.mxu0 0.0
  %3208 = vmatpush1.msra.mxu0 0.0
  %3209 = vmatprep.subr.mxu0 0.0
  %3210 = vmatpush1.msra.mxu0 0.0
  %3211 = vmatprep.subr.mxu0 0.0
  %3212 = vmatpush1.msra.mxu0 0.0
  %3213 = vmatprep.subr.mxu0 0.0
  %3214 = vmatpush1.msra.mxu0 0.0
  %3215 = vmatprep.subr.mxu0 0.0
  %3216 = vmatpush1.msra.mxu0 0.0
  %3217 = vmatprep.subr.mxu0 0.0
  %3218 = vmatpush1.msra.mxu0 0.0
  %3219 = vmatprep.subr.mxu0 0.0
  %3220 = vmatpush1.msra.mxu0 0.0
  %3221 = vmatprep.mubr.f32.mxu0 0.0
  %3222 = vmatmul.mubr.f32.gmra.mrb[0].mxu0 %v149
  %v3223 = vpop.f32.mrb[0].mxu0
  %v3224 = vadd.f32 0.0, %v3223
  %v3225 = vpop.f32.mrb[0].mxu0
  %v3226 = vadd.f32 0.0, %v3225
  %3227 = vmatprep.mubr.f32.mxu0 0.0
  %3228 = vmatmul.mubr.f32.gmra.mrb[0].mxu0 %v152
  %v3229 = vpop.f32.mrb[0].mxu0
  %v3230 = vadd.f32 0.0, %v3229
  %v3231 = vpop.f32.mrb[0].mxu0
  %v3232 = vadd.f32 0.0, %v3231
  %3233 = vdwg.mxu0
  %3234 = vmatprep.subr.mxu0 %v369
  %3235 = vmatpush1.msra.mxu0 %v366
  %3236 = vmatprep.subr.mxu0 0.0
  %3237 = vmatpush1.msra.mxu0 0.0
  %3238 = vmatprep.subr.mxu0 0.0
  %3239 = vmatpush1.msra.mxu0 0.0
  %3240 = vmatprep.subr.mxu0 0.0
  %3241 = vmatpush1.msra.mxu0 0.0
  %3242 = vmatprep.subr.mxu0 0.0
  %3243 = vmatpush1.msra.mxu0 0.0
  %3244 = vmatprep.subr.mxu0 0.0
  %3245 = vmatpush1.msra.mxu0 0.0
  %3246 = vmatprep.subr.mxu0 0.0
  %3247 = vmatpush1.msra.mxu0 0.0
  %3248 = vmatprep.subr.mxu0 0.0
  %3249 = vmatpush1.msra.mxu0 0.0
  %3250 = vmatprep.subr.mxu0 0.0
  %3251 = vmatpush1.msra.mxu0 0.0
  %3252 = vmatprep.subr.mxu0 0.0
  %3253 = vmatpush1.msra.mxu0 0.0
  %3254 = vmatprep.subr.mxu0 0.0
  %3255 = vmatpush1.msra.mxu0 0.0
  %3256 = vmatprep.subr.mxu0 0.0
  %3257 = vmatpush1.msra.mxu0 0.0
  %3258 = vmatprep.subr.mxu0 0.0
  %3259 = vmatpush1.msra.mxu0 0.0
  %3260 = vmatprep.subr.mxu0 0.0
  %3261 = vmatpush1.msra.mxu0 0.0
  %3262 = vmatprep.subr.mxu0 0.0
  %3263 = vmatpush1.msra.mxu0 0.0
  %3264 = vmatprep.subr.mxu0 0.0
  %3265 = vmatpush1.msra.mxu0 0.0
  %3266 = vmatprep.subr.mxu0 0.0
  %3267 = vmatpush1.msra.mxu0 0.0
  %3268 = vmatprep.subr.mxu0 0.0
  %3269 = vmatpush1.msra.mxu0 0.0
  %3270 = vmatprep.subr.mxu0 0.0
  %3271 = vmatpush1.msra.mxu0 0.0
  %3272 = vmatprep.subr.mxu0 0.0
  %3273 = vmatpush1.msra.mxu0 0.0
  %3274 = vmatprep.subr.mxu0 0.0
  %3275 = vmatpush1.msra.mxu0 0.0
  %3276 = vmatprep.subr.mxu0 0.0
  %3277 = vmatpush1.msra.mxu0 0.0
  %3278 = vmatprep.subr.mxu0 0.0
  %3279 = vmatpush1.msra.mxu0 0.0
  %3280 = vmatprep.subr.mxu0 0.0
  %3281 = vmatpush1.msra.mxu0 0.0
  %3282 = vmatprep.subr.mxu0 0.0
  %3283 = vmatpush1.msra.mxu0 0.0
  %3284 = vmatprep.subr.mxu0 0.0
  %3285 = vmatpush1.msra.mxu0 0.0
  %3286 = vmatprep.subr.mxu0 0.0
  %3287 = vmatpush1.msra.mxu0 0.0
  %3288 = vmatprep.subr.mxu0 0.0
  %3289 = vmatpush1.msra.mxu0 0.0
  %3290 = vmatprep.subr.mxu0 0.0
  %3291 = vmatpush1.msra.mxu0 0.0
  %3292 = vmatprep.subr.mxu0 0.0
  %3293 = vmatpush1.msra.mxu0 0.0
  %3294 = vmatprep.subr.mxu0 0.0
  %3295 = vmatpush1.msra.mxu0 0.0
  %3296 = vmatprep.subr.mxu0 0.0
  %3297 = vmatpush1.msra.mxu0 0.0
  %3298 = vmatprep.mubr.f32.mxu0 0.0
  %3299 = vmatmul.mubr.f32.gmra.mrb[0].mxu0 %v149
  %v3300 = vpop.f32.mrb[0].mxu0
  %v3301 = vadd.f32 0.0, %v3300
  %v3302 = vpop.f32.mrb[0].mxu0
  %v3303 = vadd.f32 0.0, %v3302
  %3304 = vmatprep.mubr.f32.mxu0 0.0
  %3305 = vmatmul.mubr.f32.gmra.mrb[0].mxu0 %v152
  %v3306 = vpop.f32.mrb[0].mxu0
  %v3307 = vadd.f32 0.0, %v3306
  %v3308 = vpop.f32.mrb[0].mxu0
  %v3309 = vadd.f32 0.0, %v3308
  %3310 = vdwg.mxu0
  %3311 = vmatprep.subr.mxu0 %v375
  %3312 = vmatpush1.msra.mxu0 %v372
  %3313 = vmatprep.subr.mxu0 0.0
  %3314 = vmatpush1.msra.mxu0 0.0
  %3315 = vmatprep.subr.mxu0 0.0
  %3316 = vmatpush1.msra.mxu0 0.0
  %3317 = vmatprep.subr.mxu0 0.0
  %3318 = vmatpush1.msra.mxu0 0.0
  %3319 = vmatprep.subr.mxu0 0.0
  %3320 = vmatpush1.msra.mxu0 0.0
  %3321 = vmatprep.subr.mxu0 0.0
  %3322 = vmatpush1.msra.mxu0 0.0
  %3323 = vmatprep.subr.mxu0 0.0
  %3324 = vmatpush1.msra.mxu0 0.0
  %3325 = vmatprep.subr.mxu0 0.0
  %3326 = vmatpush1.msra.mxu0 0.0
  %3327 = vmatprep.subr.mxu0 0.0
  %3328 = vmatpush1.msra.mxu0 0.0
  %3329 = vmatprep.subr.mxu0 0.0
  %3330 = vmatpush1.msra.mxu0 0.0
  %3331 = vmatprep.subr.mxu0 0.0
  %3332 = vmatpush1.msra.mxu0 0.0
  %3333 = vmatprep.subr.mxu0 0.0
  %3334 = vmatpush1.msra.mxu0 0.0
  %3335 = vmatprep.subr.mxu0 0.0
  %3336 = vmatpush1.msra.mxu0 0.0
  %3337 = vmatprep.subr.mxu0 0.0
  %3338 = vmatpush1.msra.mxu0 0.0
  %3339 = vmatprep.subr.mxu0 0.0
  %3340 = vmatpush1.msra.mxu0 0.0
  %3341 = vmatprep.subr.mxu0 0.0
  %3342 = vmatpush1.msra.mxu0 0.0
  %3343 = vmatprep.subr.mxu0 0.0
  %3344 = vmatpush1.msra.mxu0 0.0
  %3345 = vmatprep.subr.mxu0 0.0
  %3346 = vmatpush1.msra.mxu0 0.0
  %3347 = vmatprep.subr.mxu0 0.0
  %3348 = vmatpush1.msra.mxu0 0.0
  %3349 = vmatprep.subr.mxu0 0.0
  %3350 = vmatpush1.msra.mxu0 0.0
  %3351 = vmatprep.subr.mxu0 0.0
  %3352 = vmatpush1.msra.mxu0 0.0
  %3353 = vmatprep.subr.mxu0 0.0
  %3354 = vmatpush1.msra.mxu0 0.0
  %3355 = vmatprep.subr.mxu0 0.0
  %3356 = vmatpush1.msra.mxu0 0.0
  %3357 = vmatprep.subr.mxu0 0.0
  %3358 = vmatpush1.msra.mxu0 0.0
  %3359 = vmatprep.subr.mxu0 0.0
  %3360 = vmatpush1.msra.mxu0 0.0
  %3361 = vmatprep.subr.mxu0 0.0
  %3362 = vmatpush1.msra.mxu0 0.0
  %3363 = vmatprep.subr.mxu0 0.0
  %3364 = vmatpush1.msra.mxu0 0.0
  %3365 = vmatprep.subr.mxu0 0.0
  %3366 = vmatpush1.msra.mxu0 0.0
  %3367 = vmatprep.subr.mxu0 0.0
  %3368 = vmatpush1.msra.mxu0 0.0
  %3369 = vmatprep.subr.mxu0 0.0
  %3370 = vmatpush1.msra.mxu0 0.0
  %3371 = vmatprep.subr.mxu0 0.0
  %3372 = vmatpush1.msra.mxu0 0.0
  %3373 = vmatprep.subr.mxu0 0.0
  %3374 = vmatpush1.msra.mxu0 0.0
  %3375 = vmatprep.mubr.f32.mxu0 0.0
  %3376 = vmatmul.mubr.f32.gmra.mrb[0].mxu0 %v149
  %v3377 = vpop.f32.mrb[0].mxu0
  %v3378 = vadd.f32 0.0, %v3377
  %v3379 = vpop.f32.mrb[0].mxu0
  %v3380 = vadd.f32 0.0, %v3379
  %3381 = vmatprep.mubr.f32.mxu0 0.0
  %3382 = vmatmul.mubr.f32.gmra.mrb[0].mxu0 %v152
  %v3383 = vpop.f32.mrb[0].mxu0
  %v3384 = vadd.f32 0.0, %v3383
  %v3385 = vpop.f32.mrb[0].mxu0
  %v3386 = vadd.f32 0.0, %v3385
  %3387 = vdwg.mxu0
  %3388 = vmatprep.subr.mxu0 %v381
  %3389 = vmatpush1.msra.mxu0 %v378
  %3390 = vmatprep.subr.mxu0 0.0
  %3391 = vmatpush1.msra.mxu0 0.0
  %3392 = vmatprep.subr.mxu0 0.0
  %3393 = vmatpush1.msra.mxu0 0.0
  %3394 = vmatprep.subr.mxu0 0.0
  %3395 = vmatpush1.msra.mxu0 0.0
  %3396 = vmatprep.subr.mxu0 0.0
  %3397 = vmatpush1.msra.mxu0 0.0
  %3398 = vmatprep.subr.mxu0 0.0
  %3399 = vmatpush1.msra.mxu0 0.0
  %3400 = vmatprep.subr.mxu0 0.0
  %3401 = vmatpush1.msra.mxu0 0.0
  %3402 = vmatprep.subr.mxu0 0.0
  %3403 = vmatpush1.msra.mxu0 0.0
  %3404 = vmatprep.subr.mxu0 0.0
  %3405 = vmatpush1.msra.mxu0 0.0
  %3406 = vmatprep.subr.mxu0 0.0
  %3407 = vmatpush1.msra.mxu0 0.0
  %3408 = vmatprep.subr.mxu0 0.0
  %3409 = vmatpush1.msra.mxu0 0.0
  %3410 = vmatprep.subr.mxu0 0.0
  %3411 = vmatpush1.msra.mxu0 0.0
  %3412 = vmatprep.subr.mxu0 0.0
  %3413 = vmatpush1.msra.mxu0 0.0
  %3414 = vmatprep.subr.mxu0 0.0
  %3415 = vmatpush1.msra.mxu0 0.0
  %3416 = vmatprep.subr.mxu0 0.0
  %3417 = vmatpush1.msra.mxu0 0.0
  %3418 = vmatprep.subr.mxu0 0.0
  %3419 = vmatpush1.msra.mxu0 0.0
  %3420 = vmatprep.subr.mxu0 0.0
  %3421 = vmatpush1.msra.mxu0 0.0
  %3422 = vmatprep.subr.mxu0 0.0
  %3423 = vmatpush1.msra.mxu0 0.0
  %3424 = vmatprep.subr.mxu0 0.0
  %3425 = vmatpush1.msra.mxu0 0.0
  %3426 = vmatprep.subr.mxu0 0.0
  %3427 = vmatpush1.msra.mxu0 0.0
  %3428 = vmatprep.subr.mxu0 0.0
  %3429 = vmatpush1.msra.mxu0 0.0
  %3430 = vmatprep.subr.mxu0 0.0
  %3431 = vmatpush1.msra.mxu0 0.0
  %3432 = vmatprep.subr.mxu0 0.0
  %3433 = vmatpush1.msra.mxu0 0.0
  %3434 = vmatprep.subr.mxu0 0.0
  %3435 = vmatpush1.msra.mxu0 0.0
  %3436 = vmatprep.subr.mxu0 0.0
  %3437 = vmatpush1.msra.mxu0 0.0
  %3438 = vmatprep.subr.mxu0 0.0
  %3439 = vmatpush1.msra.mxu0 0.0
  %3440 = vmatprep.subr.mxu0 0.0
  %3441 = vmatpush1.msra.mxu0 0.0
  %3442 = vmatprep.subr.mxu0 0.0
  %3443 = vmatpush1.msra.mxu0 0.0
  %3444 = vmatprep.subr.mxu0 0.0
  %3445 = vmatpush1.msra.mxu0 0.0
  %3446 = vmatprep.subr.mxu0 0.0
  %3447 = vmatpush1.msra.mxu0 0.0
  %3448 = vmatprep.subr.mxu0 0.0
  %3449 = vmatpush1.msra.mxu0 0.0
  %3450 = vmatprep.subr.mxu0 0.0
  %3451 = vmatpush1.msra.mxu0 0.0
  %3452 = vmatprep.mubr.f32.mxu0 0.0
  %3453 = vmatmul.mubr.f32.gmra.mrb[0].mxu0 %v149
  %v3454 = vpop.f32.mrb[0].mxu0
  %v3455 = vadd.f32 0.0, %v3454
  %v3456 = vpop.f32.mrb[0].mxu0
  %v3457 = vadd.f32 0.0, %v3456
  %3458 = vmatprep.mubr.f32.mxu0 0.0
  %3459 = vmatmul.mubr.f32.gmra.mrb[0].mxu0 %v152
  %v3460 = vpop.f32.mrb[0].mxu0
  %v3461 = vadd.f32 0.0, %v3460
  %v3462 = vpop.f32.mrb[0].mxu0
  %v3463 = vadd.f32 0.0, %v3462
  %3464 = vdwg.mxu0
  %3465 = vmatprep.subr.mxu0 %v387
  %3466 = vmatpush1.msra.mxu0 %v384
  %3467 = vmatprep.subr.mxu0 0.0
  %3468 = vmatpush1.msra.mxu0 0.0
  %3469 = vmatprep.subr.mxu0 0.0
  %3470 = vmatpush1.msra.mxu0 0.0
  %3471 = vmatprep.subr.mxu0 0.0
  %3472 = vmatpush1.msra.mxu0 0.0
  %3473 = vmatprep.subr.mxu0 0.0
  %3474 = vmatpush1.msra.mxu0 0.0
  %3475 = vmatprep.subr.mxu0 0.0
  %3476 = vmatpush1.msra.mxu0 0.0
  %3477 = vmatprep.subr.mxu0 0.0
  %3478 = vmatpush1.msra.mxu0 0.0
  %3479 = vmatprep.subr.mxu0 0.0
  %3480 = vmatpush1.msra.mxu0 0.0
  %3481 = vmatprep.subr.mxu0 0.0
  %3482 = vmatpush1.msra.mxu0 0.0
  %3483 = vmatprep.subr.mxu0 0.0
  %3484 = vmatpush1.msra.mxu0 0.0
  %3485 = vmatprep.subr.mxu0 0.0
  %3486 = vmatpush1.msra.mxu0 0.0
  %3487 = vmatprep.subr.mxu0 0.0
  %3488 = vmatpush1.msra.mxu0 0.0
  %3489 = vmatprep.subr.mxu0 0.0
  %3490 = vmatpush1.msra.mxu0 0.0
  %3491 = vmatprep.subr.mxu0 0.0
  %3492 = vmatpush1.msra.mxu0 0.0
  %3493 = vmatprep.subr.mxu0 0.0
  %3494 = vmatpush1.msra.mxu0 0.0
  %3495 = vmatprep.subr.mxu0 0.0
  %3496 = vmatpush1.msra.mxu0 0.0
  %3497 = vmatprep.subr.mxu0 0.0
  %3498 = vmatpush1.msra.mxu0 0.0
  %3499 = vmatprep.subr.mxu0 0.0
  %3500 = vmatpush1.msra.mxu0 0.0
  %3501 = vmatprep.subr.mxu0 0.0
  %3502 = vmatpush1.msra.mxu0 0.0
  %3503 = vmatprep.subr.mxu0 0.0
  %3504 = vmatpush1.msra.mxu0 0.0
  %3505 = vmatprep.subr.mxu0 0.0
  %3506 = vmatpush1.msra.mxu0 0.0
  %3507 = vmatprep.subr.mxu0 0.0
  %3508 = vmatpush1.msra.mxu0 0.0
  %3509 = vmatprep.subr.mxu0 0.0
  %3510 = vmatpush1.msra.mxu0 0.0
  %3511 = vmatprep.subr.mxu0 0.0
  %3512 = vmatpush1.msra.mxu0 0.0
  %3513 = vmatprep.subr.mxu0 0.0
  %3514 = vmatpush1.msra.mxu0 0.0
  %3515 = vmatprep.subr.mxu0 0.0
  %3516 = vmatpush1.msra.mxu0 0.0
  %3517 = vmatprep.subr.mxu0 0.0
  %3518 = vmatpush1.msra.mxu0 0.0
  %3519 = vmatprep.subr.mxu0 0.0
  %3520 = vmatpush1.msra.mxu0 0.0
  %3521 = vmatprep.subr.mxu0 0.0
  %3522 = vmatpush1.msra.mxu0 0.0
  %3523 = vmatprep.subr.mxu0 0.0
  %3524 = vmatpush1.msra.mxu0 0.0
  %3525 = vmatprep.subr.mxu0 0.0
  %3526 = vmatpush1.msra.mxu0 0.0
  %3527 = vmatprep.subr.mxu0 0.0
  %3528 = vmatpush1.msra.mxu0 0.0
  %3529 = vmatprep.mubr.f32.mxu0 0.0
  %3530 = vmatmul.mubr.f32.gmra.mrb[0].mxu0 %v149
  %v3531 = vpop.f32.mrb[0].mxu0
  %v3532 = vadd.f32 0.0, %v3531
  %v3533 = vpop.f32.mrb[0].mxu0
  %v3534 = vadd.f32 0.0, %v3533
  %3535 = vmatprep.mubr.f32.mxu0 0.0
  %3536 = vmatmul.mubr.f32.gmra.mrb[0].mxu0 %v152
  %v3537 = vpop.f32.mrb[0].mxu0
  %v3538 = vadd.f32 0.0, %v3537
  %v3539 = vpop.f32.mrb[0].mxu0
  %v3540 = vadd.f32 0.0, %v3539
  %3541 = vdwg.mxu0
  %3542 = vmatprep.subr.mxu0 %v393
  %3543 = vmatpush1.msra.mxu0 %v390
  %3544 = vmatprep.subr.mxu0 0.0
  %3545 = vmatpush1.msra.mxu0 0.0
  %3546 = vmatprep.subr.mxu0 0.0
  %3547 = vmatpush1.msra.mxu0 0.0
  %3548 = vmatprep.subr.mxu0 0.0
  %3549 = vmatpush1.msra.mxu0 0.0
  %3550 = vmatprep.subr.mxu0 0.0
  %3551 = vmatpush1.msra.mxu0 0.0
  %3552 = vmatprep.subr.mxu0 0.0
  %3553 = vmatpush1.msra.mxu0 0.0
  %3554 = vmatprep.subr.mxu0 0.0
  %3555 = vmatpush1.msra.mxu0 0.0
  %3556 = vmatprep.subr.mxu0 0.0
  %3557 = vmatpush1.msra.mxu0 0.0
  %3558 = vmatprep.subr.mxu0 0.0
  %3559 = vmatpush1.msra.mxu0 0.0
  %3560 = vmatprep.subr.mxu0 0.0
  %3561 = vmatpush1.msra.mxu0 0.0
  %3562 = vmatprep.subr.mxu0 0.0
  %3563 = vmatpush1.msra.mxu0 0.0
  %3564 = vmatprep.subr.mxu0 0.0
  %3565 = vmatpush1.msra.mxu0 0.0
  %3566 = vmatprep.subr.mxu0 0.0
  %3567 = vmatpush1.msra.mxu0 0.0
  %3568 = vmatprep.subr.mxu0 0.0
  %3569 = vmatpush1.msra.mxu0 0.0
  %3570 = vmatprep.subr.mxu0 0.0
  %3571 = vmatpush1.msra.mxu0 0.0
  %3572 = vmatprep.subr.mxu0 0.0
  %3573 = vmatpush1.msra.mxu0 0.0
  %3574 = vmatprep.subr.mxu0 0.0
  %3575 = vmatpush1.msra.mxu0 0.0
  %3576 = vmatprep.subr.mxu0 0.0
  %3577 = vmatpush1.msra.mxu0 0.0
  %3578 = vmatprep.subr.mxu0 0.0
  %3579 = vmatpush1.msra.mxu0 0.0
  %3580 = vmatprep.subr.mxu0 0.0
  %3581 = vmatpush1.msra.mxu0 0.0
  %3582 = vmatprep.subr.mxu0 0.0
  %3583 = vmatpush1.msra.mxu0 0.0
  %3584 = vmatprep.subr.mxu0 0.0
  %3585 = vmatpush1.msra.mxu0 0.0
  %3586 = vmatprep.subr.mxu0 0.0
  %3587 = vmatpush1.msra.mxu0 0.0
  %3588 = vmatprep.subr.mxu0 0.0
  %3589 = vmatpush1.msra.mxu0 0.0
  %3590 = vmatprep.subr.mxu0 0.0
  %3591 = vmatpush1.msra.mxu0 0.0
  %3592 = vmatprep.subr.mxu0 0.0
  %3593 = vmatpush1.msra.mxu0 0.0
  %3594 = vmatprep.subr.mxu0 0.0
  %3595 = vmatpush1.msra.mxu0 0.0
  %3596 = vmatprep.subr.mxu0 0.0
  %3597 = vmatpush1.msra.mxu0 0.0
  %3598 = vmatprep.subr.mxu0 0.0
  %3599 = vmatpush1.msra.mxu0 0.0
  %3600 = vmatprep.subr.mxu0 0.0
  %3601 = vmatpush1.msra.mxu0 0.0
  %3602 = vmatprep.subr.mxu0 0.0
  %3603 = vmatpush1.msra.mxu0 0.0
  %3604 = vmatprep.subr.mxu0 0.0
  %3605 = vmatpush1.msra.mxu0 0.0
  %3606 = vmatprep.mubr.f32.mxu0 0.0
  %3607 = vmatmul.mubr.f32.gmra.mrb[0].mxu0 %v149
  %v3608 = vpop.f32.mrb[0].mxu0
  %v3609 = vadd.f32 0.0, %v3608
  %v3610 = vpop.f32.mrb[0].mxu0
  %v3611 = vadd.f32 0.0, %v3610
  %3612 = vmatprep.mubr.f32.mxu0 0.0
  %3613 = vmatmul.mubr.f32.gmra.mrb[0].mxu0 %v152
  %v3614 = vpop.f32.mrb[0].mxu0
  %v3615 = vadd.f32 0.0, %v3614
  %v3616 = vpop.f32.mrb[0].mxu0
  %v3617 = vadd.f32 0.0, %v3616
  %3618 = vdwg.mxu0
  %3619 = vmatprep.subr.mxu0 %v399
  %3620 = vmatpush1.msra.mxu0 %v396
  %3621 = vmatprep.subr.mxu0 0.0
  %3622 = vmatpush1.msra.mxu0 0.0
  %3623 = vmatprep.subr.mxu0 0.0
  %3624 = vmatpush1.msra.mxu0 0.0
  %3625 = vmatprep.subr.mxu0 0.0
  %3626 = vmatpush1.msra.mxu0 0.0
  %3627 = vmatprep.subr.mxu0 0.0
  %3628 = vmatpush1.msra.mxu0 0.0
  %3629 = vmatprep.subr.mxu0 0.0
  %3630 = vmatpush1.msra.mxu0 0.0
  %3631 = vmatprep.subr.mxu0 0.0
  %3632 = vmatpush1.msra.mxu0 0.0
  %3633 = vmatprep.subr.mxu0 0.0
  %3634 = vmatpush1.msra.mxu0 0.0
  %3635 = vmatprep.subr.mxu0 0.0
  %3636 = vmatpush1.msra.mxu0 0.0
  %3637 = vmatprep.subr.mxu0 0.0
  %3638 = vmatpush1.msra.mxu0 0.0
  %3639 = vmatprep.subr.mxu0 0.0
  %3640 = vmatpush1.msra.mxu0 0.0
  %3641 = vmatprep.subr.mxu0 0.0
  %3642 = vmatpush1.msra.mxu0 0.0
  %3643 = vmatprep.subr.mxu0 0.0
  %3644 = vmatpush1.msra.mxu0 0.0
  %3645 = vmatprep.subr.mxu0 0.0
  %3646 = vmatpush1.msra.mxu0 0.0
  %3647 = vmatprep.subr.mxu0 0.0
  %3648 = vmatpush1.msra.mxu0 0.0
  %3649 = vmatprep.subr.mxu0 0.0
  %3650 = vmatpush1.msra.mxu0 0.0
  %3651 = vmatprep.subr.mxu0 0.0
  %3652 = vmatpush1.msra.mxu0 0.0
  %3653 = vmatprep.subr.mxu0 0.0
  %3654 = vmatpush1.msra.mxu0 0.0
  %3655 = vmatprep.subr.mxu0 0.0
  %3656 = vmatpush1.msra.mxu0 0.0
  %3657 = vmatprep.subr.mxu0 0.0
  %3658 = vmatpush1.msra.mxu0 0.0
  %3659 = vmatprep.subr.mxu0 0.0
  %3660 = vmatpush1.msra.mxu0 0.0
  %3661 = vmatprep.subr.mxu0 0.0
  %3662 = vmatpush1.msra.mxu0 0.0
  %3663 = vmatprep.subr.mxu0 0.0
  %3664 = vmatpush1.msra.mxu0 0.0
  %3665 = vmatprep.subr.mxu0 0.0
  %3666 = vmatpush1.msra.mxu0 0.0
  %3667 = vmatprep.subr.mxu0 0.0
  %3668 = vmatpush1.msra.mxu0 0.0
  %3669 = vmatprep.subr.mxu0 0.0
  %3670 = vmatpush1.msra.mxu0 0.0
  %3671 = vmatprep.subr.mxu0 0.0
  %3672 = vmatpush1.msra.mxu0 0.0
  %3673 = vmatprep.subr.mxu0 0.0
  %3674 = vmatpush1.msra.mxu0 0.0
  %3675 = vmatprep.subr.mxu0 0.0
  %3676 = vmatpush1.msra.mxu0 0.0
  %3677 = vmatprep.subr.mxu0 0.0
  %3678 = vmatpush1.msra.mxu0 0.0
  %3679 = vmatprep.subr.mxu0 0.0
  %3680 = vmatpush1.msra.mxu0 0.0
  %3681 = vmatprep.subr.mxu0 0.0
  %3682 = vmatpush1.msra.mxu0 0.0
  %3683 = vmatprep.mubr.f32.mxu0 0.0
  %3684 = vmatmul.mubr.f32.gmra.mrb[0].mxu0 %v149
  %v3685 = vpop.f32.mrb[0].mxu0
  %v3686 = vadd.f32 0.0, %v3685
  %v3687 = vpop.f32.mrb[0].mxu0
  %v3688 = vadd.f32 0.0, %v3687
  %3689 = vmatprep.mubr.f32.mxu0 0.0
  %3690 = vmatmul.mubr.f32.gmra.mrb[0].mxu0 %v152
  %v3691 = vpop.f32.mrb[0].mxu0
  %v3692 = vadd.f32 0.0, %v3691
  %v3693 = vpop.f32.mrb[0].mxu0
  %v3694 = vadd.f32 0.0, %v3693
  %3695 = vdwg.mxu0
  %3696 = vmatprep.subr.mxu0 %v405
  %3697 = vmatpush1.msra.mxu0 %v402
  %3698 = vmatprep.subr.mxu0 0.0
  %3699 = vmatpush1.msra.mxu0 0.0
  %3700 = vmatprep.subr.mxu0 0.0
  %3701 = vmatpush1.msra.mxu0 0.0
  %3702 = vmatprep.subr.mxu0 0.0
  %3703 = vmatpush1.msra.mxu0 0.0
  %3704 = vmatprep.subr.mxu0 0.0
  %3705 = vmatpush1.msra.mxu0 0.0
  %3706 = vmatprep.subr.mxu0 0.0
  %3707 = vmatpush1.msra.mxu0 0.0
  %3708 = vmatprep.subr.mxu0 0.0
  %3709 = vmatpush1.msra.mxu0 0.0
  %3710 = vmatprep.subr.mxu0 0.0
  %3711 = vmatpush1.msra.mxu0 0.0
  %3712 = vmatprep.subr.mxu0 0.0
  %3713 = vmatpush1.msra.mxu0 0.0
  %3714 = vmatprep.subr.mxu0 0.0
  %3715 = vmatpush1.msra.mxu0 0.0
  %3716 = vmatprep.subr.mxu0 0.0
  %3717 = vmatpush1.msra.mxu0 0.0
  %3718 = vmatprep.subr.mxu0 0.0
  %3719 = vmatpush1.msra.mxu0 0.0
  %3720 = vmatprep.subr.mxu0 0.0
  %3721 = vmatpush1.msra.mxu0 0.0
  %3722 = vmatprep.subr.mxu0 0.0
  %3723 = vmatpush1.msra.mxu0 0.0
  %3724 = vmatprep.subr.mxu0 0.0
  %3725 = vmatpush1.msra.mxu0 0.0
  %3726 = vmatprep.subr.mxu0 0.0
  %3727 = vmatpush1.msra.mxu0 0.0
  %3728 = vmatprep.subr.mxu0 0.0
  %3729 = vmatpush1.msra.mxu0 0.0
  %3730 = vmatprep.subr.mxu0 0.0
  %3731 = vmatpush1.msra.mxu0 0.0
  %3732 = vmatprep.subr.mxu0 0.0
  %3733 = vmatpush1.msra.mxu0 0.0
  %3734 = vmatprep.subr.mxu0 0.0
  %3735 = vmatpush1.msra.mxu0 0.0
  %3736 = vmatprep.subr.mxu0 0.0
  %3737 = vmatpush1.msra.mxu0 0.0
  %3738 = vmatprep.subr.mxu0 0.0
  %3739 = vmatpush1.msra.mxu0 0.0
  %3740 = vmatprep.subr.mxu0 0.0
  %3741 = vmatpush1.msra.mxu0 0.0
  %3742 = vmatprep.subr.mxu0 0.0
  %3743 = vmatpush1.msra.mxu0 0.0
  %3744 = vmatprep.subr.mxu0 0.0
  %3745 = vmatpush1.msra.mxu0 0.0
  %3746 = vmatprep.subr.mxu0 0.0
  %3747 = vmatpush1.msra.mxu0 0.0
  %3748 = vmatprep.subr.mxu0 0.0
  %3749 = vmatpush1.msra.mxu0 0.0
  %3750 = vmatprep.subr.mxu0 0.0
  %3751 = vmatpush1.msra.mxu0 0.0
  %3752 = vmatprep.subr.mxu0 0.0
  %3753 = vmatpush1.msra.mxu0 0.0
  %3754 = vmatprep.subr.mxu0 0.0
  %3755 = vmatpush1.msra.mxu0 0.0
  %3756 = vmatprep.subr.mxu0 0.0
  %3757 = vmatpush1.msra.mxu0 0.0
  %3758 = vmatprep.subr.mxu0 0.0
  %3759 = vmatpush1.msra.mxu0 0.0
  %3760 = vmatprep.mubr.f32.mxu0 0.0
  %3761 = vmatmul.mubr.f32.gmra.mrb[0].mxu0 %v149
  %v3762 = vpop.f32.mrb[0].mxu0
  %v3763 = vadd.f32 0.0, %v3762
  %v3764 = vpop.f32.mrb[0].mxu0
  %v3765 = vadd.f32 0.0, %v3764
  %3766 = vmatprep.mubr.f32.mxu0 0.0
  %3767 = vmatmul.mubr.f32.gmra.mrb[0].mxu0 %v152
  %v3768 = vpop.f32.mrb[0].mxu0
  %v3769 = vadd.f32 0.0, %v3768
  %v3770 = vpop.f32.mrb[0].mxu0
  %v3771 = vadd.f32 0.0, %v3770
  %3772 = vdwg.mxu0
  %3773 = vmatprep.subr.mxu0 %v411
  %3774 = vmatpush1.msra.mxu0 %v408
  %3775 = vmatprep.subr.mxu0 0.0
  %3776 = vmatpush1.msra.mxu0 0.0
  %3777 = vmatprep.subr.mxu0 0.0
  %3778 = vmatpush1.msra.mxu0 0.0
  %3779 = vmatprep.subr.mxu0 0.0
  %3780 = vmatpush1.msra.mxu0 0.0
  %3781 = vmatprep.subr.mxu0 0.0
  %3782 = vmatpush1.msra.mxu0 0.0
  %3783 = vmatprep.subr.mxu0 0.0
  %3784 = vmatpush1.msra.mxu0 0.0
  %3785 = vmatprep.subr.mxu0 0.0
  %3786 = vmatpush1.msra.mxu0 0.0
  %3787 = vmatprep.subr.mxu0 0.0
  %3788 = vmatpush1.msra.mxu0 0.0
  %3789 = vmatprep.subr.mxu0 0.0
  %3790 = vmatpush1.msra.mxu0 0.0
  %3791 = vmatprep.subr.mxu0 0.0
  %3792 = vmatpush1.msra.mxu0 0.0
  %3793 = vmatprep.subr.mxu0 0.0
  %3794 = vmatpush1.msra.mxu0 0.0
  %3795 = vmatprep.subr.mxu0 0.0
  %3796 = vmatpush1.msra.mxu0 0.0
  %3797 = vmatprep.subr.mxu0 0.0
  %3798 = vmatpush1.msra.mxu0 0.0
  %3799 = vmatprep.subr.mxu0 0.0
  %3800 = vmatpush1.msra.mxu0 0.0
  %3801 = vmatprep.subr.mxu0 0.0
  %3802 = vmatpush1.msra.mxu0 0.0
  %3803 = vmatprep.subr.mxu0 0.0
  %3804 = vmatpush1.msra.mxu0 0.0
  %3805 = vmatprep.subr.mxu0 0.0
  %3806 = vmatpush1.msra.mxu0 0.0
  %3807 = vmatprep.subr.mxu0 0.0
  %3808 = vmatpush1.msra.mxu0 0.0
  %3809 = vmatprep.subr.mxu0 0.0
  %3810 = vmatpush1.msra.mxu0 0.0
  %3811 = vmatprep.subr.mxu0 0.0
  %3812 = vmatpush1.msra.mxu0 0.0
  %3813 = vmatprep.subr.mxu0 0.0
  %3814 = vmatpush1.msra.mxu0 0.0
  %3815 = vmatprep.subr.mxu0 0.0
  %3816 = vmatpush1.msra.mxu0 0.0
  %3817 = vmatprep.subr.mxu0 0.0
  %3818 = vmatpush1.msra.mxu0 0.0
  %3819 = vmatprep.subr.mxu0 0.0
  %3820 = vmatpush1.msra.mxu0 0.0
  %3821 = vmatprep.subr.mxu0 0.0
  %3822 = vmatpush1.msra.mxu0 0.0
  %3823 = vmatprep.subr.mxu0 0.0
  %3824 = vmatpush1.msra.mxu0 0.0
  %3825 = vmatprep.subr.mxu0 0.0
  %3826 = vmatpush1.msra.mxu0 0.0
  %3827 = vmatprep.subr.mxu0 0.0
  %3828 = vmatpush1.msra.mxu0 0.0
  %3829 = vmatprep.subr.mxu0 0.0
  %3830 = vmatpush1.msra.mxu0 0.0
  %3831 = vmatprep.subr.mxu0 0.0
  %3832 = vmatpush1.msra.mxu0 0.0
  %3833 = vmatprep.subr.mxu0 0.0
  %3834 = vmatpush1.msra.mxu0 0.0
  %3835 = vmatprep.subr.mxu0 0.0
  %3836 = vmatpush1.msra.mxu0 0.0
  %3837 = vmatprep.mubr.f32.mxu0 0.0
  %3838 = vmatmul.mubr.f32.gmra.mrb[0].mxu0 %v149
  %v3839 = vpop.f32.mrb[0].mxu0
  %v3840 = vadd.f32 0.0, %v3839
  %v3841 = vpop.f32.mrb[0].mxu0
  %v3842 = vadd.f32 0.0, %v3841
  %3843 = vmatprep.mubr.f32.mxu0 0.0
  %3844 = vmatmul.mubr.f32.gmra.mrb[0].mxu0 %v152
  %v3845 = vpop.f32.mrb[0].mxu0
  %v3846 = vadd.f32 0.0, %v3845
  %v3847 = vpop.f32.mrb[0].mxu0
  %v3848 = vadd.f32 0.0, %v3847
  %3849 = vdwg.mxu0
  %3850 = vmatprep.subr.mxu0 %v417
  %3851 = vmatpush1.msra.mxu0 %v414
  %3852 = vmatprep.subr.mxu0 0.0
  %3853 = vmatpush1.msra.mxu0 0.0
  %3854 = vmatprep.subr.mxu0 0.0
  %3855 = vmatpush1.msra.mxu0 0.0
  %3856 = vmatprep.subr.mxu0 0.0
  %3857 = vmatpush1.msra.mxu0 0.0
  %3858 = vmatprep.subr.mxu0 0.0
  %3859 = vmatpush1.msra.mxu0 0.0
  %3860 = vmatprep.subr.mxu0 0.0
  %3861 = vmatpush1.msra.mxu0 0.0
  %3862 = vmatprep.subr.mxu0 0.0
  %3863 = vmatpush1.msra.mxu0 0.0
  %3864 = vmatprep.subr.mxu0 0.0
  %3865 = vmatpush1.msra.mxu0 0.0
  %3866 = vmatprep.subr.mxu0 0.0
  %3867 = vmatpush1.msra.mxu0 0.0
  %3868 = vmatprep.subr.mxu0 0.0
  %3869 = vmatpush1.msra.mxu0 0.0
  %3870 = vmatprep.subr.mxu0 0.0
  %3871 = vmatpush1.msra.mxu0 0.0
  %3872 = vmatprep.subr.mxu0 0.0
  %3873 = vmatpush1.msra.mxu0 0.0
  %3874 = vmatprep.subr.mxu0 0.0
  %3875 = vmatpush1.msra.mxu0 0.0
  %3876 = vmatprep.subr.mxu0 0.0
  %3877 = vmatpush1.msra.mxu0 0.0
  %3878 = vmatprep.subr.mxu0 0.0
  %3879 = vmatpush1.msra.mxu0 0.0
  %3880 = vmatprep.subr.mxu0 0.0
  %3881 = vmatpush1.msra.mxu0 0.0
  %3882 = vmatprep.subr.mxu0 0.0
  %3883 = vmatpush1.msra.mxu0 0.0
  %3884 = vmatprep.subr.mxu0 0.0
  %3885 = vmatpush1.msra.mxu0 0.0
  %3886 = vmatprep.subr.mxu0 0.0
  %3887 = vmatpush1.msra.mxu0 0.0
  %3888 = vmatprep.subr.mxu0 0.0
  %3889 = vmatpush1.msra.mxu0 0.0
  %3890 = vmatprep.subr.mxu0 0.0
  %3891 = vmatpush1.msra.mxu0 0.0
  %3892 = vmatprep.subr.mxu0 0.0
  %3893 = vmatpush1.msra.mxu0 0.0
  %3894 = vmatprep.subr.mxu0 0.0
  %3895 = vmatpush1.msra.mxu0 0.0
  %3896 = vmatprep.subr.mxu0 0.0
  %3897 = vmatpush1.msra.mxu0 0.0
  %3898 = vmatprep.subr.mxu0 0.0
  %3899 = vmatpush1.msra.mxu0 0.0
  %3900 = vmatprep.subr.mxu0 0.0
  %3901 = vmatpush1.msra.mxu0 0.0
  %3902 = vmatprep.subr.mxu0 0.0
  %3903 = vmatpush1.msra.mxu0 0.0
  %3904 = vmatprep.subr.mxu0 0.0
  %3905 = vmatpush1.msra.mxu0 0.0
  %3906 = vmatprep.subr.mxu0 0.0
  %3907 = vmatpush1.msra.mxu0 0.0
  %3908 = vmatprep.subr.mxu0 0.0
  %3909 = vmatpush1.msra.mxu0 0.0
  %3910 = vmatprep.subr.mxu0 0.0
  %3911 = vmatpush1.msra.mxu0 0.0
  %3912 = vmatprep.subr.mxu0 0.0
  %3913 = vmatpush1.msra.mxu0 0.0
  %3914 = vmatprep.mubr.f32.mxu0 0.0
  %3915 = vmatmul.mubr.f32.gmra.mrb[0].mxu0 %v149
  %v3916 = vpop.f32.mrb[0].mxu0
  %v3917 = vadd.f32 0.0, %v3916
  %v3918 = vpop.f32.mrb[0].mxu0
  %v3919 = vadd.f32 0.0, %v3918
  %3920 = vmatprep.mubr.f32.mxu0 0.0
  %3921 = vmatmul.mubr.f32.gmra.mrb[0].mxu0 %v152
  %v3922 = vpop.f32.mrb[0].mxu0
  %v3923 = vadd.f32 0.0, %v3922
  %v3924 = vpop.f32.mrb[0].mxu0
  %v3925 = vadd.f32 0.0, %v3924
  %3926 = vdwg.mxu0
  %3927 = vmatprep.subr.mxu0 %v423
  %3928 = vmatpush1.msra.mxu0 %v420
  %3929 = vmatprep.subr.mxu0 0.0
  %3930 = vmatpush1.msra.mxu0 0.0
  %3931 = vmatprep.subr.mxu0 0.0
  %3932 = vmatpush1.msra.mxu0 0.0
  %3933 = vmatprep.subr.mxu0 0.0
  %3934 = vmatpush1.msra.mxu0 0.0
  %3935 = vmatprep.subr.mxu0 0.0
  %3936 = vmatpush1.msra.mxu0 0.0
  %3937 = vmatprep.subr.mxu0 0.0
  %3938 = vmatpush1.msra.mxu0 0.0
  %3939 = vmatprep.subr.mxu0 0.0
  %3940 = vmatpush1.msra.mxu0 0.0
  %3941 = vmatprep.subr.mxu0 0.0
  %3942 = vmatpush1.msra.mxu0 0.0
  %3943 = vmatprep.subr.mxu0 0.0
  %3944 = vmatpush1.msra.mxu0 0.0
  %3945 = vmatprep.subr.mxu0 0.0
  %3946 = vmatpush1.msra.mxu0 0.0
  %3947 = vmatprep.subr.mxu0 0.0
  %3948 = vmatpush1.msra.mxu0 0.0
  %3949 = vmatprep.subr.mxu0 0.0
  %3950 = vmatpush1.msra.mxu0 0.0
  %3951 = vmatprep.subr.mxu0 0.0
  %3952 = vmatpush1.msra.mxu0 0.0
  %3953 = vmatprep.subr.mxu0 0.0
  %3954 = vmatpush1.msra.mxu0 0.0
  %3955 = vmatprep.subr.mxu0 0.0
  %3956 = vmatpush1.msra.mxu0 0.0
  %3957 = vmatprep.subr.mxu0 0.0
  %3958 = vmatpush1.msra.mxu0 0.0
  %3959 = vmatprep.subr.mxu0 0.0
  %3960 = vmatpush1.msra.mxu0 0.0
  %3961 = vmatprep.subr.mxu0 0.0
  %3962 = vmatpush1.msra.mxu0 0.0
  %3963 = vmatprep.subr.mxu0 0.0
  %3964 = vmatpush1.msra.mxu0 0.0
  %3965 = vmatprep.subr.mxu0 0.0
  %3966 = vmatpush1.msra.mxu0 0.0
  %3967 = vmatprep.subr.mxu0 0.0
  %3968 = vmatpush1.msra.mxu0 0.0
  %3969 = vmatprep.subr.mxu0 0.0
  %3970 = vmatpush1.msra.mxu0 0.0
  %3971 = vmatprep.subr.mxu0 0.0
  %3972 = vmatpush1.msra.mxu0 0.0
  %3973 = vmatprep.subr.mxu0 0.0
  %3974 = vmatpush1.msra.mxu0 0.0
  %3975 = vmatprep.subr.mxu0 0.0
  %3976 = vmatpush1.msra.mxu0 0.0
  %3977 = vmatprep.subr.mxu0 0.0
  %3978 = vmatpush1.msra.mxu0 0.0
  %3979 = vmatprep.subr.mxu0 0.0
  %3980 = vmatpush1.msra.mxu0 0.0
  %3981 = vmatprep.subr.mxu0 0.0
  %3982 = vmatpush1.msra.mxu0 0.0
  %3983 = vmatprep.subr.mxu0 0.0
  %3984 = vmatpush1.msra.mxu0 0.0
  %3985 = vmatprep.subr.mxu0 0.0
  %3986 = vmatpush1.msra.mxu0 0.0
  %3987 = vmatprep.subr.mxu0 0.0
  %3988 = vmatpush1.msra.mxu0 0.0
  %3989 = vmatprep.subr.mxu0 0.0
  %3990 = vmatpush1.msra.mxu0 0.0
  %3991 = vmatprep.mubr.f32.mxu0 0.0
  %3992 = vmatmul.mubr.f32.gmra.mrb[0].mxu0 %v149
  %v3993 = vpop.f32.mrb[0].mxu0
  %v3994 = vadd.f32 0.0, %v3993
  %v3995 = vpop.f32.mrb[0].mxu0
  %v3996 = vadd.f32 0.0, %v3995
  %3997 = vmatprep.mubr.f32.mxu0 0.0
  %3998 = vmatmul.mubr.f32.gmra.mrb[0].mxu0 %v152
  %v3999 = vpop.f32.mrb[0].mxu0
  %v4000 = vadd.f32 0.0, %v3999
  %v4001 = vpop.f32.mrb[0].mxu0
  %v4002 = vadd.f32 0.0, %v4001
  %4003 = vdwg.mxu0
  %4004 = vmatprep.subr.mxu0 %v429
  %4005 = vmatpush1.msra.mxu0 %v426
  %4006 = vmatprep.subr.mxu0 0.0
  %4007 = vmatpush1.msra.mxu0 0.0
  %4008 = vmatprep.subr.mxu0 0.0
  %4009 = vmatpush1.msra.mxu0 0.0
  %4010 = vmatprep.subr.mxu0 0.0
  %4011 = vmatpush1.msra.mxu0 0.0
  %4012 = vmatprep.subr.mxu0 0.0
  %4013 = vmatpush1.msra.mxu0 0.0
  %4014 = vmatprep.subr.mxu0 0.0
  %4015 = vmatpush1.msra.mxu0 0.0
  %4016 = vmatprep.subr.mxu0 0.0
  %4017 = vmatpush1.msra.mxu0 0.0
  %4018 = vmatprep.subr.mxu0 0.0
  %4019 = vmatpush1.msra.mxu0 0.0
  %4020 = vmatprep.subr.mxu0 0.0
  %4021 = vmatpush1.msra.mxu0 0.0
  %4022 = vmatprep.subr.mxu0 0.0
  %4023 = vmatpush1.msra.mxu0 0.0
  %4024 = vmatprep.subr.mxu0 0.0
  %4025 = vmatpush1.msra.mxu0 0.0
  %4026 = vmatprep.subr.mxu0 0.0
  %4027 = vmatpush1.msra.mxu0 0.0
  %4028 = vmatprep.subr.mxu0 0.0
  %4029 = vmatpush1.msra.mxu0 0.0
  %4030 = vmatprep.subr.mxu0 0.0
  %4031 = vmatpush1.msra.mxu0 0.0
  %4032 = vmatprep.subr.mxu0 0.0
  %4033 = vmatpush1.msra.mxu0 0.0
  %4034 = vmatprep.subr.mxu0 0.0
  %4035 = vmatpush1.msra.mxu0 0.0
  %4036 = vmatprep.subr.mxu0 0.0
  %4037 = vmatpush1.msra.mxu0 0.0
  %4038 = vmatprep.subr.mxu0 0.0
  %4039 = vmatpush1.msra.mxu0 0.0
  %4040 = vmatprep.subr.mxu0 0.0
  %4041 = vmatpush1.msra.mxu0 0.0
  %4042 = vmatprep.subr.mxu0 0.0
  %4043 = vmatpush1.msra.mxu0 0.0
  %4044 = vmatprep.subr.mxu0 0.0
  %4045 = vmatpush1.msra.mxu0 0.0
  %4046 = vmatprep.subr.mxu0 0.0
  %4047 = vmatpush1.msra.mxu0 0.0
  %4048 = vmatprep.subr.mxu0 0.0
  %4049 = vmatpush1.msra.mxu0 0.0
  %4050 = vmatprep.subr.mxu0 0.0
  %4051 = vmatpush1.msra.mxu0 0.0
  %4052 = vmatprep.subr.mxu0 0.0
  %4053 = vmatpush1.msra.mxu0 0.0
  %4054 = vmatprep.subr.mxu0 0.0
  %4055 = vmatpush1.msra.mxu0 0.0
  %4056 = vmatprep.subr.mxu0 0.0
  %4057 = vmatpush1.msra.mxu0 0.0
  %4058 = vmatprep.subr.mxu0 0.0
  %4059 = vmatpush1.msra.mxu0 0.0
  %4060 = vmatprep.subr.mxu0 0.0
  %4061 = vmatpush1.msra.mxu0 0.0
  %4062 = vmatprep.subr.mxu0 0.0
  %4063 = vmatpush1.msra.mxu0 0.0
  %4064 = vmatprep.subr.mxu0 0.0
  %4065 = vmatpush1.msra.mxu0 0.0
  %4066 = vmatprep.subr.mxu0 0.0
  %4067 = vmatpush1.msra.mxu0 0.0
  %4068 = vmatprep.mubr.f32.mxu0 0.0
  %4069 = vmatmul.mubr.f32.gmra.mrb[0].mxu0 %v149
  %v4070 = vpop.f32.mrb[0].mxu0
  %v4071 = vadd.f32 0.0, %v4070
  %v4072 = vpop.f32.mrb[0].mxu0
  %v4073 = vadd.f32 0.0, %v4072
  %4074 = vmatprep.mubr.f32.mxu0 0.0
  %4075 = vmatmul.mubr.f32.gmra.mrb[0].mxu0 %v152
  %v4076 = vpop.f32.mrb[0].mxu0
  %v4077 = vadd.f32 0.0, %v4076
  %v4078 = vpop.f32.mrb[0].mxu0
  %v4079 = vadd.f32 0.0, %v4078
  %4080 = vdwg.mxu0
  %4081 = vmatprep.subr.mxu0 %v435
  %4082 = vmatpush1.msra.mxu0 %v432
  %4083 = vmatprep.subr.mxu0 0.0
  %4084 = vmatpush1.msra.mxu0 0.0
  %4085 = vmatprep.subr.mxu0 0.0
  %4086 = vmatpush1.msra.mxu0 0.0
  %4087 = vmatprep.subr.mxu0 0.0
  %4088 = vmatpush1.msra.mxu0 0.0
  %4089 = vmatprep.subr.mxu0 0.0
  %4090 = vmatpush1.msra.mxu0 0.0
  %4091 = vmatprep.subr.mxu0 0.0
  %4092 = vmatpush1.msra.mxu0 0.0
  %4093 = vmatprep.subr.mxu0 0.0
  %4094 = vmatpush1.msra.mxu0 0.0
  %4095 = vmatprep.subr.mxu0 0.0
  %4096 = vmatpush1.msra.mxu0 0.0
  %4097 = vmatprep.subr.mxu0 0.0
  %4098 = vmatpush1.msra.mxu0 0.0
  %4099 = vmatprep.subr.mxu0 0.0
  %4100 = vmatpush1.msra.mxu0 0.0
  %4101 = vmatprep.subr.mxu0 0.0
  %4102 = vmatpush1.msra.mxu0 0.0
  %4103 = vmatprep.subr.mxu0 0.0
  %4104 = vmatpush1.msra.mxu0 0.0
  %4105 = vmatprep.subr.mxu0 0.0
  %4106 = vmatpush1.msra.mxu0 0.0
  %4107 = vmatprep.subr.mxu0 0.0
  %4108 = vmatpush1.msra.mxu0 0.0
  %4109 = vmatprep.subr.mxu0 0.0
  %4110 = vmatpush1.msra.mxu0 0.0
  %4111 = vmatprep.subr.mxu0 0.0
  %4112 = vmatpush1.msra.mxu0 0.0
  %4113 = vmatprep.subr.mxu0 0.0
  %4114 = vmatpush1.msra.mxu0 0.0
  %4115 = vmatprep.subr.mxu0 0.0
  %4116 = vmatpush1.msra.mxu0 0.0
  %4117 = vmatprep.subr.mxu0 0.0
  %4118 = vmatpush1.msra.mxu0 0.0
  %4119 = vmatprep.subr.mxu0 0.0
  %4120 = vmatpush1.msra.mxu0 0.0
  %4121 = vmatprep.subr.mxu0 0.0
  %4122 = vmatpush1.msra.mxu0 0.0
  %4123 = vmatprep.subr.mxu0 0.0
  %4124 = vmatpush1.msra.mxu0 0.0
  %4125 = vmatprep.subr.mxu0 0.0
  %4126 = vmatpush1.msra.mxu0 0.0
  %4127 = vmatprep.subr.mxu0 0.0
  %4128 = vmatpush1.msra.mxu0 0.0
  %4129 = vmatprep.subr.mxu0 0.0
  %4130 = vmatpush1.msra.mxu0 0.0
  %4131 = vmatprep.subr.mxu0 0.0
  %4132 = vmatpush1.msra.mxu0 0.0
  %4133 = vmatprep.subr.mxu0 0.0
  %4134 = vmatpush1.msra.mxu0 0.0
  %4135 = vmatprep.subr.mxu0 0.0
  %4136 = vmatpush1.msra.mxu0 0.0
  %4137 = vmatprep.subr.mxu0 0.0
  %4138 = vmatpush1.msra.mxu0 0.0
  %4139 = vmatprep.subr.mxu0 0.0
  %4140 = vmatpush1.msra.mxu0 0.0
  %4141 = vmatprep.subr.mxu0 0.0
  %4142 = vmatpush1.msra.mxu0 0.0
  %4143 = vmatprep.subr.mxu0 0.0
  %4144 = vmatpush1.msra.mxu0 0.0
  %4145 = vmatprep.mubr.f32.mxu0 0.0
  %4146 = vmatmul.mubr.f32.gmra.mrb[0].mxu0 %v149
  %v4147 = vpop.f32.mrb[0].mxu0
  %v4148 = vadd.f32 0.0, %v4147
  %v4149 = vpop.f32.mrb[0].mxu0
  %v4150 = vadd.f32 0.0, %v4149
  %4151 = vmatprep.mubr.f32.mxu0 0.0
  %4152 = vmatmul.mubr.f32.gmra.mrb[0].mxu0 %v152
  %v4153 = vpop.f32.mrb[0].mxu0
  %v4154 = vadd.f32 0.0, %v4153
  %v4155 = vpop.f32.mrb[0].mxu0
  %v4156 = vadd.f32 0.0, %v4155
  %4157 = vdwg.mxu0
  %4158 = vmatprep.subr.mxu0 %v441
  %4159 = vmatpush1.msra.mxu0 %v438
  %4160 = vmatprep.subr.mxu0 0.0
  %4161 = vmatpush1.msra.mxu0 0.0
  %4162 = vmatprep.subr.mxu0 0.0
  %4163 = vmatpush1.msra.mxu0 0.0
  %4164 = vmatprep.subr.mxu0 0.0
  %4165 = vmatpush1.msra.mxu0 0.0
  %4166 = vmatprep.subr.mxu0 0.0
  %4167 = vmatpush1.msra.mxu0 0.0
  %4168 = vmatprep.subr.mxu0 0.0
  %4169 = vmatpush1.msra.mxu0 0.0
  %4170 = vmatprep.subr.mxu0 0.0
  %4171 = vmatpush1.msra.mxu0 0.0
  %4172 = vmatprep.subr.mxu0 0.0
  %4173 = vmatpush1.msra.mxu0 0.0
  %4174 = vmatprep.subr.mxu0 0.0
  %4175 = vmatpush1.msra.mxu0 0.0
  %4176 = vmatprep.subr.mxu0 0.0
  %4177 = vmatpush1.msra.mxu0 0.0
  %4178 = vmatprep.subr.mxu0 0.0
  %4179 = vmatpush1.msra.mxu0 0.0
  %4180 = vmatprep.subr.mxu0 0.0
  %4181 = vmatpush1.msra.mxu0 0.0
  %4182 = vmatprep.subr.mxu0 0.0
  %4183 = vmatpush1.msra.mxu0 0.0
  %4184 = vmatprep.subr.mxu0 0.0
  %4185 = vmatpush1.msra.mxu0 0.0
  %4186 = vmatprep.subr.mxu0 0.0
  %4187 = vmatpush1.msra.mxu0 0.0
  %4188 = vmatprep.subr.mxu0 0.0
  %4189 = vmatpush1.msra.mxu0 0.0
  %4190 = vmatprep.subr.mxu0 0.0
  %4191 = vmatpush1.msra.mxu0 0.0
  %4192 = vmatprep.subr.mxu0 0.0
  %4193 = vmatpush1.msra.mxu0 0.0
  %4194 = vmatprep.subr.mxu0 0.0
  %4195 = vmatpush1.msra.mxu0 0.0
  %4196 = vmatprep.subr.mxu0 0.0
  %4197 = vmatpush1.msra.mxu0 0.0
  %4198 = vmatprep.subr.mxu0 0.0
  %4199 = vmatpush1.msra.mxu0 0.0
  %4200 = vmatprep.subr.mxu0 0.0
  %4201 = vmatpush1.msra.mxu0 0.0
  %4202 = vmatprep.subr.mxu0 0.0
  %4203 = vmatpush1.msra.mxu0 0.0
  %4204 = vmatprep.subr.mxu0 0.0
  %4205 = vmatpush1.msra.mxu0 0.0
  %4206 = vmatprep.subr.mxu0 0.0
  %4207 = vmatpush1.msra.mxu0 0.0
  %4208 = vmatprep.subr.mxu0 0.0
  %4209 = vmatpush1.msra.mxu0 0.0
  %4210 = vmatprep.subr.mxu0 0.0
  %4211 = vmatpush1.msra.mxu0 0.0
  %4212 = vmatprep.subr.mxu0 0.0
  %4213 = vmatpush1.msra.mxu0 0.0
  %4214 = vmatprep.subr.mxu0 0.0
  %4215 = vmatpush1.msra.mxu0 0.0
  %4216 = vmatprep.subr.mxu0 0.0
  %4217 = vmatpush1.msra.mxu0 0.0
  %4218 = vmatprep.subr.mxu0 0.0
  %4219 = vmatpush1.msra.mxu0 0.0
  %4220 = vmatprep.subr.mxu0 0.0
  %4221 = vmatpush1.msra.mxu0 0.0
  %4222 = vmatprep.mubr.f32.mxu0 0.0
  %4223 = vmatmul.mubr.f32.gmra.mrb[0].mxu0 %v149
  %v4224 = vpop.f32.mrb[0].mxu0
  %v4225 = vadd.f32 0.0, %v4224
  %v4226 = vpop.f32.mrb[0].mxu0
  %v4227 = vadd.f32 0.0, %v4226
  %4228 = vmatprep.mubr.f32.mxu0 0.0
  %4229 = vmatmul.mubr.f32.gmra.mrb[0].mxu0 %v152
  %v4230 = vpop.f32.mrb[0].mxu0
  %v4231 = vadd.f32 0.0, %v4230
  %v4232 = vpop.f32.mrb[0].mxu0
  %v4233 = vadd.f32 0.0, %v4232
  %4234 = vdwg.mxu0
  %4235 = vmatprep.subr.mxu0 %v447
  %4236 = vmatpush1.msra.mxu0 %v444
  %4237 = vmatprep.subr.mxu0 0.0
  %4238 = vmatpush1.msra.mxu0 0.0
  %4239 = vmatprep.subr.mxu0 0.0
  %4240 = vmatpush1.msra.mxu0 0.0
  %4241 = vmatprep.subr.mxu0 0.0
  %4242 = vmatpush1.msra.mxu0 0.0
  %4243 = vmatprep.subr.mxu0 0.0
  %4244 = vmatpush1.msra.mxu0 0.0
  %4245 = vmatprep.subr.mxu0 0.0
  %4246 = vmatpush1.msra.mxu0 0.0
  %4247 = vmatprep.subr.mxu0 0.0
  %4248 = vmatpush1.msra.mxu0 0.0
  %4249 = vmatprep.subr.mxu0 0.0
  %4250 = vmatpush1.msra.mxu0 0.0
  %4251 = vmatprep.subr.mxu0 0.0
  %4252 = vmatpush1.msra.mxu0 0.0
  %4253 = vmatprep.subr.mxu0 0.0
  %4254 = vmatpush1.msra.mxu0 0.0
  %4255 = vmatprep.subr.mxu0 0.0
  %4256 = vmatpush1.msra.mxu0 0.0
  %4257 = vmatprep.subr.mxu0 0.0
  %4258 = vmatpush1.msra.mxu0 0.0
  %4259 = vmatprep.subr.mxu0 0.0
  %4260 = vmatpush1.msra.mxu0 0.0
  %4261 = vmatprep.subr.mxu0 0.0
  %4262 = vmatpush1.msra.mxu0 0.0
  %4263 = vmatprep.subr.mxu0 0.0
  %4264 = vmatpush1.msra.mxu0 0.0
  %4265 = vmatprep.subr.mxu0 0.0
  %4266 = vmatpush1.msra.mxu0 0.0
  %4267 = vmatprep.subr.mxu0 0.0
  %4268 = vmatpush1.msra.mxu0 0.0
  %4269 = vmatprep.subr.mxu0 0.0
  %4270 = vmatpush1.msra.mxu0 0.0
  %4271 = vmatprep.subr.mxu0 0.0
  %4272 = vmatpush1.msra.mxu0 0.0
  %4273 = vmatprep.subr.mxu0 0.0
  %4274 = vmatpush1.msra.mxu0 0.0
  %4275 = vmatprep.subr.mxu0 0.0
  %4276 = vmatpush1.msra.mxu0 0.0
  %4277 = vmatprep.subr.mxu0 0.0
  %4278 = vmatpush1.msra.mxu0 0.0
  %4279 = vmatprep.subr.mxu0 0.0
  %4280 = vmatpush1.msra.mxu0 0.0
  %4281 = vmatprep.subr.mxu0 0.0
  %4282 = vmatpush1.msra.mxu0 0.0
  %4283 = vmatprep.subr.mxu0 0.0
  %4284 = vmatpush1.msra.mxu0 0.0
  %4285 = vmatprep.subr.mxu0 0.0
  %4286 = vmatpush1.msra.mxu0 0.0
  %4287 = vmatprep.subr.mxu0 0.0
  %4288 = vmatpush1.msra.mxu0 0.0
  %4289 = vmatprep.subr.mxu0 0.0
  %4290 = vmatpush1.msra.mxu0 0.0
  %4291 = vmatprep.subr.mxu0 0.0
  %4292 = vmatpush1.msra.mxu0 0.0
  %4293 = vmatprep.subr.mxu0 0.0
  %4294 = vmatpush1.msra.mxu0 0.0
  %4295 = vmatprep.subr.mxu0 0.0
  %4296 = vmatpush1.msra.mxu0 0.0
  %4297 = vmatprep.subr.mxu0 0.0
  %4298 = vmatpush1.msra.mxu0 0.0
  %4299 = vmatprep.mubr.f32.mxu0 0.0
  %4300 = vmatmul.mubr.f32.gmra.mrb[0].mxu0 %v149
  %v4301 = vpop.f32.mrb[0].mxu0
  %v4302 = vadd.f32 0.0, %v4301
  %v4303 = vpop.f32.mrb[0].mxu0
  %v4304 = vadd.f32 0.0, %v4303
  %4305 = vmatprep.mubr.f32.mxu0 0.0
  %4306 = vmatmul.mubr.f32.gmra.mrb[0].mxu0 %v152
  %v4307 = vpop.f32.mrb[0].mxu0
  %v4308 = vadd.f32 0.0, %v4307
  %v4309 = vpop.f32.mrb[0].mxu0
  %v4310 = vadd.f32 0.0, %v4309
  %4311 = vdwg.mxu0
  %4312 = vmatprep.subr.mxu0 %v453
  %4313 = vmatpush1.msra.mxu0 %v450
  %4314 = vmatprep.subr.mxu0 0.0
  %4315 = vmatpush1.msra.mxu0 0.0
  %4316 = vmatprep.subr.mxu0 0.0
  %4317 = vmatpush1.msra.mxu0 0.0
  %4318 = vmatprep.subr.mxu0 0.0
  %4319 = vmatpush1.msra.mxu0 0.0
  %4320 = vmatprep.subr.mxu0 0.0
  %4321 = vmatpush1.msra.mxu0 0.0
  %4322 = vmatprep.subr.mxu0 0.0
  %4323 = vmatpush1.msra.mxu0 0.0
  %4324 = vmatprep.subr.mxu0 0.0
  %4325 = vmatpush1.msra.mxu0 0.0
  %4326 = vmatprep.subr.mxu0 0.0
  %4327 = vmatpush1.msra.mxu0 0.0
  %4328 = vmatprep.subr.mxu0 0.0
  %4329 = vmatpush1.msra.mxu0 0.0
  %4330 = vmatprep.subr.mxu0 0.0
  %4331 = vmatpush1.msra.mxu0 0.0
  %4332 = vmatprep.subr.mxu0 0.0
  %4333 = vmatpush1.msra.mxu0 0.0
  %4334 = vmatprep.subr.mxu0 0.0
  %4335 = vmatpush1.msra.mxu0 0.0
  %4336 = vmatprep.subr.mxu0 0.0
  %4337 = vmatpush1.msra.mxu0 0.0
  %4338 = vmatprep.subr.mxu0 0.0
  %4339 = vmatpush1.msra.mxu0 0.0
  %4340 = vmatprep.subr.mxu0 0.0
  %4341 = vmatpush1.msra.mxu0 0.0
  %4342 = vmatprep.subr.mxu0 0.0
  %4343 = vmatpush1.msra.mxu0 0.0
  %4344 = vmatprep.subr.mxu0 0.0
  %4345 = vmatpush1.msra.mxu0 0.0
  %4346 = vmatprep.subr.mxu0 0.0
  %4347 = vmatpush1.msra.mxu0 0.0
  %4348 = vmatprep.subr.mxu0 0.0
  %4349 = vmatpush1.msra.mxu0 0.0
  %4350 = vmatprep.subr.mxu0 0.0
  %4351 = vmatpush1.msra.mxu0 0.0
  %4352 = vmatprep.subr.mxu0 0.0
  %4353 = vmatpush1.msra.mxu0 0.0
  %4354 = vmatprep.subr.mxu0 0.0
  %4355 = vmatpush1.msra.mxu0 0.0
  %4356 = vmatprep.subr.mxu0 0.0
  %4357 = vmatpush1.msra.mxu0 0.0
  %4358 = vmatprep.subr.mxu0 0.0
  %4359 = vmatpush1.msra.mxu0 0.0
  %4360 = vmatprep.subr.mxu0 0.0
  %4361 = vmatpush1.msra.mxu0 0.0
  %4362 = vmatprep.subr.mxu0 0.0
  %4363 = vmatpush1.msra.mxu0 0.0
  %4364 = vmatprep.subr.mxu0 0.0
  %4365 = vmatpush1.msra.mxu0 0.0
  %4366 = vmatprep.subr.mxu0 0.0
  %4367 = vmatpush1.msra.mxu0 0.0
  %4368 = vmatprep.subr.mxu0 0.0
  %4369 = vmatpush1.msra.mxu0 0.0
  %4370 = vmatprep.subr.mxu0 0.0
  %4371 = vmatpush1.msra.mxu0 0.0
  %4372 = vmatprep.subr.mxu0 0.0
  %4373 = vmatpush1.msra.mxu0 0.0
  %4374 = vmatprep.subr.mxu0 0.0
  %4375 = vmatpush1.msra.mxu0 0.0
  %4376 = vmatprep.mubr.f32.mxu0 0.0
  %4377 = vmatmul.mubr.f32.gmra.mrb[0].mxu0 %v149
  %v4378 = vpop.f32.mrb[0].mxu0
  %v4379 = vadd.f32 0.0, %v4378
  %v4380 = vpop.f32.mrb[0].mxu0
  %v4381 = vadd.f32 0.0, %v4380
  %4382 = vmatprep.mubr.f32.mxu0 0.0
  %4383 = vmatmul.mubr.f32.gmra.mrb[0].mxu0 %v152
  %v4384 = vpop.f32.mrb[0].mxu0
  %v4385 = vadd.f32 0.0, %v4384
  %v4386 = vpop.f32.mrb[0].mxu0
  %v4387 = vadd.f32 0.0, %v4386
  %4388 = vdwg.mxu0
  %4389 = vmatprep.subr.mxu0 %v459
  %4390 = vmatpush1.msra.mxu0 %v456
  %4391 = vmatprep.subr.mxu0 0.0
  %4392 = vmatpush1.msra.mxu0 0.0
  %4393 = vmatprep.subr.mxu0 0.0
  %4394 = vmatpush1.msra.mxu0 0.0
  %4395 = vmatprep.subr.mxu0 0.0
  %4396 = vmatpush1.msra.mxu0 0.0
  %4397 = vmatprep.subr.mxu0 0.0
  %4398 = vmatpush1.msra.mxu0 0.0
  %4399 = vmatprep.subr.mxu0 0.0
  %4400 = vmatpush1.msra.mxu0 0.0
  %4401 = vmatprep.subr.mxu0 0.0
  %4402 = vmatpush1.msra.mxu0 0.0
  %4403 = vmatprep.subr.mxu0 0.0
  %4404 = vmatpush1.msra.mxu0 0.0
  %4405 = vmatprep.subr.mxu0 0.0
  %4406 = vmatpush1.msra.mxu0 0.0
  %4407 = vmatprep.subr.mxu0 0.0
  %4408 = vmatpush1.msra.mxu0 0.0
  %4409 = vmatprep.subr.mxu0 0.0
  %4410 = vmatpush1.msra.mxu0 0.0
  %4411 = vmatprep.subr.mxu0 0.0
  %4412 = vmatpush1.msra.mxu0 0.0
  %4413 = vmatprep.subr.mxu0 0.0
  %4414 = vmatpush1.msra.mxu0 0.0
  %4415 = vmatprep.subr.mxu0 0.0
  %4416 = vmatpush1.msra.mxu0 0.0
  %4417 = vmatprep.subr.mxu0 0.0
  %4418 = vmatpush1.msra.mxu0 0.0
  %4419 = vmatprep.subr.mxu0 0.0
  %4420 = vmatpush1.msra.mxu0 0.0
  %4421 = vmatprep.subr.mxu0 0.0
  %4422 = vmatpush1.msra.mxu0 0.0
  %4423 = vmatprep.subr.mxu0 0.0
  %4424 = vmatpush1.msra.mxu0 0.0
  %4425 = vmatprep.subr.mxu0 0.0
  %4426 = vmatpush1.msra.mxu0 0.0
  %4427 = vmatprep.subr.mxu0 0.0
  %4428 = vmatpush1.msra.mxu0 0.0
  %4429 = vmatprep.subr.mxu0 0.0
  %4430 = vmatpush1.msra.mxu0 0.0
  %4431 = vmatprep.subr.mxu0 0.0
  %4432 = vmatpush1.msra.mxu0 0.0
  %4433 = vmatprep.subr.mxu0 0.0
  %4434 = vmatpush1.msra.mxu0 0.0
  %4435 = vmatprep.subr.mxu0 0.0
  %4436 = vmatpush1.msra.mxu0 0.0
  %4437 = vmatprep.subr.mxu0 0.0
  %4438 = vmatpush1.msra.mxu0 0.0
  %4439 = vmatprep.subr.mxu0 0.0
  %4440 = vmatpush1.msra.mxu0 0.0
  %4441 = vmatprep.subr.mxu0 0.0
  %4442 = vmatpush1.msra.mxu0 0.0
  %4443 = vmatprep.subr.mxu0 0.0
  %4444 = vmatpush1.msra.mxu0 0.0
  %4445 = vmatprep.subr.mxu0 0.0
  %4446 = vmatpush1.msra.mxu0 0.0
  %4447 = vmatprep.subr.mxu0 0.0
  %4448 = vmatpush1.msra.mxu0 0.0
  %4449 = vmatprep.subr.mxu0 0.0
  %4450 = vmatpush1.msra.mxu0 0.0
  %4451 = vmatprep.subr.mxu0 0.0
  %4452 = vmatpush1.msra.mxu0 0.0
  %4453 = vmatprep.mubr.f32.mxu0 0.0
  %4454 = vmatmul.mubr.f32.gmra.mrb[0].mxu0 %v149
  %v4455 = vpop.f32.mrb[0].mxu0
  %v4456 = vadd.f32 0.0, %v4455
  %v4457 = vpop.f32.mrb[0].mxu0
  %v4458 = vadd.f32 0.0, %v4457
  %4459 = vmatprep.mubr.f32.mxu0 0.0
  %4460 = vmatmul.mubr.f32.gmra.mrb[0].mxu0 %v152
  %v4461 = vpop.f32.mrb[0].mxu0
  %v4462 = vadd.f32 0.0, %v4461
  %v4463 = vpop.f32.mrb[0].mxu0
  %v4464 = vadd.f32 0.0, %v4463
  %4465 = vdwg.mxu0
  %4466 = vmatprep.subr.mxu0 %v465
  %4467 = vmatpush1.msra.mxu0 %v462
  %4468 = vmatprep.subr.mxu0 0.0
  %4469 = vmatpush1.msra.mxu0 0.0
  %4470 = vmatprep.subr.mxu0 0.0
  %4471 = vmatpush1.msra.mxu0 0.0
  %4472 = vmatprep.subr.mxu0 0.0
  %4473 = vmatpush1.msra.mxu0 0.0
  %4474 = vmatprep.subr.mxu0 0.0
  %4475 = vmatpush1.msra.mxu0 0.0
  %4476 = vmatprep.subr.mxu0 0.0
  %4477 = vmatpush1.msra.mxu0 0.0
  %4478 = vmatprep.subr.mxu0 0.0
  %4479 = vmatpush1.msra.mxu0 0.0
  %4480 = vmatprep.subr.mxu0 0.0
  %4481 = vmatpush1.msra.mxu0 0.0
  %4482 = vmatprep.subr.mxu0 0.0
  %4483 = vmatpush1.msra.mxu0 0.0
  %4484 = vmatprep.subr.mxu0 0.0
  %4485 = vmatpush1.msra.mxu0 0.0
  %4486 = vmatprep.subr.mxu0 0.0
  %4487 = vmatpush1.msra.mxu0 0.0
  %4488 = vmatprep.subr.mxu0 0.0
  %4489 = vmatpush1.msra.mxu0 0.0
  %4490 = vmatprep.subr.mxu0 0.0
  %4491 = vmatpush1.msra.mxu0 0.0
  %4492 = vmatprep.subr.mxu0 0.0
  %4493 = vmatpush1.msra.mxu0 0.0
  %4494 = vmatprep.subr.mxu0 0.0
  %4495 = vmatpush1.msra.mxu0 0.0
  %4496 = vmatprep.subr.mxu0 0.0
  %4497 = vmatpush1.msra.mxu0 0.0
  %4498 = vmatprep.subr.mxu0 0.0
  %4499 = vmatpush1.msra.mxu0 0.0
  %4500 = vmatprep.subr.mxu0 0.0
  %4501 = vmatpush1.msra.mxu0 0.0
  %4502 = vmatprep.subr.mxu0 0.0
  %4503 = vmatpush1.msra.mxu0 0.0
  %4504 = vmatprep.subr.mxu0 0.0
  %4505 = vmatpush1.msra.mxu0 0.0
  %4506 = vmatprep.subr.mxu0 0.0
  %4507 = vmatpush1.msra.mxu0 0.0
  %4508 = vmatprep.subr.mxu0 0.0
  %4509 = vmatpush1.msra.mxu0 0.0
  %4510 = vmatprep.subr.mxu0 0.0
  %4511 = vmatpush1.msra.mxu0 0.0
  %4512 = vmatprep.subr.mxu0 0.0
  %4513 = vmatpush1.msra.mxu0 0.0
  %4514 = vmatprep.subr.mxu0 0.0
  %4515 = vmatpush1.msra.mxu0 0.0
  %4516 = vmatprep.subr.mxu0 0.0
  %4517 = vmatpush1.msra.mxu0 0.0
  %4518 = vmatprep.subr.mxu0 0.0
  %4519 = vmatpush1.msra.mxu0 0.0
  %4520 = vmatprep.subr.mxu0 0.0
  %4521 = vmatpush1.msra.mxu0 0.0
  %4522 = vmatprep.subr.mxu0 0.0
  %4523 = vmatpush1.msra.mxu0 0.0
  %4524 = vmatprep.subr.mxu0 0.0
  %4525 = vmatpush1.msra.mxu0 0.0
  %4526 = vmatprep.subr.mxu0 0.0
  %4527 = vmatpush1.msra.mxu0 0.0
  %4528 = vmatprep.subr.mxu0 0.0
  %4529 = vmatpush1.msra.mxu0 0.0
  %4530 = vmatprep.mubr.f32.mxu0 0.0
  %4531 = vmatmul.mubr.f32.gmra.mrb[0].mxu0 %v149
  %v4532 = vpop.f32.mrb[0].mxu0
  %v4533 = vadd.f32 0.0, %v4532
  %v4534 = vpop.f32.mrb[0].mxu0
  %v4535 = vadd.f32 0.0, %v4534
  %4536 = vmatprep.mubr.f32.mxu0 0.0
  %4537 = vmatmul.mubr.f32.gmra.mrb[0].mxu0 %v152
  %v4538 = vpop.f32.mrb[0].mxu0
  %v4539 = vadd.f32 0.0, %v4538
  %v4540 = vpop.f32.mrb[0].mxu0
  %v4541 = vadd.f32 0.0, %v4540
  %4542 = vdwg.mxu0
  %4543 = vmatprep.subr.mxu0 %v471
  %4544 = vmatpush1.msra.mxu0 %v468
  %4545 = vmatprep.subr.mxu0 0.0
  %4546 = vmatpush1.msra.mxu0 0.0
  %4547 = vmatprep.subr.mxu0 0.0
  %4548 = vmatpush1.msra.mxu0 0.0
  %4549 = vmatprep.subr.mxu0 0.0
  %4550 = vmatpush1.msra.mxu0 0.0
  %4551 = vmatprep.subr.mxu0 0.0
  %4552 = vmatpush1.msra.mxu0 0.0
  %4553 = vmatprep.subr.mxu0 0.0
  %4554 = vmatpush1.msra.mxu0 0.0
  %4555 = vmatprep.subr.mxu0 0.0
  %4556 = vmatpush1.msra.mxu0 0.0
  %4557 = vmatprep.subr.mxu0 0.0
  %4558 = vmatpush1.msra.mxu0 0.0
  %4559 = vmatprep.subr.mxu0 0.0
  %4560 = vmatpush1.msra.mxu0 0.0
  %4561 = vmatprep.subr.mxu0 0.0
  %4562 = vmatpush1.msra.mxu0 0.0
  %4563 = vmatprep.subr.mxu0 0.0
  %4564 = vmatpush1.msra.mxu0 0.0
  %4565 = vmatprep.subr.mxu0 0.0
  %4566 = vmatpush1.msra.mxu0 0.0
  %4567 = vmatprep.subr.mxu0 0.0
  %4568 = vmatpush1.msra.mxu0 0.0
  %4569 = vmatprep.subr.mxu0 0.0
  %4570 = vmatpush1.msra.mxu0 0.0
  %4571 = vmatprep.subr.mxu0 0.0
  %4572 = vmatpush1.msra.mxu0 0.0
  %4573 = vmatprep.subr.mxu0 0.0
  %4574 = vmatpush1.msra.mxu0 0.0
  %4575 = vmatprep.subr.mxu0 0.0
  %4576 = vmatpush1.msra.mxu0 0.0
  %4577 = vmatprep.subr.mxu0 0.0
  %4578 = vmatpush1.msra.mxu0 0.0
  %4579 = vmatprep.subr.mxu0 0.0
  %4580 = vmatpush1.msra.mxu0 0.0
  %4581 = vmatprep.subr.mxu0 0.0
  %4582 = vmatpush1.msra.mxu0 0.0
  %4583 = vmatprep.subr.mxu0 0.0
  %4584 = vmatpush1.msra.mxu0 0.0
  %4585 = vmatprep.subr.mxu0 0.0
  %4586 = vmatpush1.msra.mxu0 0.0
  %4587 = vmatprep.subr.mxu0 0.0
  %4588 = vmatpush1.msra.mxu0 0.0
  %4589 = vmatprep.subr.mxu0 0.0
  %4590 = vmatpush1.msra.mxu0 0.0
  %4591 = vmatprep.subr.mxu0 0.0
  %4592 = vmatpush1.msra.mxu0 0.0
  %4593 = vmatprep.subr.mxu0 0.0
  %4594 = vmatpush1.msra.mxu0 0.0
  %4595 = vmatprep.subr.mxu0 0.0
  %4596 = vmatpush1.msra.mxu0 0.0
  %4597 = vmatprep.subr.mxu0 0.0
  %4598 = vmatpush1.msra.mxu0 0.0
  %4599 = vmatprep.subr.mxu0 0.0
  %4600 = vmatpush1.msra.mxu0 0.0
  %4601 = vmatprep.subr.mxu0 0.0
  %4602 = vmatpush1.msra.mxu0 0.0
  %4603 = vmatprep.subr.mxu0 0.0
  %4604 = vmatpush1.msra.mxu0 0.0
  %4605 = vmatprep.subr.mxu0 0.0
  %4606 = vmatpush1.msra.mxu0 0.0
  %4607 = vmatprep.mubr.f32.mxu0 0.0
  %4608 = vmatmul.mubr.f32.gmra.mrb[0].mxu0 %v149
  %v4609 = vpop.f32.mrb[0].mxu0
  %v4610 = vadd.f32 0.0, %v4609
  %v4611 = vpop.f32.mrb[0].mxu0
  %v4612 = vadd.f32 0.0, %v4611
  %4613 = vmatprep.mubr.f32.mxu0 0.0
  %4614 = vmatmul.mubr.f32.gmra.mrb[0].mxu0 %v152
  %v4615 = vpop.f32.mrb[0].mxu0
  %v4616 = vadd.f32 0.0, %v4615
  %v4617 = vpop.f32.mrb[0].mxu0
  %v4618 = vadd.f32 0.0, %v4617
  %4619 = vdwg.mxu0
  %4620 = vmatprep.subr.mxu0 %v477
  %4621 = vmatpush1.msra.mxu0 %v474
  %4622 = vmatprep.subr.mxu0 0.0
  %4623 = vmatpush1.msra.mxu0 0.0
  %4624 = vmatprep.subr.mxu0 0.0
  %4625 = vmatpush1.msra.mxu0 0.0
  %4626 = vmatprep.subr.mxu0 0.0
  %4627 = vmatpush1.msra.mxu0 0.0
  %4628 = vmatprep.subr.mxu0 0.0
  %4629 = vmatpush1.msra.mxu0 0.0
  %4630 = vmatprep.subr.mxu0 0.0
  %4631 = vmatpush1.msra.mxu0 0.0
  %4632 = vmatprep.subr.mxu0 0.0
  %4633 = vmatpush1.msra.mxu0 0.0
  %4634 = vmatprep.subr.mxu0 0.0
  %4635 = vmatpush1.msra.mxu0 0.0
  %4636 = vmatprep.subr.mxu0 0.0
  %4637 = vmatpush1.msra.mxu0 0.0
  %4638 = vmatprep.subr.mxu0 0.0
  %4639 = vmatpush1.msra.mxu0 0.0
  %4640 = vmatprep.subr.mxu0 0.0
  %4641 = vmatpush1.msra.mxu0 0.0
  %4642 = vmatprep.subr.mxu0 0.0
  %4643 = vmatpush1.msra.mxu0 0.0
  %4644 = vmatprep.subr.mxu0 0.0
  %4645 = vmatpush1.msra.mxu0 0.0
  %4646 = vmatprep.subr.mxu0 0.0
  %4647 = vmatpush1.msra.mxu0 0.0
  %4648 = vmatprep.subr.mxu0 0.0
  %4649 = vmatpush1.msra.mxu0 0.0
  %4650 = vmatprep.subr.mxu0 0.0
  %4651 = vmatpush1.msra.mxu0 0.0
  %4652 = vmatprep.subr.mxu0 0.0
  %4653 = vmatpush1.msra.mxu0 0.0
  %4654 = vmatprep.subr.mxu0 0.0
  %4655 = vmatpush1.msra.mxu0 0.0
  %4656 = vmatprep.subr.mxu0 0.0
  %4657 = vmatpush1.msra.mxu0 0.0
  %4658 = vmatprep.subr.mxu0 0.0
  %4659 = vmatpush1.msra.mxu0 0.0
  %4660 = vmatprep.subr.mxu0 0.0
  %4661 = vmatpush1.msra.mxu0 0.0
  %4662 = vmatprep.subr.mxu0 0.0
  %4663 = vmatpush1.msra.mxu0 0.0
  %4664 = vmatprep.subr.mxu0 0.0
  %4665 = vmatpush1.msra.mxu0 0.0
  %4666 = vmatprep.subr.mxu0 0.0
  %4667 = vmatpush1.msra.mxu0 0.0
  %4668 = vmatprep.subr.mxu0 0.0
  %4669 = vmatpush1.msra.mxu0 0.0
  %4670 = vmatprep.subr.mxu0 0.0
  %4671 = vmatpush1.msra.mxu0 0.0
  %4672 = vmatprep.subr.mxu0 0.0
  %4673 = vmatpush1.msra.mxu0 0.0
  %4674 = vmatprep.subr.mxu0 0.0
  %4675 = vmatpush1.msra.mxu0 0.0
  %4676 = vmatprep.subr.mxu0 0.0
  %4677 = vmatpush1.msra.mxu0 0.0
  %4678 = vmatprep.subr.mxu0 0.0
  %4679 = vmatpush1.msra.mxu0 0.0
  %4680 = vmatprep.subr.mxu0 0.0
  %4681 = vmatpush1.msra.mxu0 0.0
  %4682 = vmatprep.subr.mxu0 0.0
  %4683 = vmatpush1.msra.mxu0 0.0
  %4684 = vmatprep.mubr.f32.mxu0 0.0
  %4685 = vmatmul.mubr.f32.gmra.mrb[0].mxu0 %v149
  %v4686 = vpop.f32.mrb[0].mxu0
  %v4687 = vadd.f32 0.0, %v4686
  %v4688 = vpop.f32.mrb[0].mxu0
  %v4689 = vadd.f32 0.0, %v4688
  %4690 = vmatprep.mubr.f32.mxu0 0.0
  %4691 = vmatmul.mubr.f32.gmra.mrb[0].mxu0 %v152
  %v4692 = vpop.f32.mrb[0].mxu0
  %v4693 = vadd.f32 0.0, %v4692
  %v4694 = vpop.f32.mrb[0].mxu0
  %v4695 = vadd.f32 0.0, %v4694
  %4696 = vdwg.mxu0
  %4697 = vmatprep.subr.mxu0 %v483
  %4698 = vmatpush1.msra.mxu0 %v480
  %4699 = vmatprep.subr.mxu0 0.0
  %4700 = vmatpush1.msra.mxu0 0.0
  %4701 = vmatprep.subr.mxu0 0.0
  %4702 = vmatpush1.msra.mxu0 0.0
  %4703 = vmatprep.subr.mxu0 0.0
  %4704 = vmatpush1.msra.mxu0 0.0
  %4705 = vmatprep.subr.mxu0 0.0
  %4706 = vmatpush1.msra.mxu0 0.0
  %4707 = vmatprep.subr.mxu0 0.0
  %4708 = vmatpush1.msra.mxu0 0.0
  %4709 = vmatprep.subr.mxu0 0.0
  %4710 = vmatpush1.msra.mxu0 0.0
  %4711 = vmatprep.subr.mxu0 0.0
  %4712 = vmatpush1.msra.mxu0 0.0
  %4713 = vmatprep.subr.mxu0 0.0
  %4714 = vmatpush1.msra.mxu0 0.0
  %4715 = vmatprep.subr.mxu0 0.0
  %4716 = vmatpush1.msra.mxu0 0.0
  %4717 = vmatprep.subr.mxu0 0.0
  %4718 = vmatpush1.msra.mxu0 0.0
  %4719 = vmatprep.subr.mxu0 0.0
  %4720 = vmatpush1.msra.mxu0 0.0
  %4721 = vmatprep.subr.mxu0 0.0
  %4722 = vmatpush1.msra.mxu0 0.0
  %4723 = vmatprep.subr.mxu0 0.0
  %4724 = vmatpush1.msra.mxu0 0.0
  %4725 = vmatprep.subr.mxu0 0.0
  %4726 = vmatpush1.msra.mxu0 0.0
  %4727 = vmatprep.subr.mxu0 0.0
  %4728 = vmatpush1.msra.mxu0 0.0
  %4729 = vmatprep.subr.mxu0 0.0
  %4730 = vmatpush1.msra.mxu0 0.0
  %4731 = vmatprep.subr.mxu0 0.0
  %4732 = vmatpush1.msra.mxu0 0.0
  %4733 = vmatprep.subr.mxu0 0.0
  %4734 = vmatpush1.msra.mxu0 0.0
  %4735 = vmatprep.subr.mxu0 0.0
  %4736 = vmatpush1.msra.mxu0 0.0
  %4737 = vmatprep.subr.mxu0 0.0
  %4738 = vmatpush1.msra.mxu0 0.0
  %4739 = vmatprep.subr.mxu0 0.0
  %4740 = vmatpush1.msra.mxu0 0.0
  %4741 = vmatprep.subr.mxu0 0.0
  %4742 = vmatpush1.msra.mxu0 0.0
  %4743 = vmatprep.subr.mxu0 0.0
  %4744 = vmatpush1.msra.mxu0 0.0
  %4745 = vmatprep.subr.mxu0 0.0
  %4746 = vmatpush1.msra.mxu0 0.0
  %4747 = vmatprep.subr.mxu0 0.0
  %4748 = vmatpush1.msra.mxu0 0.0
  %4749 = vmatprep.subr.mxu0 0.0
  %4750 = vmatpush1.msra.mxu0 0.0
  %4751 = vmatprep.subr.mxu0 0.0
  %4752 = vmatpush1.msra.mxu0 0.0
  %4753 = vmatprep.subr.mxu0 0.0
  %4754 = vmatpush1.msra.mxu0 0.0
  %4755 = vmatprep.subr.mxu0 0.0
  %4756 = vmatpush1.msra.mxu0 0.0
  %4757 = vmatprep.subr.mxu0 0.0
  %4758 = vmatpush1.msra.mxu0 0.0
  %4759 = vmatprep.subr.mxu0 0.0
  %4760 = vmatpush1.msra.mxu0 0.0
  %4761 = vmatprep.mubr.f32.mxu0 0.0
  %4762 = vmatmul.mubr.f32.gmra.mrb[0].mxu0 %v149
  %v4763 = vpop.f32.mrb[0].mxu0
  %v4764 = vadd.f32 0.0, %v4763
  %v4765 = vpop.f32.mrb[0].mxu0
  %v4766 = vadd.f32 0.0, %v4765
  %4767 = vmatprep.mubr.f32.mxu0 0.0
  %4768 = vmatmul.mubr.f32.gmra.mrb[0].mxu0 %v152
  %v4769 = vpop.f32.mrb[0].mxu0
  %v4770 = vadd.f32 0.0, %v4769
  %v4771 = vpop.f32.mrb[0].mxu0
  %v4772 = vadd.f32 0.0, %v4771
  %4773 = vdwg.mxu0
  %4774 = vmatprep.subr.mxu0 %v489
  %4775 = vmatpush1.msra.mxu0 %v486
  %4776 = vmatprep.subr.mxu0 0.0
  %4777 = vmatpush1.msra.mxu0 0.0
  %4778 = vmatprep.subr.mxu0 0.0
  %4779 = vmatpush1.msra.mxu0 0.0
  %4780 = vmatprep.subr.mxu0 0.0
  %4781 = vmatpush1.msra.mxu0 0.0
  %4782 = vmatprep.subr.mxu0 0.0
  %4783 = vmatpush1.msra.mxu0 0.0
  %4784 = vmatprep.subr.mxu0 0.0
  %4785 = vmatpush1.msra.mxu0 0.0
  %4786 = vmatprep.subr.mxu0 0.0
  %4787 = vmatpush1.msra.mxu0 0.0
  %4788 = vmatprep.subr.mxu0 0.0
  %4789 = vmatpush1.msra.mxu0 0.0
  %4790 = vmatprep.subr.mxu0 0.0
  %4791 = vmatpush1.msra.mxu0 0.0
  %4792 = vmatprep.subr.mxu0 0.0
  %4793 = vmatpush1.msra.mxu0 0.0
  %4794 = vmatprep.subr.mxu0 0.0
  %4795 = vmatpush1.msra.mxu0 0.0
  %4796 = vmatprep.subr.mxu0 0.0
  %4797 = vmatpush1.msra.mxu0 0.0
  %4798 = vmatprep.subr.mxu0 0.0
  %4799 = vmatpush1.msra.mxu0 0.0
  %4800 = vmatprep.subr.mxu0 0.0
  %4801 = vmatpush1.msra.mxu0 0.0
  %4802 = vmatprep.subr.mxu0 0.0
  %4803 = vmatpush1.msra.mxu0 0.0
  %4804 = vmatprep.subr.mxu0 0.0
  %4805 = vmatpush1.msra.mxu0 0.0
  %4806 = vmatprep.subr.mxu0 0.0
  %4807 = vmatpush1.msra.mxu0 0.0
  %4808 = vmatprep.subr.mxu0 0.0
  %4809 = vmatpush1.msra.mxu0 0.0
  %4810 = vmatprep.subr.mxu0 0.0
  %4811 = vmatpush1.msra.mxu0 0.0
  %4812 = vmatprep.subr.mxu0 0.0
  %4813 = vmatpush1.msra.mxu0 0.0
  %4814 = vmatprep.subr.mxu0 0.0
  %4815 = vmatpush1.msra.mxu0 0.0
  %4816 = vmatprep.subr.mxu0 0.0
  %4817 = vmatpush1.msra.mxu0 0.0
  %4818 = vmatprep.subr.mxu0 0.0
  %4819 = vmatpush1.msra.mxu0 0.0
  %4820 = vmatprep.subr.mxu0 0.0
  %4821 = vmatpush1.msra.mxu0 0.0
  %4822 = vmatprep.subr.mxu0 0.0
  %4823 = vmatpush1.msra.mxu0 0.0
  %4824 = vmatprep.subr.mxu0 0.0
  %4825 = vmatpush1.msra.mxu0 0.0
  %4826 = vmatprep.subr.mxu0 0.0
  %4827 = vmatpush1.msra.mxu0 0.0
  %4828 = vmatprep.subr.mxu0 0.0
  %4829 = vmatpush1.msra.mxu0 0.0
  %4830 = vmatprep.subr.mxu0 0.0
  %4831 = vmatpush1.msra.mxu0 0.0
  %4832 = vmatprep.subr.mxu0 0.0
  %4833 = vmatpush1.msra.mxu0 0.0
  %4834 = vmatprep.subr.mxu0 0.0
  %4835 = vmatpush1.msra.mxu0 0.0
  %4836 = vmatprep.subr.mxu0 0.0
  %4837 = vmatpush1.msra.mxu0 0.0
  %4838 = vmatprep.mubr.f32.mxu0 0.0
  %4839 = vmatmul.mubr.f32.gmra.mrb[0].mxu0 %v149
  %v4840 = vpop.f32.mrb[0].mxu0
  %v4841 = vadd.f32 0.0, %v4840
  %v4842 = vpop.f32.mrb[0].mxu0
  %v4843 = vadd.f32 0.0, %v4842
  %4844 = vmatprep.mubr.f32.mxu0 0.0
  %4845 = vmatmul.mubr.f32.gmra.mrb[0].mxu0 %v152
  %v4846 = vpop.f32.mrb[0].mxu0
  %v4847 = vadd.f32 0.0, %v4846
  %v4848 = vpop.f32.mrb[0].mxu0
  %v4849 = vadd.f32 0.0, %v4848
  %4850 = vdwg.mxu0
  %4851 = vmatprep.subr.mxu0 %v495
  %4852 = vmatpush1.msra.mxu0 %v492
  %4853 = vmatprep.subr.mxu0 0.0
  %4854 = vmatpush1.msra.mxu0 0.0
  %4855 = vmatprep.subr.mxu0 0.0
  %4856 = vmatpush1.msra.mxu0 0.0
  %4857 = vmatprep.subr.mxu0 0.0
  %4858 = vmatpush1.msra.mxu0 0.0
  %4859 = vmatprep.subr.mxu0 0.0
  %4860 = vmatpush1.msra.mxu0 0.0
  %4861 = vmatprep.subr.mxu0 0.0
  %4862 = vmatpush1.msra.mxu0 0.0
  %4863 = vmatprep.subr.mxu0 0.0
  %4864 = vmatpush1.msra.mxu0 0.0
  %4865 = vmatprep.subr.mxu0 0.0
  %4866 = vmatpush1.msra.mxu0 0.0
  %4867 = vmatprep.subr.mxu0 0.0
  %4868 = vmatpush1.msra.mxu0 0.0
  %4869 = vmatprep.subr.mxu0 0.0
  %4870 = vmatpush1.msra.mxu0 0.0
  %4871 = vmatprep.subr.mxu0 0.0
  %4872 = vmatpush1.msra.mxu0 0.0
  %4873 = vmatprep.subr.mxu0 0.0
  %4874 = vmatpush1.msra.mxu0 0.0
  %4875 = vmatprep.subr.mxu0 0.0
  %4876 = vmatpush1.msra.mxu0 0.0
  %4877 = vmatprep.subr.mxu0 0.0
  %4878 = vmatpush1.msra.mxu0 0.0
  %4879 = vmatprep.subr.mxu0 0.0
  %4880 = vmatpush1.msra.mxu0 0.0
  %4881 = vmatprep.subr.mxu0 0.0
  %4882 = vmatpush1.msra.mxu0 0.0
  %4883 = vmatprep.subr.mxu0 0.0
  %4884 = vmatpush1.msra.mxu0 0.0
  %4885 = vmatprep.subr.mxu0 0.0
  %4886 = vmatpush1.msra.mxu0 0.0
  %4887 = vmatprep.subr.mxu0 0.0
  %4888 = vmatpush1.msra.mxu0 0.0
  %4889 = vmatprep.subr.mxu0 0.0
  %4890 = vmatpush1.msra.mxu0 0.0
  %4891 = vmatprep.subr.mxu0 0.0
  %4892 = vmatpush1.msra.mxu0 0.0
  %4893 = vmatprep.subr.mxu0 0.0
  %4894 = vmatpush1.msra.mxu0 0.0
  %4895 = vmatprep.subr.mxu0 0.0
  %4896 = vmatpush1.msra.mxu0 0.0
  %4897 = vmatprep.subr.mxu0 0.0
  %4898 = vmatpush1.msra.mxu0 0.0
  %4899 = vmatprep.subr.mxu0 0.0
  %4900 = vmatpush1.msra.mxu0 0.0
  %4901 = vmatprep.subr.mxu0 0.0
  %4902 = vmatpush1.msra.mxu0 0.0
  %4903 = vmatprep.subr.mxu0 0.0
  %4904 = vmatpush1.msra.mxu0 0.0
  %4905 = vmatprep.subr.mxu0 0.0
  %4906 = vmatpush1.msra.mxu0 0.0
  %4907 = vmatprep.subr.mxu0 0.0
  %4908 = vmatpush1.msra.mxu0 0.0
  %4909 = vmatprep.subr.mxu0 0.0
  %4910 = vmatpush1.msra.mxu0 0.0
  %4911 = vmatprep.subr.mxu0 0.0
  %4912 = vmatpush1.msra.mxu0 0.0
  %4913 = vmatprep.subr.mxu0 0.0
  %4914 = vmatpush1.msra.mxu0 0.0
  %4915 = vmatprep.mubr.f32.mxu0 0.0
  %4916 = vmatmul.mubr.f32.gmra.mrb[0].mxu0 %v149
  %v4917 = vpop.f32.mrb[0].mxu0
  %v4918 = vadd.f32 0.0, %v4917
  %v4919 = vpop.f32.mrb[0].mxu0
  %v4920 = vadd.f32 0.0, %v4919
  %4921 = vmatprep.mubr.f32.mxu0 0.0
  %4922 = vmatmul.mubr.f32.gmra.mrb[0].mxu0 %v152
  %v4923 = vpop.f32.mrb[0].mxu0
  %v4924 = vadd.f32 0.0, %v4923
  %v4925 = vpop.f32.mrb[0].mxu0
  %v4926 = vadd.f32 0.0, %v4925
  %4927 = vdwg.mxu0
  %4928 = vmatprep.subr.mxu0 %v501
  %4929 = vmatpush1.msra.mxu0 %v498
  %4930 = vmatprep.subr.mxu0 0.0
  %4931 = vmatpush1.msra.mxu0 0.0
  %4932 = vmatprep.subr.mxu0 0.0
  %4933 = vmatpush1.msra.mxu0 0.0
  %4934 = vmatprep.subr.mxu0 0.0
  %4935 = vmatpush1.msra.mxu0 0.0
  %4936 = vmatprep.subr.mxu0 0.0
  %4937 = vmatpush1.msra.mxu0 0.0
  %4938 = vmatprep.subr.mxu0 0.0
  %4939 = vmatpush1.msra.mxu0 0.0
  %4940 = vmatprep.subr.mxu0 0.0
  %4941 = vmatpush1.msra.mxu0 0.0
  %4942 = vmatprep.subr.mxu0 0.0
  %4943 = vmatpush1.msra.mxu0 0.0
  %4944 = vmatprep.subr.mxu0 0.0
  %4945 = vmatpush1.msra.mxu0 0.0
  %4946 = vmatprep.subr.mxu0 0.0
  %4947 = vmatpush1.msra.mxu0 0.0
  %4948 = vmatprep.subr.mxu0 0.0
  %4949 = vmatpush1.msra.mxu0 0.0
  %4950 = vmatprep.subr.mxu0 0.0
  %4951 = vmatpush1.msra.mxu0 0.0
  %4952 = vmatprep.subr.mxu0 0.0
  %4953 = vmatpush1.msra.mxu0 0.0
  %4954 = vmatprep.subr.mxu0 0.0
  %4955 = vmatpush1.msra.mxu0 0.0
  %4956 = vmatprep.subr.mxu0 0.0
  %4957 = vmatpush1.msra.mxu0 0.0
  %4958 = vmatprep.subr.mxu0 0.0
  %4959 = vmatpush1.msra.mxu0 0.0
  %4960 = vmatprep.subr.mxu0 0.0
  %4961 = vmatpush1.msra.mxu0 0.0
  %4962 = vmatprep.subr.mxu0 0.0
  %4963 = vmatpush1.msra.mxu0 0.0
  %4964 = vmatprep.subr.mxu0 0.0
  %4965 = vmatpush1.msra.mxu0 0.0
  %4966 = vmatprep.subr.mxu0 0.0
  %4967 = vmatpush1.msra.mxu0 0.0
  %4968 = vmatprep.subr.mxu0 0.0
  %4969 = vmatpush1.msra.mxu0 0.0
  %4970 = vmatprep.subr.mxu0 0.0
  %4971 = vmatpush1.msra.mxu0 0.0
  %4972 = vmatprep.subr.mxu0 0.0
  %4973 = vmatpush1.msra.mxu0 0.0
  %4974 = vmatprep.subr.mxu0 0.0
  %4975 = vmatpush1.msra.mxu0 0.0
  %4976 = vmatprep.subr.mxu0 0.0
  %4977 = vmatpush1.msra.mxu0 0.0
  %4978 = vmatprep.subr.mxu0 0.0
  %4979 = vmatpush1.msra.mxu0 0.0
  %4980 = vmatprep.subr.mxu0 0.0
  %4981 = vmatpush1.msra.mxu0 0.0
  %4982 = vmatprep.subr.mxu0 0.0
  %4983 = vmatpush1.msra.mxu0 0.0
  %4984 = vmatprep.subr.mxu0 0.0
  %4985 = vmatpush1.msra.mxu0 0.0
  %4986 = vmatprep.subr.mxu0 0.0
  %4987 = vmatpush1.msra.mxu0 0.0
  %4988 = vmatprep.subr.mxu0 0.0
  %4989 = vmatpush1.msra.mxu0 0.0
  %4990 = vmatprep.subr.mxu0 0.0
  %4991 = vmatpush1.msra.mxu0 0.0
  %4992 = vmatprep.mubr.f32.mxu0 0.0
  %4993 = vmatmul.mubr.f32.gmra.mrb[0].mxu0 %v149
  %v4994 = vpop.f32.mrb[0].mxu0
  %v4995 = vadd.f32 0.0, %v4994
  %v4996 = vpop.f32.mrb[0].mxu0
  %v4997 = vadd.f32 0.0, %v4996
  %4998 = vmatprep.mubr.f32.mxu0 0.0
  %4999 = vmatmul.mubr.f32.gmra.mrb[0].mxu0 %v152
  %v5000 = vpop.f32.mrb[0].mxu0
  %v5001 = vadd.f32 0.0, %v5000
  %v5002 = vpop.f32.mrb[0].mxu0
  %v5003 = vadd.f32 0.0, %v5002
  %5004 = vdwg.mxu0
  %5005 = vmatprep.subr.mxu0 %v507
  %5006 = vmatpush1.msra.mxu0 %v504
  %5007 = vmatprep.subr.mxu0 0.0
  %5008 = vmatpush1.msra.mxu0 0.0
  %5009 = vmatprep.subr.mxu0 0.0
  %5010 = vmatpush1.msra.mxu0 0.0
  %5011 = vmatprep.subr.mxu0 0.0
  %5012 = vmatpush1.msra.mxu0 0.0
  %5013 = vmatprep.subr.mxu0 0.0
  %5014 = vmatpush1.msra.mxu0 0.0
  %5015 = vmatprep.subr.mxu0 0.0
  %5016 = vmatpush1.msra.mxu0 0.0
  %5017 = vmatprep.subr.mxu0 0.0
  %5018 = vmatpush1.msra.mxu0 0.0
  %5019 = vmatprep.subr.mxu0 0.0
  %5020 = vmatpush1.msra.mxu0 0.0
  %5021 = vmatprep.subr.mxu0 0.0
  %5022 = vmatpush1.msra.mxu0 0.0
  %5023 = vmatprep.subr.mxu0 0.0
  %5024 = vmatpush1.msra.mxu0 0.0
  %5025 = vmatprep.subr.mxu0 0.0
  %5026 = vmatpush1.msra.mxu0 0.0
  %5027 = vmatprep.subr.mxu0 0.0
  %5028 = vmatpush1.msra.mxu0 0.0
  %5029 = vmatprep.subr.mxu0 0.0
  %5030 = vmatpush1.msra.mxu0 0.0
  %5031 = vmatprep.subr.mxu0 0.0
  %5032 = vmatpush1.msra.mxu0 0.0
  %5033 = vmatprep.subr.mxu0 0.0
  %5034 = vmatpush1.msra.mxu0 0.0
  %5035 = vmatprep.subr.mxu0 0.0
  %5036 = vmatpush1.msra.mxu0 0.0
  %5037 = vmatprep.subr.mxu0 0.0
  %5038 = vmatpush1.msra.mxu0 0.0
  %5039 = vmatprep.subr.mxu0 0.0
  %5040 = vmatpush1.msra.mxu0 0.0
  %5041 = vmatprep.subr.mxu0 0.0
  %5042 = vmatpush1.msra.mxu0 0.0
  %5043 = vmatprep.subr.mxu0 0.0
  %5044 = vmatpush1.msra.mxu0 0.0
  %5045 = vmatprep.subr.mxu0 0.0
  %5046 = vmatpush1.msra.mxu0 0.0
  %5047 = vmatprep.subr.mxu0 0.0
  %5048 = vmatpush1.msra.mxu0 0.0
  %5049 = vmatprep.subr.mxu0 0.0
  %5050 = vmatpush1.msra.mxu0 0.0
  %5051 = vmatprep.subr.mxu0 0.0
  %5052 = vmatpush1.msra.mxu0 0.0
  %5053 = vmatprep.subr.mxu0 0.0
  %5054 = vmatpush1.msra.mxu0 0.0
  %5055 = vmatprep.subr.mxu0 0.0
  %5056 = vmatpush1.msra.mxu0 0.0
  %5057 = vmatprep.subr.mxu0 0.0
  %5058 = vmatpush1.msra.mxu0 0.0
  %5059 = vmatprep.subr.mxu0 0.0
  %5060 = vmatpush1.msra.mxu0 0.0
  %5061 = vmatprep.subr.mxu0 0.0
  %5062 = vmatpush1.msra.mxu0 0.0
  %5063 = vmatprep.subr.mxu0 0.0
  %5064 = vmatpush1.msra.mxu0 0.0
  %5065 = vmatprep.subr.mxu0 0.0
  %5066 = vmatpush1.msra.mxu0 0.0
  %5067 = vmatprep.subr.mxu0 0.0
  %5068 = vmatpush1.msra.mxu0 0.0
  %5069 = vmatprep.mubr.f32.mxu0 0.0
  %5070 = vmatmul.mubr.f32.gmra.mrb[0].mxu0 %v149
  %v5071 = vpop.f32.mrb[0].mxu0
  %v5072 = vadd.f32 0.0, %v5071
  %v5073 = vpop.f32.mrb[0].mxu0
  %v5074 = vadd.f32 0.0, %v5073
  %5075 = vmatprep.mubr.f32.mxu0 0.0
  %5076 = vmatmul.mubr.f32.gmra.mrb[0].mxu0 %v152
  %v5077 = vpop.f32.mrb[0].mxu0
  %v5078 = vadd.f32 0.0, %v5077
  %v5079 = vpop.f32.mrb[0].mxu0
  %v5080 = vadd.f32 0.0, %v5079
  %5081 = vdwg.mxu0
  %5082 = vmatprep.subr.mxu0 %v513
  %5083 = vmatpush1.msra.mxu0 %v510
  %5084 = vmatprep.subr.mxu0 0.0
  %5085 = vmatpush1.msra.mxu0 0.0
  %5086 = vmatprep.subr.mxu0 0.0
  %5087 = vmatpush1.msra.mxu0 0.0
  %5088 = vmatprep.subr.mxu0 0.0
  %5089 = vmatpush1.msra.mxu0 0.0
  %5090 = vmatprep.subr.mxu0 0.0
  %5091 = vmatpush1.msra.mxu0 0.0
  %5092 = vmatprep.subr.mxu0 0.0
  %5093 = vmatpush1.msra.mxu0 0.0
  %5094 = vmatprep.subr.mxu0 0.0
  %5095 = vmatpush1.msra.mxu0 0.0
  %5096 = vmatprep.subr.mxu0 0.0
  %5097 = vmatpush1.msra.mxu0 0.0
  %5098 = vmatprep.subr.mxu0 0.0
  %5099 = vmatpush1.msra.mxu0 0.0
  %5100 = vmatprep.subr.mxu0 0.0
  %5101 = vmatpush1.msra.mxu0 0.0
  %5102 = vmatprep.subr.mxu0 0.0
  %5103 = vmatpush1.msra.mxu0 0.0
  %5104 = vmatprep.subr.mxu0 0.0
  %5105 = vmatpush1.msra.mxu0 0.0
  %5106 = vmatprep.subr.mxu0 0.0
  %5107 = vmatpush1.msra.mxu0 0.0
  %5108 = vmatprep.subr.mxu0 0.0
  %5109 = vmatpush1.msra.mxu0 0.0
  %5110 = vmatprep.subr.mxu0 0.0
  %5111 = vmatpush1.msra.mxu0 0.0
  %5112 = vmatprep.subr.mxu0 0.0
  %5113 = vmatpush1.msra.mxu0 0.0
  %5114 = vmatprep.subr.mxu0 0.0
  %5115 = vmatpush1.msra.mxu0 0.0
  %5116 = vmatprep.subr.mxu0 0.0
  %5117 = vmatpush1.msra.mxu0 0.0
  %5118 = vmatprep.subr.mxu0 0.0
  %5119 = vmatpush1.msra.mxu0 0.0
  %5120 = vmatprep.subr.mxu0 0.0
  %5121 = vmatpush1.msra.mxu0 0.0
  %5122 = vmatprep.subr.mxu0 0.0
  %5123 = vmatpush1.msra.mxu0 0.0
  %5124 = vmatprep.subr.mxu0 0.0
  %5125 = vmatpush1.msra.mxu0 0.0
  %5126 = vmatprep.subr.mxu0 0.0
  %5127 = vmatpush1.msra.mxu0 0.0
  %5128 = vmatprep.subr.mxu0 0.0
  %5129 = vmatpush1.msra.mxu0 0.0
  %5130 = vmatprep.subr.mxu0 0.0
  %5131 = vmatpush1.msra.mxu0 0.0
  %5132 = vmatprep.subr.mxu0 0.0
  %5133 = vmatpush1.msra.mxu0 0.0
  %5134 = vmatprep.subr.mxu0 0.0
  %5135 = vmatpush1.msra.mxu0 0.0
  %5136 = vmatprep.subr.mxu0 0.0
  %5137 = vmatpush1.msra.mxu0 0.0
  %5138 = vmatprep.subr.mxu0 0.0
  %5139 = vmatpush1.msra.mxu0 0.0
  %5140 = vmatprep.subr.mxu0 0.0
  %5141 = vmatpush1.msra.mxu0 0.0
  %5142 = vmatprep.subr.mxu0 0.0
  %5143 = vmatpush1.msra.mxu0 0.0
  %5144 = vmatprep.subr.mxu0 0.0
  %5145 = vmatpush1.msra.mxu0 0.0
  %5146 = vmatprep.mubr.f32.mxu0 0.0
  %5147 = vmatmul.mubr.f32.gmra.mrb[0].mxu0 %v149
  %v5148 = vpop.f32.mrb[0].mxu0
  %v5149 = vadd.f32 0.0, %v5148
  %v5150 = vpop.f32.mrb[0].mxu0
  %v5151 = vadd.f32 0.0, %v5150
  %5152 = vmatprep.mubr.f32.mxu0 0.0
  %5153 = vmatmul.mubr.f32.gmra.mrb[0].mxu0 %v152
  %v5154 = vpop.f32.mrb[0].mxu0
  %v5155 = vadd.f32 0.0, %v5154
  %v5156 = vpop.f32.mrb[0].mxu0
  %v5157 = vadd.f32 0.0, %v5156
  %5158 = vdwg.mxu0
  %5159 = vmatprep.subr.mxu0 %v519
  %5160 = vmatpush1.msra.mxu0 %v516
  %5161 = vmatprep.subr.mxu0 0.0
  %5162 = vmatpush1.msra.mxu0 0.0
  %5163 = vmatprep.subr.mxu0 0.0
  %5164 = vmatpush1.msra.mxu0 0.0
  %5165 = vmatprep.subr.mxu0 0.0
  %5166 = vmatpush1.msra.mxu0 0.0
  %5167 = vmatprep.subr.mxu0 0.0
  %5168 = vmatpush1.msra.mxu0 0.0
  %5169 = vmatprep.subr.mxu0 0.0
  %5170 = vmatpush1.msra.mxu0 0.0
  %5171 = vmatprep.subr.mxu0 0.0
  %5172 = vmatpush1.msra.mxu0 0.0
  %5173 = vmatprep.subr.mxu0 0.0
  %5174 = vmatpush1.msra.mxu0 0.0
  %5175 = vmatprep.subr.mxu0 0.0
  %5176 = vmatpush1.msra.mxu0 0.0
  %5177 = vmatprep.subr.mxu0 0.0
  %5178 = vmatpush1.msra.mxu0 0.0
  %5179 = vmatprep.subr.mxu0 0.0
  %5180 = vmatpush1.msra.mxu0 0.0
  %5181 = vmatprep.subr.mxu0 0.0
  %5182 = vmatpush1.msra.mxu0 0.0
  %5183 = vmatprep.subr.mxu0 0.0
  %5184 = vmatpush1.msra.mxu0 0.0
  %5185 = vmatprep.subr.mxu0 0.0
  %5186 = vmatpush1.msra.mxu0 0.0
  %5187 = vmatprep.subr.mxu0 0.0
  %5188 = vmatpush1.msra.mxu0 0.0
  %5189 = vmatprep.subr.mxu0 0.0
  %5190 = vmatpush1.msra.mxu0 0.0
  %5191 = vmatprep.subr.mxu0 0.0
  %5192 = vmatpush1.msra.mxu0 0.0
  %5193 = vmatprep.subr.mxu0 0.0
  %5194 = vmatpush1.msra.mxu0 0.0
  %5195 = vmatprep.subr.mxu0 0.0
  %5196 = vmatpush1.msra.mxu0 0.0
  %5197 = vmatprep.subr.mxu0 0.0
  %5198 = vmatpush1.msra.mxu0 0.0
  %5199 = vmatprep.subr.mxu0 0.0
  %5200 = vmatpush1.msra.mxu0 0.0
  %5201 = vmatprep.subr.mxu0 0.0
  %5202 = vmatpush1.msra.mxu0 0.0
  %5203 = vmatprep.subr.mxu0 0.0
  %5204 = vmatpush1.msra.mxu0 0.0
  %5205 = vmatprep.subr.mxu0 0.0
  %5206 = vmatpush1.msra.mxu0 0.0
  %5207 = vmatprep.subr.mxu0 0.0
  %5208 = vmatpush1.msra.mxu0 0.0
  %5209 = vmatprep.subr.mxu0 0.0
  %5210 = vmatpush1.msra.mxu0 0.0
  %5211 = vmatprep.subr.mxu0 0.0
  %5212 = vmatpush1.msra.mxu0 0.0
  %5213 = vmatprep.subr.mxu0 0.0
  %5214 = vmatpush1.msra.mxu0 0.0
  %5215 = vmatprep.subr.mxu0 0.0
  %5216 = vmatpush1.msra.mxu0 0.0
  %5217 = vmatprep.subr.mxu0 0.0
  %5218 = vmatpush1.msra.mxu0 0.0
  %5219 = vmatprep.subr.mxu0 0.0
  %5220 = vmatpush1.msra.mxu0 0.0
  %5221 = vmatprep.subr.mxu0 0.0
  %5222 = vmatpush1.msra.mxu0 0.0
  %5223 = vmatprep.mubr.f32.mxu0 0.0
  %5224 = vmatmul.mubr.f32.gmra.mrb[0].mxu0 %v149
  %v5225 = vpop.f32.mrb[0].mxu0
  %v5226 = vadd.f32 0.0, %v5225
  %v5227 = vpop.f32.mrb[0].mxu0
  %v5228 = vadd.f32 0.0, %v5227
  %5229 = vmatprep.mubr.f32.mxu0 0.0
  %5230 = vmatmul.mubr.f32.gmra.mrb[0].mxu0 %v152
  %v5231 = vpop.f32.mrb[0].mxu0
  %v5232 = vadd.f32 0.0, %v5231
  %v5233 = vpop.f32.mrb[0].mxu0
  %v5234 = vadd.f32 0.0, %v5233
  %5235 = vdwg.mxu0
  %5236 = vmatprep.subr.mxu0 %v525
  %5237 = vmatpush1.msra.mxu0 %v522
  %5238 = vmatprep.subr.mxu0 0.0
  %5239 = vmatpush1.msra.mxu0 0.0
  %5240 = vmatprep.subr.mxu0 0.0
  %5241 = vmatpush1.msra.mxu0 0.0
  %5242 = vmatprep.subr.mxu0 0.0
  %5243 = vmatpush1.msra.mxu0 0.0
  %5244 = vmatprep.subr.mxu0 0.0
  %5245 = vmatpush1.msra.mxu0 0.0
  %5246 = vmatprep.subr.mxu0 0.0
  %5247 = vmatpush1.msra.mxu0 0.0
  %5248 = vmatprep.subr.mxu0 0.0
  %5249 = vmatpush1.msra.mxu0 0.0
  %5250 = vmatprep.subr.mxu0 0.0
  %5251 = vmatpush1.msra.mxu0 0.0
  %5252 = vmatprep.subr.mxu0 0.0
  %5253 = vmatpush1.msra.mxu0 0.0
  %5254 = vmatprep.subr.mxu0 0.0
  %5255 = vmatpush1.msra.mxu0 0.0
  %5256 = vmatprep.subr.mxu0 0.0
  %5257 = vmatpush1.msra.mxu0 0.0
  %5258 = vmatprep.subr.mxu0 0.0
  %5259 = vmatpush1.msra.mxu0 0.0
  %5260 = vmatprep.subr.mxu0 0.0
  %5261 = vmatpush1.msra.mxu0 0.0
  %5262 = vmatprep.subr.mxu0 0.0
  %5263 = vmatpush1.msra.mxu0 0.0
  %5264 = vmatprep.subr.mxu0 0.0
  %5265 = vmatpush1.msra.mxu0 0.0
  %5266 = vmatprep.subr.mxu0 0.0
  %5267 = vmatpush1.msra.mxu0 0.0
  %5268 = vmatprep.subr.mxu0 0.0
  %5269 = vmatpush1.msra.mxu0 0.0
  %5270 = vmatprep.subr.mxu0 0.0
  %5271 = vmatpush1.msra.mxu0 0.0
  %5272 = vmatprep.subr.mxu0 0.0
  %5273 = vmatpush1.msra.mxu0 0.0
  %5274 = vmatprep.subr.mxu0 0.0
  %5275 = vmatpush1.msra.mxu0 0.0
  %5276 = vmatprep.subr.mxu0 0.0
  %5277 = vmatpush1.msra.mxu0 0.0
  %5278 = vmatprep.subr.mxu0 0.0
  %5279 = vmatpush1.msra.mxu0 0.0
  %5280 = vmatprep.subr.mxu0 0.0
  %5281 = vmatpush1.msra.mxu0 0.0
  %5282 = vmatprep.subr.mxu0 0.0
  %5283 = vmatpush1.msra.mxu0 0.0
  %5284 = vmatprep.subr.mxu0 0.0
  %5285 = vmatpush1.msra.mxu0 0.0
  %5286 = vmatprep.subr.mxu0 0.0
  %5287 = vmatpush1.msra.mxu0 0.0
  %5288 = vmatprep.subr.mxu0 0.0
  %5289 = vmatpush1.msra.mxu0 0.0
  %5290 = vmatprep.subr.mxu0 0.0
  %5291 = vmatpush1.msra.mxu0 0.0
  %5292 = vmatprep.subr.mxu0 0.0
  %5293 = vmatpush1.msra.mxu0 0.0
  %5294 = vmatprep.subr.mxu0 0.0
  %5295 = vmatpush1.msra.mxu0 0.0
  %5296 = vmatprep.subr.mxu0 0.0
  %5297 = vmatpush1.msra.mxu0 0.0
  %5298 = vmatprep.subr.mxu0 0.0
  %5299 = vmatpush1.msra.mxu0 0.0
  %5300 = vmatprep.mubr.f32.mxu0 0.0
  %5301 = vmatmul.mubr.f32.gmra.mrb[0].mxu0 %v149
  %v5302 = vpop.f32.mrb[0].mxu0
  %v5303 = vadd.f32 0.0, %v5302
  %v5304 = vpop.f32.mrb[0].mxu0
  %v5305 = vadd.f32 0.0, %v5304
  %5306 = vmatprep.mubr.f32.mxu0 0.0
  %5307 = vmatmul.mubr.f32.gmra.mrb[0].mxu0 %v152
  %v5308 = vpop.f32.mrb[0].mxu0
  %v5309 = vadd.f32 0.0, %v5308
  %v5310 = vpop.f32.mrb[0].mxu0
  %v5311 = vadd.f32 0.0, %v5310
  %5312 = vdwg.mxu0
  %5313 = vmatprep.subr.mxu0 %v531
  %5314 = vmatpush1.msra.mxu0 %v528
  %5315 = vmatprep.subr.mxu0 0.0
  %5316 = vmatpush1.msra.mxu0 0.0
  %5317 = vmatprep.subr.mxu0 0.0
  %5318 = vmatpush1.msra.mxu0 0.0
  %5319 = vmatprep.subr.mxu0 0.0
  %5320 = vmatpush1.msra.mxu0 0.0
  %5321 = vmatprep.subr.mxu0 0.0
  %5322 = vmatpush1.msra.mxu0 0.0
  %5323 = vmatprep.subr.mxu0 0.0
  %5324 = vmatpush1.msra.mxu0 0.0
  %5325 = vmatprep.subr.mxu0 0.0
  %5326 = vmatpush1.msra.mxu0 0.0
  %5327 = vmatprep.subr.mxu0 0.0
  %5328 = vmatpush1.msra.mxu0 0.0
  %5329 = vmatprep.subr.mxu0 0.0
  %5330 = vmatpush1.msra.mxu0 0.0
  %5331 = vmatprep.subr.mxu0 0.0
  %5332 = vmatpush1.msra.mxu0 0.0
  %5333 = vmatprep.subr.mxu0 0.0
  %5334 = vmatpush1.msra.mxu0 0.0
  %5335 = vmatprep.subr.mxu0 0.0
  %5336 = vmatpush1.msra.mxu0 0.0
  %5337 = vmatprep.subr.mxu0 0.0
  %5338 = vmatpush1.msra.mxu0 0.0
  %5339 = vmatprep.subr.mxu0 0.0
  %5340 = vmatpush1.msra.mxu0 0.0
  %5341 = vmatprep.subr.mxu0 0.0
  %5342 = vmatpush1.msra.mxu0 0.0
  %5343 = vmatprep.subr.mxu0 0.0
  %5344 = vmatpush1.msra.mxu0 0.0
  %5345 = vmatprep.subr.mxu0 0.0
  %5346 = vmatpush1.msra.mxu0 0.0
  %5347 = vmatprep.subr.mxu0 0.0
  %5348 = vmatpush1.msra.mxu0 0.0
  %5349 = vmatprep.subr.mxu0 0.0
  %5350 = vmatpush1.msra.mxu0 0.0
  %5351 = vmatprep.subr.mxu0 0.0
  %5352 = vmatpush1.msra.mxu0 0.0
  %5353 = vmatprep.subr.mxu0 0.0
  %5354 = vmatpush1.msra.mxu0 0.0
  %5355 = vmatprep.subr.mxu0 0.0
  %5356 = vmatpush1.msra.mxu0 0.0
  %5357 = vmatprep.subr.mxu0 0.0
  %5358 = vmatpush1.msra.mxu0 0.0
  %5359 = vmatprep.subr.mxu0 0.0
  %5360 = vmatpush1.msra.mxu0 0.0
  %5361 = vmatprep.subr.mxu0 0.0
  %5362 = vmatpush1.msra.mxu0 0.0
  %5363 = vmatprep.subr.mxu0 0.0
  %5364 = vmatpush1.msra.mxu0 0.0
  %5365 = vmatprep.subr.mxu0 0.0
  %5366 = vmatpush1.msra.mxu0 0.0
  %5367 = vmatprep.subr.mxu0 0.0
  %5368 = vmatpush1.msra.mxu0 0.0
  %5369 = vmatprep.subr.mxu0 0.0
  %5370 = vmatpush1.msra.mxu0 0.0
  %5371 = vmatprep.subr.mxu0 0.0
  %5372 = vmatpush1.msra.mxu0 0.0
  %5373 = vmatprep.subr.mxu0 0.0
  %5374 = vmatpush1.msra.mxu0 0.0
  %5375 = vmatprep.subr.mxu0 0.0
  %5376 = vmatpush1.msra.mxu0 0.0
  %5377 = vmatprep.mubr.f32.mxu0 0.0
  %5378 = vmatmul.mubr.f32.gmra.mrb[0].mxu0 %v149
  %v5379 = vpop.f32.mrb[0].mxu0
  %v5380 = vadd.f32 0.0, %v5379
  %v5381 = vpop.f32.mrb[0].mxu0
  %v5382 = vadd.f32 0.0, %v5381
  %5383 = vmatprep.mubr.f32.mxu0 0.0
  %5384 = vmatmul.mubr.f32.gmra.mrb[0].mxu0 %v152
  %v5385 = vpop.f32.mrb[0].mxu0
  %v5386 = vadd.f32 0.0, %v5385
  %v5387 = vpop.f32.mrb[0].mxu0
  %v5388 = vadd.f32 0.0, %v5387
  %5389 = vdwg.mxu0
  %5390 = vmatprep.subr.mxu0 %v537
  %5391 = vmatpush1.msra.mxu0 %v534
  %5392 = vmatprep.subr.mxu0 0.0
  %5393 = vmatpush1.msra.mxu0 0.0
  %5394 = vmatprep.subr.mxu0 0.0
  %5395 = vmatpush1.msra.mxu0 0.0
  %5396 = vmatprep.subr.mxu0 0.0
  %5397 = vmatpush1.msra.mxu0 0.0
  %5398 = vmatprep.subr.mxu0 0.0
  %5399 = vmatpush1.msra.mxu0 0.0
  %5400 = vmatprep.subr.mxu0 0.0
  %5401 = vmatpush1.msra.mxu0 0.0
  %5402 = vmatprep.subr.mxu0 0.0
  %5403 = vmatpush1.msra.mxu0 0.0
  %5404 = vmatprep.subr.mxu0 0.0
  %5405 = vmatpush1.msra.mxu0 0.0
  %5406 = vmatprep.subr.mxu0 0.0
  %5407 = vmatpush1.msra.mxu0 0.0
  %5408 = vmatprep.subr.mxu0 0.0
  %5409 = vmatpush1.msra.mxu0 0.0
  %5410 = vmatprep.subr.mxu0 0.0
  %5411 = vmatpush1.msra.mxu0 0.0
  %5412 = vmatprep.subr.mxu0 0.0
  %5413 = vmatpush1.msra.mxu0 0.0
  %5414 = vmatprep.subr.mxu0 0.0
  %5415 = vmatpush1.msra.mxu0 0.0
  %5416 = vmatprep.subr.mxu0 0.0
  %5417 = vmatpush1.msra.mxu0 0.0
  %5418 = vmatprep.subr.mxu0 0.0
  %5419 = vmatpush1.msra.mxu0 0.0
  %5420 = vmatprep.subr.mxu0 0.0
  %5421 = vmatpush1.msra.mxu0 0.0
  %5422 = vmatprep.subr.mxu0 0.0
  %5423 = vmatpush1.msra.mxu0 0.0
  %5424 = vmatprep.subr.mxu0 0.0
  %5425 = vmatpush1.msra.mxu0 0.0
  %5426 = vmatprep.subr.mxu0 0.0
  %5427 = vmatpush1.msra.mxu0 0.0
  %5428 = vmatprep.subr.mxu0 0.0
  %5429 = vmatpush1.msra.mxu0 0.0
  %5430 = vmatprep.subr.mxu0 0.0
  %5431 = vmatpush1.msra.mxu0 0.0
  %5432 = vmatprep.subr.mxu0 0.0
  %5433 = vmatpush1.msra.mxu0 0.0
  %5434 = vmatprep.subr.mxu0 0.0
  %5435 = vmatpush1.msra.mxu0 0.0
  %5436 = vmatprep.subr.mxu0 0.0
  %5437 = vmatpush1.msra.mxu0 0.0
  %5438 = vmatprep.subr.mxu0 0.0
  %5439 = vmatpush1.msra.mxu0 0.0
  %5440 = vmatprep.subr.mxu0 0.0
  %5441 = vmatpush1.msra.mxu0 0.0
  %5442 = vmatprep.subr.mxu0 0.0
  %5443 = vmatpush1.msra.mxu0 0.0
  %5444 = vmatprep.subr.mxu0 0.0
  %5445 = vmatpush1.msra.mxu0 0.0
  %5446 = vmatprep.subr.mxu0 0.0
  %5447 = vmatpush1.msra.mxu0 0.0
  %5448 = vmatprep.subr.mxu0 0.0
  %5449 = vmatpush1.msra.mxu0 0.0
  %5450 = vmatprep.subr.mxu0 0.0
  %5451 = vmatpush1.msra.mxu0 0.0
  %5452 = vmatprep.subr.mxu0 0.0
  %5453 = vmatpush1.msra.mxu0 0.0
  %5454 = vmatprep.mubr.f32.mxu0 0.0
  %5455 = vmatmul.mubr.f32.gmra.mrb[0].mxu0 %v149
  %v5456 = vpop.f32.mrb[0].mxu0
  %v5457 = vadd.f32 0.0, %v5456
  %v5458 = vpop.f32.mrb[0].mxu0
  %v5459 = vadd.f32 0.0, %v5458
  %5460 = vmatprep.mubr.f32.mxu0 0.0
  %5461 = vmatmul.mubr.f32.gmra.mrb[0].mxu0 %v152
  %v5462 = vpop.f32.mrb[0].mxu0
  %v5463 = vadd.f32 0.0, %v5462
  %v5464 = vpop.f32.mrb[0].mxu0
  %v5465 = vadd.f32 0.0, %v5464
  %5466 = vdwg.mxu0
  %v5467 = vtanh.pop %v606
  %v5468 = vtanh.pop %v608
  %v5469 = vtanh.pop %v683
  %v5470 = vtanh.pop %v685
  %v5471 = vtanh.pop %v760
  %v5472 = vtanh.pop %v762
  %v5473 = vtanh.pop %v837
  %v5474 = vtanh.pop %v839
  %v5475 = vtanh.pop %v914
  %v5476 = vtanh.pop %v916
  %v5477 = vtanh.pop %v991
  %v5478 = vtanh.pop %v993
  %v5479 = vtanh.pop %v1068
  %v5480 = vtanh.pop %v1070
  %v5481 = vtanh.pop %v1145
  %v5482 = vtanh.pop %v1147
  %v5483 = vtanh.pop %v1222
  %v5484 = vtanh.pop %v1224
  %v5485 = vtanh.pop %v1299
  %v5486 = vtanh.pop %v1301
  %v5487 = vtanh.pop %v1376
  %v5488 = vtanh.pop %v1378
  %v5489 = vtanh.pop %v1453
  %v5490 = vtanh.pop %v1455
  %v5491 = vtanh.pop %v1530
  %v5492 = vtanh.pop %v1532
  %v5493 = vtanh.pop %v1607
  %v5494 = vtanh.pop %v1609
  %v5495 = vtanh.pop %v1684
  %v5496 = vtanh.pop %v1686
  %v5497 = vtanh.pop %v1761
  %v5498 = vtanh.pop %v1763
  %v5499 = vtanh.pop %v1838
  %v5500 = vtanh.pop %v1840
  %v5501 = vtanh.pop %v1915
  %v5502 = vtanh.pop %v1917
  %v5503 = vtanh.pop %v1992
  %v5504 = vtanh.pop %v1994
  %v5505 = vtanh.pop %v2069
  %v5506 = vtanh.pop %v2071
  %v5507 = vtanh.pop %v2146
  %v5508 = vtanh.pop %v2148
  %v5509 = vtanh.pop %v2223
  %v5510 = vtanh.pop %v2225
  %v5511 = vtanh.pop %v2300
  %v5512 = vtanh.pop %v2302
  %v5513 = vtanh.pop %v2377
  %v5514 = vtanh.pop %v2379
  %v5515 = vtanh.pop %v2454
  %v5516 = vtanh.pop %v2456
  %v5517 = vtanh.pop %v2531
  %v5518 = vtanh.pop %v2533
  %v5519 = vtanh.pop %v2608
  %v5520 = vtanh.pop %v2610
  %v5521 = vtanh.pop %v2685
  %v5522 = vtanh.pop %v2687
  %v5523 = vtanh.pop %v2762
  %v5524 = vtanh.pop %v2764
  %v5525 = vtanh.pop %v2839
  %v5526 = vtanh.pop %v2841
  %v5527 = vtanh.pop %v2916
  %v5528 = vtanh.pop %v2918
  %v5529 = vtanh.pop %v2993
  %v5530 = vtanh.pop %v2995
  %v5531 = vtanh.pop %v3070
  %v5532 = vtanh.pop %v3072
  %v5533 = vtanh.pop %v3147
  %v5534 = vtanh.pop %v3149
  %v5535 = vtanh.pop %v3224
  %v5536 = vtanh.pop %v3226
  %v5537 = vtanh.pop %v3301
  %v5538 = vtanh.pop %v3303
  %v5539 = vtanh.pop %v3378
  %v5540 = vtanh.pop %v3380
  %v5541 = vtanh.pop %v3455
  %v5542 = vtanh.pop %v3457
  %v5543 = vtanh.pop %v3532
  %v5544 = vtanh.pop %v3534
  %v5545 = vtanh.pop %v3609
  %v5546 = vtanh.pop %v3611
  %v5547 = vtanh.pop %v3686
  %v5548 = vtanh.pop %v3688
  %v5549 = vtanh.pop %v3763
  %v5550 = vtanh.pop %v3765
  %v5551 = vtanh.pop %v3840
  %v5552 = vtanh.pop %v3842
  %v5553 = vtanh.pop %v3917
  %v5554 = vtanh.pop %v3919
  %v5555 = vtanh.pop %v3994
  %v5556 = vtanh.pop %v3996
  %v5557 = vtanh.pop %v4071
  %v5558 = vtanh.pop %v4073
  %v5559 = vtanh.pop %v4148
  %v5560 = vtanh.pop %v4150
  %v5561 = vtanh.pop %v4225
  %v5562 = vtanh.pop %v4227
  %v5563 = vtanh.pop %v4302
  %v5564 = vtanh.pop %v4304
  %v5565 = vtanh.pop %v4379
  %v5566 = vtanh.pop %v4381
  %v5567 = vtanh.pop %v4456
  %v5568 = vtanh.pop %v4458
  %v5569 = vtanh.pop %v4533
  %v5570 = vtanh.pop %v4535
  %v5571 = vtanh.pop %v4610
  %v5572 = vtanh.pop %v4612
  %v5573 = vtanh.pop %v4687
  %v5574 = vtanh.pop %v4689
  %v5575 = vtanh.pop %v4764
  %v5576 = vtanh.pop %v4766
  %v5577 = vtanh.pop %v4841
  %v5578 = vtanh.pop %v4843
  %v5579 = vtanh.pop %v4918
  %v5580 = vtanh.pop %v4920
  %v5581 = vtanh.pop %v4995
  %v5582 = vtanh.pop %v4997
  %v5583 = vtanh.pop %v5072
  %v5584 = vtanh.pop %v5074
  %v5585 = vtanh.pop %v5149
  %v5586 = vtanh.pop %v5151
  %v5587 = vtanh.pop %v5226
  %v5588 = vtanh.pop %v5228
  %v5589 = vtanh.pop %v5303
  %v5590 = vtanh.pop %v5305
  %v5591 = vtanh.pop %v5380
  %v5592 = vtanh.pop %v5382
  %v5593 = vtanh.pop %v5457
  %v5594 = vtanh.pop %v5459
  %v5595 = vtanh.pop %v612
  %v5596 = vtanh.pop %v614
  %v5597 = vtanh.pop %v689
  %v5598 = vtanh.pop %v691
  %v5599 = vtanh.pop %v766
  %v5600 = vtanh.pop %v768
  %v5601 = vtanh.pop %v843
  %v5602 = vtanh.pop %v845
  %v5603 = vtanh.pop %v920
  %v5604 = vtanh.pop %v922
  %v5605 = vtanh.pop %v997
  %v5606 = vtanh.pop %v999
  %v5607 = vtanh.pop %v1074
  %v5608 = vtanh.pop %v1076
  %v5609 = vtanh.pop %v1151
  %v5610 = vtanh.pop %v1153
  %v5611 = vtanh.pop %v1228
  %v5612 = vtanh.pop %v1230
  %v5613 = vtanh.pop %v1305
  %v5614 = vtanh.pop %v1307
  %v5615 = vtanh.pop %v1382
  %v5616 = vtanh.pop %v1384
  %v5617 = vtanh.pop %v1459
  %v5618 = vtanh.pop %v1461
  %v5619 = vtanh.pop %v1536
  %v5620 = vtanh.pop %v1538
  %v5621 = vtanh.pop %v1613
  %v5622 = vtanh.pop %v1615
  %v5623 = vtanh.pop %v1690
  %v5624 = vtanh.pop %v1692
  %v5625 = vtanh.pop %v1767
  %v5626 = vtanh.pop %v1769
  %v5627 = vtanh.pop %v1844
  %v5628 = vtanh.pop %v1846
  %v5629 = vtanh.pop %v1921
  %v5630 = vtanh.pop %v1923
  %v5631 = vtanh.pop %v1998
  %v5632 = vtanh.pop %v2000
  %v5633 = vtanh.pop %v2075
  %v5634 = vtanh.pop %v2077
  %v5635 = vtanh.pop %v2152
  %v5636 = vtanh.pop %v2154
  %v5637 = vtanh.pop %v2229
  %v5638 = vtanh.pop %v2231
  %v5639 = vtanh.pop %v2306
  %v5640 = vtanh.pop %v2308
  %v5641 = vtanh.pop %v2383
  %v5642 = vtanh.pop %v2385
  %v5643 = vtanh.pop %v2460
  %v5644 = vtanh.pop %v2462
  %v5645 = vtanh.pop %v2537
  %v5646 = vtanh.pop %v2539
  %v5647 = vtanh.pop %v2614
  %v5648 = vtanh.pop %v2616
  %v5649 = vtanh.pop %v2691
  %v5650 = vtanh.pop %v2693
  %v5651 = vtanh.pop %v2768
  %v5652 = vtanh.pop %v2770
  %v5653 = vtanh.pop %v2845
  %v5654 = vtanh.pop %v2847
  %v5655 = vtanh.pop %v2922
  %v5656 = vtanh.pop %v2924
  %v5657 = vtanh.pop %v2999
  %v5658 = vtanh.pop %v3001
  %v5659 = vtanh.pop %v3076
  %v5660 = vtanh.pop %v3078
  %v5661 = vtanh.pop %v3153
  %v5662 = vtanh.pop %v3155
  %v5663 = vtanh.pop %v3230
  %v5664 = vtanh.pop %v3232
  %v5665 = vtanh.pop %v3307
  %v5666 = vtanh.pop %v3309
  %v5667 = vtanh.pop %v3384
  %v5668 = vtanh.pop %v3386
  %v5669 = vtanh.pop %v3461
  %v5670 = vtanh.pop %v3463
  %v5671 = vtanh.pop %v3538
  %v5672 = vtanh.pop %v3540
  %v5673 = vtanh.pop %v3615
  %v5674 = vtanh.pop %v3617
  %v5675 = vtanh.pop %v3692
  %v5676 = vtanh.pop %v3694
  %v5677 = vtanh.pop %v3769
  %v5678 = vtanh.pop %v3771
  %v5679 = vtanh.pop %v3846
  %v5680 = vtanh.pop %v3848
  %v5681 = vtanh.pop %v3923
  %v5682 = vtanh.pop %v3925
  %v5683 = vtanh.pop %v4000
  %v5684 = vtanh.pop %v4002
  %v5685 = vtanh.pop %v4077
  %v5686 = vtanh.pop %v4079
  %v5687 = vtanh.pop %v4154
  %v5688 = vtanh.pop %v4156
  %v5689 = vtanh.pop %v4231
  %v5690 = vtanh.pop %v4233
  %v5691 = vtanh.pop %v4308
  %v5692 = vtanh.pop %v4310
  %v5693 = vtanh.pop %v4385
  %v5694 = vtanh.pop %v4387
  %v5695 = vtanh.pop %v4462
  %v5696 = vtanh.pop %v4464
  %v5697 = vtanh.pop %v4539
  %v5698 = vtanh.pop %v4541
  %v5699 = vtanh.pop %v4616
  %v5700 = vtanh.pop %v4618
  %v5701 = vtanh.pop %v4693
  %v5702 = vtanh.pop %v4695
  %v5703 = vtanh.pop %v4770
  %v5704 = vtanh.pop %v4772
  %v5705 = vtanh.pop %v4847
  %v5706 = vtanh.pop %v4849
  %v5707 = vtanh.pop %v4924
  %v5708 = vtanh.pop %v4926
  %v5709 = vtanh.pop %v5001
  %v5710 = vtanh.pop %v5003
  %v5711 = vtanh.pop %v5078
  %v5712 = vtanh.pop %v5080
  %v5713 = vtanh.pop %v5155
  %v5714 = vtanh.pop %v5157
  %v5715 = vtanh.pop %v5232
  %v5716 = vtanh.pop %v5234
  %v5717 = vtanh.pop %v5309
  %v5718 = vtanh.pop %v5311
  %v5719 = vtanh.pop %v5386
  %v5720 = vtanh.pop %v5388
  %v5721 = vtanh.pop %v5463
  %v5722 = vtanh.pop %v5465
  %v5723 = vld [vmem:[%s2] ss:$4 sm:$0xff]
  %s5724 = scalar_lea.vmem %s2, 32
  %v5725 = vld [vmem:[%s5724] ss:$4 sm:$0xff]
  %s5726 = scalar_lea.vmem %s2, 64
  %v5727 = vld [vmem:[%s5726] ss:$4 sm:$0xff]
  %s5728 = scalar_lea.vmem %s2, 96
  %v5729 = vld [vmem:[%s5728] ss:$4 sm:$0xff]
  %s5730 = scalar_lea.vmem %s2, 128
  %v5731 = vld [vmem:[%s5730] ss:$4 sm:$0xff]
  %s5732 = scalar_lea.vmem %s2, 160
  %v5733 = vld [vmem:[%s5732] ss:$4 sm:$0xff]
  %s5734 = scalar_lea.vmem %s2, 192
  %v5735 = vld [vmem:[%s5734] ss:$4 sm:$0xff]
  %s5736 = scalar_lea.vmem %s2, 224
  %v5737 = vld [vmem:[%s5736] ss:$4 sm:$0xff]
  %s5738 = scalar_lea.vmem %s2, 256
  %v5739 = vld [vmem:[%s5738] ss:$4 sm:$0xff]
  %s5740 = scalar_lea.vmem %s2, 288
  %v5741 = vld [vmem:[%s5740] ss:$4 sm:$0xff]
  %s5742 = scalar_lea.vmem %s2, 320
  %v5743 = vld [vmem:[%s5742] ss:$4 sm:$0xff]
  %s5744 = scalar_lea.vmem %s2, 352
  %v5745 = vld [vmem:[%s5744] ss:$4 sm:$0xff]
  %s5746 = scalar_lea.vmem %s2, 384
  %v5747 = vld [vmem:[%s5746] ss:$4 sm:$0xff]
  %s5748 = scalar_lea.vmem %s2, 416
  %v5749 = vld [vmem:[%s5748] ss:$4 sm:$0xff]
  %s5750 = scalar_lea.vmem %s2, 448
  %v5751 = vld [vmem:[%s5750] ss:$4 sm:$0xff]
  %s5752 = scalar_lea.vmem %s2, 480
  %v5753 = vld [vmem:[%s5752] ss:$4 sm:$0xff]
  %v5770 = vlaneseq
  %v5771 = vshrl.u32 %v5770, 7
  %v5772 = vsub.s32 0, %v5771
  %v5773 = vrot.slane %v5723, %v5772
  %v5774 = vlaneseq
  %v5775 = vshrl.u32 %v5774, 7
  %v5776 = vsub.s32 1, %v5775
  %v5777 = vrot.slane %v5723, %v5776
  %v5778 = vlaneseq
  %v5779 = vshrl.u32 %v5778, 7
  %v5780 = vsub.s32 2, %v5779
  %v5781 = vrot.slane %v5723, %v5780
  %v5782 = vlaneseq
  %v5783 = vshrl.u32 %v5782, 7
  %v5784 = vsub.s32 3, %v5783
  %v5785 = vrot.slane %v5723, %v5784
  %v5786 = vlaneseq
  %v5787 = vshrl.u32 %v5786, 7
  %v5788 = vsub.s32 4, %v5787
  %v5789 = vrot.slane %v5723, %v5788
  %v5790 = vlaneseq
  %v5791 = vshrl.u32 %v5790, 7
  %v5792 = vsub.s32 5, %v5791
  %v5793 = vrot.slane %v5723, %v5792
  %v5794 = vlaneseq
  %v5795 = vshrl.u32 %v5794, 7
  %v5796 = vsub.s32 6, %v5795
  %v5797 = vrot.slane %v5723, %v5796
  %v5798 = vlaneseq
  %v5799 = vshrl.u32 %v5798, 7
  %v5800 = vsub.s32 7, %v5799
  %v5801 = vrot.slane %v5723, %v5800
  %v5802 = vlaneseq
  %v5803 = vshrl.u32 %v5802, 7
  %v5804 = vsub.s32 0, %v5803
  %v5805 = vrot.slane %v5725, %v5804
  %v5806 = vlaneseq
  %v5807 = vshrl.u32 %v5806, 7
  %v5808 = vsub.s32 1, %v5807
  %v5809 = vrot.slane %v5725, %v5808
  %v5810 = vlaneseq
  %v5811 = vshrl.u32 %v5810, 7
  %v5812 = vsub.s32 2, %v5811
  %v5813 = vrot.slane %v5725, %v5812
  %v5814 = vlaneseq
  %v5815 = vshrl.u32 %v5814, 7
  %v5816 = vsub.s32 3, %v5815
  %v5817 = vrot.slane %v5725, %v5816
  %v5818 = vlaneseq
  %v5819 = vshrl.u32 %v5818, 7
  %v5820 = vsub.s32 4, %v5819
  %v5821 = vrot.slane %v5725, %v5820
  %v5822 = vlaneseq
  %v5823 = vshrl.u32 %v5822, 7
  %v5824 = vsub.s32 5, %v5823
  %v5825 = vrot.slane %v5725, %v5824
  %v5826 = vlaneseq
  %v5827 = vshrl.u32 %v5826, 7
  %v5828 = vsub.s32 6, %v5827
  %v5829 = vrot.slane %v5725, %v5828
  %v5830 = vlaneseq
  %v5831 = vshrl.u32 %v5830, 7
  %v5832 = vsub.s32 7, %v5831
  %v5833 = vrot.slane %v5725, %v5832
  %v5834 = vlaneseq
  %v5835 = vshrl.u32 %v5834, 7
  %v5836 = vsub.s32 0, %v5835
  %v5837 = vrot.slane %v5727, %v5836
  %v5838 = vlaneseq
  %v5839 = vshrl.u32 %v5838, 7
  %v5840 = vsub.s32 1, %v5839
  %v5841 = vrot.slane %v5727, %v5840
  %v5842 = vlaneseq
  %v5843 = vshrl.u32 %v5842, 7
  %v5844 = vsub.s32 2, %v5843
  %v5845 = vrot.slane %v5727, %v5844
  %v5846 = vlaneseq
  %v5847 = vshrl.u32 %v5846, 7
  %v5848 = vsub.s32 3, %v5847
  %v5849 = vrot.slane %v5727, %v5848
  %v5850 = vlaneseq
  %v5851 = vshrl.u32 %v5850, 7
  %v5852 = vsub.s32 4, %v5851
  %v5853 = vrot.slane %v5727, %v5852
  %v5854 = vlaneseq
  %v5855 = vshrl.u32 %v5854, 7
  %v5856 = vsub.s32 5, %v5855
  %v5857 = vrot.slane %v5727, %v5856
  %v5858 = vlaneseq
  %v5859 = vshrl.u32 %v5858, 7
  %v5860 = vsub.s32 6, %v5859
  %v5861 = vrot.slane %v5727, %v5860
  %v5862 = vlaneseq
  %v5863 = vshrl.u32 %v5862, 7
  %v5864 = vsub.s32 7, %v5863
  %v5865 = vrot.slane %v5727, %v5864
  %v5866 = vlaneseq
  %v5867 = vshrl.u32 %v5866, 7
  %v5868 = vsub.s32 0, %v5867
  %v5869 = vrot.slane %v5729, %v5868
  %v5870 = vlaneseq
  %v5871 = vshrl.u32 %v5870, 7
  %v5872 = vsub.s32 1, %v5871
  %v5873 = vrot.slane %v5729, %v5872
  %v5874 = vlaneseq
  %v5875 = vshrl.u32 %v5874, 7
  %v5876 = vsub.s32 2, %v5875
  %v5877 = vrot.slane %v5729, %v5876
  %v5878 = vlaneseq
  %v5879 = vshrl.u32 %v5878, 7
  %v5880 = vsub.s32 3, %v5879
  %v5881 = vrot.slane %v5729, %v5880
  %v5882 = vlaneseq
  %v5883 = vshrl.u32 %v5882, 7
  %v5884 = vsub.s32 4, %v5883
  %v5885 = vrot.slane %v5729, %v5884
  %v5886 = vlaneseq
  %v5887 = vshrl.u32 %v5886, 7
  %v5888 = vsub.s32 5, %v5887
  %v5889 = vrot.slane %v5729, %v5888
  %v5890 = vlaneseq
  %v5891 = vshrl.u32 %v5890, 7
  %v5892 = vsub.s32 6, %v5891
  %v5893 = vrot.slane %v5729, %v5892
  %v5894 = vlaneseq
  %v5895 = vshrl.u32 %v5894, 7
  %v5896 = vsub.s32 7, %v5895
  %v5897 = vrot.slane %v5729, %v5896
  %v5898 = vlaneseq
  %v5899 = vshrl.u32 %v5898, 7
  %v5900 = vsub.s32 0, %v5899
  %v5901 = vrot.slane %v5731, %v5900
  %v5902 = vlaneseq
  %v5903 = vshrl.u32 %v5902, 7
  %v5904 = vsub.s32 1, %v5903
  %v5905 = vrot.slane %v5731, %v5904
  %v5906 = vlaneseq
  %v5907 = vshrl.u32 %v5906, 7
  %v5908 = vsub.s32 2, %v5907
  %v5909 = vrot.slane %v5731, %v5908
  %v5910 = vlaneseq
  %v5911 = vshrl.u32 %v5910, 7
  %v5912 = vsub.s32 3, %v5911
  %v5913 = vrot.slane %v5731, %v5912
  %v5914 = vlaneseq
  %v5915 = vshrl.u32 %v5914, 7
  %v5916 = vsub.s32 4, %v5915
  %v5917 = vrot.slane %v5731, %v5916
  %v5918 = vlaneseq
  %v5919 = vshrl.u32 %v5918, 7
  %v5920 = vsub.s32 5, %v5919
  %v5921 = vrot.slane %v5731, %v5920
  %v5922 = vlaneseq
  %v5923 = vshrl.u32 %v5922, 7
  %v5924 = vsub.s32 6, %v5923
  %v5925 = vrot.slane %v5731, %v5924
  %v5926 = vlaneseq
  %v5927 = vshrl.u32 %v5926, 7
  %v5928 = vsub.s32 7, %v5927
  %v5929 = vrot.slane %v5731, %v5928
  %v5930 = vlaneseq
  %v5931 = vshrl.u32 %v5930, 7
  %v5932 = vsub.s32 0, %v5931
  %v5933 = vrot.slane %v5733, %v5932
  %v5934 = vlaneseq
  %v5935 = vshrl.u32 %v5934, 7
  %v5936 = vsub.s32 1, %v5935
  %v5937 = vrot.slane %v5733, %v5936
  %v5938 = vlaneseq
  %v5939 = vshrl.u32 %v5938, 7
  %v5940 = vsub.s32 2, %v5939
  %v5941 = vrot.slane %v5733, %v5940
  %v5942 = vlaneseq
  %v5943 = vshrl.u32 %v5942, 7
  %v5944 = vsub.s32 3, %v5943
  %v5945 = vrot.slane %v5733, %v5944
  %v5946 = vlaneseq
  %v5947 = vshrl.u32 %v5946, 7
  %v5948 = vsub.s32 4, %v5947
  %v5949 = vrot.slane %v5733, %v5948
  %v5950 = vlaneseq
  %v5951 = vshrl.u32 %v5950, 7
  %v5952 = vsub.s32 5, %v5951
  %v5953 = vrot.slane %v5733, %v5952
  %v5954 = vlaneseq
  %v5955 = vshrl.u32 %v5954, 7
  %v5956 = vsub.s32 6, %v5955
  %v5957 = vrot.slane %v5733, %v5956
  %v5958 = vlaneseq
  %v5959 = vshrl.u32 %v5958, 7
  %v5960 = vsub.s32 7, %v5959
  %v5961 = vrot.slane %v5733, %v5960
  %v5962 = vlaneseq
  %v5963 = vshrl.u32 %v5962, 7
  %v5964 = vsub.s32 0, %v5963
  %v5965 = vrot.slane %v5735, %v5964
  %v5966 = vlaneseq
  %v5967 = vshrl.u32 %v5966, 7
  %v5968 = vsub.s32 1, %v5967
  %v5969 = vrot.slane %v5735, %v5968
  %v5970 = vlaneseq
  %v5971 = vshrl.u32 %v5970, 7
  %v5972 = vsub.s32 2, %v5971
  %v5973 = vrot.slane %v5735, %v5972
  %v5974 = vlaneseq
  %v5975 = vshrl.u32 %v5974, 7
  %v5976 = vsub.s32 3, %v5975
  %v5977 = vrot.slane %v5735, %v5976
  %v5978 = vlaneseq
  %v5979 = vshrl.u32 %v5978, 7
  %v5980 = vsub.s32 4, %v5979
  %v5981 = vrot.slane %v5735, %v5980
  %v5982 = vlaneseq
  %v5983 = vshrl.u32 %v5982, 7
  %v5984 = vsub.s32 5, %v5983
  %v5985 = vrot.slane %v5735, %v5984
  %v5986 = vlaneseq
  %v5987 = vshrl.u32 %v5986, 7
  %v5988 = vsub.s32 6, %v5987
  %v5989 = vrot.slane %v5735, %v5988
  %v5990 = vlaneseq
  %v5991 = vshrl.u32 %v5990, 7
  %v5992 = vsub.s32 7, %v5991
  %v5993 = vrot.slane %v5735, %v5992
  %v5994 = vlaneseq
  %v5995 = vshrl.u32 %v5994, 7
  %v5996 = vsub.s32 0, %v5995
  %v5997 = vrot.slane %v5737, %v5996
  %v5998 = vlaneseq
  %v5999 = vshrl.u32 %v5998, 7
  %v6000 = vsub.s32 1, %v5999
  %v6001 = vrot.slane %v5737, %v6000
  %v6002 = vlaneseq
  %v6003 = vshrl.u32 %v6002, 7
  %v6004 = vsub.s32 2, %v6003
  %v6005 = vrot.slane %v5737, %v6004
  %v6006 = vlaneseq
  %v6007 = vshrl.u32 %v6006, 7
  %v6008 = vsub.s32 3, %v6007
  %v6009 = vrot.slane %v5737, %v6008
  %v6010 = vlaneseq
  %v6011 = vshrl.u32 %v6010, 7
  %v6012 = vsub.s32 4, %v6011
  %v6013 = vrot.slane %v5737, %v6012
  %v6014 = vlaneseq
  %v6015 = vshrl.u32 %v6014, 7
  %v6016 = vsub.s32 5, %v6015
  %v6017 = vrot.slane %v5737, %v6016
  %v6018 = vlaneseq
  %v6019 = vshrl.u32 %v6018, 7
  %v6020 = vsub.s32 6, %v6019
  %v6021 = vrot.slane %v5737, %v6020
  %v6022 = vlaneseq
  %v6023 = vshrl.u32 %v6022, 7
  %v6024 = vsub.s32 7, %v6023
  %v6025 = vrot.slane %v5737, %v6024
  %v6026 = vlaneseq
  %v6027 = vshrl.u32 %v6026, 7
  %v6028 = vsub.s32 0, %v6027
  %v6029 = vrot.slane %v5739, %v6028
  %v6030 = vlaneseq
  %v6031 = vshrl.u32 %v6030, 7
  %v6032 = vsub.s32 1, %v6031
  %v6033 = vrot.slane %v5739, %v6032
  %v6034 = vlaneseq
  %v6035 = vshrl.u32 %v6034, 7
  %v6036 = vsub.s32 2, %v6035
  %v6037 = vrot.slane %v5739, %v6036
  %v6038 = vlaneseq
  %v6039 = vshrl.u32 %v6038, 7
  %v6040 = vsub.s32 3, %v6039
  %v6041 = vrot.slane %v5739, %v6040
  %v6042 = vlaneseq
  %v6043 = vshrl.u32 %v6042, 7
  %v6044 = vsub.s32 4, %v6043
  %v6045 = vrot.slane %v5739, %v6044
  %v6046 = vlaneseq
  %v6047 = vshrl.u32 %v6046, 7
  %v6048 = vsub.s32 5, %v6047
  %v6049 = vrot.slane %v5739, %v6048
  %v6050 = vlaneseq
  %v6051 = vshrl.u32 %v6050, 7
  %v6052 = vsub.s32 6, %v6051
  %v6053 = vrot.slane %v5739, %v6052
  %v6054 = vlaneseq
  %v6055 = vshrl.u32 %v6054, 7
  %v6056 = vsub.s32 7, %v6055
  %v6057 = vrot.slane %v5739, %v6056
  %v6058 = vlaneseq
  %v6059 = vshrl.u32 %v6058, 7
  %v6060 = vsub.s32 0, %v6059
  %v6061 = vrot.slane %v5741, %v6060
  %v6062 = vlaneseq
  %v6063 = vshrl.u32 %v6062, 7
  %v6064 = vsub.s32 1, %v6063
  %v6065 = vrot.slane %v5741, %v6064
  %v6066 = vlaneseq
  %v6067 = vshrl.u32 %v6066, 7
  %v6068 = vsub.s32 2, %v6067
  %v6069 = vrot.slane %v5741, %v6068
  %v6070 = vlaneseq
  %v6071 = vshrl.u32 %v6070, 7
  %v6072 = vsub.s32 3, %v6071
  %v6073 = vrot.slane %v5741, %v6072
  %v6074 = vlaneseq
  %v6075 = vshrl.u32 %v6074, 7
  %v6076 = vsub.s32 4, %v6075
  %v6077 = vrot.slane %v5741, %v6076
  %v6078 = vlaneseq
  %v6079 = vshrl.u32 %v6078, 7
  %v6080 = vsub.s32 5, %v6079
  %v6081 = vrot.slane %v5741, %v6080
  %v6082 = vlaneseq
  %v6083 = vshrl.u32 %v6082, 7
  %v6084 = vsub.s32 6, %v6083
  %v6085 = vrot.slane %v5741, %v6084
  %v6086 = vlaneseq
  %v6087 = vshrl.u32 %v6086, 7
  %v6088 = vsub.s32 7, %v6087
  %v6089 = vrot.slane %v5741, %v6088
  %v6090 = vlaneseq
  %v6091 = vshrl.u32 %v6090, 7
  %v6092 = vsub.s32 0, %v6091
  %v6093 = vrot.slane %v5743, %v6092
  %v6094 = vlaneseq
  %v6095 = vshrl.u32 %v6094, 7
  %v6096 = vsub.s32 1, %v6095
  %v6097 = vrot.slane %v5743, %v6096
  %v6098 = vlaneseq
  %v6099 = vshrl.u32 %v6098, 7
  %v6100 = vsub.s32 2, %v6099
  %v6101 = vrot.slane %v5743, %v6100
  %v6102 = vlaneseq
  %v6103 = vshrl.u32 %v6102, 7
  %v6104 = vsub.s32 3, %v6103
  %v6105 = vrot.slane %v5743, %v6104
  %v6106 = vlaneseq
  %v6107 = vshrl.u32 %v6106, 7
  %v6108 = vsub.s32 4, %v6107
  %v6109 = vrot.slane %v5743, %v6108
  %v6110 = vlaneseq
  %v6111 = vshrl.u32 %v6110, 7
  %v6112 = vsub.s32 5, %v6111
  %v6113 = vrot.slane %v5743, %v6112
  %v6114 = vlaneseq
  %v6115 = vshrl.u32 %v6114, 7
  %v6116 = vsub.s32 6, %v6115
  %v6117 = vrot.slane %v5743, %v6116
  %v6118 = vlaneseq
  %v6119 = vshrl.u32 %v6118, 7
  %v6120 = vsub.s32 7, %v6119
  %v6121 = vrot.slane %v5743, %v6120
  %v6122 = vlaneseq
  %v6123 = vshrl.u32 %v6122, 7
  %v6124 = vsub.s32 0, %v6123
  %v6125 = vrot.slane %v5745, %v6124
  %v6126 = vlaneseq
  %v6127 = vshrl.u32 %v6126, 7
  %v6128 = vsub.s32 1, %v6127
  %v6129 = vrot.slane %v5745, %v6128
  %v6130 = vlaneseq
  %v6131 = vshrl.u32 %v6130, 7
  %v6132 = vsub.s32 2, %v6131
  %v6133 = vrot.slane %v5745, %v6132
  %v6134 = vlaneseq
  %v6135 = vshrl.u32 %v6134, 7
  %v6136 = vsub.s32 3, %v6135
  %v6137 = vrot.slane %v5745, %v6136
  %v6138 = vlaneseq
  %v6139 = vshrl.u32 %v6138, 7
  %v6140 = vsub.s32 4, %v6139
  %v6141 = vrot.slane %v5745, %v6140
  %v6142 = vlaneseq
  %v6143 = vshrl.u32 %v6142, 7
  %v6144 = vsub.s32 5, %v6143
  %v6145 = vrot.slane %v5745, %v6144
  %v6146 = vlaneseq
  %v6147 = vshrl.u32 %v6146, 7
  %v6148 = vsub.s32 6, %v6147
  %v6149 = vrot.slane %v5745, %v6148
  %v6150 = vlaneseq
  %v6151 = vshrl.u32 %v6150, 7
  %v6152 = vsub.s32 7, %v6151
  %v6153 = vrot.slane %v5745, %v6152
  %v6154 = vlaneseq
  %v6155 = vshrl.u32 %v6154, 7
  %v6156 = vsub.s32 0, %v6155
  %v6157 = vrot.slane %v5747, %v6156
  %v6158 = vlaneseq
  %v6159 = vshrl.u32 %v6158, 7
  %v6160 = vsub.s32 1, %v6159
  %v6161 = vrot.slane %v5747, %v6160
  %v6162 = vlaneseq
  %v6163 = vshrl.u32 %v6162, 7
  %v6164 = vsub.s32 2, %v6163
  %v6165 = vrot.slane %v5747, %v6164
  %v6166 = vlaneseq
  %v6167 = vshrl.u32 %v6166, 7
  %v6168 = vsub.s32 3, %v6167
  %v6169 = vrot.slane %v5747, %v6168
  %v6170 = vlaneseq
  %v6171 = vshrl.u32 %v6170, 7
  %v6172 = vsub.s32 4, %v6171
  %v6173 = vrot.slane %v5747, %v6172
  %v6174 = vlaneseq
  %v6175 = vshrl.u32 %v6174, 7
  %v6176 = vsub.s32 5, %v6175
  %v6177 = vrot.slane %v5747, %v6176
  %v6178 = vlaneseq
  %v6179 = vshrl.u32 %v6178, 7
  %v6180 = vsub.s32 6, %v6179
  %v6181 = vrot.slane %v5747, %v6180
  %v6182 = vlaneseq
  %v6183 = vshrl.u32 %v6182, 7
  %v6184 = vsub.s32 7, %v6183
  %v6185 = vrot.slane %v5747, %v6184
  %v6186 = vlaneseq
  %v6187 = vshrl.u32 %v6186, 7
  %v6188 = vsub.s32 0, %v6187
  %v6189 = vrot.slane %v5749, %v6188
  %v6190 = vlaneseq
  %v6191 = vshrl.u32 %v6190, 7
  %v6192 = vsub.s32 1, %v6191
  %v6193 = vrot.slane %v5749, %v6192
  %v6194 = vlaneseq
  %v6195 = vshrl.u32 %v6194, 7
  %v6196 = vsub.s32 2, %v6195
  %v6197 = vrot.slane %v5749, %v6196
  %v6198 = vlaneseq
  %v6199 = vshrl.u32 %v6198, 7
  %v6200 = vsub.s32 3, %v6199
  %v6201 = vrot.slane %v5749, %v6200
  %v6202 = vlaneseq
  %v6203 = vshrl.u32 %v6202, 7
  %v6204 = vsub.s32 4, %v6203
  %v6205 = vrot.slane %v5749, %v6204
  %v6206 = vlaneseq
  %v6207 = vshrl.u32 %v6206, 7
  %v6208 = vsub.s32 5, %v6207
  %v6209 = vrot.slane %v5749, %v6208
  %v6210 = vlaneseq
  %v6211 = vshrl.u32 %v6210, 7
  %v6212 = vsub.s32 6, %v6211
  %v6213 = vrot.slane %v5749, %v6212
  %v6214 = vlaneseq
  %v6215 = vshrl.u32 %v6214, 7
  %v6216 = vsub.s32 7, %v6215
  %v6217 = vrot.slane %v5749, %v6216
  %v6218 = vlaneseq
  %v6219 = vshrl.u32 %v6218, 7
  %v6220 = vsub.s32 0, %v6219
  %v6221 = vrot.slane %v5751, %v6220
  %v6222 = vlaneseq
  %v6223 = vshrl.u32 %v6222, 7
  %v6224 = vsub.s32 1, %v6223
  %v6225 = vrot.slane %v5751, %v6224
  %v6226 = vlaneseq
  %v6227 = vshrl.u32 %v6226, 7
  %v6228 = vsub.s32 2, %v6227
  %v6229 = vrot.slane %v5751, %v6228
  %v6230 = vlaneseq
  %v6231 = vshrl.u32 %v6230, 7
  %v6232 = vsub.s32 3, %v6231
  %v6233 = vrot.slane %v5751, %v6232
  %v6234 = vlaneseq
  %v6235 = vshrl.u32 %v6234, 7
  %v6236 = vsub.s32 4, %v6235
  %v6237 = vrot.slane %v5751, %v6236
  %v6238 = vlaneseq
  %v6239 = vshrl.u32 %v6238, 7
  %v6240 = vsub.s32 5, %v6239
  %v6241 = vrot.slane %v5751, %v6240
  %v6242 = vlaneseq
  %v6243 = vshrl.u32 %v6242, 7
  %v6244 = vsub.s32 6, %v6243
  %v6245 = vrot.slane %v5751, %v6244
  %v6246 = vlaneseq
  %v6247 = vshrl.u32 %v6246, 7
  %v6248 = vsub.s32 7, %v6247
  %v6249 = vrot.slane %v5751, %v6248
  %v6250 = vlaneseq
  %v6251 = vshrl.u32 %v6250, 7
  %v6252 = vsub.s32 0, %v6251
  %v6253 = vrot.slane %v5753, %v6252
  %v6254 = vlaneseq
  %v6255 = vshrl.u32 %v6254, 7
  %v6256 = vsub.s32 1, %v6255
  %v6257 = vrot.slane %v5753, %v6256
  %v6258 = vlaneseq
  %v6259 = vshrl.u32 %v6258, 7
  %v6260 = vsub.s32 2, %v6259
  %v6261 = vrot.slane %v5753, %v6260
  %v6262 = vlaneseq
  %v6263 = vshrl.u32 %v6262, 7
  %v6264 = vsub.s32 3, %v6263
  %v6265 = vrot.slane %v5753, %v6264
  %v6266 = vlaneseq
  %v6267 = vshrl.u32 %v6266, 7
  %v6268 = vsub.s32 4, %v6267
  %v6269 = vrot.slane %v5753, %v6268
  %v6270 = vlaneseq
  %v6271 = vshrl.u32 %v6270, 7
  %v6272 = vsub.s32 5, %v6271
  %v6273 = vrot.slane %v5753, %v6272
  %v6274 = vlaneseq
  %v6275 = vshrl.u32 %v6274, 7
  %v6276 = vsub.s32 6, %v6275
  %v6277 = vrot.slane %v5753, %v6276
  %v6278 = vlaneseq
  %v6279 = vshrl.u32 %v6278, 7
  %v6280 = vsub.s32 7, %v6279
  %v6281 = vrot.slane %v5753, %v6280
  %v6410 = vmul.f32 %v5467, %v5773
  %v6411 = vmul.f32 %v5468, %v5777
  %v6412 = vmul.f32 %v5469, %v5781
  %v6413 = vmul.f32 %v5470, %v5785
  %v6414 = vmul.f32 %v5471, %v5789
  %v6415 = vmul.f32 %v5472, %v5793
  %v6416 = vmul.f32 %v5473, %v5797
  %v6417 = vmul.f32 %v5474, %v5801
  %v6418 = vmul.f32 %v5475, %v5805
  %v6419 = vmul.f32 %v5476, %v5809
  %v6420 = vmul.f32 %v5477, %v5813
  %v6421 = vmul.f32 %v5478, %v5817
  %v6422 = vmul.f32 %v5479, %v5821
  %v6423 = vmul.f32 %v5480, %v5825
  %v6424 = vmul.f32 %v5481, %v5829
  %v6425 = vmul.f32 %v5482, %v5833
  %v6426 = vmul.f32 %v5483, %v5837
  %v6427 = vmul.f32 %v5484, %v5841
  %v6428 = vmul.f32 %v5485, %v5845
  %v6429 = vmul.f32 %v5486, %v5849
  %v6430 = vmul.f32 %v5487, %v5853
  %v6431 = vmul.f32 %v5488, %v5857
  %v6432 = vmul.f32 %v5489, %v5861
  %v6433 = vmul.f32 %v5490, %v5865
  %v6434 = vmul.f32 %v5491, %v5869
  %v6435 = vmul.f32 %v5492, %v5873
  %v6436 = vmul.f32 %v5493, %v5877
  %v6437 = vmul.f32 %v5494, %v5881
  %v6438 = vmul.f32 %v5495, %v5885
  %v6439 = vmul.f32 %v5496, %v5889
  %v6440 = vmul.f32 %v5497, %v5893
  %v6441 = vmul.f32 %v5498, %v5897
  %v6442 = vmul.f32 %v5499, %v5901
  %v6443 = vmul.f32 %v5500, %v5905
  %v6444 = vmul.f32 %v5501, %v5909
  %v6445 = vmul.f32 %v5502, %v5913
  %v6446 = vmul.f32 %v5503, %v5917
  %v6447 = vmul.f32 %v5504, %v5921
  %v6448 = vmul.f32 %v5505, %v5925
  %v6449 = vmul.f32 %v5506, %v5929
  %v6450 = vmul.f32 %v5507, %v5933
  %v6451 = vmul.f32 %v5508, %v5937
  %v6452 = vmul.f32 %v5509, %v5941
  %v6453 = vmul.f32 %v5510, %v5945
  %v6454 = vmul.f32 %v5511, %v5949
  %v6455 = vmul.f32 %v5512, %v5953
  %v6456 = vmul.f32 %v5513, %v5957
  %v6457 = vmul.f32 %v5514, %v5961
  %v6458 = vmul.f32 %v5515, %v5965
  %v6459 = vmul.f32 %v5516, %v5969
  %v6460 = vmul.f32 %v5517, %v5973
  %v6461 = vmul.f32 %v5518, %v5977
  %v6462 = vmul.f32 %v5519, %v5981
  %v6463 = vmul.f32 %v5520, %v5985
  %v6464 = vmul.f32 %v5521, %v5989
  %v6465 = vmul.f32 %v5522, %v5993
  %v6466 = vmul.f32 %v5523, %v5997
  %v6467 = vmul.f32 %v5524, %v6001
  %v6468 = vmul.f32 %v5525, %v6005
  %v6469 = vmul.f32 %v5526, %v6009
  %v6470 = vmul.f32 %v5527, %v6013
  %v6471 = vmul.f32 %v5528, %v6017
  %v6472 = vmul.f32 %v5529, %v6021
  %v6473 = vmul.f32 %v5530, %v6025
  %v6474 = vmul.f32 %v5531, %v6029
  %v6475 = vmul.f32 %v5532, %v6033
  %v6476 = vmul.f32 %v5533, %v6037
  %v6477 = vmul.f32 %v5534, %v6041
  %v6478 = vmul.f32 %v5535, %v6045
  %v6479 = vmul.f32 %v5536, %v6049
  %v6480 = vmul.f32 %v5537, %v6053
  %v6481 = vmul.f32 %v5538, %v6057
  %v6482 = vmul.f32 %v5539, %v6061
  %v6483 = vmul.f32 %v5540, %v6065
  %v6484 = vmul.f32 %v5541, %v6069
  %v6485 = vmul.f32 %v5542, %v6073
  %v6486 = vmul.f32 %v5543, %v6077
  %v6487 = vmul.f32 %v5544, %v6081
  %v6488 = vmul.f32 %v5545, %v6085
  %v6489 = vmul.f32 %v5546, %v6089
  %v6490 = vmul.f32 %v5547, %v6093
  %v6491 = vmul.f32 %v5548, %v6097
  %v6492 = vmul.f32 %v5549, %v6101
  %v6493 = vmul.f32 %v5550, %v6105
  %v6494 = vmul.f32 %v5551, %v6109
  %v6495 = vmul.f32 %v5552, %v6113
  %v6496 = vmul.f32 %v5553, %v6117
  %v6497 = vmul.f32 %v5554, %v6121
  %v6498 = vmul.f32 %v5555, %v6125
  %v6499 = vmul.f32 %v5556, %v6129
  %v6500 = vmul.f32 %v5557, %v6133
  %v6501 = vmul.f32 %v5558, %v6137
  %v6502 = vmul.f32 %v5559, %v6141
  %v6503 = vmul.f32 %v5560, %v6145
  %v6504 = vmul.f32 %v5561, %v6149
  %v6505 = vmul.f32 %v5562, %v6153
  %v6506 = vmul.f32 %v5563, %v6157
  %v6507 = vmul.f32 %v5564, %v6161
  %v6508 = vmul.f32 %v5565, %v6165
  %v6509 = vmul.f32 %v5566, %v6169
  %v6510 = vmul.f32 %v5567, %v6173
  %v6511 = vmul.f32 %v5568, %v6177
  %v6512 = vmul.f32 %v5569, %v6181
  %v6513 = vmul.f32 %v5570, %v6185
  %v6514 = vmul.f32 %v5571, %v6189
  %v6515 = vmul.f32 %v5572, %v6193
  %v6516 = vmul.f32 %v5573, %v6197
  %v6517 = vmul.f32 %v5574, %v6201
  %v6518 = vmul.f32 %v5575, %v6205
  %v6519 = vmul.f32 %v5576, %v6209
  %v6520 = vmul.f32 %v5577, %v6213
  %v6521 = vmul.f32 %v5578, %v6217
  %v6522 = vmul.f32 %v5579, %v6221
  %v6523 = vmul.f32 %v5580, %v6225
  %v6524 = vmul.f32 %v5581, %v6229
  %v6525 = vmul.f32 %v5582, %v6233
  %v6526 = vmul.f32 %v5583, %v6237
  %v6527 = vmul.f32 %v5584, %v6241
  %v6528 = vmul.f32 %v5585, %v6245
  %v6529 = vmul.f32 %v5586, %v6249
  %v6530 = vmul.f32 %v5587, %v6253
  %v6531 = vmul.f32 %v5588, %v6257
  %v6532 = vmul.f32 %v5589, %v6261
  %v6533 = vmul.f32 %v5590, %v6265
  %v6534 = vmul.f32 %v5591, %v6269
  %v6535 = vmul.f32 %v5592, %v6273
  %v6536 = vmul.f32 %v5593, %v6277
  %v6537 = vmul.f32 %v5594, %v6281
  %v6538 = vmul.f32 %v5595, %v5773
  %v6539 = vmul.f32 %v5596, %v5777
  %v6540 = vmul.f32 %v5597, %v5781
  %v6541 = vmul.f32 %v5598, %v5785
  %v6542 = vmul.f32 %v5599, %v5789
  %v6543 = vmul.f32 %v5600, %v5793
  %v6544 = vmul.f32 %v5601, %v5797
  %v6545 = vmul.f32 %v5602, %v5801
  %v6546 = vmul.f32 %v5603, %v5805
  %v6547 = vmul.f32 %v5604, %v5809
  %v6548 = vmul.f32 %v5605, %v5813
  %v6549 = vmul.f32 %v5606, %v5817
  %v6550 = vmul.f32 %v5607, %v5821
  %v6551 = vmul.f32 %v5608, %v5825
  %v6552 = vmul.f32 %v5609, %v5829
  %v6553 = vmul.f32 %v5610, %v5833
  %v6554 = vmul.f32 %v5611, %v5837
  %v6555 = vmul.f32 %v5612, %v5841
  %v6556 = vmul.f32 %v5613, %v5845
  %v6557 = vmul.f32 %v5614, %v5849
  %v6558 = vmul.f32 %v5615, %v5853
  %v6559 = vmul.f32 %v5616, %v5857
  %v6560 = vmul.f32 %v5617, %v5861
  %v6561 = vmul.f32 %v5618, %v5865
  %v6562 = vmul.f32 %v5619, %v5869
  %v6563 = vmul.f32 %v5620, %v5873
  %v6564 = vmul.f32 %v5621, %v5877
  %v6565 = vmul.f32 %v5622, %v5881
  %v6566 = vmul.f32 %v5623, %v5885
  %v6567 = vmul.f32 %v5624, %v5889
  %v6568 = vmul.f32 %v5625, %v5893
  %v6569 = vmul.f32 %v5626, %v5897
  %v6570 = vmul.f32 %v5627, %v5901
  %v6571 = vmul.f32 %v5628, %v5905
  %v6572 = vmul.f32 %v5629, %v5909
  %v6573 = vmul.f32 %v5630, %v5913
  %v6574 = vmul.f32 %v5631, %v5917
  %v6575 = vmul.f32 %v5632, %v5921
  %v6576 = vmul.f32 %v5633, %v5925
  %v6577 = vmul.f32 %v5634, %v5929
  %v6578 = vmul.f32 %v5635, %v5933
  %v6579 = vmul.f32 %v5636, %v5937
  %v6580 = vmul.f32 %v5637, %v5941
  %v6581 = vmul.f32 %v5638, %v5945
  %v6582 = vmul.f32 %v5639, %v5949
  %v6583 = vmul.f32 %v5640, %v5953
  %v6584 = vmul.f32 %v5641, %v5957
  %v6585 = vmul.f32 %v5642, %v5961
  %v6586 = vmul.f32 %v5643, %v5965
  %v6587 = vmul.f32 %v5644, %v5969
  %v6588 = vmul.f32 %v5645, %v5973
  %v6589 = vmul.f32 %v5646, %v5977
  %v6590 = vmul.f32 %v5647, %v5981
  %v6591 = vmul.f32 %v5648, %v5985
  %v6592 = vmul.f32 %v5649, %v5989
  %v6593 = vmul.f32 %v5650, %v5993
  %v6594 = vmul.f32 %v5651, %v5997
  %v6595 = vmul.f32 %v5652, %v6001
  %v6596 = vmul.f32 %v5653, %v6005
  %v6597 = vmul.f32 %v5654, %v6009
  %v6598 = vmul.f32 %v5655, %v6013
  %v6599 = vmul.f32 %v5656, %v6017
  %v6600 = vmul.f32 %v5657, %v6021
  %v6601 = vmul.f32 %v5658, %v6025
  %v6602 = vmul.f32 %v5659, %v6029
  %v6603 = vmul.f32 %v5660, %v6033
  %v6604 = vmul.f32 %v5661, %v6037
  %v6605 = vmul.f32 %v5662, %v6041
  %v6606 = vmul.f32 %v5663, %v6045
  %v6607 = vmul.f32 %v5664, %v6049
  %v6608 = vmul.f32 %v5665, %v6053
  %v6609 = vmul.f32 %v5666, %v6057
  %v6610 = vmul.f32 %v5667, %v6061
  %v6611 = vmul.f32 %v5668, %v6065
  %v6612 = vmul.f32 %v5669, %v6069
  %v6613 = vmul.f32 %v5670, %v6073
  %v6614 = vmul.f32 %v5671, %v6077
  %v6615 = vmul.f32 %v5672, %v6081
  %v6616 = vmul.f32 %v5673, %v6085
  %v6617 = vmul.f32 %v5674, %v6089
  %v6618 = vmul.f32 %v5675, %v6093
  %v6619 = vmul.f32 %v5676, %v6097
  %v6620 = vmul.f32 %v5677, %v6101
  %v6621 = vmul.f32 %v5678, %v6105
  %v6622 = vmul.f32 %v5679, %v6109
  %v6623 = vmul.f32 %v5680, %v6113
  %v6624 = vmul.f32 %v5681, %v6117
  %v6625 = vmul.f32 %v5682, %v6121
  %v6626 = vmul.f32 %v5683, %v6125
  %v6627 = vmul.f32 %v5684, %v6129
  %v6628 = vmul.f32 %v5685, %v6133
  %v6629 = vmul.f32 %v5686, %v6137
  %v6630 = vmul.f32 %v5687, %v6141
  %v6631 = vmul.f32 %v5688, %v6145
  %v6632 = vmul.f32 %v5689, %v6149
  %v6633 = vmul.f32 %v5690, %v6153
  %v6634 = vmul.f32 %v5691, %v6157
  %v6635 = vmul.f32 %v5692, %v6161
  %v6636 = vmul.f32 %v5693, %v6165
  %v6637 = vmul.f32 %v5694, %v6169
  %v6638 = vmul.f32 %v5695, %v6173
  %v6639 = vmul.f32 %v5696, %v6177
  %v6640 = vmul.f32 %v5697, %v6181
  %v6641 = vmul.f32 %v5698, %v6185
  %v6642 = vmul.f32 %v5699, %v6189
  %v6643 = vmul.f32 %v5700, %v6193
  %v6644 = vmul.f32 %v5701, %v6197
  %v6645 = vmul.f32 %v5702, %v6201
  %v6646 = vmul.f32 %v5703, %v6205
  %v6647 = vmul.f32 %v5704, %v6209
  %v6648 = vmul.f32 %v5705, %v6213
  %v6649 = vmul.f32 %v5706, %v6217
  %v6650 = vmul.f32 %v5707, %v6221
  %v6651 = vmul.f32 %v5708, %v6225
  %v6652 = vmul.f32 %v5709, %v6229
  %v6653 = vmul.f32 %v5710, %v6233
  %v6654 = vmul.f32 %v5711, %v6237
  %v6655 = vmul.f32 %v5712, %v6241
  %v6656 = vmul.f32 %v5713, %v6245
  %v6657 = vmul.f32 %v5714, %v6249
  %v6658 = vmul.f32 %v5715, %v6253
  %v6659 = vmul.f32 %v5716, %v6257
  %v6660 = vmul.f32 %v5717, %v6261
  %v6661 = vmul.f32 %v5718, %v6265
  %v6662 = vmul.f32 %v5719, %v6269
  %v6663 = vmul.f32 %v5720, %v6273
  %v6664 = vmul.f32 %v5721, %v6277
  %v6665 = vmul.f32 %v5722, %v6281
  %v6666 = vadd.f32 %v6410, %v6411
  %v6667 = vadd.f32 %v6538, %v6539
  %v6668 = vadd.f32 %v6412, %v6413
  %v6669 = vadd.f32 %v6540, %v6541
  %v6670 = vadd.f32 %v6414, %v6415
  %v6671 = vadd.f32 %v6542, %v6543
  %v6672 = vadd.f32 %v6416, %v6417
  %v6673 = vadd.f32 %v6544, %v6545
  %v6674 = vadd.f32 %v6418, %v6419
  %v6675 = vadd.f32 %v6546, %v6547
  %v6676 = vadd.f32 %v6420, %v6421
  %v6677 = vadd.f32 %v6548, %v6549
  %v6678 = vadd.f32 %v6422, %v6423
  %v6679 = vadd.f32 %v6550, %v6551
  %v6680 = vadd.f32 %v6424, %v6425
  %v6681 = vadd.f32 %v6552, %v6553
  %v6682 = vadd.f32 %v6426, %v6427
  %v6683 = vadd.f32 %v6554, %v6555
  %v6684 = vadd.f32 %v6428, %v6429
  %v6685 = vadd.f32 %v6556, %v6557
  %v6686 = vadd.f32 %v6430, %v6431
  %v6687 = vadd.f32 %v6558, %v6559
  %v6688 = vadd.f32 %v6432, %v6433
  %v6689 = vadd.f32 %v6560, %v6561
  %v6690 = vadd.f32 %v6434, %v6435
  %v6691 = vadd.f32 %v6562, %v6563
  %v6692 = vadd.f32 %v6436, %v6437
  %v6693 = vadd.f32 %v6564, %v6565
  %v6694 = vadd.f32 %v6438, %v6439
  %v6695 = vadd.f32 %v6566, %v6567
  %v6696 = vadd.f32 %v6440, %v6441
  %v6697 = vadd.f32 %v6568, %v6569
  %v6698 = vadd.f32 %v6442, %v6443
  %v6699 = vadd.f32 %v6570, %v6571
  %v6700 = vadd.f32 %v6444, %v6445
  %v6701 = vadd.f32 %v6572, %v6573
  %v6702 = vadd.f32 %v6446, %v6447
  %v6703 = vadd.f32 %v6574, %v6575
  %v6704 = vadd.f32 %v6448, %v6449
  %v6705 = vadd.f32 %v6576, %v6577
  %v6706 = vadd.f32 %v6450, %v6451
  %v6707 = vadd.f32 %v6578, %v6579
  %v6708 = vadd.f32 %v6452, %v6453
  %v6709 = vadd.f32 %v6580, %v6581
  %v6710 = vadd.f32 %v6454, %v6455
  %v6711 = vadd.f32 %v6582, %v6583
  %v6712 = vadd.f32 %v6456, %v6457
  %v6713 = vadd.f32 %v6584, %v6585
  %v6714 = vadd.f32 %v6458, %v6459
  %v6715 = vadd.f32 %v6586, %v6587
  %v6716 = vadd.f32 %v6460, %v6461
  %v6717 = vadd.f32 %v6588, %v6589
  %v6718 = vadd.f32 %v6462, %v6463
  %v6719 = vadd.f32 %v6590, %v6591
  %v6720 = vadd.f32 %v6464, %v6465
  %v6721 = vadd.f32 %v6592, %v6593
  %v6722 = vadd.f32 %v6466, %v6467
  %v6723 = vadd.f32 %v6594, %v6595
  %v6724 = vadd.f32 %v6468, %v6469
  %v6725 = vadd.f32 %v6596, %v6597
  %v6726 = vadd.f32 %v6470, %v6471
  %v6727 = vadd.f32 %v6598, %v6599
  %v6728 = vadd.f32 %v6472, %v6473
  %v6729 = vadd.f32 %v6600, %v6601
  %v6730 = vadd.f32 %v6474, %v6475
  %v6731 = vadd.f32 %v6602, %v6603
  %v6732 = vadd.f32 %v6476, %v6477
  %v6733 = vadd.f32 %v6604, %v6605
  %v6734 = vadd.f32 %v6478, %v6479
  %v6735 = vadd.f32 %v6606, %v6607
  %v6736 = vadd.f32 %v6480, %v6481
  %v6737 = vadd.f32 %v6608, %v6609
  %v6738 = vadd.f32 %v6482, %v6483
  %v6739 = vadd.f32 %v6610, %v6611
  %v6740 = vadd.f32 %v6484, %v6485
  %v6741 = vadd.f32 %v6612, %v6613
  %v6742 = vadd.f32 %v6486, %v6487
  %v6743 = vadd.f32 %v6614, %v6615
  %v6744 = vadd.f32 %v6488, %v6489
  %v6745 = vadd.f32 %v6616, %v6617
  %v6746 = vadd.f32 %v6490, %v6491
  %v6747 = vadd.f32 %v6618, %v6619
  %v6748 = vadd.f32 %v6492, %v6493
  %v6749 = vadd.f32 %v6620, %v6621
  %v6750 = vadd.f32 %v6494, %v6495
  %v6751 = vadd.f32 %v6622, %v6623
  %v6752 = vadd.f32 %v6496, %v6497
  %v6753 = vadd.f32 %v6624, %v6625
  %v6754 = vadd.f32 %v6498, %v6499
  %v6755 = vadd.f32 %v6626, %v6627
  %v6756 = vadd.f32 %v6500, %v6501
  %v6757 = vadd.f32 %v6628, %v6629
  %v6758 = vadd.f32 %v6502, %v6503
  %v6759 = vadd.f32 %v6630, %v6631
  %v6760 = vadd.f32 %v6504, %v6505
  %v6761 = vadd.f32 %v6632, %v6633
  %v6762 = vadd.f32 %v6506, %v6507
  %v6763 = vadd.f32 %v6634, %v6635
  %v6764 = vadd.f32 %v6508, %v6509
  %v6765 = vadd.f32 %v6636, %v6637
  %v6766 = vadd.f32 %v6510, %v6511
  %v6767 = vadd.f32 %v6638, %v6639
  %v6768 = vadd.f32 %v6512, %v6513
  %v6769 = vadd.f32 %v6640, %v6641
  %v6770 = vadd.f32 %v6514, %v6515
  %v6771 = vadd.f32 %v6642, %v6643
  %v6772 = vadd.f32 %v6516, %v6517
  %v6773 = vadd.f32 %v6644, %v6645
  %v6774 = vadd.f32 %v6518, %v6519
  %v6775 = vadd.f32 %v6646, %v6647
  %v6776 = vadd.f32 %v6520, %v6521
  %v6777 = vadd.f32 %v6648, %v6649
  %v6778 = vadd.f32 %v6522, %v6523
  %v6779 = vadd.f32 %v6650, %v6651
  %v6780 = vadd.f32 %v6524, %v6525
  %v6781 = vadd.f32 %v6652, %v6653
  %v6782 = vadd.f32 %v6526, %v6527
  %v6783 = vadd.f32 %v6654, %v6655
  %v6784 = vadd.f32 %v6528, %v6529
  %v6785 = vadd.f32 %v6656, %v6657
  %v6786 = vadd.f32 %v6530, %v6531
  %v6787 = vadd.f32 %v6658, %v6659
  %v6788 = vadd.f32 %v6532, %v6533
  %v6789 = vadd.f32 %v6660, %v6661
  %v6790 = vadd.f32 %v6534, %v6535
  %v6791 = vadd.f32 %v6662, %v6663
  %v6792 = vadd.f32 %v6536, %v6537
  %v6793 = vadd.f32 %v6664, %v6665
  %v6794 = vadd.f32 %v6666, %v6668
  %v6795 = vadd.f32 %v6667, %v6669
  %v6796 = vadd.f32 %v6670, %v6672
  %v6797 = vadd.f32 %v6671, %v6673
  %v6798 = vadd.f32 %v6674, %v6676
  %v6799 = vadd.f32 %v6675, %v6677
  %v6800 = vadd.f32 %v6678, %v6680
  %v6801 = vadd.f32 %v6679, %v6681
  %v6802 = vadd.f32 %v6682, %v6684
  %v6803 = vadd.f32 %v6683, %v6685
  %v6804 = vadd.f32 %v6686, %v6688
  %v6805 = vadd.f32 %v6687, %v6689
  %v6806 = vadd.f32 %v6690, %v6692
  %v6807 = vadd.f32 %v6691, %v6693
  %v6808 = vadd.f32 %v6694, %v6696
  %v6809 = vadd.f32 %v6695, %v6697
  %v6810 = vadd.f32 %v6698, %v6700
  %v6811 = vadd.f32 %v6699, %v6701
  %v6812 = vadd.f32 %v6702, %v6704
  %v6813 = vadd.f32 %v6703, %v6705
  %v6814 = vadd.f32 %v6706, %v6708
  %v6815 = vadd.f32 %v6707, %v6709
  %v6816 = vadd.f32 %v6710, %v6712
  %v6817 = vadd.f32 %v6711, %v6713
  %v6818 = vadd.f32 %v6714, %v6716
  %v6819 = vadd.f32 %v6715, %v6717
  %v6820 = vadd.f32 %v6718, %v6720
  %v6821 = vadd.f32 %v6719, %v6721
  %v6822 = vadd.f32 %v6722, %v6724
  %v6823 = vadd.f32 %v6723, %v6725
  %v6824 = vadd.f32 %v6726, %v6728
  %v6825 = vadd.f32 %v6727, %v6729
  %v6826 = vadd.f32 %v6730, %v6732
  %v6827 = vadd.f32 %v6731, %v6733
  %v6828 = vadd.f32 %v6734, %v6736
  %v6829 = vadd.f32 %v6735, %v6737
  %v6830 = vadd.f32 %v6738, %v6740
  %v6831 = vadd.f32 %v6739, %v6741
  %v6832 = vadd.f32 %v6742, %v6744
  %v6833 = vadd.f32 %v6743, %v6745
  %v6834 = vadd.f32 %v6746, %v6748
  %v6835 = vadd.f32 %v6747, %v6749
  %v6836 = vadd.f32 %v6750, %v6752
  %v6837 = vadd.f32 %v6751, %v6753
  %v6838 = vadd.f32 %v6754, %v6756
  %v6839 = vadd.f32 %v6755, %v6757
  %v6840 = vadd.f32 %v6758, %v6760
  %v6841 = vadd.f32 %v6759, %v6761
  %v6842 = vadd.f32 %v6762, %v6764
  %v6843 = vadd.f32 %v6763, %v6765
  %v6844 = vadd.f32 %v6766, %v6768
  %v6845 = vadd.f32 %v6767, %v6769
  %v6846 = vadd.f32 %v6770, %v6772
  %v6847 = vadd.f32 %v6771, %v6773
  %v6848 = vadd.f32 %v6774, %v6776
  %v6849 = vadd.f32 %v6775, %v6777
  %v6850 = vadd.f32 %v6778, %v6780
  %v6851 = vadd.f32 %v6779, %v6781
  %v6852 = vadd.f32 %v6782, %v6784
  %v6853 = vadd.f32 %v6783, %v6785
  %v6854 = vadd.f32 %v6786, %v6788
  %v6855 = vadd.f32 %v6787, %v6789
  %v6856 = vadd.f32 %v6790, %v6792
  %v6857 = vadd.f32 %v6791, %v6793
  %v6858 = vadd.f32 %v6794, %v6796
  %v6859 = vadd.f32 %v6795, %v6797
  %v6860 = vadd.f32 %v6798, %v6800
  %v6861 = vadd.f32 %v6799, %v6801
  %v6862 = vadd.f32 %v6802, %v6804
  %v6863 = vadd.f32 %v6803, %v6805
  %v6864 = vadd.f32 %v6806, %v6808
  %v6865 = vadd.f32 %v6807, %v6809
  %v6866 = vadd.f32 %v6810, %v6812
  %v6867 = vadd.f32 %v6811, %v6813
  %v6868 = vadd.f32 %v6814, %v6816
  %v6869 = vadd.f32 %v6815, %v6817
  %v6870 = vadd.f32 %v6818, %v6820
  %v6871 = vadd.f32 %v6819, %v6821
  %v6872 = vadd.f32 %v6822, %v6824
  %v6873 = vadd.f32 %v6823, %v6825
  %v6874 = vadd.f32 %v6826, %v6828
  %v6875 = vadd.f32 %v6827, %v6829
  %v6876 = vadd.f32 %v6830, %v6832
  %v6877 = vadd.f32 %v6831, %v6833
  %v6878 = vadd.f32 %v6834, %v6836
  %v6879 = vadd.f32 %v6835, %v6837
  %v6880 = vadd.f32 %v6838, %v6840
  %v6881 = vadd.f32 %v6839, %v6841
  %v6882 = vadd.f32 %v6842, %v6844
  %v6883 = vadd.f32 %v6843, %v6845
  %v6884 = vadd.f32 %v6846, %v6848
  %v6885 = vadd.f32 %v6847, %v6849
  %v6886 = vadd.f32 %v6850, %v6852
  %v6887 = vadd.f32 %v6851, %v6853
  %v6888 = vadd.f32 %v6854, %v6856
  %v6889 = vadd.f32 %v6855, %v6857
  %v6890 = vadd.f32 %v6858, %v6860
  %v6891 = vadd.f32 %v6859, %v6861
  %v6892 = vadd.f32 %v6862, %v6864
  %v6893 = vadd.f32 %v6863, %v6865
  %v6894 = vadd.f32 %v6866, %v6868
  %v6895 = vadd.f32 %v6867, %v6869
  %v6896 = vadd.f32 %v6870, %v6872
  %v6897 = vadd.f32 %v6871, %v6873
  %v6898 = vadd.f32 %v6874, %v6876
  %v6899 = vadd.f32 %v6875, %v6877
  %v6900 = vadd.f32 %v6878, %v6880
  %v6901 = vadd.f32 %v6879, %v6881
  %v6902 = vadd.f32 %v6882, %v6884
  %v6903 = vadd.f32 %v6883, %v6885
  %v6904 = vadd.f32 %v6886, %v6888
  %v6905 = vadd.f32 %v6887, %v6889
  %v6906 = vadd.f32 %v6890, %v6892
  %v6907 = vadd.f32 %v6891, %v6893
  %v6908 = vadd.f32 %v6894, %v6896
  %v6909 = vadd.f32 %v6895, %v6897
  %v6910 = vadd.f32 %v6898, %v6900
  %v6911 = vadd.f32 %v6899, %v6901
  %v6912 = vadd.f32 %v6902, %v6904
  %v6913 = vadd.f32 %v6903, %v6905
  %v6914 = vadd.f32 %v6906, %v6908
  %v6915 = vadd.f32 %v6907, %v6909
  %v6916 = vadd.f32 %v6910, %v6912
  %v6917 = vadd.f32 %v6911, %v6913
  %v6918 = vadd.f32 %v6914, %v6916
  %v6919 = vadd.f32 %v6915, %v6917
  %v6920 = vld [vmem:[%s3] sm:$0x1]
  %v6921 = vlaneseq
  %v6922 = vshrl.u32 %v6921, 7
  %v6923 = vsub.s32 0, %v6922
  %v6924 = vrot.slane %v6920, %v6923
  %v6925 = vadd.f32 %v6918, %v6924
  %v6926 = vadd.f32 %v6919, %v6924
  %6927 = vst [vmem:[%s4] sm:$0xff] %v6925
  %6928 = vst [vmem:[%s4 + $0x8] sm:$0xff] %v6926
  %s6929 = scalar_lea.vmem %s2, 1
  %v6930 = vld [vmem:[%s6929] ss:$4 sm:$0xff]
  %s6931 = scalar_lea.vmem %s2, 33
  %v6932 = vld [vmem:[%s6931] ss:$4 sm:$0xff]
  %s6933 = scalar_lea.vmem %s2, 65
  %v6934 = vld [vmem:[%s6933] ss:$4 sm:$0xff]
  %s6935 = scalar_lea.vmem %s2, 97
  %v6936 = vld [vmem:[%s6935] ss:$4 sm:$0xff]
  %s6937 = scalar_lea.vmem %s2, 129
  %v6938 = vld [vmem:[%s6937] ss:$4 sm:$0xff]
  %s6939 = scalar_lea.vmem %s2, 161
  %v6940 = vld [vmem:[%s6939] ss:$4 sm:$0xff]
  %s6941 = scalar_lea.vmem %s2, 193
  %v6942 = vld [vmem:[%s6941] ss:$4 sm:$0xff]
  %s6943 = scalar_lea.vmem %s2, 225
  %v6944 = vld [vmem:[%s6943] ss:$4 sm:$0xff]
  %s6945 = scalar_lea.vmem %s2, 257
  %v6946 = vld [vmem:[%s6945] ss:$4 sm:$0xff]
  %s6947 = scalar_lea.vmem %s2, 289
  %v6948 = vld [vmem:[%s6947] ss:$4 sm:$0xff]
  %s6949 = scalar_lea.vmem %s2, 321
  %v6950 = vld [vmem:[%s6949] ss:$4 sm:$0xff]
  %s6951 = scalar_lea.vmem %s2, 353
  %v6952 = vld [vmem:[%s6951] ss:$4 sm:$0xff]
  %s6953 = scalar_lea.vmem %s2, 385
  %v6954 = vld [vmem:[%s6953] ss:$4 sm:$0xff]
  %s6955 = scalar_lea.vmem %s2, 417
  %v6956 = vld [vmem:[%s6955] ss:$4 sm:$0xff]
  %s6957 = scalar_lea.vmem %s2, 449
  %v6958 = vld [vmem:[%s6957] ss:$4 sm:$0xff]
  %s6959 = scalar_lea.vmem %s2, 481
  %v6960 = vld [vmem:[%s6959] ss:$4 sm:$0xff]
  %v6977 = vlaneseq
  %v6978 = vshrl.u32 %v6977, 7
  %v6979 = vsub.s32 0, %v6978
  %v6980 = vrot.slane %v6930, %v6979
  %v6981 = vlaneseq
  %v6982 = vshrl.u32 %v6981, 7
  %v6983 = vsub.s32 1, %v6982
  %v6984 = vrot.slane %v6930, %v6983
  %v6985 = vlaneseq
  %v6986 = vshrl.u32 %v6985, 7
  %v6987 = vsub.s32 2, %v6986
  %v6988 = vrot.slane %v6930, %v6987
  %v6989 = vlaneseq
  %v6990 = vshrl.u32 %v6989, 7
  %v6991 = vsub.s32 3, %v6990
  %v6992 = vrot.slane %v6930, %v6991
  %v6993 = vlaneseq
  %v6994 = vshrl.u32 %v6993, 7
  %v6995 = vsub.s32 4, %v6994
  %v6996 = vrot.slane %v6930, %v6995
  %v6997 = vlaneseq
  %v6998 = vshrl.u32 %v6997, 7
  %v6999 = vsub.s32 5, %v6998
  %v7000 = vrot.slane %v6930, %v6999
  %v7001 = vlaneseq
  %v7002 = vshrl.u32 %v7001, 7
  %v7003 = vsub.s32 6, %v7002
  %v7004 = vrot.slane %v6930, %v7003
  %v7005 = vlaneseq
  %v7006 = vshrl.u32 %v7005, 7
  %v7007 = vsub.s32 7, %v7006
  %v7008 = vrot.slane %v6930, %v7007
  %v7009 = vlaneseq
  %v7010 = vshrl.u32 %v7009, 7
  %v7011 = vsub.s32 0, %v7010
  %v7012 = vrot.slane %v6932, %v7011
  %v7013 = vlaneseq
  %v7014 = vshrl.u32 %v7013, 7
  %v7015 = vsub.s32 1, %v7014
  %v7016 = vrot.slane %v6932, %v7015
  %v7017 = vlaneseq
  %v7018 = vshrl.u32 %v7017, 7
  %v7019 = vsub.s32 2, %v7018
  %v7020 = vrot.slane %v6932, %v7019
  %v7021 = vlaneseq
  %v7022 = vshrl.u32 %v7021, 7
  %v7023 = vsub.s32 3, %v7022
  %v7024 = vrot.slane %v6932, %v7023
  %v7025 = vlaneseq
  %v7026 = vshrl.u32 %v7025, 7
  %v7027 = vsub.s32 4, %v7026
  %v7028 = vrot.slane %v6932, %v7027
  %v7029 = vlaneseq
  %v7030 = vshrl.u32 %v7029, 7
  %v7031 = vsub.s32 5, %v7030
  %v7032 = vrot.slane %v6932, %v7031
  %v7033 = vlaneseq
  %v7034 = vshrl.u32 %v7033, 7
  %v7035 = vsub.s32 6, %v7034
  %v7036 = vrot.slane %v6932, %v7035
  %v7037 = vlaneseq
  %v7038 = vshrl.u32 %v7037, 7
  %v7039 = vsub.s32 7, %v7038
  %v7040 = vrot.slane %v6932, %v7039
  %v7041 = vlaneseq
  %v7042 = vshrl.u32 %v7041, 7
  %v7043 = vsub.s32 0, %v7042
  %v7044 = vrot.slane %v6934, %v7043
  %v7045 = vlaneseq
  %v7046 = vshrl.u32 %v7045, 7
  %v7047 = vsub.s32 1, %v7046
  %v7048 = vrot.slane %v6934, %v7047
  %v7049 = vlaneseq
  %v7050 = vshrl.u32 %v7049, 7
  %v7051 = vsub.s32 2, %v7050
  %v7052 = vrot.slane %v6934, %v7051
  %v7053 = vlaneseq
  %v7054 = vshrl.u32 %v7053, 7
  %v7055 = vsub.s32 3, %v7054
  %v7056 = vrot.slane %v6934, %v7055
  %v7057 = vlaneseq
  %v7058 = vshrl.u32 %v7057, 7
  %v7059 = vsub.s32 4, %v7058
  %v7060 = vrot.slane %v6934, %v7059
  %v7061 = vlaneseq
  %v7062 = vshrl.u32 %v7061, 7
  %v7063 = vsub.s32 5, %v7062
  %v7064 = vrot.slane %v6934, %v7063
  %v7065 = vlaneseq
  %v7066 = vshrl.u32 %v7065, 7
  %v7067 = vsub.s32 6, %v7066
  %v7068 = vrot.slane %v6934, %v7067
  %v7069 = vlaneseq
  %v7070 = vshrl.u32 %v7069, 7
  %v7071 = vsub.s32 7, %v7070
  %v7072 = vrot.slane %v6934, %v7071
  %v7073 = vlaneseq
  %v7074 = vshrl.u32 %v7073, 7
  %v7075 = vsub.s32 0, %v7074
  %v7076 = vrot.slane %v6936, %v7075
  %v7077 = vlaneseq
  %v7078 = vshrl.u32 %v7077, 7
  %v7079 = vsub.s32 1, %v7078
  %v7080 = vrot.slane %v6936, %v7079
  %v7081 = vlaneseq
  %v7082 = vshrl.u32 %v7081, 7
  %v7083 = vsub.s32 2, %v7082
  %v7084 = vrot.slane %v6936, %v7083
  %v7085 = vlaneseq
  %v7086 = vshrl.u32 %v7085, 7
  %v7087 = vsub.s32 3, %v7086
  %v7088 = vrot.slane %v6936, %v7087
  %v7089 = vlaneseq
  %v7090 = vshrl.u32 %v7089, 7
  %v7091 = vsub.s32 4, %v7090
  %v7092 = vrot.slane %v6936, %v7091
  %v7093 = vlaneseq
  %v7094 = vshrl.u32 %v7093, 7
  %v7095 = vsub.s32 5, %v7094
  %v7096 = vrot.slane %v6936, %v7095
  %v7097 = vlaneseq
  %v7098 = vshrl.u32 %v7097, 7
  %v7099 = vsub.s32 6, %v7098
  %v7100 = vrot.slane %v6936, %v7099
  %v7101 = vlaneseq
  %v7102 = vshrl.u32 %v7101, 7
  %v7103 = vsub.s32 7, %v7102
  %v7104 = vrot.slane %v6936, %v7103
  %v7105 = vlaneseq
  %v7106 = vshrl.u32 %v7105, 7
  %v7107 = vsub.s32 0, %v7106
  %v7108 = vrot.slane %v6938, %v7107
  %v7109 = vlaneseq
  %v7110 = vshrl.u32 %v7109, 7
  %v7111 = vsub.s32 1, %v7110
  %v7112 = vrot.slane %v6938, %v7111
  %v7113 = vlaneseq
  %v7114 = vshrl.u32 %v7113, 7
  %v7115 = vsub.s32 2, %v7114
  %v7116 = vrot.slane %v6938, %v7115
  %v7117 = vlaneseq
  %v7118 = vshrl.u32 %v7117, 7
  %v7119 = vsub.s32 3, %v7118
  %v7120 = vrot.slane %v6938, %v7119
  %v7121 = vlaneseq
  %v7122 = vshrl.u32 %v7121, 7
  %v7123 = vsub.s32 4, %v7122
  %v7124 = vrot.slane %v6938, %v7123
  %v7125 = vlaneseq
  %v7126 = vshrl.u32 %v7125, 7
  %v7127 = vsub.s32 5, %v7126
  %v7128 = vrot.slane %v6938, %v7127
  %v7129 = vlaneseq
  %v7130 = vshrl.u32 %v7129, 7
  %v7131 = vsub.s32 6, %v7130
  %v7132 = vrot.slane %v6938, %v7131
  %v7133 = vlaneseq
  %v7134 = vshrl.u32 %v7133, 7
  %v7135 = vsub.s32 7, %v7134
  %v7136 = vrot.slane %v6938, %v7135
  %v7137 = vlaneseq
  %v7138 = vshrl.u32 %v7137, 7
  %v7139 = vsub.s32 0, %v7138
  %v7140 = vrot.slane %v6940, %v7139
  %v7141 = vlaneseq
  %v7142 = vshrl.u32 %v7141, 7
  %v7143 = vsub.s32 1, %v7142
  %v7144 = vrot.slane %v6940, %v7143
  %v7145 = vlaneseq
  %v7146 = vshrl.u32 %v7145, 7
  %v7147 = vsub.s32 2, %v7146
  %v7148 = vrot.slane %v6940, %v7147
  %v7149 = vlaneseq
  %v7150 = vshrl.u32 %v7149, 7
  %v7151 = vsub.s32 3, %v7150
  %v7152 = vrot.slane %v6940, %v7151
  %v7153 = vlaneseq
  %v7154 = vshrl.u32 %v7153, 7
  %v7155 = vsub.s32 4, %v7154
  %v7156 = vrot.slane %v6940, %v7155
  %v7157 = vlaneseq
  %v7158 = vshrl.u32 %v7157, 7
  %v7159 = vsub.s32 5, %v7158
  %v7160 = vrot.slane %v6940, %v7159
  %v7161 = vlaneseq
  %v7162 = vshrl.u32 %v7161, 7
  %v7163 = vsub.s32 6, %v7162
  %v7164 = vrot.slane %v6940, %v7163
  %v7165 = vlaneseq
  %v7166 = vshrl.u32 %v7165, 7
  %v7167 = vsub.s32 7, %v7166
  %v7168 = vrot.slane %v6940, %v7167
  %v7169 = vlaneseq
  %v7170 = vshrl.u32 %v7169, 7
  %v7171 = vsub.s32 0, %v7170
  %v7172 = vrot.slane %v6942, %v7171
  %v7173 = vlaneseq
  %v7174 = vshrl.u32 %v7173, 7
  %v7175 = vsub.s32 1, %v7174
  %v7176 = vrot.slane %v6942, %v7175
  %v7177 = vlaneseq
  %v7178 = vshrl.u32 %v7177, 7
  %v7179 = vsub.s32 2, %v7178
  %v7180 = vrot.slane %v6942, %v7179
  %v7181 = vlaneseq
  %v7182 = vshrl.u32 %v7181, 7
  %v7183 = vsub.s32 3, %v7182
  %v7184 = vrot.slane %v6942, %v7183
  %v7185 = vlaneseq
  %v7186 = vshrl.u32 %v7185, 7
  %v7187 = vsub.s32 4, %v7186
  %v7188 = vrot.slane %v6942, %v7187
  %v7189 = vlaneseq
  %v7190 = vshrl.u32 %v7189, 7
  %v7191 = vsub.s32 5, %v7190
  %v7192 = vrot.slane %v6942, %v7191
  %v7193 = vlaneseq
  %v7194 = vshrl.u32 %v7193, 7
  %v7195 = vsub.s32 6, %v7194
  %v7196 = vrot.slane %v6942, %v7195
  %v7197 = vlaneseq
  %v7198 = vshrl.u32 %v7197, 7
  %v7199 = vsub.s32 7, %v7198
  %v7200 = vrot.slane %v6942, %v7199
  %v7201 = vlaneseq
  %v7202 = vshrl.u32 %v7201, 7
  %v7203 = vsub.s32 0, %v7202
  %v7204 = vrot.slane %v6944, %v7203
  %v7205 = vlaneseq
  %v7206 = vshrl.u32 %v7205, 7
  %v7207 = vsub.s32 1, %v7206
  %v7208 = vrot.slane %v6944, %v7207
  %v7209 = vlaneseq
  %v7210 = vshrl.u32 %v7209, 7
  %v7211 = vsub.s32 2, %v7210
  %v7212 = vrot.slane %v6944, %v7211
  %v7213 = vlaneseq
  %v7214 = vshrl.u32 %v7213, 7
  %v7215 = vsub.s32 3, %v7214
  %v7216 = vrot.slane %v6944, %v7215
  %v7217 = vlaneseq
  %v7218 = vshrl.u32 %v7217, 7
  %v7219 = vsub.s32 4, %v7218
  %v7220 = vrot.slane %v6944, %v7219
  %v7221 = vlaneseq
  %v7222 = vshrl.u32 %v7221, 7
  %v7223 = vsub.s32 5, %v7222
  %v7224 = vrot.slane %v6944, %v7223
  %v7225 = vlaneseq
  %v7226 = vshrl.u32 %v7225, 7
  %v7227 = vsub.s32 6, %v7226
  %v7228 = vrot.slane %v6944, %v7227
  %v7229 = vlaneseq
  %v7230 = vshrl.u32 %v7229, 7
  %v7231 = vsub.s32 7, %v7230
  %v7232 = vrot.slane %v6944, %v7231
  %v7233 = vlaneseq
  %v7234 = vshrl.u32 %v7233, 7
  %v7235 = vsub.s32 0, %v7234
  %v7236 = vrot.slane %v6946, %v7235
  %v7237 = vlaneseq
  %v7238 = vshrl.u32 %v7237, 7
  %v7239 = vsub.s32 1, %v7238
  %v7240 = vrot.slane %v6946, %v7239
  %v7241 = vlaneseq
  %v7242 = vshrl.u32 %v7241, 7
  %v7243 = vsub.s32 2, %v7242
  %v7244 = vrot.slane %v6946, %v7243
  %v7245 = vlaneseq
  %v7246 = vshrl.u32 %v7245, 7
  %v7247 = vsub.s32 3, %v7246
  %v7248 = vrot.slane %v6946, %v7247
  %v7249 = vlaneseq
  %v7250 = vshrl.u32 %v7249, 7
  %v7251 = vsub.s32 4, %v7250
  %v7252 = vrot.slane %v6946, %v7251
  %v7253 = vlaneseq
  %v7254 = vshrl.u32 %v7253, 7
  %v7255 = vsub.s32 5, %v7254
  %v7256 = vrot.slane %v6946, %v7255
  %v7257 = vlaneseq
  %v7258 = vshrl.u32 %v7257, 7
  %v7259 = vsub.s32 6, %v7258
  %v7260 = vrot.slane %v6946, %v7259
  %v7261 = vlaneseq
  %v7262 = vshrl.u32 %v7261, 7
  %v7263 = vsub.s32 7, %v7262
  %v7264 = vrot.slane %v6946, %v7263
  %v7265 = vlaneseq
  %v7266 = vshrl.u32 %v7265, 7
  %v7267 = vsub.s32 0, %v7266
  %v7268 = vrot.slane %v6948, %v7267
  %v7269 = vlaneseq
  %v7270 = vshrl.u32 %v7269, 7
  %v7271 = vsub.s32 1, %v7270
  %v7272 = vrot.slane %v6948, %v7271
  %v7273 = vlaneseq
  %v7274 = vshrl.u32 %v7273, 7
  %v7275 = vsub.s32 2, %v7274
  %v7276 = vrot.slane %v6948, %v7275
  %v7277 = vlaneseq
  %v7278 = vshrl.u32 %v7277, 7
  %v7279 = vsub.s32 3, %v7278
  %v7280 = vrot.slane %v6948, %v7279
  %v7281 = vlaneseq
  %v7282 = vshrl.u32 %v7281, 7
  %v7283 = vsub.s32 4, %v7282
  %v7284 = vrot.slane %v6948, %v7283
  %v7285 = vlaneseq
  %v7286 = vshrl.u32 %v7285, 7
  %v7287 = vsub.s32 5, %v7286
  %v7288 = vrot.slane %v6948, %v7287
  %v7289 = vlaneseq
  %v7290 = vshrl.u32 %v7289, 7
  %v7291 = vsub.s32 6, %v7290
  %v7292 = vrot.slane %v6948, %v7291
  %v7293 = vlaneseq
  %v7294 = vshrl.u32 %v7293, 7
  %v7295 = vsub.s32 7, %v7294
  %v7296 = vrot.slane %v6948, %v7295
  %v7297 = vlaneseq
  %v7298 = vshrl.u32 %v7297, 7
  %v7299 = vsub.s32 0, %v7298
  %v7300 = vrot.slane %v6950, %v7299
  %v7301 = vlaneseq
  %v7302 = vshrl.u32 %v7301, 7
  %v7303 = vsub.s32 1, %v7302
  %v7304 = vrot.slane %v6950, %v7303
  %v7305 = vlaneseq
  %v7306 = vshrl.u32 %v7305, 7
  %v7307 = vsub.s32 2, %v7306
  %v7308 = vrot.slane %v6950, %v7307
  %v7309 = vlaneseq
  %v7310 = vshrl.u32 %v7309, 7
  %v7311 = vsub.s32 3, %v7310
  %v7312 = vrot.slane %v6950, %v7311
  %v7313 = vlaneseq
  %v7314 = vshrl.u32 %v7313, 7
  %v7315 = vsub.s32 4, %v7314
  %v7316 = vrot.slane %v6950, %v7315
  %v7317 = vlaneseq
  %v7318 = vshrl.u32 %v7317, 7
  %v7319 = vsub.s32 5, %v7318
  %v7320 = vrot.slane %v6950, %v7319
  %v7321 = vlaneseq
  %v7322 = vshrl.u32 %v7321, 7
  %v7323 = vsub.s32 6, %v7322
  %v7324 = vrot.slane %v6950, %v7323
  %v7325 = vlaneseq
  %v7326 = vshrl.u32 %v7325, 7
  %v7327 = vsub.s32 7, %v7326
  %v7328 = vrot.slane %v6950, %v7327
  %v7329 = vlaneseq
  %v7330 = vshrl.u32 %v7329, 7
  %v7331 = vsub.s32 0, %v7330
  %v7332 = vrot.slane %v6952, %v7331
  %v7333 = vlaneseq
  %v7334 = vshrl.u32 %v7333, 7
  %v7335 = vsub.s32 1, %v7334
  %v7336 = vrot.slane %v6952, %v7335
  %v7337 = vlaneseq
  %v7338 = vshrl.u32 %v7337, 7
  %v7339 = vsub.s32 2, %v7338
  %v7340 = vrot.slane %v6952, %v7339
  %v7341 = vlaneseq
  %v7342 = vshrl.u32 %v7341, 7
  %v7343 = vsub.s32 3, %v7342
  %v7344 = vrot.slane %v6952, %v7343
  %v7345 = vlaneseq
  %v7346 = vshrl.u32 %v7345, 7
  %v7347 = vsub.s32 4, %v7346
  %v7348 = vrot.slane %v6952, %v7347
  %v7349 = vlaneseq
  %v7350 = vshrl.u32 %v7349, 7
  %v7351 = vsub.s32 5, %v7350
  %v7352 = vrot.slane %v6952, %v7351
  %v7353 = vlaneseq
  %v7354 = vshrl.u32 %v7353, 7
  %v7355 = vsub.s32 6, %v7354
  %v7356 = vrot.slane %v6952, %v7355
  %v7357 = vlaneseq
  %v7358 = vshrl.u32 %v7357, 7
  %v7359 = vsub.s32 7, %v7358
  %v7360 = vrot.slane %v6952, %v7359
  %v7361 = vlaneseq
  %v7362 = vshrl.u32 %v7361, 7
  %v7363 = vsub.s32 0, %v7362
  %v7364 = vrot.slane %v6954, %v7363
  %v7365 = vlaneseq
  %v7366 = vshrl.u32 %v7365, 7
  %v7367 = vsub.s32 1, %v7366
  %v7368 = vrot.slane %v6954, %v7367
  %v7369 = vlaneseq
  %v7370 = vshrl.u32 %v7369, 7
  %v7371 = vsub.s32 2, %v7370
  %v7372 = vrot.slane %v6954, %v7371
  %v7373 = vlaneseq
  %v7374 = vshrl.u32 %v7373, 7
  %v7375 = vsub.s32 3, %v7374
  %v7376 = vrot.slane %v6954, %v7375
  %v7377 = vlaneseq
  %v7378 = vshrl.u32 %v7377, 7
  %v7379 = vsub.s32 4, %v7378
  %v7380 = vrot.slane %v6954, %v7379
  %v7381 = vlaneseq
  %v7382 = vshrl.u32 %v7381, 7
  %v7383 = vsub.s32 5, %v7382
  %v7384 = vrot.slane %v6954, %v7383
  %v7385 = vlaneseq
  %v7386 = vshrl.u32 %v7385, 7
  %v7387 = vsub.s32 6, %v7386
  %v7388 = vrot.slane %v6954, %v7387
  %v7389 = vlaneseq
  %v7390 = vshrl.u32 %v7389, 7
  %v7391 = vsub.s32 7, %v7390
  %v7392 = vrot.slane %v6954, %v7391
  %v7393 = vlaneseq
  %v7394 = vshrl.u32 %v7393, 7
  %v7395 = vsub.s32 0, %v7394
  %v7396 = vrot.slane %v6956, %v7395
  %v7397 = vlaneseq
  %v7398 = vshrl.u32 %v7397, 7
  %v7399 = vsub.s32 1, %v7398
  %v7400 = vrot.slane %v6956, %v7399
  %v7401 = vlaneseq
  %v7402 = vshrl.u32 %v7401, 7
  %v7403 = vsub.s32 2, %v7402
  %v7404 = vrot.slane %v6956, %v7403
  %v7405 = vlaneseq
  %v7406 = vshrl.u32 %v7405, 7
  %v7407 = vsub.s32 3, %v7406
  %v7408 = vrot.slane %v6956, %v7407
  %v7409 = vlaneseq
  %v7410 = vshrl.u32 %v7409, 7
  %v7411 = vsub.s32 4, %v7410
  %v7412 = vrot.slane %v6956, %v7411
  %v7413 = vlaneseq
  %v7414 = vshrl.u32 %v7413, 7
  %v7415 = vsub.s32 5, %v7414
  %v7416 = vrot.slane %v6956, %v7415
  %v7417 = vlaneseq
  %v7418 = vshrl.u32 %v7417, 7
  %v7419 = vsub.s32 6, %v7418
  %v7420 = vrot.slane %v6956, %v7419
  %v7421 = vlaneseq
  %v7422 = vshrl.u32 %v7421, 7
  %v7423 = vsub.s32 7, %v7422
  %v7424 = vrot.slane %v6956, %v7423
  %v7425 = vlaneseq
  %v7426 = vshrl.u32 %v7425, 7
  %v7427 = vsub.s32 0, %v7426
  %v7428 = vrot.slane %v6958, %v7427
  %v7429 = vlaneseq
  %v7430 = vshrl.u32 %v7429, 7
  %v7431 = vsub.s32 1, %v7430
  %v7432 = vrot.slane %v6958, %v7431
  %v7433 = vlaneseq
  %v7434 = vshrl.u32 %v7433, 7
  %v7435 = vsub.s32 2, %v7434
  %v7436 = vrot.slane %v6958, %v7435
  %v7437 = vlaneseq
  %v7438 = vshrl.u32 %v7437, 7
  %v7439 = vsub.s32 3, %v7438
  %v7440 = vrot.slane %v6958, %v7439
  %v7441 = vlaneseq
  %v7442 = vshrl.u32 %v7441, 7
  %v7443 = vsub.s32 4, %v7442
  %v7444 = vrot.slane %v6958, %v7443
  %v7445 = vlaneseq
  %v7446 = vshrl.u32 %v7445, 7
  %v7447 = vsub.s32 5, %v7446
  %v7448 = vrot.slane %v6958, %v7447
  %v7449 = vlaneseq
  %v7450 = vshrl.u32 %v7449, 7
  %v7451 = vsub.s32 6, %v7450
  %v7452 = vrot.slane %v6958, %v7451
  %v7453 = vlaneseq
  %v7454 = vshrl.u32 %v7453, 7
  %v7455 = vsub.s32 7, %v7454
  %v7456 = vrot.slane %v6958, %v7455
  %v7457 = vlaneseq
  %v7458 = vshrl.u32 %v7457, 7
  %v7459 = vsub.s32 0, %v7458
  %v7460 = vrot.slane %v6960, %v7459
  %v7461 = vlaneseq
  %v7462 = vshrl.u32 %v7461, 7
  %v7463 = vsub.s32 1, %v7462
  %v7464 = vrot.slane %v6960, %v7463
  %v7465 = vlaneseq
  %v7466 = vshrl.u32 %v7465, 7
  %v7467 = vsub.s32 2, %v7466
  %v7468 = vrot.slane %v6960, %v7467
  %v7469 = vlaneseq
  %v7470 = vshrl.u32 %v7469, 7
  %v7471 = vsub.s32 3, %v7470
  %v7472 = vrot.slane %v6960, %v7471
  %v7473 = vlaneseq
  %v7474 = vshrl.u32 %v7473, 7
  %v7475 = vsub.s32 4, %v7474
  %v7476 = vrot.slane %v6960, %v7475
  %v7477 = vlaneseq
  %v7478 = vshrl.u32 %v7477, 7
  %v7479 = vsub.s32 5, %v7478
  %v7480 = vrot.slane %v6960, %v7479
  %v7481 = vlaneseq
  %v7482 = vshrl.u32 %v7481, 7
  %v7483 = vsub.s32 6, %v7482
  %v7484 = vrot.slane %v6960, %v7483
  %v7485 = vlaneseq
  %v7486 = vshrl.u32 %v7485, 7
  %v7487 = vsub.s32 7, %v7486
  %v7488 = vrot.slane %v6960, %v7487
  %v7617 = vmul.f32 %v5467, %v6980
  %v7618 = vmul.f32 %v5468, %v6984
  %v7619 = vmul.f32 %v5469, %v6988
  %v7620 = vmul.f32 %v5470, %v6992
  %v7621 = vmul.f32 %v5471, %v6996
  %v7622 = vmul.f32 %v5472, %v7000
  %v7623 = vmul.f32 %v5473, %v7004
  %v7624 = vmul.f32 %v5474, %v7008
  %v7625 = vmul.f32 %v5475, %v7012
  %v7626 = vmul.f32 %v5476, %v7016
  %v7627 = vmul.f32 %v5477, %v7020
  %v7628 = vmul.f32 %v5478, %v7024
  %v7629 = vmul.f32 %v5479, %v7028
  %v7630 = vmul.f32 %v5480, %v7032
  %v7631 = vmul.f32 %v5481, %v7036
  %v7632 = vmul.f32 %v5482, %v7040
  %v7633 = vmul.f32 %v5483, %v7044
  %v7634 = vmul.f32 %v5484, %v7048
  %v7635 = vmul.f32 %v5485, %v7052
  %v7636 = vmul.f32 %v5486, %v7056
  %v7637 = vmul.f32 %v5487, %v7060
  %v7638 = vmul.f32 %v5488, %v7064
  %v7639 = vmul.f32 %v5489, %v7068
  %v7640 = vmul.f32 %v5490, %v7072
  %v7641 = vmul.f32 %v5491, %v7076
  %v7642 = vmul.f32 %v5492, %v7080
  %v7643 = vmul.f32 %v5493, %v7084
  %v7644 = vmul.f32 %v5494, %v7088
  %v7645 = vmul.f32 %v5495, %v7092
  %v7646 = vmul.f32 %v5496, %v7096
  %v7647 = vmul.f32 %v5497, %v7100
  %v7648 = vmul.f32 %v5498, %v7104
  %v7649 = vmul.f32 %v5499, %v7108
  %v7650 = vmul.f32 %v5500, %v7112
  %v7651 = vmul.f32 %v5501, %v7116
  %v7652 = vmul.f32 %v5502, %v7120
  %v7653 = vmul.f32 %v5503, %v7124
  %v7654 = vmul.f32 %v5504, %v7128
  %v7655 = vmul.f32 %v5505, %v7132
  %v7656 = vmul.f32 %v5506, %v7136
  %v7657 = vmul.f32 %v5507, %v7140
  %v7658 = vmul.f32 %v5508, %v7144
  %v7659 = vmul.f32 %v5509, %v7148
  %v7660 = vmul.f32 %v5510, %v7152
  %v7661 = vmul.f32 %v5511, %v7156
  %v7662 = vmul.f32 %v5512, %v7160
  %v7663 = vmul.f32 %v5513, %v7164
  %v7664 = vmul.f32 %v5514, %v7168
  %v7665 = vmul.f32 %v5515, %v7172
  %v7666 = vmul.f32 %v5516, %v7176
  %v7667 = vmul.f32 %v5517, %v7180
  %v7668 = vmul.f32 %v5518, %v7184
  %v7669 = vmul.f32 %v5519, %v7188
  %v7670 = vmul.f32 %v5520, %v7192
  %v7671 = vmul.f32 %v5521, %v7196
  %v7672 = vmul.f32 %v5522, %v7200
  %v7673 = vmul.f32 %v5523, %v7204
  %v7674 = vmul.f32 %v5524, %v7208
  %v7675 = vmul.f32 %v5525, %v7212
  %v7676 = vmul.f32 %v5526, %v7216
  %v7677 = vmul.f32 %v5527, %v7220
  %v7678 = vmul.f32 %v5528, %v7224
  %v7679 = vmul.f32 %v5529, %v7228
  %v7680 = vmul.f32 %v5530, %v7232
  %v7681 = vmul.f32 %v5531, %v7236
  %v7682 = vmul.f32 %v5532, %v7240
  %v7683 = vmul.f32 %v5533, %v7244
  %v7684 = vmul.f32 %v5534, %v7248
  %v7685 = vmul.f32 %v5535, %v7252
  %v7686 = vmul.f32 %v5536, %v7256
  %v7687 = vmul.f32 %v5537, %v7260
  %v7688 = vmul.f32 %v5538, %v7264
  %v7689 = vmul.f32 %v5539, %v7268
  %v7690 = vmul.f32 %v5540, %v7272
  %v7691 = vmul.f32 %v5541, %v7276
  %v7692 = vmul.f32 %v5542, %v7280
  %v7693 = vmul.f32 %v5543, %v7284
  %v7694 = vmul.f32 %v5544, %v7288
  %v7695 = vmul.f32 %v5545, %v7292
  %v7696 = vmul.f32 %v5546, %v7296
  %v7697 = vmul.f32 %v5547, %v7300
  %v7698 = vmul.f32 %v5548, %v7304
  %v7699 = vmul.f32 %v5549, %v7308
  %v7700 = vmul.f32 %v5550, %v7312
  %v7701 = vmul.f32 %v5551, %v7316
  %v7702 = vmul.f32 %v5552, %v7320
  %v7703 = vmul.f32 %v5553, %v7324
  %v7704 = vmul.f32 %v5554, %v7328
  %v7705 = vmul.f32 %v5555, %v7332
  %v7706 = vmul.f32 %v5556, %v7336
  %v7707 = vmul.f32 %v5557, %v7340
  %v7708 = vmul.f32 %v5558, %v7344
  %v7709 = vmul.f32 %v5559, %v7348
  %v7710 = vmul.f32 %v5560, %v7352
  %v7711 = vmul.f32 %v5561, %v7356
  %v7712 = vmul.f32 %v5562, %v7360
  %v7713 = vmul.f32 %v5563, %v7364
  %v7714 = vmul.f32 %v5564, %v7368
  %v7715 = vmul.f32 %v5565, %v7372
  %v7716 = vmul.f32 %v5566, %v7376
  %v7717 = vmul.f32 %v5567, %v7380
  %v7718 = vmul.f32 %v5568, %v7384
  %v7719 = vmul.f32 %v5569, %v7388
  %v7720 = vmul.f32 %v5570, %v7392
  %v7721 = vmul.f32 %v5571, %v7396
  %v7722 = vmul.f32 %v5572, %v7400
  %v7723 = vmul.f32 %v5573, %v7404
  %v7724 = vmul.f32 %v5574, %v7408
  %v7725 = vmul.f32 %v5575, %v7412
  %v7726 = vmul.f32 %v5576, %v7416
  %v7727 = vmul.f32 %v5577, %v7420
  %v7728 = vmul.f32 %v5578, %v7424
  %v7729 = vmul.f32 %v5579, %v7428
  %v7730 = vmul.f32 %v5580, %v7432
  %v7731 = vmul.f32 %v5581, %v7436
  %v7732 = vmul.f32 %v5582, %v7440
  %v7733 = vmul.f32 %v5583, %v7444
  %v7734 = vmul.f32 %v5584, %v7448
  %v7735 = vmul.f32 %v5585, %v7452
  %v7736 = vmul.f32 %v5586, %v7456
  %v7737 = vmul.f32 %v5587, %v7460
  %v7738 = vmul.f32 %v5588, %v7464
  %v7739 = vmul.f32 %v5589, %v7468
  %v7740 = vmul.f32 %v5590, %v7472
  %v7741 = vmul.f32 %v5591, %v7476
  %v7742 = vmul.f32 %v5592, %v7480
  %v7743 = vmul.f32 %v5593, %v7484
  %v7744 = vmul.f32 %v5594, %v7488
  %v7745 = vmul.f32 %v5595, %v6980
  %v7746 = vmul.f32 %v5596, %v6984
  %v7747 = vmul.f32 %v5597, %v6988
  %v7748 = vmul.f32 %v5598, %v6992
  %v7749 = vmul.f32 %v5599, %v6996
  %v7750 = vmul.f32 %v5600, %v7000
  %v7751 = vmul.f32 %v5601, %v7004
  %v7752 = vmul.f32 %v5602, %v7008
  %v7753 = vmul.f32 %v5603, %v7012
  %v7754 = vmul.f32 %v5604, %v7016
  %v7755 = vmul.f32 %v5605, %v7020
  %v7756 = vmul.f32 %v5606, %v7024
  %v7757 = vmul.f32 %v5607, %v7028
  %v7758 = vmul.f32 %v5608, %v7032
  %v7759 = vmul.f32 %v5609, %v7036
  %v7760 = vmul.f32 %v5610, %v7040
  %v7761 = vmul.f32 %v5611, %v7044
  %v7762 = vmul.f32 %v5612, %v7048
  %v7763 = vmul.f32 %v5613, %v7052
  %v7764 = vmul.f32 %v5614, %v7056
  %v7765 = vmul.f32 %v5615, %v7060
  %v7766 = vmul.f32 %v5616, %v7064
  %v7767 = vmul.f32 %v5617, %v7068
  %v7768 = vmul.f32 %v5618, %v7072
  %v7769 = vmul.f32 %v5619, %v7076
  %v7770 = vmul.f32 %v5620, %v7080
  %v7771 = vmul.f32 %v5621, %v7084
  %v7772 = vmul.f32 %v5622, %v7088
  %v7773 = vmul.f32 %v5623, %v7092
  %v7774 = vmul.f32 %v5624, %v7096
  %v7775 = vmul.f32 %v5625, %v7100
  %v7776 = vmul.f32 %v5626, %v7104
  %v7777 = vmul.f32 %v5627, %v7108
  %v7778 = vmul.f32 %v5628, %v7112
  %v7779 = vmul.f32 %v5629, %v7116
  %v7780 = vmul.f32 %v5630, %v7120
  %v7781 = vmul.f32 %v5631, %v7124
  %v7782 = vmul.f32 %v5632, %v7128
  %v7783 = vmul.f32 %v5633, %v7132
  %v7784 = vmul.f32 %v5634, %v7136
  %v7785 = vmul.f32 %v5635, %v7140
  %v7786 = vmul.f32 %v5636, %v7144
  %v7787 = vmul.f32 %v5637, %v7148
  %v7788 = vmul.f32 %v5638, %v7152
  %v7789 = vmul.f32 %v5639, %v7156
  %v7790 = vmul.f32 %v5640, %v7160
  %v7791 = vmul.f32 %v5641, %v7164
  %v7792 = vmul.f32 %v5642, %v7168
  %v7793 = vmul.f32 %v5643, %v7172
  %v7794 = vmul.f32 %v5644, %v7176
  %v7795 = vmul.f32 %v5645, %v7180
  %v7796 = vmul.f32 %v5646, %v7184
  %v7797 = vmul.f32 %v5647, %v7188
  %v7798 = vmul.f32 %v5648, %v7192
  %v7799 = vmul.f32 %v5649, %v7196
  %v7800 = vmul.f32 %v5650, %v7200
  %v7801 = vmul.f32 %v5651, %v7204
  %v7802 = vmul.f32 %v5652, %v7208
  %v7803 = vmul.f32 %v5653, %v7212
  %v7804 = vmul.f32 %v5654, %v7216
  %v7805 = vmul.f32 %v5655, %v7220
  %v7806 = vmul.f32 %v5656, %v7224
  %v7807 = vmul.f32 %v5657, %v7228
  %v7808 = vmul.f32 %v5658, %v7232
  %v7809 = vmul.f32 %v5659, %v7236
  %v7810 = vmul.f32 %v5660, %v7240
  %v7811 = vmul.f32 %v5661, %v7244
  %v7812 = vmul.f32 %v5662, %v7248
  %v7813 = vmul.f32 %v5663, %v7252
  %v7814 = vmul.f32 %v5664, %v7256
  %v7815 = vmul.f32 %v5665, %v7260
  %v7816 = vmul.f32 %v5666, %v7264
  %v7817 = vmul.f32 %v5667, %v7268
  %v7818 = vmul.f32 %v5668, %v7272
  %v7819 = vmul.f32 %v5669, %v7276
  %v7820 = vmul.f32 %v5670, %v7280
  %v7821 = vmul.f32 %v5671, %v7284
  %v7822 = vmul.f32 %v5672, %v7288
  %v7823 = vmul.f32 %v5673, %v7292
  %v7824 = vmul.f32 %v5674, %v7296
  %v7825 = vmul.f32 %v5675, %v7300
  %v7826 = vmul.f32 %v5676, %v7304
  %v7827 = vmul.f32 %v5677, %v7308
  %v7828 = vmul.f32 %v5678, %v7312
  %v7829 = vmul.f32 %v5679, %v7316
  %v7830 = vmul.f32 %v5680, %v7320
  %v7831 = vmul.f32 %v5681, %v7324
  %v7832 = vmul.f32 %v5682, %v7328
  %v7833 = vmul.f32 %v5683, %v7332
  %v7834 = vmul.f32 %v5684, %v7336
  %v7835 = vmul.f32 %v5685, %v7340
  %v7836 = vmul.f32 %v5686, %v7344
  %v7837 = vmul.f32 %v5687, %v7348
  %v7838 = vmul.f32 %v5688, %v7352
  %v7839 = vmul.f32 %v5689, %v7356
  %v7840 = vmul.f32 %v5690, %v7360
  %v7841 = vmul.f32 %v5691, %v7364
  %v7842 = vmul.f32 %v5692, %v7368
  %v7843 = vmul.f32 %v5693, %v7372
  %v7844 = vmul.f32 %v5694, %v7376
  %v7845 = vmul.f32 %v5695, %v7380
  %v7846 = vmul.f32 %v5696, %v7384
  %v7847 = vmul.f32 %v5697, %v7388
  %v7848 = vmul.f32 %v5698, %v7392
  %v7849 = vmul.f32 %v5699, %v7396
  %v7850 = vmul.f32 %v5700, %v7400
  %v7851 = vmul.f32 %v5701, %v7404
  %v7852 = vmul.f32 %v5702, %v7408
  %v7853 = vmul.f32 %v5703, %v7412
  %v7854 = vmul.f32 %v5704, %v7416
  %v7855 = vmul.f32 %v5705, %v7420
  %v7856 = vmul.f32 %v5706, %v7424
  %v7857 = vmul.f32 %v5707, %v7428
  %v7858 = vmul.f32 %v5708, %v7432
  %v7859 = vmul.f32 %v5709, %v7436
  %v7860 = vmul.f32 %v5710, %v7440
  %v7861 = vmul.f32 %v5711, %v7444
  %v7862 = vmul.f32 %v5712, %v7448
  %v7863 = vmul.f32 %v5713, %v7452
  %v7864 = vmul.f32 %v5714, %v7456
  %v7865 = vmul.f32 %v5715, %v7460
  %v7866 = vmul.f32 %v5716, %v7464
  %v7867 = vmul.f32 %v5717, %v7468
  %v7868 = vmul.f32 %v5718, %v7472
  %v7869 = vmul.f32 %v5719, %v7476
  %v7870 = vmul.f32 %v5720, %v7480
  %v7871 = vmul.f32 %v5721, %v7484
  %v7872 = vmul.f32 %v5722, %v7488
  %v7873 = vadd.f32 %v7617, %v7618
  %v7874 = vadd.f32 %v7745, %v7746
  %v7875 = vadd.f32 %v7619, %v7620
  %v7876 = vadd.f32 %v7747, %v7748
  %v7877 = vadd.f32 %v7621, %v7622
  %v7878 = vadd.f32 %v7749, %v7750
  %v7879 = vadd.f32 %v7623, %v7624
  %v7880 = vadd.f32 %v7751, %v7752
  %v7881 = vadd.f32 %v7625, %v7626
  %v7882 = vadd.f32 %v7753, %v7754
  %v7883 = vadd.f32 %v7627, %v7628
  %v7884 = vadd.f32 %v7755, %v7756
  %v7885 = vadd.f32 %v7629, %v7630
  %v7886 = vadd.f32 %v7757, %v7758
  %v7887 = vadd.f32 %v7631, %v7632
  %v7888 = vadd.f32 %v7759, %v7760
  %v7889 = vadd.f32 %v7633, %v7634
  %v7890 = vadd.f32 %v7761, %v7762
  %v7891 = vadd.f32 %v7635, %v7636
  %v7892 = vadd.f32 %v7763, %v7764
  %v7893 = vadd.f32 %v7637, %v7638
  %v7894 = vadd.f32 %v7765, %v7766
  %v7895 = vadd.f32 %v7639, %v7640
  %v7896 = vadd.f32 %v7767, %v7768
  %v7897 = vadd.f32 %v7641, %v7642
  %v7898 = vadd.f32 %v7769, %v7770
  %v7899 = vadd.f32 %v7643, %v7644
  %v7900 = vadd.f32 %v7771, %v7772
  %v7901 = vadd.f32 %v7645, %v7646
  %v7902 = vadd.f32 %v7773, %v7774
  %v7903 = vadd.f32 %v7647, %v7648
  %v7904 = vadd.f32 %v7775, %v7776
  %v7905 = vadd.f32 %v7649, %v7650
  %v7906 = vadd.f32 %v7777, %v7778
  %v7907 = vadd.f32 %v7651, %v7652
  %v7908 = vadd.f32 %v7779, %v7780
  %v7909 = vadd.f32 %v7653, %v7654
  %v7910 = vadd.f32 %v7781, %v7782
  %v7911 = vadd.f32 %v7655, %v7656
  %v7912 = vadd.f32 %v7783, %v7784
  %v7913 = vadd.f32 %v7657, %v7658
  %v7914 = vadd.f32 %v7785, %v7786
  %v7915 = vadd.f32 %v7659, %v7660
  %v7916 = vadd.f32 %v7787, %v7788
  %v7917 = vadd.f32 %v7661, %v7662
  %v7918 = vadd.f32 %v7789, %v7790
  %v7919 = vadd.f32 %v7663, %v7664
  %v7920 = vadd.f32 %v7791, %v7792
  %v7921 = vadd.f32 %v7665, %v7666
  %v7922 = vadd.f32 %v7793, %v7794
  %v7923 = vadd.f32 %v7667, %v7668
  %v7924 = vadd.f32 %v7795, %v7796
  %v7925 = vadd.f32 %v7669, %v7670
  %v7926 = vadd.f32 %v7797, %v7798
  %v7927 = vadd.f32 %v7671, %v7672
  %v7928 = vadd.f32 %v7799, %v7800
  %v7929 = vadd.f32 %v7673, %v7674
  %v7930 = vadd.f32 %v7801, %v7802
  %v7931 = vadd.f32 %v7675, %v7676
  %v7932 = vadd.f32 %v7803, %v7804
  %v7933 = vadd.f32 %v7677, %v7678
  %v7934 = vadd.f32 %v7805, %v7806
  %v7935 = vadd.f32 %v7679, %v7680
  %v7936 = vadd.f32 %v7807, %v7808
  %v7937 = vadd.f32 %v7681, %v7682
  %v7938 = vadd.f32 %v7809, %v7810
  %v7939 = vadd.f32 %v7683, %v7684
  %v7940 = vadd.f32 %v7811, %v7812
  %v7941 = vadd.f32 %v7685, %v7686
  %v7942 = vadd.f32 %v7813, %v7814
  %v7943 = vadd.f32 %v7687, %v7688
  %v7944 = vadd.f32 %v7815, %v7816
  %v7945 = vadd.f32 %v7689, %v7690
  %v7946 = vadd.f32 %v7817, %v7818
  %v7947 = vadd.f32 %v7691, %v7692
  %v7948 = vadd.f32 %v7819, %v7820
  %v7949 = vadd.f32 %v7693, %v7694
  %v7950 = vadd.f32 %v7821, %v7822
  %v7951 = vadd.f32 %v7695, %v7696
  %v7952 = vadd.f32 %v7823, %v7824
  %v7953 = vadd.f32 %v7697, %v7698
  %v7954 = vadd.f32 %v7825, %v7826
  %v7955 = vadd.f32 %v7699, %v7700
  %v7956 = vadd.f32 %v7827, %v7828
  %v7957 = vadd.f32 %v7701, %v7702
  %v7958 = vadd.f32 %v7829, %v7830
  %v7959 = vadd.f32 %v7703, %v7704
  %v7960 = vadd.f32 %v7831, %v7832
  %v7961 = vadd.f32 %v7705, %v7706
  %v7962 = vadd.f32 %v7833, %v7834
  %v7963 = vadd.f32 %v7707, %v7708
  %v7964 = vadd.f32 %v7835, %v7836
  %v7965 = vadd.f32 %v7709, %v7710
  %v7966 = vadd.f32 %v7837, %v7838
  %v7967 = vadd.f32 %v7711, %v7712
  %v7968 = vadd.f32 %v7839, %v7840
  %v7969 = vadd.f32 %v7713, %v7714
  %v7970 = vadd.f32 %v7841, %v7842
  %v7971 = vadd.f32 %v7715, %v7716
  %v7972 = vadd.f32 %v7843, %v7844
  %v7973 = vadd.f32 %v7717, %v7718
  %v7974 = vadd.f32 %v7845, %v7846
  %v7975 = vadd.f32 %v7719, %v7720
  %v7976 = vadd.f32 %v7847, %v7848
  %v7977 = vadd.f32 %v7721, %v7722
  %v7978 = vadd.f32 %v7849, %v7850
  %v7979 = vadd.f32 %v7723, %v7724
  %v7980 = vadd.f32 %v7851, %v7852
  %v7981 = vadd.f32 %v7725, %v7726
  %v7982 = vadd.f32 %v7853, %v7854
  %v7983 = vadd.f32 %v7727, %v7728
  %v7984 = vadd.f32 %v7855, %v7856
  %v7985 = vadd.f32 %v7729, %v7730
  %v7986 = vadd.f32 %v7857, %v7858
  %v7987 = vadd.f32 %v7731, %v7732
  %v7988 = vadd.f32 %v7859, %v7860
  %v7989 = vadd.f32 %v7733, %v7734
  %v7990 = vadd.f32 %v7861, %v7862
  %v7991 = vadd.f32 %v7735, %v7736
  %v7992 = vadd.f32 %v7863, %v7864
  %v7993 = vadd.f32 %v7737, %v7738
  %v7994 = vadd.f32 %v7865, %v7866
  %v7995 = vadd.f32 %v7739, %v7740
  %v7996 = vadd.f32 %v7867, %v7868
  %v7997 = vadd.f32 %v7741, %v7742
  %v7998 = vadd.f32 %v7869, %v7870
  %v7999 = vadd.f32 %v7743, %v7744
  %v8000 = vadd.f32 %v7871, %v7872
  %v8001 = vadd.f32 %v7873, %v7875
  %v8002 = vadd.f32 %v7874, %v7876
  %v8003 = vadd.f32 %v7877, %v7879
  %v8004 = vadd.f32 %v7878, %v7880
  %v8005 = vadd.f32 %v7881, %v7883
  %v8006 = vadd.f32 %v7882, %v7884
  %v8007 = vadd.f32 %v7885, %v7887
  %v8008 = vadd.f32 %v7886, %v7888
  %v8009 = vadd.f32 %v7889, %v7891
  %v8010 = vadd.f32 %v7890, %v7892
  %v8011 = vadd.f32 %v7893, %v7895
  %v8012 = vadd.f32 %v7894, %v7896
  %v8013 = vadd.f32 %v7897, %v7899
  %v8014 = vadd.f32 %v7898, %v7900
  %v8015 = vadd.f32 %v7901, %v7903
  %v8016 = vadd.f32 %v7902, %v7904
  %v8017 = vadd.f32 %v7905, %v7907
  %v8018 = vadd.f32 %v7906, %v7908
  %v8019 = vadd.f32 %v7909, %v7911
  %v8020 = vadd.f32 %v7910, %v7912
  %v8021 = vadd.f32 %v7913, %v7915
  %v8022 = vadd.f32 %v7914, %v7916
  %v8023 = vadd.f32 %v7917, %v7919
  %v8024 = vadd.f32 %v7918, %v7920
  %v8025 = vadd.f32 %v7921, %v7923
  %v8026 = vadd.f32 %v7922, %v7924
  %v8027 = vadd.f32 %v7925, %v7927
  %v8028 = vadd.f32 %v7926, %v7928
  %v8029 = vadd.f32 %v7929, %v7931
  %v8030 = vadd.f32 %v7930, %v7932
  %v8031 = vadd.f32 %v7933, %v7935
  %v8032 = vadd.f32 %v7934, %v7936
  %v8033 = vadd.f32 %v7937, %v7939
  %v8034 = vadd.f32 %v7938, %v7940
  %v8035 = vadd.f32 %v7941, %v7943
  %v8036 = vadd.f32 %v7942, %v7944
  %v8037 = vadd.f32 %v7945, %v7947
  %v8038 = vadd.f32 %v7946, %v7948
  %v8039 = vadd.f32 %v7949, %v7951
  %v8040 = vadd.f32 %v7950, %v7952
  %v8041 = vadd.f32 %v7953, %v7955
  %v8042 = vadd.f32 %v7954, %v7956
  %v8043 = vadd.f32 %v7957, %v7959
  %v8044 = vadd.f32 %v7958, %v7960
  %v8045 = vadd.f32 %v7961, %v7963
  %v8046 = vadd.f32 %v7962, %v7964
  %v8047 = vadd.f32 %v7965, %v7967
  %v8048 = vadd.f32 %v7966, %v7968
  %v8049 = vadd.f32 %v7969, %v7971
  %v8050 = vadd.f32 %v7970, %v7972
  %v8051 = vadd.f32 %v7973, %v7975
  %v8052 = vadd.f32 %v7974, %v7976
  %v8053 = vadd.f32 %v7977, %v7979
  %v8054 = vadd.f32 %v7978, %v7980
  %v8055 = vadd.f32 %v7981, %v7983
  %v8056 = vadd.f32 %v7982, %v7984
  %v8057 = vadd.f32 %v7985, %v7987
  %v8058 = vadd.f32 %v7986, %v7988
  %v8059 = vadd.f32 %v7989, %v7991
  %v8060 = vadd.f32 %v7990, %v7992
  %v8061 = vadd.f32 %v7993, %v7995
  %v8062 = vadd.f32 %v7994, %v7996
  %v8063 = vadd.f32 %v7997, %v7999
  %v8064 = vadd.f32 %v7998, %v8000
  %v8065 = vadd.f32 %v8001, %v8003
  %v8066 = vadd.f32 %v8002, %v8004
  %v8067 = vadd.f32 %v8005, %v8007
  %v8068 = vadd.f32 %v8006, %v8008
  %v8069 = vadd.f32 %v8009, %v8011
  %v8070 = vadd.f32 %v8010, %v8012
  %v8071 = vadd.f32 %v8013, %v8015
  %v8072 = vadd.f32 %v8014, %v8016
  %v8073 = vadd.f32 %v8017, %v8019
  %v8074 = vadd.f32 %v8018, %v8020
  %v8075 = vadd.f32 %v8021, %v8023
  %v8076 = vadd.f32 %v8022, %v8024
  %v8077 = vadd.f32 %v8025, %v8027
  %v8078 = vadd.f32 %v8026, %v8028
  %v8079 = vadd.f32 %v8029, %v8031
  %v8080 = vadd.f32 %v8030, %v8032
  %v8081 = vadd.f32 %v8033, %v8035
  %v8082 = vadd.f32 %v8034, %v8036
  %v8083 = vadd.f32 %v8037, %v8039
  %v8084 = vadd.f32 %v8038, %v8040
  %v8085 = vadd.f32 %v8041, %v8043
  %v8086 = vadd.f32 %v8042, %v8044
  %v8087 = vadd.f32 %v8045, %v8047
  %v8088 = vadd.f32 %v8046, %v8048
  %v8089 = vadd.f32 %v8049, %v8051
  %v8090 = vadd.f32 %v8050, %v8052
  %v8091 = vadd.f32 %v8053, %v8055
  %v8092 = vadd.f32 %v8054, %v8056
  %v8093 = vadd.f32 %v8057, %v8059
  %v8094 = vadd.f32 %v8058, %v8060
  %v8095 = vadd.f32 %v8061, %v8063
  %v8096 = vadd.f32 %v8062, %v8064
  %v8097 = vadd.f32 %v8065, %v8067
  %v8098 = vadd.f32 %v8066, %v8068
  %v8099 = vadd.f32 %v8069, %v8071
  %v8100 = vadd.f32 %v8070, %v8072
  %v8101 = vadd.f32 %v8073, %v8075
  %v8102 = vadd.f32 %v8074, %v8076
  %v8103 = vadd.f32 %v8077, %v8079
  %v8104 = vadd.f32 %v8078, %v8080
  %v8105 = vadd.f32 %v8081, %v8083
  %v8106 = vadd.f32 %v8082, %v8084
  %v8107 = vadd.f32 %v8085, %v8087
  %v8108 = vadd.f32 %v8086, %v8088
  %v8109 = vadd.f32 %v8089, %v8091
  %v8110 = vadd.f32 %v8090, %v8092
  %v8111 = vadd.f32 %v8093, %v8095
  %v8112 = vadd.f32 %v8094, %v8096
  %v8113 = vadd.f32 %v8097, %v8099
  %v8114 = vadd.f32 %v8098, %v8100
  %v8115 = vadd.f32 %v8101, %v8103
  %v8116 = vadd.f32 %v8102, %v8104
  %v8117 = vadd.f32 %v8105, %v8107
  %v8118 = vadd.f32 %v8106, %v8108
  %v8119 = vadd.f32 %v8109, %v8111
  %v8120 = vadd.f32 %v8110, %v8112
  %v8121 = vadd.f32 %v8113, %v8115
  %v8122 = vadd.f32 %v8114, %v8116
  %v8123 = vadd.f32 %v8117, %v8119
  %v8124 = vadd.f32 %v8118, %v8120
  %v8125 = vadd.f32 %v8121, %v8123
  %v8126 = vadd.f32 %v8122, %v8124
  %v8127 = vld [vmem:[%s3 + $0x1] sm:$0x1]
  %v8128 = vlaneseq
  %v8129 = vshrl.u32 %v8128, 7
  %v8130 = vsub.s32 0, %v8129
  %v8131 = vrot.slane %v8127, %v8130
  %v8132 = vadd.f32 %v8125, %v8131
  %v8133 = vadd.f32 %v8126, %v8131
  %s8134 = scalar_lea.vmem %s4, 16
  %8135 = vst [vmem:[%s8134] sm:$0xff] %v8132
  %8136 = vst [vmem:[%s8134 + $0x8] sm:$0xff] %v8133
  %s8137 = scalar_lea.vmem %s2, 2
  %v8138 = vld [vmem:[%s8137] ss:$4 sm:$0xff]
  %s8139 = scalar_lea.vmem %s2, 34
  %v8140 = vld [vmem:[%s8139] ss:$4 sm:$0xff]
  %s8141 = scalar_lea.vmem %s2, 66
  %v8142 = vld [vmem:[%s8141] ss:$4 sm:$0xff]
  %s8143 = scalar_lea.vmem %s2, 98
  %v8144 = vld [vmem:[%s8143] ss:$4 sm:$0xff]
  %s8145 = scalar_lea.vmem %s2, 130
  %v8146 = vld [vmem:[%s8145] ss:$4 sm:$0xff]
  %s8147 = scalar_lea.vmem %s2, 162
  %v8148 = vld [vmem:[%s8147] ss:$4 sm:$0xff]
  %s8149 = scalar_lea.vmem %s2, 194
  %v8150 = vld [vmem:[%s8149] ss:$4 sm:$0xff]
  %s8151 = scalar_lea.vmem %s2, 226
  %v8152 = vld [vmem:[%s8151] ss:$4 sm:$0xff]
  %s8153 = scalar_lea.vmem %s2, 258
  %v8154 = vld [vmem:[%s8153] ss:$4 sm:$0xff]
  %s8155 = scalar_lea.vmem %s2, 290
  %v8156 = vld [vmem:[%s8155] ss:$4 sm:$0xff]
  %s8157 = scalar_lea.vmem %s2, 322
  %v8158 = vld [vmem:[%s8157] ss:$4 sm:$0xff]
  %s8159 = scalar_lea.vmem %s2, 354
  %v8160 = vld [vmem:[%s8159] ss:$4 sm:$0xff]
  %s8161 = scalar_lea.vmem %s2, 386
  %v8162 = vld [vmem:[%s8161] ss:$4 sm:$0xff]
  %s8163 = scalar_lea.vmem %s2, 418
  %v8164 = vld [vmem:[%s8163] ss:$4 sm:$0xff]
  %s8165 = scalar_lea.vmem %s2, 450
  %v8166 = vld [vmem:[%s8165] ss:$4 sm:$0xff]
  %s8167 = scalar_lea.vmem %s2, 482
  %v8168 = vld [vmem:[%s8167] ss:$4 sm:$0xff]
  %v8185 = vlaneseq
  %v8186 = vshrl.u32 %v8185, 7
  %v8187 = vsub.s32 0, %v8186
  %v8188 = vrot.slane %v8138, %v8187
  %v8189 = vlaneseq
  %v8190 = vshrl.u32 %v8189, 7
  %v8191 = vsub.s32 1, %v8190
  %v8192 = vrot.slane %v8138, %v8191
  %v8193 = vlaneseq
  %v8194 = vshrl.u32 %v8193, 7
  %v8195 = vsub.s32 2, %v8194
  %v8196 = vrot.slane %v8138, %v8195
  %v8197 = vlaneseq
  %v8198 = vshrl.u32 %v8197, 7
  %v8199 = vsub.s32 3, %v8198
  %v8200 = vrot.slane %v8138, %v8199
  %v8201 = vlaneseq
  %v8202 = vshrl.u32 %v8201, 7
  %v8203 = vsub.s32 4, %v8202
  %v8204 = vrot.slane %v8138, %v8203
  %v8205 = vlaneseq
  %v8206 = vshrl.u32 %v8205, 7
  %v8207 = vsub.s32 5, %v8206
  %v8208 = vrot.slane %v8138, %v8207
  %v8209 = vlaneseq
  %v8210 = vshrl.u32 %v8209, 7
  %v8211 = vsub.s32 6, %v8210
  %v8212 = vrot.slane %v8138, %v8211
  %v8213 = vlaneseq
  %v8214 = vshrl.u32 %v8213, 7
  %v8215 = vsub.s32 7, %v8214
  %v8216 = vrot.slane %v8138, %v8215
  %v8217 = vlaneseq
  %v8218 = vshrl.u32 %v8217, 7
  %v8219 = vsub.s32 0, %v8218
  %v8220 = vrot.slane %v8140, %v8219
  %v8221 = vlaneseq
  %v8222 = vshrl.u32 %v8221, 7
  %v8223 = vsub.s32 1, %v8222
  %v8224 = vrot.slane %v8140, %v8223
  %v8225 = vlaneseq
  %v8226 = vshrl.u32 %v8225, 7
  %v8227 = vsub.s32 2, %v8226
  %v8228 = vrot.slane %v8140, %v8227
  %v8229 = vlaneseq
  %v8230 = vshrl.u32 %v8229, 7
  %v8231 = vsub.s32 3, %v8230
  %v8232 = vrot.slane %v8140, %v8231
  %v8233 = vlaneseq
  %v8234 = vshrl.u32 %v8233, 7
  %v8235 = vsub.s32 4, %v8234
  %v8236 = vrot.slane %v8140, %v8235
  %v8237 = vlaneseq
  %v8238 = vshrl.u32 %v8237, 7
  %v8239 = vsub.s32 5, %v8238
  %v8240 = vrot.slane %v8140, %v8239
  %v8241 = vlaneseq
  %v8242 = vshrl.u32 %v8241, 7
  %v8243 = vsub.s32 6, %v8242
  %v8244 = vrot.slane %v8140, %v8243
  %v8245 = vlaneseq
  %v8246 = vshrl.u32 %v8245, 7
  %v8247 = vsub.s32 7, %v8246
  %v8248 = vrot.slane %v8140, %v8247
  %v8249 = vlaneseq
  %v8250 = vshrl.u32 %v8249, 7
  %v8251 = vsub.s32 0, %v8250
  %v8252 = vrot.slane %v8142, %v8251
  %v8253 = vlaneseq
  %v8254 = vshrl.u32 %v8253, 7
  %v8255 = vsub.s32 1, %v8254
  %v8256 = vrot.slane %v8142, %v8255
  %v8257 = vlaneseq
  %v8258 = vshrl.u32 %v8257, 7
  %v8259 = vsub.s32 2, %v8258
  %v8260 = vrot.slane %v8142, %v8259
  %v8261 = vlaneseq
  %v8262 = vshrl.u32 %v8261, 7
  %v8263 = vsub.s32 3, %v8262
  %v8264 = vrot.slane %v8142, %v8263
  %v8265 = vlaneseq
  %v8266 = vshrl.u32 %v8265, 7
  %v8267 = vsub.s32 4, %v8266
  %v8268 = vrot.slane %v8142, %v8267
  %v8269 = vlaneseq
  %v8270 = vshrl.u32 %v8269, 7
  %v8271 = vsub.s32 5, %v8270
  %v8272 = vrot.slane %v8142, %v8271
  %v8273 = vlaneseq
  %v8274 = vshrl.u32 %v8273, 7
  %v8275 = vsub.s32 6, %v8274
  %v8276 = vrot.slane %v8142, %v8275
  %v8277 = vlaneseq
  %v8278 = vshrl.u32 %v8277, 7
  %v8279 = vsub.s32 7, %v8278
  %v8280 = vrot.slane %v8142, %v8279
  %v8281 = vlaneseq
  %v8282 = vshrl.u32 %v8281, 7
  %v8283 = vsub.s32 0, %v8282
  %v8284 = vrot.slane %v8144, %v8283
  %v8285 = vlaneseq
  %v8286 = vshrl.u32 %v8285, 7
  %v8287 = vsub.s32 1, %v8286
  %v8288 = vrot.slane %v8144, %v8287
  %v8289 = vlaneseq
  %v8290 = vshrl.u32 %v8289, 7
  %v8291 = vsub.s32 2, %v8290
  %v8292 = vrot.slane %v8144, %v8291
  %v8293 = vlaneseq
  %v8294 = vshrl.u32 %v8293, 7
  %v8295 = vsub.s32 3, %v8294
  %v8296 = vrot.slane %v8144, %v8295
  %v8297 = vlaneseq
  %v8298 = vshrl.u32 %v8297, 7
  %v8299 = vsub.s32 4, %v8298
  %v8300 = vrot.slane %v8144, %v8299
  %v8301 = vlaneseq
  %v8302 = vshrl.u32 %v8301, 7
  %v8303 = vsub.s32 5, %v8302
  %v8304 = vrot.slane %v8144, %v8303
  %v8305 = vlaneseq
  %v8306 = vshrl.u32 %v8305, 7
  %v8307 = vsub.s32 6, %v8306
  %v8308 = vrot.slane %v8144, %v8307
  %v8309 = vlaneseq
  %v8310 = vshrl.u32 %v8309, 7
  %v8311 = vsub.s32 7, %v8310
  %v8312 = vrot.slane %v8144, %v8311
  %v8313 = vlaneseq
  %v8314 = vshrl.u32 %v8313, 7
  %v8315 = vsub.s32 0, %v8314
  %v8316 = vrot.slane %v8146, %v8315
  %v8317 = vlaneseq
  %v8318 = vshrl.u32 %v8317, 7
  %v8319 = vsub.s32 1, %v8318
  %v8320 = vrot.slane %v8146, %v8319
  %v8321 = vlaneseq
  %v8322 = vshrl.u32 %v8321, 7
  %v8323 = vsub.s32 2, %v8322
  %v8324 = vrot.slane %v8146, %v8323
  %v8325 = vlaneseq
  %v8326 = vshrl.u32 %v8325, 7
  %v8327 = vsub.s32 3, %v8326
  %v8328 = vrot.slane %v8146, %v8327
  %v8329 = vlaneseq
  %v8330 = vshrl.u32 %v8329, 7
  %v8331 = vsub.s32 4, %v8330
  %v8332 = vrot.slane %v8146, %v8331
  %v8333 = vlaneseq
  %v8334 = vshrl.u32 %v8333, 7
  %v8335 = vsub.s32 5, %v8334
  %v8336 = vrot.slane %v8146, %v8335
  %v8337 = vlaneseq
  %v8338 = vshrl.u32 %v8337, 7
  %v8339 = vsub.s32 6, %v8338
  %v8340 = vrot.slane %v8146, %v8339
  %v8341 = vlaneseq
  %v8342 = vshrl.u32 %v8341, 7
  %v8343 = vsub.s32 7, %v8342
  %v8344 = vrot.slane %v8146, %v8343
  %v8345 = vlaneseq
  %v8346 = vshrl.u32 %v8345, 7
  %v8347 = vsub.s32 0, %v8346
  %v8348 = vrot.slane %v8148, %v8347
  %v8349 = vlaneseq
  %v8350 = vshrl.u32 %v8349, 7
  %v8351 = vsub.s32 1, %v8350
  %v8352 = vrot.slane %v8148, %v8351
  %v8353 = vlaneseq
  %v8354 = vshrl.u32 %v8353, 7
  %v8355 = vsub.s32 2, %v8354
  %v8356 = vrot.slane %v8148, %v8355
  %v8357 = vlaneseq
  %v8358 = vshrl.u32 %v8357, 7
  %v8359 = vsub.s32 3, %v8358
  %v8360 = vrot.slane %v8148, %v8359
  %v8361 = vlaneseq
  %v8362 = vshrl.u32 %v8361, 7
  %v8363 = vsub.s32 4, %v8362
  %v8364 = vrot.slane %v8148, %v8363
  %v8365 = vlaneseq
  %v8366 = vshrl.u32 %v8365, 7
  %v8367 = vsub.s32 5, %v8366
  %v8368 = vrot.slane %v8148, %v8367
  %v8369 = vlaneseq
  %v8370 = vshrl.u32 %v8369, 7
  %v8371 = vsub.s32 6, %v8370
  %v8372 = vrot.slane %v8148, %v8371
  %v8373 = vlaneseq
  %v8374 = vshrl.u32 %v8373, 7
  %v8375 = vsub.s32 7, %v8374
  %v8376 = vrot.slane %v8148, %v8375
  %v8377 = vlaneseq
  %v8378 = vshrl.u32 %v8377, 7
  %v8379 = vsub.s32 0, %v8378
  %v8380 = vrot.slane %v8150, %v8379
  %v8381 = vlaneseq
  %v8382 = vshrl.u32 %v8381, 7
  %v8383 = vsub.s32 1, %v8382
  %v8384 = vrot.slane %v8150, %v8383
  %v8385 = vlaneseq
  %v8386 = vshrl.u32 %v8385, 7
  %v8387 = vsub.s32 2, %v8386
  %v8388 = vrot.slane %v8150, %v8387
  %v8389 = vlaneseq
  %v8390 = vshrl.u32 %v8389, 7
  %v8391 = vsub.s32 3, %v8390
  %v8392 = vrot.slane %v8150, %v8391
  %v8393 = vlaneseq
  %v8394 = vshrl.u32 %v8393, 7
  %v8395 = vsub.s32 4, %v8394
  %v8396 = vrot.slane %v8150, %v8395
  %v8397 = vlaneseq
  %v8398 = vshrl.u32 %v8397, 7
  %v8399 = vsub.s32 5, %v8398
  %v8400 = vrot.slane %v8150, %v8399
  %v8401 = vlaneseq
  %v8402 = vshrl.u32 %v8401, 7
  %v8403 = vsub.s32 6, %v8402
  %v8404 = vrot.slane %v8150, %v8403
  %v8405 = vlaneseq
  %v8406 = vshrl.u32 %v8405, 7
  %v8407 = vsub.s32 7, %v8406
  %v8408 = vrot.slane %v8150, %v8407
  %v8409 = vlaneseq
  %v8410 = vshrl.u32 %v8409, 7
  %v8411 = vsub.s32 0, %v8410
  %v8412 = vrot.slane %v8152, %v8411
  %v8413 = vlaneseq
  %v8414 = vshrl.u32 %v8413, 7
  %v8415 = vsub.s32 1, %v8414
  %v8416 = vrot.slane %v8152, %v8415
  %v8417 = vlaneseq
  %v8418 = vshrl.u32 %v8417, 7
  %v8419 = vsub.s32 2, %v8418
  %v8420 = vrot.slane %v8152, %v8419
  %v8421 = vlaneseq
  %v8422 = vshrl.u32 %v8421, 7
  %v8423 = vsub.s32 3, %v8422
  %v8424 = vrot.slane %v8152, %v8423
  %v8425 = vlaneseq
  %v8426 = vshrl.u32 %v8425, 7
  %v8427 = vsub.s32 4, %v8426
  %v8428 = vrot.slane %v8152, %v8427
  %v8429 = vlaneseq
  %v8430 = vshrl.u32 %v8429, 7
  %v8431 = vsub.s32 5, %v8430
  %v8432 = vrot.slane %v8152, %v8431
  %v8433 = vlaneseq
  %v8434 = vshrl.u32 %v8433, 7
  %v8435 = vsub.s32 6, %v8434
  %v8436 = vrot.slane %v8152, %v8435
  %v8437 = vlaneseq
  %v8438 = vshrl.u32 %v8437, 7
  %v8439 = vsub.s32 7, %v8438
  %v8440 = vrot.slane %v8152, %v8439
  %v8441 = vlaneseq
  %v8442 = vshrl.u32 %v8441, 7
  %v8443 = vsub.s32 0, %v8442
  %v8444 = vrot.slane %v8154, %v8443
  %v8445 = vlaneseq
  %v8446 = vshrl.u32 %v8445, 7
  %v8447 = vsub.s32 1, %v8446
  %v8448 = vrot.slane %v8154, %v8447
  %v8449 = vlaneseq
  %v8450 = vshrl.u32 %v8449, 7
  %v8451 = vsub.s32 2, %v8450
  %v8452 = vrot.slane %v8154, %v8451
  %v8453 = vlaneseq
  %v8454 = vshrl.u32 %v8453, 7
  %v8455 = vsub.s32 3, %v8454
  %v8456 = vrot.slane %v8154, %v8455
  %v8457 = vlaneseq
  %v8458 = vshrl.u32 %v8457, 7
  %v8459 = vsub.s32 4, %v8458
  %v8460 = vrot.slane %v8154, %v8459
  %v8461 = vlaneseq
  %v8462 = vshrl.u32 %v8461, 7
  %v8463 = vsub.s32 5, %v8462
  %v8464 = vrot.slane %v8154, %v8463
  %v8465 = vlaneseq
  %v8466 = vshrl.u32 %v8465, 7
  %v8467 = vsub.s32 6, %v8466
  %v8468 = vrot.slane %v8154, %v8467
  %v8469 = vlaneseq
  %v8470 = vshrl.u32 %v8469, 7
  %v8471 = vsub.s32 7, %v8470
  %v8472 = vrot.slane %v8154, %v8471
  %v8473 = vlaneseq
  %v8474 = vshrl.u32 %v8473, 7
  %v8475 = vsub.s32 0, %v8474
  %v8476 = vrot.slane %v8156, %v8475
  %v8477 = vlaneseq
  %v8478 = vshrl.u32 %v8477, 7
  %v8479 = vsub.s32 1, %v8478
  %v8480 = vrot.slane %v8156, %v8479
  %v8481 = vlaneseq
  %v8482 = vshrl.u32 %v8481, 7
  %v8483 = vsub.s32 2, %v8482
  %v8484 = vrot.slane %v8156, %v8483
  %v8485 = vlaneseq
  %v8486 = vshrl.u32 %v8485, 7
  %v8487 = vsub.s32 3, %v8486
  %v8488 = vrot.slane %v8156, %v8487
  %v8489 = vlaneseq
  %v8490 = vshrl.u32 %v8489, 7
  %v8491 = vsub.s32 4, %v8490
  %v8492 = vrot.slane %v8156, %v8491
  %v8493 = vlaneseq
  %v8494 = vshrl.u32 %v8493, 7
  %v8495 = vsub.s32 5, %v8494
  %v8496 = vrot.slane %v8156, %v8495
  %v8497 = vlaneseq
  %v8498 = vshrl.u32 %v8497, 7
  %v8499 = vsub.s32 6, %v8498
  %v8500 = vrot.slane %v8156, %v8499
  %v8501 = vlaneseq
  %v8502 = vshrl.u32 %v8501, 7
  %v8503 = vsub.s32 7, %v8502
  %v8504 = vrot.slane %v8156, %v8503
  %v8505 = vlaneseq
  %v8506 = vshrl.u32 %v8505, 7
  %v8507 = vsub.s32 0, %v8506
  %v8508 = vrot.slane %v8158, %v8507
  %v8509 = vlaneseq
  %v8510 = vshrl.u32 %v8509, 7
  %v8511 = vsub.s32 1, %v8510
  %v8512 = vrot.slane %v8158, %v8511
  %v8513 = vlaneseq
  %v8514 = vshrl.u32 %v8513, 7
  %v8515 = vsub.s32 2, %v8514
  %v8516 = vrot.slane %v8158, %v8515
  %v8517 = vlaneseq
  %v8518 = vshrl.u32 %v8517, 7
  %v8519 = vsub.s32 3, %v8518
  %v8520 = vrot.slane %v8158, %v8519
  %v8521 = vlaneseq
  %v8522 = vshrl.u32 %v8521, 7
  %v8523 = vsub.s32 4, %v8522
  %v8524 = vrot.slane %v8158, %v8523
  %v8525 = vlaneseq
  %v8526 = vshrl.u32 %v8525, 7
  %v8527 = vsub.s32 5, %v8526
  %v8528 = vrot.slane %v8158, %v8527
  %v8529 = vlaneseq
  %v8530 = vshrl.u32 %v8529, 7
  %v8531 = vsub.s32 6, %v8530
  %v8532 = vrot.slane %v8158, %v8531
  %v8533 = vlaneseq
  %v8534 = vshrl.u32 %v8533, 7
  %v8535 = vsub.s32 7, %v8534
  %v8536 = vrot.slane %v8158, %v8535
  %v8537 = vlaneseq
  %v8538 = vshrl.u32 %v8537, 7
  %v8539 = vsub.s32 0, %v8538
  %v8540 = vrot.slane %v8160, %v8539
  %v8541 = vlaneseq
  %v8542 = vshrl.u32 %v8541, 7
  %v8543 = vsub.s32 1, %v8542
  %v8544 = vrot.slane %v8160, %v8543
  %v8545 = vlaneseq
  %v8546 = vshrl.u32 %v8545, 7
  %v8547 = vsub.s32 2, %v8546
  %v8548 = vrot.slane %v8160, %v8547
  %v8549 = vlaneseq
  %v8550 = vshrl.u32 %v8549, 7
  %v8551 = vsub.s32 3, %v8550
  %v8552 = vrot.slane %v8160, %v8551
  %v8553 = vlaneseq
  %v8554 = vshrl.u32 %v8553, 7
  %v8555 = vsub.s32 4, %v8554
  %v8556 = vrot.slane %v8160, %v8555
  %v8557 = vlaneseq
  %v8558 = vshrl.u32 %v8557, 7
  %v8559 = vsub.s32 5, %v8558
  %v8560 = vrot.slane %v8160, %v8559
  %v8561 = vlaneseq
  %v8562 = vshrl.u32 %v8561, 7
  %v8563 = vsub.s32 6, %v8562
  %v8564 = vrot.slane %v8160, %v8563
  %v8565 = vlaneseq
  %v8566 = vshrl.u32 %v8565, 7
  %v8567 = vsub.s32 7, %v8566
  %v8568 = vrot.slane %v8160, %v8567
  %v8569 = vlaneseq
  %v8570 = vshrl.u32 %v8569, 7
  %v8571 = vsub.s32 0, %v8570
  %v8572 = vrot.slane %v8162, %v8571
  %v8573 = vlaneseq
  %v8574 = vshrl.u32 %v8573, 7
  %v8575 = vsub.s32 1, %v8574
  %v8576 = vrot.slane %v8162, %v8575
  %v8577 = vlaneseq
  %v8578 = vshrl.u32 %v8577, 7
  %v8579 = vsub.s32 2, %v8578
  %v8580 = vrot.slane %v8162, %v8579
  %v8581 = vlaneseq
  %v8582 = vshrl.u32 %v8581, 7
  %v8583 = vsub.s32 3, %v8582
  %v8584 = vrot.slane %v8162, %v8583
  %v8585 = vlaneseq
  %v8586 = vshrl.u32 %v8585, 7
  %v8587 = vsub.s32 4, %v8586
  %v8588 = vrot.slane %v8162, %v8587
  %v8589 = vlaneseq
  %v8590 = vshrl.u32 %v8589, 7
  %v8591 = vsub.s32 5, %v8590
  %v8592 = vrot.slane %v8162, %v8591
  %v8593 = vlaneseq
  %v8594 = vshrl.u32 %v8593, 7
  %v8595 = vsub.s32 6, %v8594
  %v8596 = vrot.slane %v8162, %v8595
  %v8597 = vlaneseq
  %v8598 = vshrl.u32 %v8597, 7
  %v8599 = vsub.s32 7, %v8598
  %v8600 = vrot.slane %v8162, %v8599
  %v8601 = vlaneseq
  %v8602 = vshrl.u32 %v8601, 7
  %v8603 = vsub.s32 0, %v8602
  %v8604 = vrot.slane %v8164, %v8603
  %v8605 = vlaneseq
  %v8606 = vshrl.u32 %v8605, 7
  %v8607 = vsub.s32 1, %v8606
  %v8608 = vrot.slane %v8164, %v8607
  %v8609 = vlaneseq
  %v8610 = vshrl.u32 %v8609, 7
  %v8611 = vsub.s32 2, %v8610
  %v8612 = vrot.slane %v8164, %v8611
  %v8613 = vlaneseq
  %v8614 = vshrl.u32 %v8613, 7
  %v8615 = vsub.s32 3, %v8614
  %v8616 = vrot.slane %v8164, %v8615
  %v8617 = vlaneseq
  %v8618 = vshrl.u32 %v8617, 7
  %v8619 = vsub.s32 4, %v8618
  %v8620 = vrot.slane %v8164, %v8619
  %v8621 = vlaneseq
  %v8622 = vshrl.u32 %v8621, 7
  %v8623 = vsub.s32 5, %v8622
  %v8624 = vrot.slane %v8164, %v8623
  %v8625 = vlaneseq
  %v8626 = vshrl.u32 %v8625, 7
  %v8627 = vsub.s32 6, %v8626
  %v8628 = vrot.slane %v8164, %v8627
  %v8629 = vlaneseq
  %v8630 = vshrl.u32 %v8629, 7
  %v8631 = vsub.s32 7, %v8630
  %v8632 = vrot.slane %v8164, %v8631
  %v8633 = vlaneseq
  %v8634 = vshrl.u32 %v8633, 7
  %v8635 = vsub.s32 0, %v8634
  %v8636 = vrot.slane %v8166, %v8635
  %v8637 = vlaneseq
  %v8638 = vshrl.u32 %v8637, 7
  %v8639 = vsub.s32 1, %v8638
  %v8640 = vrot.slane %v8166, %v8639
  %v8641 = vlaneseq
  %v8642 = vshrl.u32 %v8641, 7
  %v8643 = vsub.s32 2, %v8642
  %v8644 = vrot.slane %v8166, %v8643
  %v8645 = vlaneseq
  %v8646 = vshrl.u32 %v8645, 7
  %v8647 = vsub.s32 3, %v8646
  %v8648 = vrot.slane %v8166, %v8647
  %v8649 = vlaneseq
  %v8650 = vshrl.u32 %v8649, 7
  %v8651 = vsub.s32 4, %v8650
  %v8652 = vrot.slane %v8166, %v8651
  %v8653 = vlaneseq
  %v8654 = vshrl.u32 %v8653, 7
  %v8655 = vsub.s32 5, %v8654
  %v8656 = vrot.slane %v8166, %v8655
  %v8657 = vlaneseq
  %v8658 = vshrl.u32 %v8657, 7
  %v8659 = vsub.s32 6, %v8658
  %v8660 = vrot.slane %v8166, %v8659
  %v8661 = vlaneseq
  %v8662 = vshrl.u32 %v8661, 7
  %v8663 = vsub.s32 7, %v8662
  %v8664 = vrot.slane %v8166, %v8663
  %v8665 = vlaneseq
  %v8666 = vshrl.u32 %v8665, 7
  %v8667 = vsub.s32 0, %v8666
  %v8668 = vrot.slane %v8168, %v8667
  %v8669 = vlaneseq
  %v8670 = vshrl.u32 %v8669, 7
  %v8671 = vsub.s32 1, %v8670
  %v8672 = vrot.slane %v8168, %v8671
  %v8673 = vlaneseq
  %v8674 = vshrl.u32 %v8673, 7
  %v8675 = vsub.s32 2, %v8674
  %v8676 = vrot.slane %v8168, %v8675
  %v8677 = vlaneseq
  %v8678 = vshrl.u32 %v8677, 7
  %v8679 = vsub.s32 3, %v8678
  %v8680 = vrot.slane %v8168, %v8679
  %v8681 = vlaneseq
  %v8682 = vshrl.u32 %v8681, 7
  %v8683 = vsub.s32 4, %v8682
  %v8684 = vrot.slane %v8168, %v8683
  %v8685 = vlaneseq
  %v8686 = vshrl.u32 %v8685, 7
  %v8687 = vsub.s32 5, %v8686
  %v8688 = vrot.slane %v8168, %v8687
  %v8689 = vlaneseq
  %v8690 = vshrl.u32 %v8689, 7
  %v8691 = vsub.s32 6, %v8690
  %v8692 = vrot.slane %v8168, %v8691
  %v8693 = vlaneseq
  %v8694 = vshrl.u32 %v8693, 7
  %v8695 = vsub.s32 7, %v8694
  %v8696 = vrot.slane %v8168, %v8695
  %v8825 = vmul.f32 %v5467, %v8188
  %v8826 = vmul.f32 %v5468, %v8192
  %v8827 = vmul.f32 %v5469, %v8196
  %v8828 = vmul.f32 %v5470, %v8200
  %v8829 = vmul.f32 %v5471, %v8204
  %v8830 = vmul.f32 %v5472, %v8208
  %v8831 = vmul.f32 %v5473, %v8212
  %v8832 = vmul.f32 %v5474, %v8216
  %v8833 = vmul.f32 %v5475, %v8220
  %v8834 = vmul.f32 %v5476, %v8224
  %v8835 = vmul.f32 %v5477, %v8228
  %v8836 = vmul.f32 %v5478, %v8232
  %v8837 = vmul.f32 %v5479, %v8236
  %v8838 = vmul.f32 %v5480, %v8240
  %v8839 = vmul.f32 %v5481, %v8244
  %v8840 = vmul.f32 %v5482, %v8248
  %v8841 = vmul.f32 %v5483, %v8252
  %v8842 = vmul.f32 %v5484, %v8256
  %v8843 = vmul.f32 %v5485, %v8260
  %v8844 = vmul.f32 %v5486, %v8264
  %v8845 = vmul.f32 %v5487, %v8268
  %v8846 = vmul.f32 %v5488, %v8272
  %v8847 = vmul.f32 %v5489, %v8276
  %v8848 = vmul.f32 %v5490, %v8280
  %v8849 = vmul.f32 %v5491, %v8284
  %v8850 = vmul.f32 %v5492, %v8288
  %v8851 = vmul.f32 %v5493, %v8292
  %v8852 = vmul.f32 %v5494, %v8296
  %v8853 = vmul.f32 %v5495, %v8300
  %v8854 = vmul.f32 %v5496, %v8304
  %v8855 = vmul.f32 %v5497, %v8308
  %v8856 = vmul.f32 %v5498, %v8312
  %v8857 = vmul.f32 %v5499, %v8316
  %v8858 = vmul.f32 %v5500, %v8320
  %v8859 = vmul.f32 %v5501, %v8324
  %v8860 = vmul.f32 %v5502, %v8328
  %v8861 = vmul.f32 %v5503, %v8332
  %v8862 = vmul.f32 %v5504, %v8336
  %v8863 = vmul.f32 %v5505, %v8340
  %v8864 = vmul.f32 %v5506, %v8344
  %v8865 = vmul.f32 %v5507, %v8348
  %v8866 = vmul.f32 %v5508, %v8352
  %v8867 = vmul.f32 %v5509, %v8356
  %v8868 = vmul.f32 %v5510, %v8360
  %v8869 = vmul.f32 %v5511, %v8364
  %v8870 = vmul.f32 %v5512, %v8368
  %v8871 = vmul.f32 %v5513, %v8372
  %v8872 = vmul.f32 %v5514, %v8376
  %v8873 = vmul.f32 %v5515, %v8380
  %v8874 = vmul.f32 %v5516, %v8384
  %v8875 = vmul.f32 %v5517, %v8388
  %v8876 = vmul.f32 %v5518, %v8392
  %v8877 = vmul.f32 %v5519, %v8396
  %v8878 = vmul.f32 %v5520, %v8400
  %v8879 = vmul.f32 %v5521, %v8404
  %v8880 = vmul.f32 %v5522, %v8408
  %v8881 = vmul.f32 %v5523, %v8412
  %v8882 = vmul.f32 %v5524, %v8416
  %v8883 = vmul.f32 %v5525, %v8420
  %v8884 = vmul.f32 %v5526, %v8424
  %v8885 = vmul.f32 %v5527, %v8428
  %v8886 = vmul.f32 %v5528, %v8432
  %v8887 = vmul.f32 %v5529, %v8436
  %v8888 = vmul.f32 %v5530, %v8440
  %v8889 = vmul.f32 %v5531, %v8444
  %v8890 = vmul.f32 %v5532, %v8448
  %v8891 = vmul.f32 %v5533, %v8452
  %v8892 = vmul.f32 %v5534, %v8456
  %v8893 = vmul.f32 %v5535, %v8460
  %v8894 = vmul.f32 %v5536, %v8464
  %v8895 = vmul.f32 %v5537, %v8468
  %v8896 = vmul.f32 %v5538, %v8472
  %v8897 = vmul.f32 %v5539, %v8476
  %v8898 = vmul.f32 %v5540, %v8480
  %v8899 = vmul.f32 %v5541, %v8484
  %v8900 = vmul.f32 %v5542, %v8488
  %v8901 = vmul.f32 %v5543, %v8492
  %v8902 = vmul.f32 %v5544, %v8496
  %v8903 = vmul.f32 %v5545, %v8500
  %v8904 = vmul.f32 %v5546, %v8504
  %v8905 = vmul.f32 %v5547, %v8508
  %v8906 = vmul.f32 %v5548, %v8512
  %v8907 = vmul.f32 %v5549, %v8516
  %v8908 = vmul.f32 %v5550, %v8520
  %v8909 = vmul.f32 %v5551, %v8524
  %v8910 = vmul.f32 %v5552, %v8528
  %v8911 = vmul.f32 %v5553, %v8532
  %v8912 = vmul.f32 %v5554, %v8536
  %v8913 = vmul.f32 %v5555, %v8540
  %v8914 = vmul.f32 %v5556, %v8544
  %v8915 = vmul.f32 %v5557, %v8548
  %v8916 = vmul.f32 %v5558, %v8552
  %v8917 = vmul.f32 %v5559, %v8556
  %v8918 = vmul.f32 %v5560, %v8560
  %v8919 = vmul.f32 %v5561, %v8564
  %v8920 = vmul.f32 %v5562, %v8568
  %v8921 = vmul.f32 %v5563, %v8572
  %v8922 = vmul.f32 %v5564, %v8576
  %v8923 = vmul.f32 %v5565, %v8580
  %v8924 = vmul.f32 %v5566, %v8584
  %v8925 = vmul.f32 %v5567, %v8588
  %v8926 = vmul.f32 %v5568, %v8592
  %v8927 = vmul.f32 %v5569, %v8596
  %v8928 = vmul.f32 %v5570, %v8600
  %v8929 = vmul.f32 %v5571, %v8604
  %v8930 = vmul.f32 %v5572, %v8608
  %v8931 = vmul.f32 %v5573, %v8612
  %v8932 = vmul.f32 %v5574, %v8616
  %v8933 = vmul.f32 %v5575, %v8620
  %v8934 = vmul.f32 %v5576, %v8624
  %v8935 = vmul.f32 %v5577, %v8628
  %v8936 = vmul.f32 %v5578, %v8632
  %v8937 = vmul.f32 %v5579, %v8636
  %v8938 = vmul.f32 %v5580, %v8640
  %v8939 = vmul.f32 %v5581, %v8644
  %v8940 = vmul.f32 %v5582, %v8648
  %v8941 = vmul.f32 %v5583, %v8652
  %v8942 = vmul.f32 %v5584, %v8656
  %v8943 = vmul.f32 %v5585, %v8660
  %v8944 = vmul.f32 %v5586, %v8664
  %v8945 = vmul.f32 %v5587, %v8668
  %v8946 = vmul.f32 %v5588, %v8672
  %v8947 = vmul.f32 %v5589, %v8676
  %v8948 = vmul.f32 %v5590, %v8680
  %v8949 = vmul.f32 %v5591, %v8684
  %v8950 = vmul.f32 %v5592, %v8688
  %v8951 = vmul.f32 %v5593, %v8692
  %v8952 = vmul.f32 %v5594, %v8696
  %v8953 = vmul.f32 %v5595, %v8188
  %v8954 = vmul.f32 %v5596, %v8192
  %v8955 = vmul.f32 %v5597, %v8196
  %v8956 = vmul.f32 %v5598, %v8200
  %v8957 = vmul.f32 %v5599, %v8204
  %v8958 = vmul.f32 %v5600, %v8208
  %v8959 = vmul.f32 %v5601, %v8212
  %v8960 = vmul.f32 %v5602, %v8216
  %v8961 = vmul.f32 %v5603, %v8220
  %v8962 = vmul.f32 %v5604, %v8224
  %v8963 = vmul.f32 %v5605, %v8228
  %v8964 = vmul.f32 %v5606, %v8232
  %v8965 = vmul.f32 %v5607, %v8236
  %v8966 = vmul.f32 %v5608, %v8240
  %v8967 = vmul.f32 %v5609, %v8244
  %v8968 = vmul.f32 %v5610, %v8248
  %v8969 = vmul.f32 %v5611, %v8252
  %v8970 = vmul.f32 %v5612, %v8256
  %v8971 = vmul.f32 %v5613, %v8260
  %v8972 = vmul.f32 %v5614, %v8264
  %v8973 = vmul.f32 %v5615, %v8268
  %v8974 = vmul.f32 %v5616, %v8272
  %v8975 = vmul.f32 %v5617, %v8276
  %v8976 = vmul.f32 %v5618, %v8280
  %v8977 = vmul.f32 %v5619, %v8284
  %v8978 = vmul.f32 %v5620, %v8288
  %v8979 = vmul.f32 %v5621, %v8292
  %v8980 = vmul.f32 %v5622, %v8296
  %v8981 = vmul.f32 %v5623, %v8300
  %v8982 = vmul.f32 %v5624, %v8304
  %v8983 = vmul.f32 %v5625, %v8308
  %v8984 = vmul.f32 %v5626, %v8312
  %v8985 = vmul.f32 %v5627, %v8316
  %v8986 = vmul.f32 %v5628, %v8320
  %v8987 = vmul.f32 %v5629, %v8324
  %v8988 = vmul.f32 %v5630, %v8328
  %v8989 = vmul.f32 %v5631, %v8332
  %v8990 = vmul.f32 %v5632, %v8336
  %v8991 = vmul.f32 %v5633, %v8340
  %v8992 = vmul.f32 %v5634, %v8344
  %v8993 = vmul.f32 %v5635, %v8348
  %v8994 = vmul.f32 %v5636, %v8352
  %v8995 = vmul.f32 %v5637, %v8356
  %v8996 = vmul.f32 %v5638, %v8360
  %v8997 = vmul.f32 %v5639, %v8364
  %v8998 = vmul.f32 %v5640, %v8368
  %v8999 = vmul.f32 %v5641, %v8372
  %v9000 = vmul.f32 %v5642, %v8376
  %v9001 = vmul.f32 %v5643, %v8380
  %v9002 = vmul.f32 %v5644, %v8384
  %v9003 = vmul.f32 %v5645, %v8388
  %v9004 = vmul.f32 %v5646, %v8392
  %v9005 = vmul.f32 %v5647, %v8396
  %v9006 = vmul.f32 %v5648, %v8400
  %v9007 = vmul.f32 %v5649, %v8404
  %v9008 = vmul.f32 %v5650, %v8408
  %v9009 = vmul.f32 %v5651, %v8412
  %v9010 = vmul.f32 %v5652, %v8416
  %v9011 = vmul.f32 %v5653, %v8420
  %v9012 = vmul.f32 %v5654, %v8424
  %v9013 = vmul.f32 %v5655, %v8428
  %v9014 = vmul.f32 %v5656, %v8432
  %v9015 = vmul.f32 %v5657, %v8436
  %v9016 = vmul.f32 %v5658, %v8440
  %v9017 = vmul.f32 %v5659, %v8444
  %v9018 = vmul.f32 %v5660, %v8448
  %v9019 = vmul.f32 %v5661, %v8452
  %v9020 = vmul.f32 %v5662, %v8456
  %v9021 = vmul.f32 %v5663, %v8460
  %v9022 = vmul.f32 %v5664, %v8464
  %v9023 = vmul.f32 %v5665, %v8468
  %v9024 = vmul.f32 %v5666, %v8472
  %v9025 = vmul.f32 %v5667, %v8476
  %v9026 = vmul.f32 %v5668, %v8480
  %v9027 = vmul.f32 %v5669, %v8484
  %v9028 = vmul.f32 %v5670, %v8488
  %v9029 = vmul.f32 %v5671, %v8492
  %v9030 = vmul.f32 %v5672, %v8496
  %v9031 = vmul.f32 %v5673, %v8500
  %v9032 = vmul.f32 %v5674, %v8504
  %v9033 = vmul.f32 %v5675, %v8508
  %v9034 = vmul.f32 %v5676, %v8512
  %v9035 = vmul.f32 %v5677, %v8516
  %v9036 = vmul.f32 %v5678, %v8520
  %v9037 = vmul.f32 %v5679, %v8524
  %v9038 = vmul.f32 %v5680, %v8528
  %v9039 = vmul.f32 %v5681, %v8532
  %v9040 = vmul.f32 %v5682, %v8536
  %v9041 = vmul.f32 %v5683, %v8540
  %v9042 = vmul.f32 %v5684, %v8544
  %v9043 = vmul.f32 %v5685, %v8548
  %v9044 = vmul.f32 %v5686, %v8552
  %v9045 = vmul.f32 %v5687, %v8556
  %v9046 = vmul.f32 %v5688, %v8560
  %v9047 = vmul.f32 %v5689, %v8564
  %v9048 = vmul.f32 %v5690, %v8568
  %v9049 = vmul.f32 %v5691, %v8572
  %v9050 = vmul.f32 %v5692, %v8576
  %v9051 = vmul.f32 %v5693, %v8580
  %v9052 = vmul.f32 %v5694, %v8584
  %v9053 = vmul.f32 %v5695, %v8588
  %v9054 = vmul.f32 %v5696, %v8592
  %v9055 = vmul.f32 %v5697, %v8596
  %v9056 = vmul.f32 %v5698, %v8600
  %v9057 = vmul.f32 %v5699, %v8604
  %v9058 = vmul.f32 %v5700, %v8608
  %v9059 = vmul.f32 %v5701, %v8612
  %v9060 = vmul.f32 %v5702, %v8616
  %v9061 = vmul.f32 %v5703, %v8620
  %v9062 = vmul.f32 %v5704, %v8624
  %v9063 = vmul.f32 %v5705, %v8628
  %v9064 = vmul.f32 %v5706, %v8632
  %v9065 = vmul.f32 %v5707, %v8636
  %v9066 = vmul.f32 %v5708, %v8640
  %v9067 = vmul.f32 %v5709, %v8644
  %v9068 = vmul.f32 %v5710, %v8648
  %v9069 = vmul.f32 %v5711, %v8652
  %v9070 = vmul.f32 %v5712, %v8656
  %v9071 = vmul.f32 %v5713, %v8660
  %v9072 = vmul.f32 %v5714, %v8664
  %v9073 = vmul.f32 %v5715, %v8668
  %v9074 = vmul.f32 %v5716, %v8672
  %v9075 = vmul.f32 %v5717, %v8676
  %v9076 = vmul.f32 %v5718, %v8680
  %v9077 = vmul.f32 %v5719, %v8684
  %v9078 = vmul.f32 %v5720, %v8688
  %v9079 = vmul.f32 %v5721, %v8692
  %v9080 = vmul.f32 %v5722, %v8696
  %v9081 = vadd.f32 %v8825, %v8826
  %v9082 = vadd.f32 %v8953, %v8954
  %v9083 = vadd.f32 %v8827, %v8828
  %v9084 = vadd.f32 %v8955, %v8956
  %v9085 = vadd.f32 %v8829, %v8830
  %v9086 = vadd.f32 %v8957, %v8958
  %v9087 = vadd.f32 %v8831, %v8832
  %v9088 = vadd.f32 %v8959, %v8960
  %v9089 = vadd.f32 %v8833, %v8834
  %v9090 = vadd.f32 %v8961, %v8962
  %v9091 = vadd.f32 %v8835, %v8836
  %v9092 = vadd.f32 %v8963, %v8964
  %v9093 = vadd.f32 %v8837, %v8838
  %v9094 = vadd.f32 %v8965, %v8966
  %v9095 = vadd.f32 %v8839, %v8840
  %v9096 = vadd.f32 %v8967, %v8968
  %v9097 = vadd.f32 %v8841, %v8842
  %v9098 = vadd.f32 %v8969, %v8970
  %v9099 = vadd.f32 %v8843, %v8844
  %v9100 = vadd.f32 %v8971, %v8972
  %v9101 = vadd.f32 %v8845, %v8846
  %v9102 = vadd.f32 %v8973, %v8974
  %v9103 = vadd.f32 %v8847, %v8848
  %v9104 = vadd.f32 %v8975, %v8976
  %v9105 = vadd.f32 %v8849, %v8850
  %v9106 = vadd.f32 %v8977, %v8978
  %v9107 = vadd.f32 %v8851, %v8852
  %v9108 = vadd.f32 %v8979, %v8980
  %v9109 = vadd.f32 %v8853, %v8854
  %v9110 = vadd.f32 %v8981, %v8982
  %v9111 = vadd.f32 %v8855, %v8856
  %v9112 = vadd.f32 %v8983, %v8984
  %v9113 = vadd.f32 %v8857, %v8858
  %v9114 = vadd.f32 %v8985, %v8986
  %v9115 = vadd.f32 %v8859, %v8860
  %v9116 = vadd.f32 %v8987, %v8988
  %v9117 = vadd.f32 %v8861, %v8862
  %v9118 = vadd.f32 %v8989, %v8990
  %v9119 = vadd.f32 %v8863, %v8864
  %v9120 = vadd.f32 %v8991, %v8992
  %v9121 = vadd.f32 %v8865, %v8866
  %v9122 = vadd.f32 %v8993, %v8994
  %v9123 = vadd.f32 %v8867, %v8868
  %v9124 = vadd.f32 %v8995, %v8996
  %v9125 = vadd.f32 %v8869, %v8870
  %v9126 = vadd.f32 %v8997, %v8998
  %v9127 = vadd.f32 %v8871, %v8872
  %v9128 = vadd.f32 %v8999, %v9000
  %v9129 = vadd.f32 %v8873, %v8874
  %v9130 = vadd.f32 %v9001, %v9002
  %v9131 = vadd.f32 %v8875, %v8876
  %v9132 = vadd.f32 %v9003, %v9004
  %v9133 = vadd.f32 %v8877, %v8878
  %v9134 = vadd.f32 %v9005, %v9006
  %v9135 = vadd.f32 %v8879, %v8880
  %v9136 = vadd.f32 %v9007, %v9008
  %v9137 = vadd.f32 %v8881, %v8882
  %v9138 = vadd.f32 %v9009, %v9010
  %v9139 = vadd.f32 %v8883, %v8884
  %v9140 = vadd.f32 %v9011, %v9012
  %v9141 = vadd.f32 %v8885, %v8886
  %v9142 = vadd.f32 %v9013, %v9014
  %v9143 = vadd.f32 %v8887, %v8888
  %v9144 = vadd.f32 %v9015, %v9016
  %v9145 = vadd.f32 %v8889, %v8890
  %v9146 = vadd.f32 %v9017, %v9018
  %v9147 = vadd.f32 %v8891, %v8892
  %v9148 = vadd.f32 %v9019, %v9020
  %v9149 = vadd.f32 %v8893, %v8894
  %v9150 = vadd.f32 %v9021, %v9022
  %v9151 = vadd.f32 %v8895, %v8896
  %v9152 = vadd.f32 %v9023, %v9024
  %v9153 = vadd.f32 %v8897, %v8898
  %v9154 = vadd.f32 %v9025, %v9026
  %v9155 = vadd.f32 %v8899, %v8900
  %v9156 = vadd.f32 %v9027, %v9028
  %v9157 = vadd.f32 %v8901, %v8902
  %v9158 = vadd.f32 %v9029, %v9030
  %v9159 = vadd.f32 %v8903, %v8904
  %v9160 = vadd.f32 %v9031, %v9032
  %v9161 = vadd.f32 %v8905, %v8906
  %v9162 = vadd.f32 %v9033, %v9034
  %v9163 = vadd.f32 %v8907, %v8908
  %v9164 = vadd.f32 %v9035, %v9036
  %v9165 = vadd.f32 %v8909, %v8910
  %v9166 = vadd.f32 %v9037, %v9038
  %v9167 = vadd.f32 %v8911, %v8912
  %v9168 = vadd.f32 %v9039, %v9040
  %v9169 = vadd.f32 %v8913, %v8914
  %v9170 = vadd.f32 %v9041, %v9042
  %v9171 = vadd.f32 %v8915, %v8916
  %v9172 = vadd.f32 %v9043, %v9044
  %v9173 = vadd.f32 %v8917, %v8918
  %v9174 = vadd.f32 %v9045, %v9046
  %v9175 = vadd.f32 %v8919, %v8920
  %v9176 = vadd.f32 %v9047, %v9048
  %v9177 = vadd.f32 %v8921, %v8922
  %v9178 = vadd.f32 %v9049, %v9050
  %v9179 = vadd.f32 %v8923, %v8924
  %v9180 = vadd.f32 %v9051, %v9052
  %v9181 = vadd.f32 %v8925, %v8926
  %v9182 = vadd.f32 %v9053, %v9054
  %v9183 = vadd.f32 %v8927, %v8928
  %v9184 = vadd.f32 %v9055, %v9056
  %v9185 = vadd.f32 %v8929, %v8930
  %v9186 = vadd.f32 %v9057, %v9058
  %v9187 = vadd.f32 %v8931, %v8932
  %v9188 = vadd.f32 %v9059, %v9060
  %v9189 = vadd.f32 %v8933, %v8934
  %v9190 = vadd.f32 %v9061, %v9062
  %v9191 = vadd.f32 %v8935, %v8936
  %v9192 = vadd.f32 %v9063, %v9064
  %v9193 = vadd.f32 %v8937, %v8938
  %v9194 = vadd.f32 %v9065, %v9066
  %v9195 = vadd.f32 %v8939, %v8940
  %v9196 = vadd.f32 %v9067, %v9068
  %v9197 = vadd.f32 %v8941, %v8942
  %v9198 = vadd.f32 %v9069, %v9070
  %v9199 = vadd.f32 %v8943, %v8944
  %v9200 = vadd.f32 %v9071, %v9072
  %v9201 = vadd.f32 %v8945, %v8946
  %v9202 = vadd.f32 %v9073, %v9074
  %v9203 = vadd.f32 %v8947, %v8948
  %v9204 = vadd.f32 %v9075, %v9076
  %v9205 = vadd.f32 %v8949, %v8950
  %v9206 = vadd.f32 %v9077, %v9078
  %v9207 = vadd.f32 %v8951, %v8952
  %v9208 = vadd.f32 %v9079, %v9080
  %v9209 = vadd.f32 %v9081, %v9083
  %v9210 = vadd.f32 %v9082, %v9084
  %v9211 = vadd.f32 %v9085, %v9087
  %v9212 = vadd.f32 %v9086, %v9088
  %v9213 = vadd.f32 %v9089, %v9091
  %v9214 = vadd.f32 %v9090, %v9092
  %v9215 = vadd.f32 %v9093, %v9095
  %v9216 = vadd.f32 %v9094, %v9096
  %v9217 = vadd.f32 %v9097, %v9099
  %v9218 = vadd.f32 %v9098, %v9100
  %v9219 = vadd.f32 %v9101, %v9103
  %v9220 = vadd.f32 %v9102, %v9104
  %v9221 = vadd.f32 %v9105, %v9107
  %v9222 = vadd.f32 %v9106, %v9108
  %v9223 = vadd.f32 %v9109, %v9111
  %v9224 = vadd.f32 %v9110, %v9112
  %v9225 = vadd.f32 %v9113, %v9115
  %v9226 = vadd.f32 %v9114, %v9116
  %v9227 = vadd.f32 %v9117, %v9119
  %v9228 = vadd.f32 %v9118, %v9120
  %v9229 = vadd.f32 %v9121, %v9123
  %v9230 = vadd.f32 %v9122, %v9124
  %v9231 = vadd.f32 %v9125, %v9127
  %v9232 = vadd.f32 %v9126, %v9128
  %v9233 = vadd.f32 %v9129, %v9131
  %v9234 = vadd.f32 %v9130, %v9132
  %v9235 = vadd.f32 %v9133, %v9135
  %v9236 = vadd.f32 %v9134, %v9136
  %v9237 = vadd.f32 %v9137, %v9139
  %v9238 = vadd.f32 %v9138, %v9140
  %v9239 = vadd.f32 %v9141, %v9143
  %v9240 = vadd.f32 %v9142, %v9144
  %v9241 = vadd.f32 %v9145, %v9147
  %v9242 = vadd.f32 %v9146, %v9148
  %v9243 = vadd.f32 %v9149, %v9151
  %v9244 = vadd.f32 %v9150, %v9152
  %v9245 = vadd.f32 %v9153, %v9155
  %v9246 = vadd.f32 %v9154, %v9156
  %v9247 = vadd.f32 %v9157, %v9159
  %v9248 = vadd.f32 %v9158, %v9160
  %v9249 = vadd.f32 %v9161, %v9163
  %v9250 = vadd.f32 %v9162, %v9164
  %v9251 = vadd.f32 %v9165, %v9167
  %v9252 = vadd.f32 %v9166, %v9168
  %v9253 = vadd.f32 %v9169, %v9171
  %v9254 = vadd.f32 %v9170, %v9172
  %v9255 = vadd.f32 %v9173, %v9175
  %v9256 = vadd.f32 %v9174, %v9176
  %v9257 = vadd.f32 %v9177, %v9179
  %v9258 = vadd.f32 %v9178, %v9180
  %v9259 = vadd.f32 %v9181, %v9183
  %v9260 = vadd.f32 %v9182, %v9184
  %v9261 = vadd.f32 %v9185, %v9187
  %v9262 = vadd.f32 %v9186, %v9188
  %v9263 = vadd.f32 %v9189, %v9191
  %v9264 = vadd.f32 %v9190, %v9192
  %v9265 = vadd.f32 %v9193, %v9195
  %v9266 = vadd.f32 %v9194, %v9196
  %v9267 = vadd.f32 %v9197, %v9199
  %v9268 = vadd.f32 %v9198, %v9200
  %v9269 = vadd.f32 %v9201, %v9203
  %v9270 = vadd.f32 %v9202, %v9204
  %v9271 = vadd.f32 %v9205, %v9207
  %v9272 = vadd.f32 %v9206, %v9208
  %v9273 = vadd.f32 %v9209, %v9211
  %v9274 = vadd.f32 %v9210, %v9212
  %v9275 = vadd.f32 %v9213, %v9215
  %v9276 = vadd.f32 %v9214, %v9216
  %v9277 = vadd.f32 %v9217, %v9219
  %v9278 = vadd.f32 %v9218, %v9220
  %v9279 = vadd.f32 %v9221, %v9223
  %v9280 = vadd.f32 %v9222, %v9224
  %v9281 = vadd.f32 %v9225, %v9227
  %v9282 = vadd.f32 %v9226, %v9228
  %v9283 = vadd.f32 %v9229, %v9231
  %v9284 = vadd.f32 %v9230, %v9232
  %v9285 = vadd.f32 %v9233, %v9235
  %v9286 = vadd.f32 %v9234, %v9236
  %v9287 = vadd.f32 %v9237, %v9239
  %v9288 = vadd.f32 %v9238, %v9240
  %v9289 = vadd.f32 %v9241, %v9243
  %v9290 = vadd.f32 %v9242, %v9244
  %v9291 = vadd.f32 %v9245, %v9247
  %v9292 = vadd.f32 %v9246, %v9248
  %v9293 = vadd.f32 %v9249, %v9251
  %v9294 = vadd.f32 %v9250, %v9252
  %v9295 = vadd.f32 %v9253, %v9255
  %v9296 = vadd.f32 %v9254, %v9256
  %v9297 = vadd.f32 %v9257, %v9259
  %v9298 = vadd.f32 %v9258, %v9260
  %v9299 = vadd.f32 %v9261, %v9263
  %v9300 = vadd.f32 %v9262, %v9264
  %v9301 = vadd.f32 %v9265, %v9267
  %v9302 = vadd.f32 %v9266, %v9268
  %v9303 = vadd.f32 %v9269, %v9271
  %v9304 = vadd.f32 %v9270, %v9272
  %v9305 = vadd.f32 %v9273, %v9275
  %v9306 = vadd.f32 %v9274, %v9276
  %v9307 = vadd.f32 %v9277, %v9279
  %v9308 = vadd.f32 %v9278, %v9280
  %v9309 = vadd.f32 %v9281, %v9283
  %v9310 = vadd.f32 %v9282, %v9284
  %v9311 = vadd.f32 %v9285, %v9287
  %v9312 = vadd.f32 %v9286, %v9288
  %v9313 = vadd.f32 %v9289, %v9291
  %v9314 = vadd.f32 %v9290, %v9292
  %v9315 = vadd.f32 %v9293, %v9295
  %v9316 = vadd.f32 %v9294, %v9296
  %v9317 = vadd.f32 %v9297, %v9299
  %v9318 = vadd.f32 %v9298, %v9300
  %v9319 = vadd.f32 %v9301, %v9303
  %v9320 = vadd.f32 %v9302, %v9304
  %v9321 = vadd.f32 %v9305, %v9307
  %v9322 = vadd.f32 %v9306, %v9308
  %v9323 = vadd.f32 %v9309, %v9311
  %v9324 = vadd.f32 %v9310, %v9312
  %v9325 = vadd.f32 %v9313, %v9315
  %v9326 = vadd.f32 %v9314, %v9316
  %v9327 = vadd.f32 %v9317, %v9319
  %v9328 = vadd.f32 %v9318, %v9320
  %v9329 = vadd.f32 %v9321, %v9323
  %v9330 = vadd.f32 %v9322, %v9324
  %v9331 = vadd.f32 %v9325, %v9327
  %v9332 = vadd.f32 %v9326, %v9328
  %v9333 = vadd.f32 %v9329, %v9331
  %v9334 = vadd.f32 %v9330, %v9332
  %v9335 = vld [vmem:[%s3 + $0x2] sm:$0x1]
  %v9336 = vlaneseq
  %v9337 = vshrl.u32 %v9336, 7
  %v9338 = vsub.s32 0, %v9337
  %v9339 = vrot.slane %v9335, %v9338
  %v9340 = vadd.f32 %v9333, %v9339
  %v9341 = vadd.f32 %v9334, %v9339
  %s9342 = scalar_lea.vmem %s4, 32
  %9343 = vst [vmem:[%s9342] sm:$0xff] %v9340
  %9344 = vst [vmem:[%s9342 + $0x8] sm:$0xff] %v9341
  %s9345 = scalar_lea.vmem %s2, 3
  %v9346 = vld [vmem:[%s9345] ss:$4 sm:$0xff]
  %s9347 = scalar_lea.vmem %s2, 35
  %v9348 = vld [vmem:[%s9347] ss:$4 sm:$0xff]
  %s9349 = scalar_lea.vmem %s2, 67
  %v9350 = vld [vmem:[%s9349] ss:$4 sm:$0xff]
  %s9351 = scalar_lea.vmem %s2, 99
  %v9352 = vld [vmem:[%s9351] ss:$4 sm:$0xff]
  %s9353 = scalar_lea.vmem %s2, 131
  %v9354 = vld [vmem:[%s9353] ss:$4 sm:$0xff]
  %s9355 = scalar_lea.vmem %s2, 163
  %v9356 = vld [vmem:[%s9355] ss:$4 sm:$0xff]
  %s9357 = scalar_lea.vmem %s2, 195
  %v9358 = vld [vmem:[%s9357] ss:$4 sm:$0xff]
  %s9359 = scalar_lea.vmem %s2, 227
  %v9360 = vld [vmem:[%s9359] ss:$4 sm:$0xff]
  %s9361 = scalar_lea.vmem %s2, 259
  %v9362 = vld [vmem:[%s9361] ss:$4 sm:$0xff]
  %s9363 = scalar_lea.vmem %s2, 291
  %v9364 = vld [vmem:[%s9363] ss:$4 sm:$0xff]
  %s9365 = scalar_lea.vmem %s2, 323
  %v9366 = vld [vmem:[%s9365] ss:$4 sm:$0xff]
  %s9367 = scalar_lea.vmem %s2, 355
  %v9368 = vld [vmem:[%s9367] ss:$4 sm:$0xff]
  %s9369 = scalar_lea.vmem %s2, 387
  %v9370 = vld [vmem:[%s9369] ss:$4 sm:$0xff]
  %s9371 = scalar_lea.vmem %s2, 419
  %v9372 = vld [vmem:[%s9371] ss:$4 sm:$0xff]
  %s9373 = scalar_lea.vmem %s2, 451
  %v9374 = vld [vmem:[%s9373] ss:$4 sm:$0xff]
  %s9375 = scalar_lea.vmem %s2, 483
  %v9376 = vld [vmem:[%s9375] ss:$4 sm:$0xff]
  %v9393 = vlaneseq
  %v9394 = vshrl.u32 %v9393, 7
  %v9395 = vsub.s32 0, %v9394
  %v9396 = vrot.slane %v9346, %v9395
  %v9397 = vlaneseq
  %v9398 = vshrl.u32 %v9397, 7
  %v9399 = vsub.s32 1, %v9398
  %v9400 = vrot.slane %v9346, %v9399
  %v9401 = vlaneseq
  %v9402 = vshrl.u32 %v9401, 7
  %v9403 = vsub.s32 2, %v9402
  %v9404 = vrot.slane %v9346, %v9403
  %v9405 = vlaneseq
  %v9406 = vshrl.u32 %v9405, 7
  %v9407 = vsub.s32 3, %v9406
  %v9408 = vrot.slane %v9346, %v9407
  %v9409 = vlaneseq
  %v9410 = vshrl.u32 %v9409, 7
  %v9411 = vsub.s32 4, %v9410
  %v9412 = vrot.slane %v9346, %v9411
  %v9413 = vlaneseq
  %v9414 = vshrl.u32 %v9413, 7
  %v9415 = vsub.s32 5, %v9414
  %v9416 = vrot.slane %v9346, %v9415
  %v9417 = vlaneseq
  %v9418 = vshrl.u32 %v9417, 7
  %v9419 = vsub.s32 6, %v9418
  %v9420 = vrot.slane %v9346, %v9419
  %v9421 = vlaneseq
  %v9422 = vshrl.u32 %v9421, 7
  %v9423 = vsub.s32 7, %v9422
  %v9424 = vrot.slane %v9346, %v9423
  %v9425 = vlaneseq
  %v9426 = vshrl.u32 %v9425, 7
  %v9427 = vsub.s32 0, %v9426
  %v9428 = vrot.slane %v9348, %v9427
  %v9429 = vlaneseq
  %v9430 = vshrl.u32 %v9429, 7
  %v9431 = vsub.s32 1, %v9430
  %v9432 = vrot.slane %v9348, %v9431
  %v9433 = vlaneseq
  %v9434 = vshrl.u32 %v9433, 7
  %v9435 = vsub.s32 2, %v9434
  %v9436 = vrot.slane %v9348, %v9435
  %v9437 = vlaneseq
  %v9438 = vshrl.u32 %v9437, 7
  %v9439 = vsub.s32 3, %v9438
  %v9440 = vrot.slane %v9348, %v9439
  %v9441 = vlaneseq
  %v9442 = vshrl.u32 %v9441, 7
  %v9443 = vsub.s32 4, %v9442
  %v9444 = vrot.slane %v9348, %v9443
  %v9445 = vlaneseq
  %v9446 = vshrl.u32 %v9445, 7
  %v9447 = vsub.s32 5, %v9446
  %v9448 = vrot.slane %v9348, %v9447
  %v9449 = vlaneseq
  %v9450 = vshrl.u32 %v9449, 7
  %v9451 = vsub.s32 6, %v9450
  %v9452 = vrot.slane %v9348, %v9451
  %v9453 = vlaneseq
  %v9454 = vshrl.u32 %v9453, 7
  %v9455 = vsub.s32 7, %v9454
  %v9456 = vrot.slane %v9348, %v9455
  %v9457 = vlaneseq
  %v9458 = vshrl.u32 %v9457, 7
  %v9459 = vsub.s32 0, %v9458
  %v9460 = vrot.slane %v9350, %v9459
  %v9461 = vlaneseq
  %v9462 = vshrl.u32 %v9461, 7
  %v9463 = vsub.s32 1, %v9462
  %v9464 = vrot.slane %v9350, %v9463
  %v9465 = vlaneseq
  %v9466 = vshrl.u32 %v9465, 7
  %v9467 = vsub.s32 2, %v9466
  %v9468 = vrot.slane %v9350, %v9467
  %v9469 = vlaneseq
  %v9470 = vshrl.u32 %v9469, 7
  %v9471 = vsub.s32 3, %v9470
  %v9472 = vrot.slane %v9350, %v9471
  %v9473 = vlaneseq
  %v9474 = vshrl.u32 %v9473, 7
  %v9475 = vsub.s32 4, %v9474
  %v9476 = vrot.slane %v9350, %v9475
  %v9477 = vlaneseq
  %v9478 = vshrl.u32 %v9477, 7
  %v9479 = vsub.s32 5, %v9478
  %v9480 = vrot.slane %v9350, %v9479
  %v9481 = vlaneseq
  %v9482 = vshrl.u32 %v9481, 7
  %v9483 = vsub.s32 6, %v9482
  %v9484 = vrot.slane %v9350, %v9483
  %v9485 = vlaneseq
  %v9486 = vshrl.u32 %v9485, 7
  %v9487 = vsub.s32 7, %v9486
  %v9488 = vrot.slane %v9350, %v9487
  %v9489 = vlaneseq
  %v9490 = vshrl.u32 %v9489, 7
  %v9491 = vsub.s32 0, %v9490
  %v9492 = vrot.slane %v9352, %v9491
  %v9493 = vlaneseq
  %v9494 = vshrl.u32 %v9493, 7
  %v9495 = vsub.s32 1, %v9494
  %v9496 = vrot.slane %v9352, %v9495
  %v9497 = vlaneseq
  %v9498 = vshrl.u32 %v9497, 7
  %v9499 = vsub.s32 2, %v9498
  %v9500 = vrot.slane %v9352, %v9499
  %v9501 = vlaneseq
  %v9502 = vshrl.u32 %v9501, 7
  %v9503 = vsub.s32 3, %v9502
  %v9504 = vrot.slane %v9352, %v9503
  %v9505 = vlaneseq
  %v9506 = vshrl.u32 %v9505, 7
  %v9507 = vsub.s32 4, %v9506
  %v9508 = vrot.slane %v9352, %v9507
  %v9509 = vlaneseq
  %v9510 = vshrl.u32 %v9509, 7
  %v9511 = vsub.s32 5, %v9510
  %v9512 = vrot.slane %v9352, %v9511
  %v9513 = vlaneseq
  %v9514 = vshrl.u32 %v9513, 7
  %v9515 = vsub.s32 6, %v9514
  %v9516 = vrot.slane %v9352, %v9515
  %v9517 = vlaneseq
  %v9518 = vshrl.u32 %v9517, 7
  %v9519 = vsub.s32 7, %v9518
  %v9520 = vrot.slane %v9352, %v9519
  %v9521 = vlaneseq
  %v9522 = vshrl.u32 %v9521, 7
  %v9523 = vsub.s32 0, %v9522
  %v9524 = vrot.slane %v9354, %v9523
  %v9525 = vlaneseq
  %v9526 = vshrl.u32 %v9525, 7
  %v9527 = vsub.s32 1, %v9526
  %v9528 = vrot.slane %v9354, %v9527
  %v9529 = vlaneseq
  %v9530 = vshrl.u32 %v9529, 7
  %v9531 = vsub.s32 2, %v9530
  %v9532 = vrot.slane %v9354, %v9531
  %v9533 = vlaneseq
  %v9534 = vshrl.u32 %v9533, 7
  %v9535 = vsub.s32 3, %v9534
  %v9536 = vrot.slane %v9354, %v9535
  %v9537 = vlaneseq
  %v9538 = vshrl.u32 %v9537, 7
  %v9539 = vsub.s32 4, %v9538
  %v9540 = vrot.slane %v9354, %v9539
  %v9541 = vlaneseq
  %v9542 = vshrl.u32 %v9541, 7
  %v9543 = vsub.s32 5, %v9542
  %v9544 = vrot.slane %v9354, %v9543
  %v9545 = vlaneseq
  %v9546 = vshrl.u32 %v9545, 7
  %v9547 = vsub.s32 6, %v9546
  %v9548 = vrot.slane %v9354, %v9547
  %v9549 = vlaneseq
  %v9550 = vshrl.u32 %v9549, 7
  %v9551 = vsub.s32 7, %v9550
  %v9552 = vrot.slane %v9354, %v9551
  %v9553 = vlaneseq
  %v9554 = vshrl.u32 %v9553, 7
  %v9555 = vsub.s32 0, %v9554
  %v9556 = vrot.slane %v9356, %v9555
  %v9557 = vlaneseq
  %v9558 = vshrl.u32 %v9557, 7
  %v9559 = vsub.s32 1, %v9558
  %v9560 = vrot.slane %v9356, %v9559
  %v9561 = vlaneseq
  %v9562 = vshrl.u32 %v9561, 7
  %v9563 = vsub.s32 2, %v9562
  %v9564 = vrot.slane %v9356, %v9563
  %v9565 = vlaneseq
  %v9566 = vshrl.u32 %v9565, 7
  %v9567 = vsub.s32 3, %v9566
  %v9568 = vrot.slane %v9356, %v9567
  %v9569 = vlaneseq
  %v9570 = vshrl.u32 %v9569, 7
  %v9571 = vsub.s32 4, %v9570
  %v9572 = vrot.slane %v9356, %v9571
  %v9573 = vlaneseq
  %v9574 = vshrl.u32 %v9573, 7
  %v9575 = vsub.s32 5, %v9574
  %v9576 = vrot.slane %v9356, %v9575
  %v9577 = vlaneseq
  %v9578 = vshrl.u32 %v9577, 7
  %v9579 = vsub.s32 6, %v9578
  %v9580 = vrot.slane %v9356, %v9579
  %v9581 = vlaneseq
  %v9582 = vshrl.u32 %v9581, 7
  %v9583 = vsub.s32 7, %v9582
  %v9584 = vrot.slane %v9356, %v9583
  %v9585 = vlaneseq
  %v9586 = vshrl.u32 %v9585, 7
  %v9587 = vsub.s32 0, %v9586
  %v9588 = vrot.slane %v9358, %v9587
  %v9589 = vlaneseq
  %v9590 = vshrl.u32 %v9589, 7
  %v9591 = vsub.s32 1, %v9590
  %v9592 = vrot.slane %v9358, %v9591
  %v9593 = vlaneseq
  %v9594 = vshrl.u32 %v9593, 7
  %v9595 = vsub.s32 2, %v9594
  %v9596 = vrot.slane %v9358, %v9595
  %v9597 = vlaneseq
  %v9598 = vshrl.u32 %v9597, 7
  %v9599 = vsub.s32 3, %v9598
  %v9600 = vrot.slane %v9358, %v9599
  %v9601 = vlaneseq
  %v9602 = vshrl.u32 %v9601, 7
  %v9603 = vsub.s32 4, %v9602
  %v9604 = vrot.slane %v9358, %v9603
  %v9605 = vlaneseq
  %v9606 = vshrl.u32 %v9605, 7
  %v9607 = vsub.s32 5, %v9606
  %v9608 = vrot.slane %v9358, %v9607
  %v9609 = vlaneseq
  %v9610 = vshrl.u32 %v9609, 7
  %v9611 = vsub.s32 6, %v9610
  %v9612 = vrot.slane %v9358, %v9611
  %v9613 = vlaneseq
  %v9614 = vshrl.u32 %v9613, 7
  %v9615 = vsub.s32 7, %v9614
  %v9616 = vrot.slane %v9358, %v9615
  %v9617 = vlaneseq
  %v9618 = vshrl.u32 %v9617, 7
  %v9619 = vsub.s32 0, %v9618
  %v9620 = vrot.slane %v9360, %v9619
  %v9621 = vlaneseq
  %v9622 = vshrl.u32 %v9621, 7
  %v9623 = vsub.s32 1, %v9622
  %v9624 = vrot.slane %v9360, %v9623
  %v9625 = vlaneseq
  %v9626 = vshrl.u32 %v9625, 7
  %v9627 = vsub.s32 2, %v9626
  %v9628 = vrot.slane %v9360, %v9627
  %v9629 = vlaneseq
  %v9630 = vshrl.u32 %v9629, 7
  %v9631 = vsub.s32 3, %v9630
  %v9632 = vrot.slane %v9360, %v9631
  %v9633 = vlaneseq
  %v9634 = vshrl.u32 %v9633, 7
  %v9635 = vsub.s32 4, %v9634
  %v9636 = vrot.slane %v9360, %v9635
  %v9637 = vlaneseq
  %v9638 = vshrl.u32 %v9637, 7
  %v9639 = vsub.s32 5, %v9638
  %v9640 = vrot.slane %v9360, %v9639
  %v9641 = vlaneseq
  %v9642 = vshrl.u32 %v9641, 7
  %v9643 = vsub.s32 6, %v9642
  %v9644 = vrot.slane %v9360, %v9643
  %v9645 = vlaneseq
  %v9646 = vshrl.u32 %v9645, 7
  %v9647 = vsub.s32 7, %v9646
  %v9648 = vrot.slane %v9360, %v9647
  %v9649 = vlaneseq
  %v9650 = vshrl.u32 %v9649, 7
  %v9651 = vsub.s32 0, %v9650
  %v9652 = vrot.slane %v9362, %v9651
  %v9653 = vlaneseq
  %v9654 = vshrl.u32 %v9653, 7
  %v9655 = vsub.s32 1, %v9654
  %v9656 = vrot.slane %v9362, %v9655
  %v9657 = vlaneseq
  %v9658 = vshrl.u32 %v9657, 7
  %v9659 = vsub.s32 2, %v9658
  %v9660 = vrot.slane %v9362, %v9659
  %v9661 = vlaneseq
  %v9662 = vshrl.u32 %v9661, 7
  %v9663 = vsub.s32 3, %v9662
  %v9664 = vrot.slane %v9362, %v9663
  %v9665 = vlaneseq
  %v9666 = vshrl.u32 %v9665, 7
  %v9667 = vsub.s32 4, %v9666
  %v9668 = vrot.slane %v9362, %v9667
  %v9669 = vlaneseq
  %v9670 = vshrl.u32 %v9669, 7
  %v9671 = vsub.s32 5, %v9670
  %v9672 = vrot.slane %v9362, %v9671
  %v9673 = vlaneseq
  %v9674 = vshrl.u32 %v9673, 7
  %v9675 = vsub.s32 6, %v9674
  %v9676 = vrot.slane %v9362, %v9675
  %v9677 = vlaneseq
  %v9678 = vshrl.u32 %v9677, 7
  %v9679 = vsub.s32 7, %v9678
  %v9680 = vrot.slane %v9362, %v9679
  %v9681 = vlaneseq
  %v9682 = vshrl.u32 %v9681, 7
  %v9683 = vsub.s32 0, %v9682
  %v9684 = vrot.slane %v9364, %v9683
  %v9685 = vlaneseq
  %v9686 = vshrl.u32 %v9685, 7
  %v9687 = vsub.s32 1, %v9686
  %v9688 = vrot.slane %v9364, %v9687
  %v9689 = vlaneseq
  %v9690 = vshrl.u32 %v9689, 7
  %v9691 = vsub.s32 2, %v9690
  %v9692 = vrot.slane %v9364, %v9691
  %v9693 = vlaneseq
  %v9694 = vshrl.u32 %v9693, 7
  %v9695 = vsub.s32 3, %v9694
  %v9696 = vrot.slane %v9364, %v9695
  %v9697 = vlaneseq
  %v9698 = vshrl.u32 %v9697, 7
  %v9699 = vsub.s32 4, %v9698
  %v9700 = vrot.slane %v9364, %v9699
  %v9701 = vlaneseq
  %v9702 = vshrl.u32 %v9701, 7
  %v9703 = vsub.s32 5, %v9702
  %v9704 = vrot.slane %v9364, %v9703
  %v9705 = vlaneseq
  %v9706 = vshrl.u32 %v9705, 7
  %v9707 = vsub.s32 6, %v9706
  %v9708 = vrot.slane %v9364, %v9707
  %v9709 = vlaneseq
  %v9710 = vshrl.u32 %v9709, 7
  %v9711 = vsub.s32 7, %v9710
  %v9712 = vrot.slane %v9364, %v9711
  %v9713 = vlaneseq
  %v9714 = vshrl.u32 %v9713, 7
  %v9715 = vsub.s32 0, %v9714
  %v9716 = vrot.slane %v9366, %v9715
  %v9717 = vlaneseq
  %v9718 = vshrl.u32 %v9717, 7
  %v9719 = vsub.s32 1, %v9718
  %v9720 = vrot.slane %v9366, %v9719
  %v9721 = vlaneseq
  %v9722 = vshrl.u32 %v9721, 7
  %v9723 = vsub.s32 2, %v9722
  %v9724 = vrot.slane %v9366, %v9723
  %v9725 = vlaneseq
  %v9726 = vshrl.u32 %v9725, 7
  %v9727 = vsub.s32 3, %v9726
  %v9728 = vrot.slane %v9366, %v9727
  %v9729 = vlaneseq
  %v9730 = vshrl.u32 %v9729, 7
  %v9731 = vsub.s32 4, %v9730
  %v9732 = vrot.slane %v9366, %v9731
  %v9733 = vlaneseq
  %v9734 = vshrl.u32 %v9733, 7
  %v9735 = vsub.s32 5, %v9734
  %v9736 = vrot.slane %v9366, %v9735
  %v9737 = vlaneseq
  %v9738 = vshrl.u32 %v9737, 7
  %v9739 = vsub.s32 6, %v9738
  %v9740 = vrot.slane %v9366, %v9739
  %v9741 = vlaneseq
  %v9742 = vshrl.u32 %v9741, 7
  %v9743 = vsub.s32 7, %v9742
  %v9744 = vrot.slane %v9366, %v9743
  %v9745 = vlaneseq
  %v9746 = vshrl.u32 %v9745, 7
  %v9747 = vsub.s32 0, %v9746
  %v9748 = vrot.slane %v9368, %v9747
  %v9749 = vlaneseq
  %v9750 = vshrl.u32 %v9749, 7
  %v9751 = vsub.s32 1, %v9750
  %v9752 = vrot.slane %v9368, %v9751
  %v9753 = vlaneseq
  %v9754 = vshrl.u32 %v9753, 7
  %v9755 = vsub.s32 2, %v9754
  %v9756 = vrot.slane %v9368, %v9755
  %v9757 = vlaneseq
  %v9758 = vshrl.u32 %v9757, 7
  %v9759 = vsub.s32 3, %v9758
  %v9760 = vrot.slane %v9368, %v9759
  %v9761 = vlaneseq
  %v9762 = vshrl.u32 %v9761, 7
  %v9763 = vsub.s32 4, %v9762
  %v9764 = vrot.slane %v9368, %v9763
  %v9765 = vlaneseq
  %v9766 = vshrl.u32 %v9765, 7
  %v9767 = vsub.s32 5, %v9766
  %v9768 = vrot.slane %v9368, %v9767
  %v9769 = vlaneseq
  %v9770 = vshrl.u32 %v9769, 7
  %v9771 = vsub.s32 6, %v9770
  %v9772 = vrot.slane %v9368, %v9771
  %v9773 = vlaneseq
  %v9774 = vshrl.u32 %v9773, 7
  %v9775 = vsub.s32 7, %v9774
  %v9776 = vrot.slane %v9368, %v9775
  %v9777 = vlaneseq
  %v9778 = vshrl.u32 %v9777, 7
  %v9779 = vsub.s32 0, %v9778
  %v9780 = vrot.slane %v9370, %v9779
  %v9781 = vlaneseq
  %v9782 = vshrl.u32 %v9781, 7
  %v9783 = vsub.s32 1, %v9782
  %v9784 = vrot.slane %v9370, %v9783
  %v9785 = vlaneseq
  %v9786 = vshrl.u32 %v9785, 7
  %v9787 = vsub.s32 2, %v9786
  %v9788 = vrot.slane %v9370, %v9787
  %v9789 = vlaneseq
  %v9790 = vshrl.u32 %v9789, 7
  %v9791 = vsub.s32 3, %v9790
  %v9792 = vrot.slane %v9370, %v9791
  %v9793 = vlaneseq
  %v9794 = vshrl.u32 %v9793, 7
  %v9795 = vsub.s32 4, %v9794
  %v9796 = vrot.slane %v9370, %v9795
  %v9797 = vlaneseq
  %v9798 = vshrl.u32 %v9797, 7
  %v9799 = vsub.s32 5, %v9798
  %v9800 = vrot.slane %v9370, %v9799
  %v9801 = vlaneseq
  %v9802 = vshrl.u32 %v9801, 7
  %v9803 = vsub.s32 6, %v9802
  %v9804 = vrot.slane %v9370, %v9803
  %v9805 = vlaneseq
  %v9806 = vshrl.u32 %v9805, 7
  %v9807 = vsub.s32 7, %v9806
  %v9808 = vrot.slane %v9370, %v9807
  %v9809 = vlaneseq
  %v9810 = vshrl.u32 %v9809, 7
  %v9811 = vsub.s32 0, %v9810
  %v9812 = vrot.slane %v9372, %v9811
  %v9813 = vlaneseq
  %v9814 = vshrl.u32 %v9813, 7
  %v9815 = vsub.s32 1, %v9814
  %v9816 = vrot.slane %v9372, %v9815
  %v9817 = vlaneseq
  %v9818 = vshrl.u32 %v9817, 7
  %v9819 = vsub.s32 2, %v9818
  %v9820 = vrot.slane %v9372, %v9819
  %v9821 = vlaneseq
  %v9822 = vshrl.u32 %v9821, 7
  %v9823 = vsub.s32 3, %v9822
  %v9824 = vrot.slane %v9372, %v9823
  %v9825 = vlaneseq
  %v9826 = vshrl.u32 %v9825, 7
  %v9827 = vsub.s32 4, %v9826
  %v9828 = vrot.slane %v9372, %v9827
  %v9829 = vlaneseq
  %v9830 = vshrl.u32 %v9829, 7
  %v9831 = vsub.s32 5, %v9830
  %v9832 = vrot.slane %v9372, %v9831
  %v9833 = vlaneseq
  %v9834 = vshrl.u32 %v9833, 7
  %v9835 = vsub.s32 6, %v9834
  %v9836 = vrot.slane %v9372, %v9835
  %v9837 = vlaneseq
  %v9838 = vshrl.u32 %v9837, 7
  %v9839 = vsub.s32 7, %v9838
  %v9840 = vrot.slane %v9372, %v9839
  %v9841 = vlaneseq
  %v9842 = vshrl.u32 %v9841, 7
  %v9843 = vsub.s32 0, %v9842
  %v9844 = vrot.slane %v9374, %v9843
  %v9845 = vlaneseq
  %v9846 = vshrl.u32 %v9845, 7
  %v9847 = vsub.s32 1, %v9846
  %v9848 = vrot.slane %v9374, %v9847
  %v9849 = vlaneseq
  %v9850 = vshrl.u32 %v9849, 7
  %v9851 = vsub.s32 2, %v9850
  %v9852 = vrot.slane %v9374, %v9851
  %v9853 = vlaneseq
  %v9854 = vshrl.u32 %v9853, 7
  %v9855 = vsub.s32 3, %v9854
  %v9856 = vrot.slane %v9374, %v9855
  %v9857 = vlaneseq
  %v9858 = vshrl.u32 %v9857, 7
  %v9859 = vsub.s32 4, %v9858
  %v9860 = vrot.slane %v9374, %v9859
  %v9861 = vlaneseq
  %v9862 = vshrl.u32 %v9861, 7
  %v9863 = vsub.s32 5, %v9862
  %v9864 = vrot.slane %v9374, %v9863
  %v9865 = vlaneseq
  %v9866 = vshrl.u32 %v9865, 7
  %v9867 = vsub.s32 6, %v9866
  %v9868 = vrot.slane %v9374, %v9867
  %v9869 = vlaneseq
  %v9870 = vshrl.u32 %v9869, 7
  %v9871 = vsub.s32 7, %v9870
  %v9872 = vrot.slane %v9374, %v9871
  %v9873 = vlaneseq
  %v9874 = vshrl.u32 %v9873, 7
  %v9875 = vsub.s32 0, %v9874
  %v9876 = vrot.slane %v9376, %v9875
  %v9877 = vlaneseq
  %v9878 = vshrl.u32 %v9877, 7
  %v9879 = vsub.s32 1, %v9878
  %v9880 = vrot.slane %v9376, %v9879
  %v9881 = vlaneseq
  %v9882 = vshrl.u32 %v9881, 7
  %v9883 = vsub.s32 2, %v9882
  %v9884 = vrot.slane %v9376, %v9883
  %v9885 = vlaneseq
  %v9886 = vshrl.u32 %v9885, 7
  %v9887 = vsub.s32 3, %v9886
  %v9888 = vrot.slane %v9376, %v9887
  %v9889 = vlaneseq
  %v9890 = vshrl.u32 %v9889, 7
  %v9891 = vsub.s32 4, %v9890
  %v9892 = vrot.slane %v9376, %v9891
  %v9893 = vlaneseq
  %v9894 = vshrl.u32 %v9893, 7
  %v9895 = vsub.s32 5, %v9894
  %v9896 = vrot.slane %v9376, %v9895
  %v9897 = vlaneseq
  %v9898 = vshrl.u32 %v9897, 7
  %v9899 = vsub.s32 6, %v9898
  %v9900 = vrot.slane %v9376, %v9899
  %v9901 = vlaneseq
  %v9902 = vshrl.u32 %v9901, 7
  %v9903 = vsub.s32 7, %v9902
  %v9904 = vrot.slane %v9376, %v9903
  %v10033 = vmul.f32 %v5467, %v9396
  %v10034 = vmul.f32 %v5468, %v9400
  %v10035 = vmul.f32 %v5469, %v9404
  %v10036 = vmul.f32 %v5470, %v9408
  %v10037 = vmul.f32 %v5471, %v9412
  %v10038 = vmul.f32 %v5472, %v9416
  %v10039 = vmul.f32 %v5473, %v9420
  %v10040 = vmul.f32 %v5474, %v9424
  %v10041 = vmul.f32 %v5475, %v9428
  %v10042 = vmul.f32 %v5476, %v9432
  %v10043 = vmul.f32 %v5477, %v9436
  %v10044 = vmul.f32 %v5478, %v9440
  %v10045 = vmul.f32 %v5479, %v9444
  %v10046 = vmul.f32 %v5480, %v9448
  %v10047 = vmul.f32 %v5481, %v9452
  %v10048 = vmul.f32 %v5482, %v9456
  %v10049 = vmul.f32 %v5483, %v9460
  %v10050 = vmul.f32 %v5484, %v9464
  %v10051 = vmul.f32 %v5485, %v9468
  %v10052 = vmul.f32 %v5486, %v9472
  %v10053 = vmul.f32 %v5487, %v9476
  %v10054 = vmul.f32 %v5488, %v9480
  %v10055 = vmul.f32 %v5489, %v9484
  %v10056 = vmul.f32 %v5490, %v9488
  %v10057 = vmul.f32 %v5491, %v9492
  %v10058 = vmul.f32 %v5492, %v9496
  %v10059 = vmul.f32 %v5493, %v9500
  %v10060 = vmul.f32 %v5494, %v9504
  %v10061 = vmul.f32 %v5495, %v9508
  %v10062 = vmul.f32 %v5496, %v9512
  %v10063 = vmul.f32 %v5497, %v9516
  %v10064 = vmul.f32 %v5498, %v9520
  %v10065 = vmul.f32 %v5499, %v9524
  %v10066 = vmul.f32 %v5500, %v9528
  %v10067 = vmul.f32 %v5501, %v9532
  %v10068 = vmul.f32 %v5502, %v9536
  %v10069 = vmul.f32 %v5503, %v9540
  %v10070 = vmul.f32 %v5504, %v9544
  %v10071 = vmul.f32 %v5505, %v9548
  %v10072 = vmul.f32 %v5506, %v9552
  %v10073 = vmul.f32 %v5507, %v9556
  %v10074 = vmul.f32 %v5508, %v9560
  %v10075 = vmul.f32 %v5509, %v9564
  %v10076 = vmul.f32 %v5510, %v9568
  %v10077 = vmul.f32 %v5511, %v9572
  %v10078 = vmul.f32 %v5512, %v9576
  %v10079 = vmul.f32 %v5513, %v9580
  %v10080 = vmul.f32 %v5514, %v9584
  %v10081 = vmul.f32 %v5515, %v9588
  %v10082 = vmul.f32 %v5516, %v9592
  %v10083 = vmul.f32 %v5517, %v9596
  %v10084 = vmul.f32 %v5518, %v9600
  %v10085 = vmul.f32 %v5519, %v9604
  %v10086 = vmul.f32 %v5520, %v9608
  %v10087 = vmul.f32 %v5521, %v9612
  %v10088 = vmul.f32 %v5522, %v9616
  %v10089 = vmul.f32 %v5523, %v9620
  %v10090 = vmul.f32 %v5524, %v9624
  %v10091 = vmul.f32 %v5525, %v9628
  %v10092 = vmul.f32 %v5526, %v9632
  %v10093 = vmul.f32 %v5527, %v9636
  %v10094 = vmul.f32 %v5528, %v9640
  %v10095 = vmul.f32 %v5529, %v9644
  %v10096 = vmul.f32 %v5530, %v9648
  %v10097 = vmul.f32 %v5531, %v9652
  %v10098 = vmul.f32 %v5532, %v9656
  %v10099 = vmul.f32 %v5533, %v9660
  %v10100 = vmul.f32 %v5534, %v9664
  %v10101 = vmul.f32 %v5535, %v9668
  %v10102 = vmul.f32 %v5536, %v9672
  %v10103 = vmul.f32 %v5537, %v9676
  %v10104 = vmul.f32 %v5538, %v9680
  %v10105 = vmul.f32 %v5539, %v9684
  %v10106 = vmul.f32 %v5540, %v9688
  %v10107 = vmul.f32 %v5541, %v9692
  %v10108 = vmul.f32 %v5542, %v9696
  %v10109 = vmul.f32 %v5543, %v9700
  %v10110 = vmul.f32 %v5544, %v9704
  %v10111 = vmul.f32 %v5545, %v9708
  %v10112 = vmul.f32 %v5546, %v9712
  %v10113 = vmul.f32 %v5547, %v9716
  %v10114 = vmul.f32 %v5548, %v9720
  %v10115 = vmul.f32 %v5549, %v9724
  %v10116 = vmul.f32 %v5550, %v9728
  %v10117 = vmul.f32 %v5551, %v9732
  %v10118 = vmul.f32 %v5552, %v9736
  %v10119 = vmul.f32 %v5553, %v9740
  %v10120 = vmul.f32 %v5554, %v9744
  %v10121 = vmul.f32 %v5555, %v9748
  %v10122 = vmul.f32 %v5556, %v9752
  %v10123 = vmul.f32 %v5557, %v9756
  %v10124 = vmul.f32 %v5558, %v9760
  %v10125 = vmul.f32 %v5559, %v9764
  %v10126 = vmul.f32 %v5560, %v9768
  %v10127 = vmul.f32 %v5561, %v9772
  %v10128 = vmul.f32 %v5562, %v9776
  %v10129 = vmul.f32 %v5563, %v9780
  %v10130 = vmul.f32 %v5564, %v9784
  %v10131 = vmul.f32 %v5565, %v9788
  %v10132 = vmul.f32 %v5566, %v9792
  %v10133 = vmul.f32 %v5567, %v9796
  %v10134 = vmul.f32 %v5568, %v9800
  %v10135 = vmul.f32 %v5569, %v9804
  %v10136 = vmul.f32 %v5570, %v9808
  %v10137 = vmul.f32 %v5571, %v9812
  %v10138 = vmul.f32 %v5572, %v9816
  %v10139 = vmul.f32 %v5573, %v9820
  %v10140 = vmul.f32 %v5574, %v9824
  %v10141 = vmul.f32 %v5575, %v9828
  %v10142 = vmul.f32 %v5576, %v9832
  %v10143 = vmul.f32 %v5577, %v9836
  %v10144 = vmul.f32 %v5578, %v9840
  %v10145 = vmul.f32 %v5579, %v9844
  %v10146 = vmul.f32 %v5580, %v9848
  %v10147 = vmul.f32 %v5581, %v9852
  %v10148 = vmul.f32 %v5582, %v9856
  %v10149 = vmul.f32 %v5583, %v9860
  %v10150 = vmul.f32 %v5584, %v9864
  %v10151 = vmul.f32 %v5585, %v9868
  %v10152 = vmul.f32 %v5586, %v9872
  %v10153 = vmul.f32 %v5587, %v9876
  %v10154 = vmul.f32 %v5588, %v9880
  %v10155 = vmul.f32 %v5589, %v9884
  %v10156 = vmul.f32 %v5590, %v9888
  %v10157 = vmul.f32 %v5591, %v9892
  %v10158 = vmul.f32 %v5592, %v9896
  %v10159 = vmul.f32 %v5593, %v9900
  %v10160 = vmul.f32 %v5594, %v9904
  %v10161 = vmul.f32 %v5595, %v9396
  %v10162 = vmul.f32 %v5596, %v9400
  %v10163 = vmul.f32 %v5597, %v9404
  %v10164 = vmul.f32 %v5598, %v9408
  %v10165 = vmul.f32 %v5599, %v9412
  %v10166 = vmul.f32 %v5600, %v9416
  %v10167 = vmul.f32 %v5601, %v9420
  %v10168 = vmul.f32 %v5602, %v9424
  %v10169 = vmul.f32 %v5603, %v9428
  %v10170 = vmul.f32 %v5604, %v9432
  %v10171 = vmul.f32 %v5605, %v9436
  %v10172 = vmul.f32 %v5606, %v9440
  %v10173 = vmul.f32 %v5607, %v9444
  %v10174 = vmul.f32 %v5608, %v9448
  %v10175 = vmul.f32 %v5609, %v9452
  %v10176 = vmul.f32 %v5610, %v9456
  %v10177 = vmul.f32 %v5611, %v9460
  %v10178 = vmul.f32 %v5612, %v9464
  %v10179 = vmul.f32 %v5613, %v9468
  %v10180 = vmul.f32 %v5614, %v9472
  %v10181 = vmul.f32 %v5615, %v9476
  %v10182 = vmul.f32 %v5616, %v9480
  %v10183 = vmul.f32 %v5617, %v9484
  %v10184 = vmul.f32 %v5618, %v9488
  %v10185 = vmul.f32 %v5619, %v9492
  %v10186 = vmul.f32 %v5620, %v9496
  %v10187 = vmul.f32 %v5621, %v9500
  %v10188 = vmul.f32 %v5622, %v9504
  %v10189 = vmul.f32 %v5623, %v9508
  %v10190 = vmul.f32 %v5624, %v9512
  %v10191 = vmul.f32 %v5625, %v9516
  %v10192 = vmul.f32 %v5626, %v9520
  %v10193 = vmul.f32 %v5627, %v9524
  %v10194 = vmul.f32 %v5628, %v9528
  %v10195 = vmul.f32 %v5629, %v9532
  %v10196 = vmul.f32 %v5630, %v9536
  %v10197 = vmul.f32 %v5631, %v9540
  %v10198 = vmul.f32 %v5632, %v9544
  %v10199 = vmul.f32 %v5633, %v9548
  %v10200 = vmul.f32 %v5634, %v9552
  %v10201 = vmul.f32 %v5635, %v9556
  %v10202 = vmul.f32 %v5636, %v9560
  %v10203 = vmul.f32 %v5637, %v9564
  %v10204 = vmul.f32 %v5638, %v9568
  %v10205 = vmul.f32 %v5639, %v9572
  %v10206 = vmul.f32 %v5640, %v9576
  %v10207 = vmul.f32 %v5641, %v9580
  %v10208 = vmul.f32 %v5642, %v9584
  %v10209 = vmul.f32 %v5643, %v9588
  %v10210 = vmul.f32 %v5644, %v9592
  %v10211 = vmul.f32 %v5645, %v9596
  %v10212 = vmul.f32 %v5646, %v9600
  %v10213 = vmul.f32 %v5647, %v9604
  %v10214 = vmul.f32 %v5648, %v9608
  %v10215 = vmul.f32 %v5649, %v9612
  %v10216 = vmul.f32 %v5650, %v9616
  %v10217 = vmul.f32 %v5651, %v9620
  %v10218 = vmul.f32 %v5652, %v9624
  %v10219 = vmul.f32 %v5653, %v9628
  %v10220 = vmul.f32 %v5654, %v9632
  %v10221 = vmul.f32 %v5655, %v9636
  %v10222 = vmul.f32 %v5656, %v9640
  %v10223 = vmul.f32 %v5657, %v9644
  %v10224 = vmul.f32 %v5658, %v9648
  %v10225 = vmul.f32 %v5659, %v9652
  %v10226 = vmul.f32 %v5660, %v9656
  %v10227 = vmul.f32 %v5661, %v9660
  %v10228 = vmul.f32 %v5662, %v9664
  %v10229 = vmul.f32 %v5663, %v9668
  %v10230 = vmul.f32 %v5664, %v9672
  %v10231 = vmul.f32 %v5665, %v9676
  %v10232 = vmul.f32 %v5666, %v9680
  %v10233 = vmul.f32 %v5667, %v9684
  %v10234 = vmul.f32 %v5668, %v9688
  %v10235 = vmul.f32 %v5669, %v9692
  %v10236 = vmul.f32 %v5670, %v9696
  %v10237 = vmul.f32 %v5671, %v9700
  %v10238 = vmul.f32 %v5672, %v9704
  %v10239 = vmul.f32 %v5673, %v9708
  %v10240 = vmul.f32 %v5674, %v9712
  %v10241 = vmul.f32 %v5675, %v9716
  %v10242 = vmul.f32 %v5676, %v9720
  %v10243 = vmul.f32 %v5677, %v9724
  %v10244 = vmul.f32 %v5678, %v9728
  %v10245 = vmul.f32 %v5679, %v9732
  %v10246 = vmul.f32 %v5680, %v9736
  %v10247 = vmul.f32 %v5681, %v9740
  %v10248 = vmul.f32 %v5682, %v9744
  %v10249 = vmul.f32 %v5683, %v9748
  %v10250 = vmul.f32 %v5684, %v9752
  %v10251 = vmul.f32 %v5685, %v9756
  %v10252 = vmul.f32 %v5686, %v9760
  %v10253 = vmul.f32 %v5687, %v9764
  %v10254 = vmul.f32 %v5688, %v9768
  %v10255 = vmul.f32 %v5689, %v9772
  %v10256 = vmul.f32 %v5690, %v9776
  %v10257 = vmul.f32 %v5691, %v9780
  %v10258 = vmul.f32 %v5692, %v9784
  %v10259 = vmul.f32 %v5693, %v9788
  %v10260 = vmul.f32 %v5694, %v9792
  %v10261 = vmul.f32 %v5695, %v9796
  %v10262 = vmul.f32 %v5696, %v9800
  %v10263 = vmul.f32 %v5697, %v9804
  %v10264 = vmul.f32 %v5698, %v9808
  %v10265 = vmul.f32 %v5699, %v9812
  %v10266 = vmul.f32 %v5700, %v9816
  %v10267 = vmul.f32 %v5701, %v9820
  %v10268 = vmul.f32 %v5702, %v9824
  %v10269 = vmul.f32 %v5703, %v9828
  %v10270 = vmul.f32 %v5704, %v9832
  %v10271 = vmul.f32 %v5705, %v9836
  %v10272 = vmul.f32 %v5706, %v9840
  %v10273 = vmul.f32 %v5707, %v9844
  %v10274 = vmul.f32 %v5708, %v9848
  %v10275 = vmul.f32 %v5709, %v9852
  %v10276 = vmul.f32 %v5710, %v9856
  %v10277 = vmul.f32 %v5711, %v9860
  %v10278 = vmul.f32 %v5712, %v9864
  %v10279 = vmul.f32 %v5713, %v9868
  %v10280 = vmul.f32 %v5714, %v9872
  %v10281 = vmul.f32 %v5715, %v9876
  %v10282 = vmul.f32 %v5716, %v9880
  %v10283 = vmul.f32 %v5717, %v9884
  %v10284 = vmul.f32 %v5718, %v9888
  %v10285 = vmul.f32 %v5719, %v9892
  %v10286 = vmul.f32 %v5720, %v9896
  %v10287 = vmul.f32 %v5721, %v9900
  %v10288 = vmul.f32 %v5722, %v9904
  %v10289 = vadd.f32 %v10033, %v10034
  %v10290 = vadd.f32 %v10161, %v10162
  %v10291 = vadd.f32 %v10035, %v10036
  %v10292 = vadd.f32 %v10163, %v10164
  %v10293 = vadd.f32 %v10037, %v10038
  %v10294 = vadd.f32 %v10165, %v10166
  %v10295 = vadd.f32 %v10039, %v10040
  %v10296 = vadd.f32 %v10167, %v10168
  %v10297 = vadd.f32 %v10041, %v10042
  %v10298 = vadd.f32 %v10169, %v10170
  %v10299 = vadd.f32 %v10043, %v10044
  %v10300 = vadd.f32 %v10171, %v10172
  %v10301 = vadd.f32 %v10045, %v10046
  %v10302 = vadd.f32 %v10173, %v10174
  %v10303 = vadd.f32 %v10047, %v10048
  %v10304 = vadd.f32 %v10175, %v10176
  %v10305 = vadd.f32 %v10049, %v10050
  %v10306 = vadd.f32 %v10177, %v10178
  %v10307 = vadd.f32 %v10051, %v10052
  %v10308 = vadd.f32 %v10179, %v10180
  %v10309 = vadd.f32 %v10053, %v10054
  %v10310 = vadd.f32 %v10181, %v10182
  %v10311 = vadd.f32 %v10055, %v10056
  %v10312 = vadd.f32 %v10183, %v10184
  %v10313 = vadd.f32 %v10057, %v10058
  %v10314 = vadd.f32 %v10185, %v10186
  %v10315 = vadd.f32 %v10059, %v10060
  %v10316 = vadd.f32 %v10187, %v10188
  %v10317 = vadd.f32 %v10061, %v10062
  %v10318 = vadd.f32 %v10189, %v10190
  %v10319 = vadd.f32 %v10063, %v10064
  %v10320 = vadd.f32 %v10191, %v10192
  %v10321 = vadd.f32 %v10065, %v10066
  %v10322 = vadd.f32 %v10193, %v10194
  %v10323 = vadd.f32 %v10067, %v10068
  %v10324 = vadd.f32 %v10195, %v10196
  %v10325 = vadd.f32 %v10069, %v10070
  %v10326 = vadd.f32 %v10197, %v10198
  %v10327 = vadd.f32 %v10071, %v10072
  %v10328 = vadd.f32 %v10199, %v10200
  %v10329 = vadd.f32 %v10073, %v10074
  %v10330 = vadd.f32 %v10201, %v10202
  %v10331 = vadd.f32 %v10075, %v10076
  %v10332 = vadd.f32 %v10203, %v10204
  %v10333 = vadd.f32 %v10077, %v10078
  %v10334 = vadd.f32 %v10205, %v10206
  %v10335 = vadd.f32 %v10079, %v10080
  %v10336 = vadd.f32 %v10207, %v10208
  %v10337 = vadd.f32 %v10081, %v10082
  %v10338 = vadd.f32 %v10209, %v10210
  %v10339 = vadd.f32 %v10083, %v10084
  %v10340 = vadd.f32 %v10211, %v10212
  %v10341 = vadd.f32 %v10085, %v10086
  %v10342 = vadd.f32 %v10213, %v10214
  %v10343 = vadd.f32 %v10087, %v10088
  %v10344 = vadd.f32 %v10215, %v10216
  %v10345 = vadd.f32 %v10089, %v10090
  %v10346 = vadd.f32 %v10217, %v10218
  %v10347 = vadd.f32 %v10091, %v10092
  %v10348 = vadd.f32 %v10219, %v10220
  %v10349 = vadd.f32 %v10093, %v10094
  %v10350 = vadd.f32 %v10221, %v10222
  %v10351 = vadd.f32 %v10095, %v10096
  %v10352 = vadd.f32 %v10223, %v10224
  %v10353 = vadd.f32 %v10097, %v10098
  %v10354 = vadd.f32 %v10225, %v10226
  %v10355 = vadd.f32 %v10099, %v10100
  %v10356 = vadd.f32 %v10227, %v10228
  %v10357 = vadd.f32 %v10101, %v10102
  %v10358 = vadd.f32 %v10229, %v10230
  %v10359 = vadd.f32 %v10103, %v10104
  %v10360 = vadd.f32 %v10231, %v10232
  %v10361 = vadd.f32 %v10105, %v10106
  %v10362 = vadd.f32 %v10233, %v10234
  %v10363 = vadd.f32 %v10107, %v10108
  %v10364 = vadd.f32 %v10235, %v10236
  %v10365 = vadd.f32 %v10109, %v10110
  %v10366 = vadd.f32 %v10237, %v10238
  %v10367 = vadd.f32 %v10111, %v10112
  %v10368 = vadd.f32 %v10239, %v10240
  %v10369 = vadd.f32 %v10113, %v10114
  %v10370 = vadd.f32 %v10241, %v10242
  %v10371 = vadd.f32 %v10115, %v10116
  %v10372 = vadd.f32 %v10243, %v10244
  %v10373 = vadd.f32 %v10117, %v10118
  %v10374 = vadd.f32 %v10245, %v10246
  %v10375 = vadd.f32 %v10119, %v10120
  %v10376 = vadd.f32 %v10247, %v10248
  %v10377 = vadd.f32 %v10121, %v10122
  %v10378 = vadd.f32 %v10249, %v10250
  %v10379 = vadd.f32 %v10123, %v10124
  %v10380 = vadd.f32 %v10251, %v10252
  %v10381 = vadd.f32 %v10125, %v10126
  %v10382 = vadd.f32 %v10253, %v10254
  %v10383 = vadd.f32 %v10127, %v10128
  %v10384 = vadd.f32 %v10255, %v10256
  %v10385 = vadd.f32 %v10129, %v10130
  %v10386 = vadd.f32 %v10257, %v10258
  %v10387 = vadd.f32 %v10131, %v10132
  %v10388 = vadd.f32 %v10259, %v10260
  %v10389 = vadd.f32 %v10133, %v10134
  %v10390 = vadd.f32 %v10261, %v10262
  %v10391 = vadd.f32 %v10135, %v10136
  %v10392 = vadd.f32 %v10263, %v10264
  %v10393 = vadd.f32 %v10137, %v10138
  %v10394 = vadd.f32 %v10265, %v10266
  %v10395 = vadd.f32 %v10139, %v10140
  %v10396 = vadd.f32 %v10267, %v10268
  %v10397 = vadd.f32 %v10141, %v10142
  %v10398 = vadd.f32 %v10269, %v10270
  %v10399 = vadd.f32 %v10143, %v10144
  %v10400 = vadd.f32 %v10271, %v10272
  %v10401 = vadd.f32 %v10145, %v10146
  %v10402 = vadd.f32 %v10273, %v10274
  %v10403 = vadd.f32 %v10147, %v10148
  %v10404 = vadd.f32 %v10275, %v10276
  %v10405 = vadd.f32 %v10149, %v10150
  %v10406 = vadd.f32 %v10277, %v10278
  %v10407 = vadd.f32 %v10151, %v10152
  %v10408 = vadd.f32 %v10279, %v10280
  %v10409 = vadd.f32 %v10153, %v10154
  %v10410 = vadd.f32 %v10281, %v10282
  %v10411 = vadd.f32 %v10155, %v10156
  %v10412 = vadd.f32 %v10283, %v10284
  %v10413 = vadd.f32 %v10157, %v10158
  %v10414 = vadd.f32 %v10285, %v10286
  %v10415 = vadd.f32 %v10159, %v10160
  %v10416 = vadd.f32 %v10287, %v10288
  %v10417 = vadd.f32 %v10289, %v10291
  %v10418 = vadd.f32 %v10290, %v10292
  %v10419 = vadd.f32 %v10293, %v10295
  %v10420 = vadd.f32 %v10294, %v10296
  %v10421 = vadd.f32 %v10297, %v10299
  %v10422 = vadd.f32 %v10298, %v10300
  %v10423 = vadd.f32 %v10301, %v10303
  %v10424 = vadd.f32 %v10302, %v10304
  %v10425 = vadd.f32 %v10305, %v10307
  %v10426 = vadd.f32 %v10306, %v10308
  %v10427 = vadd.f32 %v10309, %v10311
  %v10428 = vadd.f32 %v10310, %v10312
  %v10429 = vadd.f32 %v10313, %v10315
  %v10430 = vadd.f32 %v10314, %v10316
  %v10431 = vadd.f32 %v10317, %v10319
  %v10432 = vadd.f32 %v10318, %v10320
  %v10433 = vadd.f32 %v10321, %v10323
  %v10434 = vadd.f32 %v10322, %v10324
  %v10435 = vadd.f32 %v10325, %v10327
  %v10436 = vadd.f32 %v10326, %v10328
  %v10437 = vadd.f32 %v10329, %v10331
  %v10438 = vadd.f32 %v10330, %v10332
  %v10439 = vadd.f32 %v10333, %v10335
  %v10440 = vadd.f32 %v10334, %v10336
  %v10441 = vadd.f32 %v10337, %v10339
  %v10442 = vadd.f32 %v10338, %v10340
  %v10443 = vadd.f32 %v10341, %v10343
  %v10444 = vadd.f32 %v10342, %v10344
  %v10445 = vadd.f32 %v10345, %v10347
  %v10446 = vadd.f32 %v10346, %v10348
  %v10447 = vadd.f32 %v10349, %v10351
  %v10448 = vadd.f32 %v10350, %v10352
  %v10449 = vadd.f32 %v10353, %v10355
  %v10450 = vadd.f32 %v10354, %v10356
  %v10451 = vadd.f32 %v10357, %v10359
  %v10452 = vadd.f32 %v10358, %v10360
  %v10453 = vadd.f32 %v10361, %v10363
  %v10454 = vadd.f32 %v10362, %v10364
  %v10455 = vadd.f32 %v10365, %v10367
  %v10456 = vadd.f32 %v10366, %v10368
  %v10457 = vadd.f32 %v10369, %v10371
  %v10458 = vadd.f32 %v10370, %v10372
  %v10459 = vadd.f32 %v10373, %v10375
  %v10460 = vadd.f32 %v10374, %v10376
  %v10461 = vadd.f32 %v10377, %v10379
  %v10462 = vadd.f32 %v10378, %v10380
  %v10463 = vadd.f32 %v10381, %v10383
  %v10464 = vadd.f32 %v10382, %v10384
  %v10465 = vadd.f32 %v10385, %v10387
  %v10466 = vadd.f32 %v10386, %v10388
  %v10467 = vadd.f32 %v10389, %v10391
  %v10468 = vadd.f32 %v10390, %v10392
  %v10469 = vadd.f32 %v10393, %v10395
  %v10470 = vadd.f32 %v10394, %v10396
  %v10471 = vadd.f32 %v10397, %v10399
  %v10472 = vadd.f32 %v10398, %v10400
  %v10473 = vadd.f32 %v10401, %v10403
  %v10474 = vadd.f32 %v10402, %v10404
  %v10475 = vadd.f32 %v10405, %v10407
  %v10476 = vadd.f32 %v10406, %v10408
  %v10477 = vadd.f32 %v10409, %v10411
  %v10478 = vadd.f32 %v10410, %v10412
  %v10479 = vadd.f32 %v10413, %v10415
  %v10480 = vadd.f32 %v10414, %v10416
  %v10481 = vadd.f32 %v10417, %v10419
  %v10482 = vadd.f32 %v10418, %v10420
  %v10483 = vadd.f32 %v10421, %v10423
  %v10484 = vadd.f32 %v10422, %v10424
  %v10485 = vadd.f32 %v10425, %v10427
  %v10486 = vadd.f32 %v10426, %v10428
  %v10487 = vadd.f32 %v10429, %v10431
  %v10488 = vadd.f32 %v10430, %v10432
  %v10489 = vadd.f32 %v10433, %v10435
  %v10490 = vadd.f32 %v10434, %v10436
  %v10491 = vadd.f32 %v10437, %v10439
  %v10492 = vadd.f32 %v10438, %v10440
  %v10493 = vadd.f32 %v10441, %v10443
  %v10494 = vadd.f32 %v10442, %v10444
  %v10495 = vadd.f32 %v10445, %v10447
  %v10496 = vadd.f32 %v10446, %v10448
  %v10497 = vadd.f32 %v10449, %v10451
  %v10498 = vadd.f32 %v10450, %v10452
  %v10499 = vadd.f32 %v10453, %v10455
  %v10500 = vadd.f32 %v10454, %v10456
  %v10501 = vadd.f32 %v10457, %v10459
  %v10502 = vadd.f32 %v10458, %v10460
  %v10503 = vadd.f32 %v10461, %v10463
  %v10504 = vadd.f32 %v10462, %v10464
  %v10505 = vadd.f32 %v10465, %v10467
  %v10506 = vadd.f32 %v10466, %v10468
  %v10507 = vadd.f32 %v10469, %v10471
  %v10508 = vadd.f32 %v10470, %v10472
  %v10509 = vadd.f32 %v10473, %v10475
  %v10510 = vadd.f32 %v10474, %v10476
  %v10511 = vadd.f32 %v10477, %v10479
  %v10512 = vadd.f32 %v10478, %v10480
  %v10513 = vadd.f32 %v10481, %v10483
  %v10514 = vadd.f32 %v10482, %v10484
  %v10515 = vadd.f32 %v10485, %v10487
  %v10516 = vadd.f32 %v10486, %v10488
  %v10517 = vadd.f32 %v10489, %v10491
  %v10518 = vadd.f32 %v10490, %v10492
  %v10519 = vadd.f32 %v10493, %v10495
  %v10520 = vadd.f32 %v10494, %v10496
  %v10521 = vadd.f32 %v10497, %v10499
  %v10522 = vadd.f32 %v10498, %v10500
  %v10523 = vadd.f32 %v10501, %v10503
  %v10524 = vadd.f32 %v10502, %v10504
  %v10525 = vadd.f32 %v10505, %v10507
  %v10526 = vadd.f32 %v10506, %v10508
  %v10527 = vadd.f32 %v10509, %v10511
  %v10528 = vadd.f32 %v10510, %v10512
  %v10529 = vadd.f32 %v10513, %v10515
  %v10530 = vadd.f32 %v10514, %v10516
  %v10531 = vadd.f32 %v10517, %v10519
  %v10532 = vadd.f32 %v10518, %v10520
  %v10533 = vadd.f32 %v10521, %v10523
  %v10534 = vadd.f32 %v10522, %v10524
  %v10535 = vadd.f32 %v10525, %v10527
  %v10536 = vadd.f32 %v10526, %v10528
  %v10537 = vadd.f32 %v10529, %v10531
  %v10538 = vadd.f32 %v10530, %v10532
  %v10539 = vadd.f32 %v10533, %v10535
  %v10540 = vadd.f32 %v10534, %v10536
  %v10541 = vadd.f32 %v10537, %v10539
  %v10542 = vadd.f32 %v10538, %v10540
  %v10543 = vld [vmem:[%s3 + $0x3] sm:$0x1]
  %v10544 = vlaneseq
  %v10545 = vshrl.u32 %v10544, 7
  %v10546 = vsub.s32 0, %v10545
  %v10547 = vrot.slane %v10543, %v10546
  %v10548 = vadd.f32 %v10541, %v10547
  %v10549 = vadd.f32 %v10542, %v10547
  %s10550 = scalar_lea.vmem %s4, 48
  %10551 = vst [vmem:[%s10550] sm:$0xff] %v10548
  %10552 = vst [vmem:[%s10550 + $0x8] sm:$0xff] %v10549
  // Predicated region
  $region18: #{bnn_forward_pallas.1} parent=0 // pred_check
    _
  $region19: #{bnn_forward_pallas.1} parent=0 // pred_check_branch
    %10554 = sbr.rel (0) target = $region21
  $region20: #{bnn_forward_pallas.1} parent=0 // pred_region
    _
  $region21: #{bnn_forward_pallas.1} parent=0 // pred_fallthru
    _
  // Predicated region
  $region22: #{bnn_forward_pallas.1} parent=0 // pred_check
    _
  $region23: #{bnn_forward_pallas.1} parent=0 // pred_check_branch
    %10556 = sbr.rel (0) target = $region25
  $region24: #{bnn_forward_pallas.1} parent=0 // pred_region
    _
  $region25: #{bnn_forward_pallas.1} parent=0 // pred_fallthru
    _

</llo_original>
